<compile_context>
chip_gen: v6e
topology: v6e:2x2x1
jax: 0.10.0
libtpu: 0.0.40
codegen_flags: <defaults>
</compile_context>

<pallas_src>
import jax
import jax.numpy as jnp
from jax.experimental import pallas as pl
from jax.experimental.pallas import tpu as pltpu

D_IN = 3 * 224 * 224     # 150528 = 21 * 7168
H1 = 500                 # logical mlp1 width
H1P = 512                # padded width (2 x 256 lane-aligned column halves)
H1_HALF = H1P // 2       # 256
N_COL = 2                # column-split grid axis (maps onto v7x's 2 TCs)
H2 = 128
D_OUT = 2
EPS = 1e-5
TK = 7168                # K-chunk of the first matmul; 150528 / 7168 = 21
N_K = D_IN // TK


# --------------------------------------------------------------------------
# Kernel 1: h1[:, half_j] = BN1(ReLU(x @ W1[:, half_j] + b1[half_j]))
# Grid = (column-half j : parallel, K-chunk k : arbitrary reduction)
# --------------------------------------------------------------------------
def _mlp1_bn1_kernel(x_ref, w1_ref, b1_ref, g1_ref, be1_ref, h1_ref, acc_ref):
    k = pl.program_id(1)

    @pl.when(k == 0)
    def _():
        acc_ref[...] = jnp.zeros_like(acc_ref)

    # bf16 x bf16 on the MXU, f32 accumulation: (B, TK) @ (TK, 256)
    acc_ref[...] += jnp.dot(x_ref[...], w1_ref[...],
                            preferred_element_type=jnp.float32)

    @pl.when(k == pl.num_programs(1) - 1)
    def _():
        # bias + ReLU + BatchNorm1d (training-mode batch stats, per-feature,
        # so each column half is independent).
        h = jnp.maximum(acc_ref[...] + b1_ref[...], 0.0)
        m = jnp.mean(h, axis=0, keepdims=True)
        v = jnp.mean((h - m) ** 2, axis=0, keepdims=True)      # biased var
        h1_ref[...] = ((h - m) * jax.lax.rsqrt(v + EPS) * g1_ref[...]
                       + be1_ref[...]).astype(h1_ref.dtype)


# --------------------------------------------------------------------------
# Kernel 2 (tiny, everything resident): mlp2 + ReLU + BN2 + mlp3
# --------------------------------------------------------------------------
def _tail_kernel(h1_ref, w2_ref, b2_ref, g2_ref, be2_ref, w3_ref, b3_ref,
                 o_ref):
    h2 = jnp.dot(h1_ref[...], w2_ref[...], preferred_element_type=jnp.float32)
    h2 = jnp.maximum(h2 + b2_ref[...], 0.0)
    m = jnp.mean(h2, axis=0, keepdims=True)
    v = jnp.mean((h2 - m) ** 2, axis=0, keepdims=True)
    h2 = (h2 - m) * jax.lax.rsqrt(v + EPS) * g2_ref[...] + be2_ref[...]
    out = jnp.dot(h2, w3_ref[...], preferred_element_type=jnp.float32)
    o_ref[...] = (out + b3_ref[...]).astype(o_ref.dtype)


@jax.jit
def net_forward(x_nchw, prepared):
    (w1p, b1p, g1p, be1p, w2p, b2, g2, be2, w3, b3) = prepared
    B = x_nchw.shape[0]
    x = x_nchw.reshape(B, D_IN).astype(jnp.bfloat16)   # row-major == torch

    cost = pl.CostEstimate(
        flops=2 * B * D_IN * H1P,
        transcendentals=0,
        bytes_accessed=D_IN * H1P * 2          # bf16 W1 stream (dominant)
        + N_COL * B * D_IN * 2                 # bf16 x chunks (once per half)
        + B * H1P * 4,                         # f32 h1 output
    )

    h1 = pl.pallas_call(
        _mlp1_bn1_kernel,
        out_shape=jax.ShapeDtypeStruct((B, H1P), jnp.float32),
        grid_spec=pltpu.PrefetchScalarGridSpec(
            num_scalar_prefetch=0,
            grid=(N_COL, N_K),
            in_specs=[
                pl.BlockSpec((B, TK), lambda j, k: (0, k)),         # x chunk
                pl.BlockSpec((TK, H1_HALF), lambda j, k: (k, j)),   # W1 block
                pl.BlockSpec((1, H1_HALF), lambda j, k: (0, j)),    # b1 half
                pl.BlockSpec((1, H1_HALF), lambda j, k: (0, j)),    # gamma1
                pl.BlockSpec((1, H1_HALF), lambda j, k: (0, j)),    # beta1
            ],
            out_specs=pl.BlockSpec((B, H1_HALF), lambda j, k: (0, j)),
            scratch_shapes=[pltpu.VMEM((B, H1_HALF), jnp.float32)],
        ),
        compiler_params=pltpu.CompilerParams(
            dimension_semantics=("parallel", "arbitrary"),
            # 40 MiB: leaves headroom on v7x (64 MiB/TC) and is far above the
            # ~10 MiB this kernel actually needs on any generation.
            vmem_limit_bytes=40 << 20,
        ),
        cost_estimate=cost,
    )(x, w1p, b1p, g1p, be1p)

    # Tail: all operands tiny -> whole-array resident blocks, single step.
    out = pl.pallas_call(
        _tail_kernel,
        out_shape=jax.ShapeDtypeStruct((B, D_OUT), jnp.float32),
    )(h1, w2p, b2, g2, be2, w3, b3)
    return out


def init_params(key):
    k1, k2, k3, k4, k5, k6 = jax.random.split(key, 6)
    # Linear weights stored transposed: (in_features, out_features)
    w1 = jax.random.normal(k1, (D_IN, H1), jnp.float32) * 0.01
    b1 = jax.random.normal(k2, (1, H1), jnp.float32) * 0.01
    w2 = jax.random.normal(k3, (H1, H2), jnp.float32) * 0.05
    b2 = jax.random.normal(k4, (1, H2), jnp.float32) * 0.05
    w3 = jax.random.normal(k5, (H2, D_OUT), jnp.float32) * 0.05
    b3 = jax.random.normal(k6, (1, D_OUT), jnp.float32) * 0.05
    # BatchNorm affine params: PyTorch defaults (weight=1, bias=0)
    g1, be1 = jnp.ones((1, H1), jnp.float32), jnp.zeros((1, H1), jnp.float32)
    g2, be2 = jnp.ones((1, H2), jnp.float32), jnp.zeros((1, H2), jnp.float32)
    return (w1, b1, g1, be1, w2, b2, g2, be2, w3, b3)


def prepare_params(params):
    """Pad H1 500->512 and cast W1 to bf16 (one-time parameter prep).

    Padding is exact: padded W1 columns / b1 entries are zero so the padded
    h1 features are ReLU(0)=0 and BN maps them to beta_pad=0; padded W2 rows
    are zero so they contribute nothing to mlp2.
    """
    (w1, b1, g1, be1, w2, b2, g2, be2, w3, b3) = params
    pad = H1P - H1
    w1p = jnp.pad(w1, ((0, 0), (0, pad))).astype(jnp.bfloat16)
    b1p = jnp.pad(b1, ((0, 0), (0, pad)))
    g1p = jnp.pad(g1, ((0, 0), (0, pad)), constant_values=1.0)
    be1p = jnp.pad(be1, ((0, 0), (0, pad)))
    w2p = jnp.pad(w2, ((0, pad), (0, 0)))
    return (w1p, b1p, g1p, be1p, w2p, b2, g2, be2, w3, b3)


def reference_forward(x_nchw, params):
    (w1, b1, g1, be1, w2, b2, g2, be2, w3, b3) = params
    x = x_nchw.reshape(x_nchw.shape[0], D_IN)
    # Match the kernel's bf16 quantization of the HBM-bound first matmul
    # (f32 accumulation in both); everything downstream is f32.
    h = jnp.dot(x.astype(jnp.bfloat16), w1.astype(jnp.bfloat16),
                preferred_element_type=jnp.float32)
    h = jnp.maximum(h + b1, 0.0)
    m, v = jnp.mean(h, 0, keepdims=True), jnp.var(h, 0, keepdims=True)
    h = (h - m) / jnp.sqrt(v + EPS) * g1 + be1
    h = jnp.maximum(h @ w2 + b2, 0.0)
    m, v = jnp.mean(h, 0, keepdims=True), jnp.var(h, 0, keepdims=True)
    h = (h - m) / jnp.sqrt(v + EPS) * g2 + be2
    return h @ w3 + b3


if __name__ == "__main__":
    key = jax.random.PRNGKey(0)
    kx, kp = jax.random.split(key)
    B = 2
    x = jax.random.normal(kx, (B, 3, 224, 224), jnp.float32)
    params = init_params(kp)
    prepared = prepare_params(params)

    out = jax.block_until_ready(net_forward(x, prepared))
    ref = reference_forward(x, params)

    assert out.shape == (B, D_OUT)
    assert jnp.allclose(out, ref, atol=1e-2, rtol=1e-2), (out, ref)
    print("KERNEL_OK")
</pallas_src>

<mosaic_0001>
module attributes {stable_mosaic.version = 11 : i64} {
  func.func @_mlp1_bn1_kernel(%arg0: i32, %arg1: i32, %arg2: memref<2x7168xbf16, #tpu.memory_space<vmem>>, %arg3: memref<7168x256xbf16, #tpu.memory_space<vmem>>, %arg4: memref<1x256xf32, #tpu.memory_space<vmem>>, %arg5: memref<1x256xf32, #tpu.memory_space<vmem>>, %arg6: memref<1x256xf32, #tpu.memory_space<vmem>>, %arg7: memref<2x256xf32, #tpu.memory_space<vmem>>, %arg8: memref<2x256xf32, #tpu.memory_space<vmem>>) attributes {dimension_semantics = [#tpu.dimension_semantics<parallel>, #tpu.dimension_semantics<arbitrary>], iteration_bounds = array<i64: 2, 21>, scalar_prefetch = 0 : i64, scratch_operands = 1 : i64, tpu.core_type = #tpu.core_type<tc>, window_params = [{transform_indices = @transform_0, window_bounds = array<i64: 2, 7168>}, {transform_indices = @transform_1, window_bounds = array<i64: 7168, 256>}, {transform_indices = @transform_2, window_bounds = array<i64: 1, 256>}, {transform_indices = @transform_3, window_bounds = array<i64: 1, 256>}, {transform_indices = @transform_4, window_bounds = array<i64: 1, 256>}, {transform_indices = @transform_5, window_bounds = array<i64: 2, 256>}]} {
    %c0_i32 = arith.constant 0 : i32
    %0 = arith.cmpi eq, %arg1, %c0_i32 : i32
    %1 = arith.extui %0 : i1 to i32
    %c0_i32_0 = arith.constant 0 : i32
    %2 = arith.cmpi ne, %1, %c0_i32_0 : i32
    scf.if %2 {
      %cst_9 = arith.constant 0.000000e+00 : f32
      %12 = vector.broadcast %cst_9 : f32 to vector<2x256xf32>
      %c0_10 = arith.constant 0 : index
      %c0_11 = arith.constant 0 : index
      %13 = vector.load %arg8[%c0_10, %c0_11] : memref<2x256xf32, #tpu.memory_space<vmem>>, vector<2x256xf32>
      tpu.vector_store %arg8[%c0_10, %c0_11], %12 {strides = array<i32>} : memref<2x256xf32, #tpu.memory_space<vmem>>, vector<2x256xf32>,
    } else {
    }
    %c0 = arith.constant 0 : index
    %c0_1 = arith.constant 0 : index
    %3 = vector.load %arg8[%c0, %c0_1] : memref<2x256xf32, #tpu.memory_space<vmem>>, vector<2x256xf32>
    %c0_2 = arith.constant 0 : index
    %c0_3 = arith.constant 0 : index
    %4 = vector.load %arg2[%c0_2, %c0_3] : memref<2x7168xbf16, #tpu.memory_space<vmem>>, vector<2x7168xbf16>
    %c0_4 = arith.constant 0 : index
    %c0_5 = arith.constant 0 : index
    %5 = vector.load %arg3[%c0_4, %c0_5] : memref<7168x256xbf16, #tpu.memory_space<vmem>>, vector<7168x256xbf16>
    %cst = arith.constant dense<0.000000e+00> : vector<2x256xf32>
    %6 = tpu.matmul %4, %5, %cst {dimension_numbers = #tpu.dot_dimension_numbers<[1], [0], [0], [1], [0, 0, 1, 1], [], []>} : vector<2x7168xbf16>, vector<7168x256xbf16>, vector<2x256xf32> -> vector<2x256xf32>
    %7 = arith.addf %3, %6 : vector<2x256xf32>
    %c0_6 = arith.constant 0 : index
    %c0_7 = arith.constant 0 : index
    %8 = vector.load %arg8[%c0_6, %c0_7] : memref<2x256xf32, #tpu.memory_space<vmem>>, vector<2x256xf32>
    tpu.vector_store %arg8[%c0_6, %c0_7], %7 {strides = array<i32>} : memref<2x256xf32, #tpu.memory_space<vmem>>, vector<2x256xf32>,
    %c20_i32 = arith.constant 20 : i32
    %9 = arith.cmpi eq, %arg1, %c20_i32 : i32
    %10 = arith.extui %9 : i1 to i32
    %c0_i32_8 = arith.constant 0 : i32
    %11 = arith.cmpi ne, %10, %c0_i32_8 : i32
    scf.if %11 {
      %c0_9 = arith.constant 0 : index
      %c0_10 = arith.constant 0 : index
      %12 = vector.load %arg8[%c0_9, %c0_10] : memref<2x256xf32, #tpu.memory_space<vmem>>, vector<2x256xf32>
      %c0_11 = arith.constant 0 : index
      %c0_12 = arith.constant 0 : index
      %13 = vector.load %arg4[%c0_11, %c0_12] : memref<1x256xf32, #tpu.memory_space<vmem>>, vector<1x256xf32>
      %14 = vector.broadcast %13 : vector<1x256xf32> to vector<2x256xf32>
      %15 = arith.addf %12, %14 : vector<2x256xf32>
      %cst_13 = arith.constant 0.000000e+00 : f32
      %16 = vector.broadcast %cst_13 : f32 to vector<2x256xf32>
      %17 = arith.maximumf %15, %16 : vector<2x256xf32>
      %cst_14 = arith.constant dense<0.000000e+00> : vector<256xf32>
      %18 = vector.multi_reduction <add>, %17, %cst_14 [0] : vector<2x256xf32> to vector<256xf32>
      %19 = vector.shape_cast %18 : vector<256xf32> to vector<1x256xf32>
      %cst_15 = arith.constant 2.000000e+00 : f32
      %20 = vector.broadcast %cst_15 : f32 to vector<1x256xf32>
      %21 = arith.divf %19, %20 : vector<1x256xf32>
      %22 = vector.broadcast %21 : vector<1x256xf32> to vector<2x256xf32>
      %23 = arith.subf %17, %22 : vector<2x256xf32>
      %24 = arith.mulf %23, %23 : vector<2x256xf32>
      %cst_16 = arith.constant dense<0.000000e+00> : vector<256xf32>
      %25 = vector.multi_reduction <add>, %24, %cst_16 [0] : vector<2x256xf32> to vector<256xf32>
      %26 = vector.shape_cast %25 : vector<256xf32> to vector<1x256xf32>
      %cst_17 = arith.constant 2.000000e+00 : f32
      %27 = vector.broadcast %cst_17 : f32 to vector<1x256xf32>
      %28 = arith.divf %26, %27 : vector<1x256xf32>
      %29 = vector.broadcast %21 : vector<1x256xf32> to vector<2x256xf32>
      %30 = arith.subf %17, %29 : vector<2x256xf32>
      %cst_18 = arith.constant 9.99999974E-6 : f32
      %31 = vector.broadcast %cst_18 : f32 to vector<1x256xf32>
      %32 = arith.addf %28, %31 : vector<1x256xf32>
      %33 = math.rsqrt %32 : vector<1x256xf32>
      %34 = vector.broadcast %33 : vector<1x256xf32> to vector<2x256xf32>
      %35 = arith.mulf %30, %34 : vector<2x256xf32>
      %c0_19 = arith.constant 0 : index
      %c0_20 = arith.constant 0 : index
      %36 = vector.load %arg5[%c0_19, %c0_20] : memref<1x256xf32, #tpu.memory_space<vmem>>, vector<1x256xf32>
      %37 = vector.broadcast %36 : vector<1x256xf32> to vector<2x256xf32>
      %38 = arith.mulf %35, %37 : vector<2x256xf32>
      %c0_21 = arith.constant 0 : index
      %c0_22 = arith.constant 0 : index
      %39 = vector.load %arg6[%c0_21, %c0_22] : memref<1x256xf32, #tpu.memory_space<vmem>>, vector<1x256xf32>
      %40 = vector.broadcast %39 : vector<1x256xf32> to vector<2x256xf32>
      %41 = arith.addf %38, %40 : vector<2x256xf32>
      %c0_23 = arith.constant 0 : index
      %c0_24 = arith.constant 0 : index
      %42 = vector.load %arg7[%c0_23, %c0_24] : memref<2x256xf32, #tpu.memory_space<vmem>>, vector<2x256xf32>
      tpu.vector_store %arg7[%c0_23, %c0_24], %41 {strides = array<i32>} : memref<2x256xf32, #tpu.memory_space<vmem>>, vector<2x256xf32>,
    } else {
    }
    return
  }
  func.func @transform_0(%arg0: i32, %arg1: i32) -> (i32, i32) {
    %c0_i32 = arith.constant 0 : i32
    %c0_i32_0 = arith.constant 0 : i32
    return %c0_i32, %arg1 : i32, i32
  }
  func.func @transform_1(%arg0: i32, %arg1: i32) -> (i32, i32) {
    %c0_i32 = arith.constant 0 : i32
    return %arg1, %arg0 : i32, i32
  }
  func.func @transform_2(%arg0: i32, %arg1: i32) -> (i32, i32) {
    %c0_i32 = arith.constant 0 : i32
    %c0_i32_0 = arith.constant 0 : i32
    return %c0_i32, %arg0 : i32, i32
  }
  func.func @transform_3(%arg0: i32, %arg1: i32) -> (i32, i32) {
    %c0_i32 = arith.constant 0 : i32
    %c0_i32_0 = arith.constant 0 : i32
    return %c0_i32, %arg0 : i32, i32
  }
  func.func @transform_4(%arg0: i32, %arg1: i32) -> (i32, i32) {
    %c0_i32 = arith.constant 0 : i32
    %c0_i32_0 = arith.constant 0 : i32
    return %c0_i32, %arg0 : i32, i32
  }
  func.func @transform_5(%arg0: i32, %arg1: i32) -> (i32, i32) {
    %c0_i32 = arith.constant 0 : i32
    %c0_i32_0 = arith.constant 0 : i32
    return %c0_i32, %arg0 : i32, i32
  }
}

module attributes {stable_mosaic.version = 11 : i64} {
  func.func @_tail_kernel(%arg0: memref<2x512xf32, #tpu.memory_space<vmem>>, %arg1: memref<512x128xf32, #tpu.memory_space<vmem>>, %arg2: memref<1x128xf32, #tpu.memory_space<vmem>>, %arg3: memref<1x128xf32, #tpu.memory_space<vmem>>, %arg4: memref<1x128xf32, #tpu.memory_space<vmem>>, %arg5: memref<128x2xf32, #tpu.memory_space<vmem>>, %arg6: memref<1x2xf32, #tpu.memory_space<vmem>>, %arg7: memref<2x2xf32, #tpu.memory_space<vmem>>) attributes {dimension_semantics = [], scalar_prefetch = 0 : i64, scratch_operands = 0 : i64, tpu.core_type = #tpu.core_type<tc>} {
    %c0 = arith.constant 0 : index
    %c0_0 = arith.constant 0 : index
    %0 = vector.load %arg0[%c0, %c0_0] : memref<2x512xf32, #tpu.memory_space<vmem>>, vector<2x512xf32>
    %c0_1 = arith.constant 0 : index
    %c0_2 = arith.constant 0 : index
    %1 = vector.load %arg1[%c0_1, %c0_2] : memref<512x128xf32, #tpu.memory_space<vmem>>, vector<512x128xf32>
    %cst = arith.constant dense<0.000000e+00> : vector<2x128xf32>
    %2 = tpu.matmul %0, %1, %cst {dimension_numbers = #tpu.dot_dimension_numbers<[1], [0], [0], [1], [0, 0, 1, 1], [], []>} : vector<2x512xf32>, vector<512x128xf32>, vector<2x128xf32> -> vector<2x128xf32>
    %c0_3 = arith.constant 0 : index
    %c0_4 = arith.constant 0 : index
    %3 = vector.load %arg2[%c0_3, %c0_4] : memref<1x128xf32, #tpu.memory_space<vmem>>, vector<1x128xf32>
    %4 = vector.broadcast %3 : vector<1x128xf32> to vector<2x128xf32>
    %5 = arith.addf %2, %4 : vector<2x128xf32>
    %cst_5 = arith.constant 0.000000e+00 : f32
    %6 = vector.broadcast %cst_5 : f32 to vector<2x128xf32>
    %7 = arith.maximumf %5, %6 : vector<2x128xf32>
    %cst_6 = arith.constant dense<0.000000e+00> : vector<128xf32>
    %8 = vector.multi_reduction <add>, %7, %cst_6 [0] : vector<2x128xf32> to vector<128xf32>
    %9 = vector.shape_cast %8 : vector<128xf32> to vector<1x128xf32>
    %cst_7 = arith.constant 2.000000e+00 : f32
    %10 = vector.broadcast %cst_7 : f32 to vector<1x128xf32>
    %11 = arith.divf %9, %10 : vector<1x128xf32>
    %12 = vector.broadcast %11 : vector<1x128xf32> to vector<2x128xf32>
    %13 = arith.subf %7, %12 : vector<2x128xf32>
    %14 = arith.mulf %13, %13 : vector<2x128xf32>
    %cst_8 = arith.constant dense<0.000000e+00> : vector<128xf32>
    %15 = vector.multi_reduction <add>, %14, %cst_8 [0] : vector<2x128xf32> to vector<128xf32>
    %16 = vector.shape_cast %15 : vector<128xf32> to vector<1x128xf32>
    %cst_9 = arith.constant 2.000000e+00 : f32
    %17 = vector.broadcast %cst_9 : f32 to vector<1x128xf32>
    %18 = arith.divf %16, %17 : vector<1x128xf32>
    %19 = vector.broadcast %11 : vector<1x128xf32> to vector<2x128xf32>
    %20 = arith.subf %7, %19 : vector<2x128xf32>
    %cst_10 = arith.constant 9.99999974E-6 : f32
    %21 = vector.broadcast %cst_10 : f32 to vector<1x128xf32>
    %22 = arith.addf %18, %21 : vector<1x128xf32>
    %23 = math.rsqrt %22 : vector<1x128xf32>
    %24 = vector.broadcast %23 : vector<1x128xf32> to vector<2x128xf32>
    %25 = arith.mulf %20, %24 : vector<2x128xf32>
    %c0_11 = arith.constant 0 : index
    %c0_12 = arith.constant 0 : index
    %26 = vector.load %arg3[%c0_11, %c0_12] : memref<1x128xf32, #tpu.memory_space<vmem>>, vector<1x128xf32>
    %27 = vector.broadcast %26 : vector<1x128xf32> to vector<2x128xf32>
    %28 = arith.mulf %25, %27 : vector<2x128xf32>
    %c0_13 = arith.constant 0 : index
    %c0_14 = arith.constant 0 : index
    %29 = vector.load %arg4[%c0_13, %c0_14] : memref<1x128xf32, #tpu.memory_space<vmem>>, vector<1x128xf32>
    %30 = vector.broadcast %29 : vector<1x128xf32> to vector<2x128xf32>
    %31 = arith.addf %28, %30 : vector<2x128xf32>
    %c0_15 = arith.constant 0 : index
    %c0_16 = arith.constant 0 : index
    %32 = vector.load %arg5[%c0_15, %c0_16] : memref<128x2xf32, #tpu.memory_space<vmem>>, vector<128x2xf32>
    %cst_17 = arith.constant dense<0.000000e+00> : vector<2x2xf32>
    %33 = tpu.matmul %31, %32, %cst_17 {dimension_numbers = #tpu.dot_dimension_numbers<[1], [0], [0], [1], [0, 0, 1, 1], [], []>} : vector<2x128xf32>, vector<128x2xf32>, vector<2x2xf32> -> vector<2x2xf32>
    %c0_18 = arith.constant 0 : index
    %c0_19 = arith.constant 0 : index
    %34 = vector.load %arg6[%c0_18, %c0_19] : memref<1x2xf32, #tpu.memory_space<vmem>>, vector<1x2xf32>
    %35 = vector.broadcast %34 : vector<1x2xf32> to vector<2x2xf32>
    %36 = arith.addf %33, %35 : vector<2x2xf32>
    %c0_20 = arith.constant 0 : index
    %c0_21 = arith.constant 0 : index
    %37 = vector.load %arg7[%c0_20, %c0_21] : memref<2x2xf32, #tpu.memory_space<vmem>>, vector<2x2xf32>
    tpu.vector_store %arg7[%c0_20, %c0_21], %36 {strides = array<i32>} : memref<2x2xf32, #tpu.memory_space<vmem>>, vector<2x2xf32>,
    return
  }
}

</mosaic_0001>

<llo_original>
// kernel: net_forward.3
$region0: #{net_forward.3}
  #allocation0 [shape = 'u32[]', space=smem, size = 0x4, offset = 0x4, fixed_abs, tag = 'smem constant byte address 0x4 - core index']
  #allocation1 [shape = 'u32[144,128]{1,0:T(1,128)}', space=vmem, size = 0x12000, scoped, tag = 'internal scratch']
  %s0 = inlined_call_operand.vmem [shape: f32[2,512], index: 0, kind: input, shape index: {}]
  %s1 = inlined_call_operand.vmem [shape: f32[512,128], index: 1, kind: input, shape index: {}]
  %s2 = inlined_call_operand.vmem [shape: f32[1,128], index: 2, kind: input, shape index: {}]
  %s3 = inlined_call_operand.vmem [shape: f32[1,128], index: 3, kind: input, shape index: {}]
  %s4 = inlined_call_operand.vmem [shape: f32[1,128], index: 4, kind: input, shape index: {}]
  %s5 = inlined_call_operand.vmem [shape: f32[128,2], index: 5, kind: input, shape index: {}]
  %s6 = inlined_call_operand.vmem [shape: f32[1,2], index: 6, kind: input, shape index: {}]
  %s7 = inlined_call_operand.hbm [shape: f32[2,2], index: 7, kind: output, shape index: {}]
  %s8 = sld [smem:[#allocation0]]
  $region38: #{net_forward.3} parent=0
    _
  %s10 = ssub.s32 1, %s8
  %s11 = scalar_select 0, %s10, %s8
  $region1: #{net_forward.3} parent=0
    #allocation2 [shape = 'u8[1024]{0}', space=vmem, size = 0x400, scoped, tag = 'output window, operand 0, single buffered']
    #allocation3 [shape = 's32[1]{0}', space=sflag, size = 0x4, scoped, tag = 'scoped memory for net_forward.3']
    %12 = vsyncpa [#allocation3], 0
    // Predicated region
    $region2: #{net_forward.3} parent=1 // pred_check
      _
    $region3: #{net_forward.3} parent=1 // pred_check_branch
      %14 = sbr.rel (0) target = $region5
    $region4: #{net_forward.3} parent=1 // pred_region
      _
    $region5: #{net_forward.3} parent=1 // pred_fallthru
      _
    // Predicated region
    $region6: #{net_forward.3} parent=1 // pred_check
      _
    $region7: #{net_forward.3} parent=1 // pred_check_branch
      %16 = sbr.rel (0) target = $region9
    $region8: #{net_forward.3} parent=1 // pred_region
      _
    $region9: #{net_forward.3} parent=1 // pred_fallthru
      _
    // Predicated region
    $region10: #{net_forward.3} parent=1 // pred_check
      _
    $region11: #{net_forward.3} parent=1 // pred_check_branch
      %18 = sbr.rel (0) target = $region13
    $region12: #{net_forward.3} parent=1 // pred_region
      _
    $region13: #{net_forward.3} parent=1 // pred_fallthru
      _
    // Predicated region
    $region14: #{net_forward.3} parent=1 // pred_check
      _
    $region15: #{net_forward.3} parent=1 // pred_check_branch
      %20 = sbr.rel (0) target = $region17
    $region16: #{net_forward.3} parent=1 // pred_region
      _
    $region17: #{net_forward.3} parent=1 // pred_fallthru
      _
    // Predicated region
    $region18: #{net_forward.3} parent=1 // pred_check
      _
    $region19: #{net_forward.3} parent=1 // pred_check_branch
      %22 = sbr.rel (0) target = $region21
    $region20: #{net_forward.3} parent=1 // pred_region
      _
    $region21: #{net_forward.3} parent=1 // pred_fallthru
      _
    // Predicated region
    $region22: #{net_forward.3} parent=1 // pred_check
      _
    $region23: #{net_forward.3} parent=1 // pred_check_branch
      %24 = sbr.rel (0) target = $region25
    $region24: #{net_forward.3} parent=1 // pred_region
      _
    $region25: #{net_forward.3} parent=1 // pred_fallthru
      _
    // Predicated region
    $region26: #{net_forward.3} parent=1 // pred_check
      _
    $region27: #{net_forward.3} parent=1 // pred_check_branch
      %26 = sbr.rel (0) target = $region29
    $region28: #{net_forward.3} parent=1 // pred_region
      _
    $region29: #{net_forward.3} parent=1 // pred_fallthru
      _
    %v27 = vld [vmem:[%s0] sm:$0xff]
    %v28 = vld [vmem:[%s1] sm:$0xff]
    %v29 = vld [vmem:[%s1 + $0x8] sm:$0xff]
    %v30 = vld [vmem:[%s1 + $0x10] sm:$0xff]
    %v31 = vld [vmem:[%s1 + $0x18] sm:$0xff]
    %v32 = vld [vmem:[%s1 + $0x20] sm:$0xff]
    %v33 = vld [vmem:[%s1 + $0x28] sm:$0xff]
    %v34 = vld [vmem:[%s1 + $0x30] sm:$0xff]
    %v35 = vld [vmem:[%s1 + $0x38] sm:$0xff]
    %v36 = vld [vmem:[%s1 + $0x40] sm:$0xff]
    %v37 = vld [vmem:[%s1 + $0x48] sm:$0xff]
    %v38 = vld [vmem:[%s1 + $0x50] sm:$0xff]
    %v39 = vld [vmem:[%s1 + $0x58] sm:$0xff]
    %v40 = vld [vmem:[%s1 + $0x60] sm:$0xff]
    %v41 = vld [vmem:[%s1 + $0x68] sm:$0xff]
    %v42 = vld [vmem:[%s1 + $0x70] sm:$0xff]
    %v43 = vld [vmem:[%s1 + $0x78] sm:$0xff]
    %v44 = vld [vmem:[%s1 + $0x80] sm:$0xff]
    %v45 = vld [vmem:[%s1 + $0x88] sm:$0xff]
    %v46 = vld [vmem:[%s1 + $0x90] sm:$0xff]
    %v47 = vld [vmem:[%s1 + $0x98] sm:$0xff]
    %v48 = vld [vmem:[%s1 + $0xa0] sm:$0xff]
    %v49 = vld [vmem:[%s1 + $0xa8] sm:$0xff]
    %v50 = vld [vmem:[%s1 + $0xb0] sm:$0xff]
    %v51 = vld [vmem:[%s1 + $0xb8] sm:$0xff]
    %v52 = vld [vmem:[%s1 + $0xc0] sm:$0xff]
    %v53 = vld [vmem:[%s1 + $0xc8] sm:$0xff]
    %v54 = vld [vmem:[%s1 + $0xd0] sm:$0xff]
    %v55 = vld [vmem:[%s1 + $0xd8] sm:$0xff]
    %v56 = vld [vmem:[%s1 + $0xe0] sm:$0xff]
    %v57 = vld [vmem:[%s1 + $0xe8] sm:$0xff]
    %v58 = vld [vmem:[%s1 + $0xf0] sm:$0xff]
    %v59 = vld [vmem:[%s1 + $0xf8] sm:$0xff]
    %v60 = vld [vmem:[%s1 + $0x100] sm:$0xff]
    %v61 = vld [vmem:[%s1 + $0x108] sm:$0xff]
    %v62 = vld [vmem:[%s1 + $0x110] sm:$0xff]
    %v63 = vld [vmem:[%s1 + $0x118] sm:$0xff]
    %v64 = vld [vmem:[%s1 + $0x120] sm:$0xff]
    %v65 = vld [vmem:[%s1 + $0x128] sm:$0xff]
    %v66 = vld [vmem:[%s1 + $0x130] sm:$0xff]
    %v67 = vld [vmem:[%s1 + $0x138] sm:$0xff]
    %v68 = vld [vmem:[%s1 + $0x140] sm:$0xff]
    %v69 = vld [vmem:[%s1 + $0x148] sm:$0xff]
    %v70 = vld [vmem:[%s1 + $0x150] sm:$0xff]
    %v71 = vld [vmem:[%s1 + $0x158] sm:$0xff]
    %v72 = vld [vmem:[%s1 + $0x160] sm:$0xff]
    %v73 = vld [vmem:[%s1 + $0x168] sm:$0xff]
    %v74 = vld [vmem:[%s1 + $0x170] sm:$0xff]
    %v75 = vld [vmem:[%s1 + $0x178] sm:$0xff]
    %v76 = vld [vmem:[%s1 + $0x180] sm:$0xff]
    %v77 = vld [vmem:[%s1 + $0x188] sm:$0xff]
    %v78 = vld [vmem:[%s1 + $0x190] sm:$0xff]
    %v79 = vld [vmem:[%s1 + $0x198] sm:$0xff]
    %v80 = vld [vmem:[%s1 + $0x1a0] sm:$0xff]
    %v81 = vld [vmem:[%s1 + $0x1a8] sm:$0xff]
    %v82 = vld [vmem:[%s1 + $0x1b0] sm:$0xff]
    %v83 = vld [vmem:[%s1 + $0x1b8] sm:$0xff]
    %v84 = vld [vmem:[%s1 + $0x1c0] sm:$0xff]
    %v85 = vld [vmem:[%s1 + $0x1c8] sm:$0xff]
    %v86 = vld [vmem:[%s1 + $0x1d0] sm:$0xff]
    %v87 = vld [vmem:[%s1 + $0x1d8] sm:$0xff]
    %v88 = vld [vmem:[%s1 + $0x1e0] sm:$0xff]
    %v89 = vld [vmem:[%s1 + $0x1e8] sm:$0xff]
    %v90 = vld [vmem:[%s1 + $0x1f0] sm:$0xff]
    %v91 = vld [vmem:[%s1 + $0x1f8] sm:$0xff]
    %v92 = vld [vmem:[%s2] sm:$0x1]
    %v94 = vlaneseq
    %v95 = vshrl.u32 %v94, 7
    %v96 = vsub.s32 0, %v95
    %v97 = vrot.slane %v92, %v96
    %v100 = vcombine.high %v27, %v27
    %v102 = vunpack.c.l.s4 1983009808
    %v103 = vunpack.c.0.s8 %v102
    %v104 = vlaneseq
    %v105 = vshrl.u32 %v104, 7
    %v106 = vsub.s32 %v103, %v105
    %v107 = vrot.slane %v27, %v106
    %v109 = vunpack.c.l.s4 1983009808
    %v110 = vunpack.c.0.s8 %v109
    %v111 = vlaneseq
    %v112 = vshrl.u32 %v111, 7
    %v113 = vsub.s32 %v110, %v112
    %v114 = vrot.slane %v100, %v113
    %v115 = vcombine.high %v107, %v107
    %v116 = vcombine.high %v114, %v114
    %121 = vmatprep.subr.mxu0 0.0
    %122 = vmatpush1.msra.mxu0 %v43
    %123 = vmatprep.subr.mxu0 0.0
    %124 = vmatpush1.msra.mxu0 %v42
    %125 = vmatprep.subr.mxu0 0.0
    %126 = vmatpush1.msra.mxu0 %v41
    %127 = vmatprep.subr.mxu0 0.0
    %128 = vmatpush1.msra.mxu0 %v40
    %129 = vmatprep.subr.mxu0 0.0
    %130 = vmatpush1.msra.mxu0 %v39
    %131 = vmatprep.subr.mxu0 0.0
    %132 = vmatpush1.msra.mxu0 %v38
    %133 = vmatprep.subr.mxu0 0.0
    %134 = vmatpush1.msra.mxu0 %v37
    %135 = vmatprep.subr.mxu0 0.0
    %136 = vmatpush1.msra.mxu0 %v36
    %137 = vmatprep.subr.mxu0 0.0
    %138 = vmatpush1.msra.mxu0 %v35
    %139 = vmatprep.subr.mxu0 0.0
    %140 = vmatpush1.msra.mxu0 %v34
    %141 = vmatprep.subr.mxu0 0.0
    %142 = vmatpush1.msra.mxu0 %v33
    %143 = vmatprep.subr.mxu0 0.0
    %144 = vmatpush1.msra.mxu0 %v32
    %145 = vmatprep.subr.mxu0 0.0
    %146 = vmatpush1.msra.mxu0 %v31
    %147 = vmatprep.subr.mxu0 0.0
    %148 = vmatpush1.msra.mxu0 %v30
    %149 = vmatprep.subr.mxu0 0.0
    %150 = vmatpush1.msra.mxu0 %v29
    %151 = vmatprep.subr.mxu0 0.0
    %152 = vmatpush1.msra.mxu0 %v28
    %153 = vmatprep.subr.mxu0 0.0
    %154 = vmatpush2.msra.mxu0 %v59
    %155 = vmatprep.subr.mxu0 0.0
    %156 = vmatpush2.msra.mxu0 %v58
    %157 = vmatprep.subr.mxu0 0.0
    %158 = vmatpush2.msra.mxu0 %v57
    %159 = vmatprep.subr.mxu0 0.0
    %160 = vmatpush2.msra.mxu0 %v56
    %161 = vmatprep.subr.mxu0 0.0
    %162 = vmatpush2.msra.mxu0 %v55
    %163 = vmatprep.subr.mxu0 0.0
    %164 = vmatpush2.msra.mxu0 %v54
    %165 = vmatprep.subr.mxu0 0.0
    %166 = vmatpush2.msra.mxu0 %v53
    %167 = vmatprep.subr.mxu0 0.0
    %168 = vmatpush2.msra.mxu0 %v52
    %169 = vmatprep.subr.mxu0 0.0
    %170 = vmatpush2.msra.mxu0 %v51
    %171 = vmatprep.subr.mxu0 0.0
    %172 = vmatpush2.msra.mxu0 %v50
    %173 = vmatprep.subr.mxu0 0.0
    %174 = vmatpush2.msra.mxu0 %v49
    %175 = vmatprep.subr.mxu0 0.0
    %176 = vmatpush2.msra.mxu0 %v48
    %177 = vmatprep.subr.mxu0 0.0
    %178 = vmatpush2.msra.mxu0 %v47
    %179 = vmatprep.subr.mxu0 0.0
    %180 = vmatpush2.msra.mxu0 %v46
    %181 = vmatprep.subr.mxu0 0.0
    %182 = vmatpush2.msra.mxu0 %v45
    %183 = vmatprep.subr.mxu0 0.0
    %184 = vmatpush2.msra.mxu0 %v44
    %185 = vmatprep.mubr.f32.mxu0 %v115
    %186 = vmatmul.mubr.f32.gmra.mxu0 %v107
    %v187 = vpop.f32.mrf.mxu0
    %v188 = vadd.f32 %v97, %v187
    %v189 = vpop.f32.mrf.mxu0
    %190 = vdwg.mxu0
    %191 = vmatprep.subr.mxu0 0.0
    %192 = vmatpush1.msra.mxu0 %v75
    %193 = vmatprep.subr.mxu0 0.0
    %194 = vmatpush1.msra.mxu0 %v74
    %195 = vmatprep.subr.mxu0 0.0
    %196 = vmatpush1.msra.mxu0 %v73
    %197 = vmatprep.subr.mxu0 0.0
    %198 = vmatpush1.msra.mxu0 %v72
    %199 = vmatprep.subr.mxu0 0.0
    %200 = vmatpush1.msra.mxu0 %v71
    %201 = vmatprep.subr.mxu0 0.0
    %202 = vmatpush1.msra.mxu0 %v70
    %203 = vmatprep.subr.mxu0 0.0
    %204 = vmatpush1.msra.mxu0 %v69
    %205 = vmatprep.subr.mxu0 0.0
    %206 = vmatpush1.msra.mxu0 %v68
    %207 = vmatprep.subr.mxu0 0.0
    %208 = vmatpush1.msra.mxu0 %v67
    %209 = vmatprep.subr.mxu0 0.0
    %210 = vmatpush1.msra.mxu0 %v66
    %211 = vmatprep.subr.mxu0 0.0
    %212 = vmatpush1.msra.mxu0 %v65
    %213 = vmatprep.subr.mxu0 0.0
    %214 = vmatpush1.msra.mxu0 %v64
    %215 = vmatprep.subr.mxu0 0.0
    %216 = vmatpush1.msra.mxu0 %v63
    %217 = vmatprep.subr.mxu0 0.0
    %218 = vmatpush1.msra.mxu0 %v62
    %219 = vmatprep.subr.mxu0 0.0
    %220 = vmatpush1.msra.mxu0 %v61
    %221 = vmatprep.subr.mxu0 0.0
    %222 = vmatpush1.msra.mxu0 %v60
    %223 = vmatprep.subr.mxu0 0.0
    %224 = vmatpush2.msra.mxu0 %v91
    %225 = vmatprep.subr.mxu0 0.0
    %226 = vmatpush2.msra.mxu0 %v90
    %227 = vmatprep.subr.mxu0 0.0
    %228 = vmatpush2.msra.mxu0 %v89
    %229 = vmatprep.subr.mxu0 0.0
    %230 = vmatpush2.msra.mxu0 %v88
    %231 = vmatprep.subr.mxu0 0.0
    %232 = vmatpush2.msra.mxu0 %v87
    %233 = vmatprep.subr.mxu0 0.0
    %234 = vmatpush2.msra.mxu0 %v86
    %235 = vmatprep.subr.mxu0 0.0
    %236 = vmatpush2.msra.mxu0 %v85
    %237 = vmatprep.subr.mxu0 0.0
    %238 = vmatpush2.msra.mxu0 %v84
    %239 = vmatprep.subr.mxu0 0.0
    %240 = vmatpush2.msra.mxu0 %v83
    %241 = vmatprep.subr.mxu0 0.0
    %242 = vmatpush2.msra.mxu0 %v82
    %243 = vmatprep.subr.mxu0 0.0
    %244 = vmatpush2.msra.mxu0 %v81
    %245 = vmatprep.subr.mxu0 0.0
    %246 = vmatpush2.msra.mxu0 %v80
    %247 = vmatprep.subr.mxu0 0.0
    %248 = vmatpush2.msra.mxu0 %v79
    %249 = vmatprep.subr.mxu0 0.0
    %250 = vmatpush2.msra.mxu0 %v78
    %251 = vmatprep.subr.mxu0 0.0
    %252 = vmatpush2.msra.mxu0 %v77
    %253 = vmatprep.subr.mxu0 0.0
    %254 = vmatpush2.msra.mxu0 %v76
    %255 = vmatprep.mubr.f32.mxu0 %v116
    %256 = vmatmul.mubr.f32.gmra.mxu0 %v114
    %v257 = vpop.f32.mrf.mxu0
    %v258 = vadd.f32 %v188, %v257
    %v259 = vpop.f32.mrf.mxu0
    %260 = vdwg.mxu0
    %v261 = vmax.f32 %v258, 0.0
    %vm262 = vcmask 1041408
    %v263 = vsel %vm262, %v261, 0.0
    %v264 = vrot.slane %v263, 4
    %v265 = vadd.f32 %v263, %v264
    %v266 = vrot.slane %v265, 2
    %v267 = vadd.f32 %v265, %v266
    %v268 = vrot.slane %v267, 1
    %v269 = vadd.f32 %v267, %v268
    %v270 = vrcp.pop 2.0
    %v271 = vmul.f32 %v269, %v270
    %v272 = vsub.f32 %v261, %v271
    %v273 = vmul.f32 %v272, %v272
    %v274 = vsel %vm262, %v273, 0.0
    %v275 = vrot.slane %v274, 4
    %v276 = vadd.f32 %v274, %v275
    %v277 = vrot.slane %v276, 2
    %v278 = vadd.f32 %v276, %v277
    %v279 = vrot.slane %v278, 1
    %v280 = vadd.f32 %v278, %v279
    %v281 = vmul.f32 %v280, %v270
    %v282 = vadd.f32 %v281, 1e-05
    %v283 = vrsqrt.pop %v282
    %v284 = vmul.f32 %v272, %v283
    %v285 = vld [vmem:[%s3] sm:$0x1]
    %v287 = vlaneseq
    %v288 = vshrl.u32 %v287, 7
    %v289 = vsub.s32 0, %v288
    %v290 = vrot.slane %v285, %v289
    %v292 = vmul.f32 %v284, %v290
    %v293 = vld [vmem:[%s4] sm:$0x1]
    %v295 = vlaneseq
    %v296 = vshrl.u32 %v295, 7
    %v297 = vsub.s32 0, %v296
    %v298 = vrot.slane %v293, %v297
    %v300 = vadd.f32 %v292, %v298
    %v301 = vld [vmem:[%s5] sm:$0xff]
    %v302 = vld [vmem:[%s5 + $0x8] sm:$0xff]
    %v303 = vld [vmem:[%s5 + $0x10] sm:$0xff]
    %v304 = vld [vmem:[%s5 + $0x18] sm:$0xff]
    %v305 = vld [vmem:[%s5 + $0x20] sm:$0xff]
    %v306 = vld [vmem:[%s5 + $0x28] sm:$0xff]
    %v307 = vld [vmem:[%s5 + $0x30] sm:$0xff]
    %v308 = vld [vmem:[%s5 + $0x38] sm:$0xff]
    %v309 = vld [vmem:[%s5 + $0x40] sm:$0xff]
    %v310 = vld [vmem:[%s5 + $0x48] sm:$0xff]
    %v311 = vld [vmem:[%s5 + $0x50] sm:$0xff]
    %v312 = vld [vmem:[%s5 + $0x58] sm:$0xff]
    %v313 = vld [vmem:[%s5 + $0x60] sm:$0xff]
    %v314 = vld [vmem:[%s5 + $0x68] sm:$0xff]
    %v315 = vld [vmem:[%s5 + $0x70] sm:$0xff]
    %v316 = vld [vmem:[%s5 + $0x78] sm:$0xff]
    %v317 = vld [vmem:[%s6] sm:$0x1]
    %v319 = vlaneseq
    %v320 = vshrl.u32 %v319, 7
    %v321 = vsub.s32 0, %v320
    %v322 = vrot.slane %v317, %v321
    %324 = vmatprep.subr.mxu0 0.0
    %325 = vmatpush1.msra.mxu0 %v316
    %326 = vmatprep.subr.mxu0 0.0
    %327 = vmatpush1.msra.mxu0 %v315
    %328 = vmatprep.subr.mxu0 0.0
    %329 = vmatpush1.msra.mxu0 %v314
    %330 = vmatprep.subr.mxu0 0.0
    %331 = vmatpush1.msra.mxu0 %v313
    %332 = vmatprep.subr.mxu0 0.0
    %333 = vmatpush1.msra.mxu0 %v312
    %334 = vmatprep.subr.mxu0 0.0
    %335 = vmatpush1.msra.mxu0 %v311
    %336 = vmatprep.subr.mxu0 0.0
    %337 = vmatpush1.msra.mxu0 %v310
    %338 = vmatprep.subr.mxu0 0.0
    %339 = vmatpush1.msra.mxu0 %v309
    %340 = vmatprep.subr.mxu0 0.0
    %341 = vmatpush1.msra.mxu0 %v308
    %342 = vmatprep.subr.mxu0 0.0
    %343 = vmatpush1.msra.mxu0 %v307
    %344 = vmatprep.subr.mxu0 0.0
    %345 = vmatpush1.msra.mxu0 %v306
    %346 = vmatprep.subr.mxu0 0.0
    %347 = vmatpush1.msra.mxu0 %v305
    %348 = vmatprep.subr.mxu0 0.0
    %349 = vmatpush1.msra.mxu0 %v304
    %350 = vmatprep.subr.mxu0 0.0
    %351 = vmatpush1.msra.mxu0 %v303
    %352 = vmatprep.subr.mxu0 0.0
    %353 = vmatpush1.msra.mxu0 %v302
    %354 = vmatprep.subr.mxu0 0.0
    %355 = vmatpush1.msra.mxu0 %v301
    %356 = vmatprep.subr.mxu0 0.0
    %357 = vmatpush2.msra.mxu0 0.0
    %358 = vmatprep.subr.mxu0 0.0
    %359 = vmatpush2.msra.mxu0 0.0
    %360 = vmatprep.subr.mxu0 0.0
    %361 = vmatpush2.msra.mxu0 0.0
    %362 = vmatprep.subr.mxu0 0.0
    %363 = vmatpush2.msra.mxu0 0.0
    %364 = vmatprep.subr.mxu0 0.0
    %365 = vmatpush2.msra.mxu0 0.0
    %366 = vmatprep.subr.mxu0 0.0
    %367 = vmatpush2.msra.mxu0 0.0
    %368 = vmatprep.subr.mxu0 0.0
    %369 = vmatpush2.msra.mxu0 0.0
    %370 = vmatprep.subr.mxu0 0.0
    %371 = vmatpush2.msra.mxu0 0.0
    %372 = vmatprep.subr.mxu0 0.0
    %373 = vmatpush2.msra.mxu0 0.0
    %374 = vmatprep.subr.mxu0 0.0
    %375 = vmatpush2.msra.mxu0 0.0
    %376 = vmatprep.subr.mxu0 0.0
    %377 = vmatpush2.msra.mxu0 0.0
    %378 = vmatprep.subr.mxu0 0.0
    %379 = vmatpush2.msra.mxu0 0.0
    %380 = vmatprep.subr.mxu0 0.0
    %381 = vmatpush2.msra.mxu0 0.0
    %382 = vmatprep.subr.mxu0 0.0
    %383 = vmatpush2.msra.mxu0 0.0
    %384 = vmatprep.subr.mxu0 0.0
    %385 = vmatpush2.msra.mxu0 0.0
    %386 = vmatprep.subr.mxu0 0.0
    %387 = vmatpush2.msra.mxu0 0.0
    %388 = vmatprep.mubr.f32.mxu0 0.0
    %389 = vmatmul.mubr.f32.gmra.mxu0 %v300
    %v390 = vpop.f32.mrf.mxu0
    %v391 = vadd.f32 %v322, %v390
    %v392 = vpop.f32.mrf.mxu0
    %393 = vdwg.mxu0
    %vm394 = vcmask 9216
    %395 = vst.msk [vmem:[#allocation2] sm:$0x3] %vm394, %v391
    // Predicated region
    $region30: #{net_forward.3} parent=1 // pred_check
      _
    $region31: #{net_forward.3} parent=1 // pred_check_branch
      %397 = sbr.rel (0) target = $region33
    $region32: #{net_forward.3} parent=1 // pred_region
      %s399 = ssub.s32 32, 32
      %400 = vsyncadd [#allocation3], %s399
      %s402 = sshll.u32 [#allocation2], 4
      %s403 = int_to_ptr.vmem [resolvable:$true] %s402
      %405 = dma.vmem_to_hbm [thread:$0]  %s403, 32, %s7, [#allocation3]
    $region33: #{net_forward.3} parent=1 // pred_fallthru
      _
    // Predicated region
    $region34: #{net_forward.3} parent=1 // pred_check
      _
    $region35: #{net_forward.3} parent=1 // pred_check_branch
      %407 = sbr.rel (0) target = $region37
    $region36: #{net_forward.3} parent=1 // pred_region
      %408 = dma.done [#allocation3], 32
    $region37: #{net_forward.3} parent=1 // pred_fallthru
      _
    %409 = vsyncpa [#allocation3], 1

// kernel: net_forward.2
$region0: #{net_forward.2}
  #allocation0 [shape = 'u32[]', space=smem, size = 0x4, offset = 0x4, fixed_abs, tag = 'smem constant byte address 0x4 - core index']
  #allocation1 [shape = 'u32[144,128]{1,0:T(1,128)}', space=vmem, size = 0x12000, scoped, tag = 'internal scratch']
  #allocation2 [shape = 'f32[2,256]{1,0:T(2,128)}', space=vmem, size = 0x800, scoped, tag = 'scratch operand']
  %s0 = inlined_call_operand.vmem [shape: bf16[2,150528], index: 0, kind: input, shape index: {}]
  %s1 = inlined_call_operand.hbm [shape: bf16[150528,512], index: 1, kind: input, shape index: {}]
  %s2 = inlined_call_operand.hbm [shape: f32[1,512], index: 2, kind: input, shape index: {}]
  %s3 = inlined_call_operand.hbm [shape: f32[1,512], index: 3, kind: input, shape index: {}]
  %s4 = inlined_call_operand.hbm [shape: f32[1,512], index: 4, kind: input, shape index: {}]
  %s5 = inlined_call_operand.vmem [shape: f32[2,512], index: 5, kind: output, shape index: {}]
  %s6 = sld [smem:[#allocation0]]
  $region77: #{net_forward.2} parent=0
    _
  %s8 = ssub.s32 1, %s6
  %s9 = scalar_select 0, %s8, %s6
  $region1: #{net_forward.2} parent=0
    #allocation3 [shape = 'u8[7340032]{0}', space=vmem, size = 0x700000, scoped, tag = 'input window, operand 1']
    #allocation4 [shape = 's32[2]{0}', space=sflag, size = 0x8, scoped, tag = 'scoped memory for net_forward.2']
    #allocation5 [shape = 'u8[2048]{0}', space=vmem, size = 0x800, scoped, tag = 'input window, operand 2']
    #allocation6 [shape = 's32[2]{0}', space=sflag, size = 0x8, scoped, tag = 'scoped memory for net_forward.2']
    #allocation7 [shape = 'u8[2048]{0}', space=vmem, size = 0x800, scoped, tag = 'input window, operand 3']
    #allocation8 [shape = 'u8[2048]{0}', space=vmem, size = 0x800, scoped, tag = 'input window, operand 4']
    #allocation9 [shape = 's32[2]{0}', space=sflag, size = 0x8, scoped, tag = 'scoped memory for net_forward.2']
    %10 = vsyncpa [#allocation4], 0
    %s11 = scalar_lea.sflag [#allocation4], 1
    %12 = vsyncpa %s11, 0
    %13 = vsyncpa [#allocation6], 0
    %s14 = scalar_lea.sflag [#allocation6], 1
    %15 = vsyncpa %s14, 0
    %16 = vsyncpa [#allocation9], 0
    %s17 = scalar_lea.sflag [#allocation9], 1
    %18 = vsyncpa %s17, 0
    loop: start=0, step=1, limit=44
    $region2: #{net_forward.2} parent=1 // loop_pre_header
      _
    $region3: #{net_forward.2} parent=1 // loop_header
      %s20 = sphi 0, %s24
      %p21 = scmp.ge.s32.totalorder %s20, 44
      %s27 = sphi 0, %s39
      %s28 = sphi 0, %s35
      %s29 = sphi 0, %s27
      %s30 = sphi 0, %s28
      %s31 = sphi 0, %s29
      %s32 = sphi 0, %s30
      %s42 = sphi 0, %s44
      %s45 = sphi 0, %s42
      %s46 = sphi 0, %s45
      %s62 = sphi 0, %s46
      %s70 = sphi 0, %s72
      %s73 = sphi 0, %s70
      %s74 = sphi 0, %s73
      %s90 = sphi 0, %s74
      %s96 = sphi 0, %s98
      %s99 = sphi 0, %s96
      %s100 = sphi 0, %s99
      %s116 = sphi 0, %s100
      %s122 = sphi 0, %s124
      %s125 = sphi 0, %s122
      %s126 = sphi 0, %s125
      %s142 = sphi 0, %s126
      %s148 = sphi 0, %s150
      %s151 = sphi 0, %s148
      %s152 = sphi 0, %s151
      %s168 = sphi 0, %s152
      %s174 = sphi 0, %s176
      %s177 = sphi 0, %s174
      %s178 = sphi 0, %s177
      %s194 = sphi 0, %s178
    $region4: #{net_forward.2} parent=1 // loop_header_branch
      %23 = sbr.rel (%p21) target = $region8
    $region5: #{net_forward.2} parent=1 // loop_body
      %s25 = ssub.s32 %s20, 1
      %s26 = ssub.s32 %s20, 2
      %s33 = sadd.s32 1, %s28
      %p34 = scmp.ge.s32.totalorder %s33, 21
      %s35 = scalar_select %p34, 0, %s33
      %s36 = sadd.s32 1, %s27
      %s37 = scalar_select %p34, %s36, %s27
      %p38 = scmp.ge.s32.totalorder %s37, 2
      %s39 = scalar_select %p38, 0, %s37
      %s40 = ssub.s32 %s28, %s35
      %p41 = scmp.eq.s32.totalorder %s40, 0
      %s43 = sadd.s32 %s42, 1
      %s44 = scalar_select %p41, %s42, %s43
      %p47 = pneg %p41
      %p48 = scmp.eq.s32.totalorder %s20, 41
      %p49 = por %p47, %p48
      %p50 = scmp.ne.s32.totalorder %s42, %s45
      %p51 = scmp.eq.s32.totalorder %s20, 0
      %p52 = por %p50, %p51
      %p53 = scmp.ne.s32.totalorder %s42, %s45
      %p54 = scmp.eq.s32.totalorder %s25, 41
      %p55 = por %p53, %p54
      %p56 = scmp.ne.s32.totalorder %s45, %s46
      %p57 = scmp.eq.s32.totalorder %s25, 0
      %p58 = por %p56, %p57
      %p59 = scmp.ne.s32.totalorder %s45, %s46
      %p60 = scmp.eq.s32.totalorder %s26, 41
      %p61 = por %p59, %p60
      %p63 = scmp.ne.s32.totalorder %s46, %s62
      %p64 = scmp.eq.s32.totalorder %s26, 0
      %p65 = por %p63, %p64
      %s66 = ssub.s32 %s28, %s35
      %s67 = ssub.s32 %s27, %s39
      %s68 = sor.u32 %s66, %s67
      %p69 = scmp.eq.s32.totalorder %s68, 0
      %s71 = sadd.s32 %s70, 1
      %s72 = scalar_select %p69, %s70, %s71
      %p75 = pneg %p69
      %p76 = scmp.eq.s32.totalorder %s20, 41
      %p77 = por %p75, %p76
      %p78 = scmp.ne.s32.totalorder %s70, %s73
      %p79 = scmp.eq.s32.totalorder %s20, 0
      %p80 = por %p78, %p79
      %p81 = scmp.ne.s32.totalorder %s70, %s73
      %p82 = scmp.eq.s32.totalorder %s25, 41
      %p83 = por %p81, %p82
      %p84 = scmp.ne.s32.totalorder %s73, %s74
      %p85 = scmp.eq.s32.totalorder %s25, 0
      %p86 = por %p84, %p85
      %p87 = scmp.ne.s32.totalorder %s73, %s74
      %p88 = scmp.eq.s32.totalorder %s26, 41
      %p89 = por %p87, %p88
      %p91 = scmp.ne.s32.totalorder %s74, %s90
      %p92 = scmp.eq.s32.totalorder %s26, 0
      %p93 = por %p91, %p92
      %s94 = ssub.s32 %s27, %s39
      %p95 = scmp.eq.s32.totalorder %s94, 0
      %s97 = sadd.s32 %s96, 1
      %s98 = scalar_select %p95, %s96, %s97
      %p101 = pneg %p95
      %p102 = scmp.eq.s32.totalorder %s20, 41
      %p103 = por %p101, %p102
      %p104 = scmp.ne.s32.totalorder %s96, %s99
      %p105 = scmp.eq.s32.totalorder %s20, 0
      %p106 = por %p104, %p105
      %p107 = scmp.ne.s32.totalorder %s96, %s99
      %p108 = scmp.eq.s32.totalorder %s25, 41
      %p109 = por %p107, %p108
      %p110 = scmp.ne.s32.totalorder %s99, %s100
      %p111 = scmp.eq.s32.totalorder %s25, 0
      %p112 = por %p110, %p111
      %p113 = scmp.ne.s32.totalorder %s99, %s100
      %p114 = scmp.eq.s32.totalorder %s26, 41
      %p115 = por %p113, %p114
      %p117 = scmp.ne.s32.totalorder %s100, %s116
      %p118 = scmp.eq.s32.totalorder %s26, 0
      %p119 = por %p117, %p118
      %s120 = ssub.s32 %s27, %s39
      %p121 = scmp.eq.s32.totalorder %s120, 0
      %s123 = sadd.s32 %s122, 1
      %s124 = scalar_select %p121, %s122, %s123
      %p127 = pneg %p121
      %p128 = scmp.eq.s32.totalorder %s20, 41
      %p129 = por %p127, %p128
      %p130 = scmp.ne.s32.totalorder %s122, %s125
      %p131 = scmp.eq.s32.totalorder %s20, 0
      %p132 = por %p130, %p131
      %p133 = scmp.ne.s32.totalorder %s122, %s125
      %p134 = scmp.eq.s32.totalorder %s25, 41
      %p135 = por %p133, %p134
      %p136 = scmp.ne.s32.totalorder %s125, %s126
      %p137 = scmp.eq.s32.totalorder %s25, 0
      %p138 = por %p136, %p137
      %p139 = scmp.ne.s32.totalorder %s125, %s126
      %p140 = scmp.eq.s32.totalorder %s26, 41
      %p141 = por %p139, %p140
      %p143 = scmp.ne.s32.totalorder %s126, %s142
      %p144 = scmp.eq.s32.totalorder %s26, 0
      %p145 = por %p143, %p144
      %s146 = ssub.s32 %s27, %s39
      %p147 = scmp.eq.s32.totalorder %s146, 0
      %s149 = sadd.s32 %s148, 1
      %s150 = scalar_select %p147, %s148, %s149
      %p153 = pneg %p147
      %p154 = scmp.eq.s32.totalorder %s20, 41
      %p155 = por %p153, %p154
      %p156 = scmp.ne.s32.totalorder %s148, %s151
      %p157 = scmp.eq.s32.totalorder %s20, 0
      %p158 = por %p156, %p157
      %p159 = scmp.ne.s32.totalorder %s148, %s151
      %p160 = scmp.eq.s32.totalorder %s25, 41
      %p161 = por %p159, %p160
      %p162 = scmp.ne.s32.totalorder %s151, %s152
      %p163 = scmp.eq.s32.totalorder %s25, 0
      %p164 = por %p162, %p163
      %p165 = scmp.ne.s32.totalorder %s151, %s152
      %p166 = scmp.eq.s32.totalorder %s26, 41
      %p167 = por %p165, %p166
      %p169 = scmp.ne.s32.totalorder %s152, %s168
      %p170 = scmp.eq.s32.totalorder %s26, 0
      %p171 = por %p169, %p170
      %s172 = ssub.s32 %s27, %s39
      %p173 = scmp.eq.s32.totalorder %s172, 0
      %s175 = sadd.s32 %s174, 1
      %s176 = scalar_select %p173, %s174, %s175
      %p179 = pneg %p173
      %p180 = scmp.eq.s32.totalorder %s20, 41
      %p181 = por %p179, %p180
      %p182 = scmp.ne.s32.totalorder %s174, %s177
      %p183 = scmp.eq.s32.totalorder %s20, 0
      %p184 = por %p182, %p183
      %p185 = scmp.ne.s32.totalorder %s174, %s177
      %p186 = scmp.eq.s32.totalorder %s25, 41
      %p187 = por %p185, %p186
      %p188 = scmp.ne.s32.totalorder %s177, %s178
      %p189 = scmp.eq.s32.totalorder %s25, 0
      %p190 = por %p188, %p189
      %p191 = scmp.ne.s32.totalorder %s177, %s178
      %p192 = scmp.eq.s32.totalorder %s26, 41
      %p193 = por %p191, %p192
      %p195 = scmp.ne.s32.totalorder %s178, %s194
      %p196 = scmp.eq.s32.totalorder %s26, 0
      %p197 = por %p195, %p196
      %p198 = scmp.le.s32.totalorder 1, %s20
      %p199 = scmp.lt.s32.totalorder %s20, 43
      %p200 = pnand %p198, %p199
      %p201 = pneg %p200
      // Predicated region
      $region9: #{net_forward.2} parent=5 // pred_check
        _
      $region10: #{net_forward.2} parent=5 // pred_check_branch
        %203 = sbr.rel (%p200) target = $region12
      $region11: #{net_forward.2} parent=5 // pred_region
        %s204 = ssub.s32 %s20, 1
      $region12: #{net_forward.2} parent=5 // pred_fallthru
        _
      %p205 = scmp.lt.s32.totalorder %s20, 42
      // Predicated region
      $region13: #{net_forward.2} parent=5 // pred_check
        %p206 = pneg %p205
      $region14: #{net_forward.2} parent=5 // pred_check_branch
        %208 = sbr.rel (%p206) target = $region16
      $region15: #{net_forward.2} parent=5 // pred_region
        // Predicated region
        $region17: #{net_forward.2} parent=15 // pred_check
          %p209 = pneg %p52
        $region18: #{net_forward.2} parent=15 // pred_check_branch
          %211 = sbr.rel (%p209) target = $region20
        $region19: #{net_forward.2} parent=15 // pred_region
          %s212 = smul.u32 56, %s28
          %p213 = scmp.lt.s32.totalorder %s212, 1175
          %s214 = scalar_select %p213, %s212, 1175
          %s215 = scalar_lea.vmem %s0, %s214
          %s216 = smul.u32 56, %s28
        $region20: #{net_forward.2} parent=15 // pred_fallthru
          _
        // Predicated region
        $region21: #{net_forward.2} parent=15 // pred_check
          %p217 = pneg %p80
        $region22: #{net_forward.2} parent=15 // pred_check_branch
          %219 = sbr.rel (%p217) target = $region24
        $region23: #{net_forward.2} parent=15 // pred_region
          %s220 = sand.u32 %s70, 1
          %s221 = scalar_lea.sflag [#allocation4], %s220
          %s222 = sand.u32 %s70, 1
          %s223 = smul.addr %s222, 7168
          %s224 = scalar_lea.vmem [#allocation3], %s223
          %s225 = smul.u32 896, %s28
          %s226 = smul.u32 2, %s27
          %s228 = ssub.s32 114688, 114688
          %229 = vsyncadd %s221, %s228
          %s230 = smul.addr %s225, 4
          %s231 = sadd.s32 %s226, %s230
          %s232 = smul.addr %s231, 64
          %s233 = scalar_lea.hbm %s1, %s232
          %s234 = sshll.u32 %s224, 4
          %s235 = int_to_ptr.vmem [resolvable:$true] %s234
          %240 = dma.hbm_to_vmem [thread:$0]  %s233, 114688, %s235, %s221, 256, 128, 8
        $region24: #{net_forward.2} parent=15 // pred_fallthru
          _
        // Predicated region
        $region25: #{net_forward.2} parent=15 // pred_check
          %p241 = pneg %p106
        $region26: #{net_forward.2} parent=15 // pred_check_branch
          %243 = sbr.rel (%p241) target = $region28
        $region27: #{net_forward.2} parent=15 // pred_region
          %s244 = sand.u32 %s20, 1
          %s245 = scalar_lea.sflag [#allocation6], %s244
          %s246 = sand.u32 %s96, 1
          %s247 = smul.addr %s246, 2
          %s248 = scalar_lea.vmem [#allocation5], %s247
          %s249 = smul.u32 2, %s27
          %s251 = ssub.s32 32, 32
          %252 = vsyncadd %s245, %s251
          %s253 = smul.addr %s249, 16
          %s254 = scalar_lea.hbm %s2, %s253
          %s256 = sshll.u32 %s248, 4
          %s257 = int_to_ptr.vmem [resolvable:$true] %s256
          %259 = dma.hbm_to_vmem [thread:$0]  %s254, 32, %s257, %s245
        $region28: #{net_forward.2} parent=15 // pred_fallthru
          _
        // Predicated region
        $region29: #{net_forward.2} parent=15 // pred_check
          %p260 = pneg %p132
        $region30: #{net_forward.2} parent=15 // pred_check_branch
          %262 = sbr.rel (%p260) target = $region32
        $region31: #{net_forward.2} parent=15 // pred_region
          %s263 = sand.u32 %s20, 1
          %s264 = scalar_lea.sflag [#allocation6], %s263
          %s265 = sand.u32 %s122, 1
          %s266 = smul.addr %s265, 2
          %s267 = scalar_lea.vmem [#allocation7], %s266
          %s268 = smul.u32 2, %s27
          %s270 = ssub.s32 32, 32
          %271 = vsyncadd %s264, %s270
          %s272 = smul.addr %s268, 16
          %s273 = scalar_lea.hbm %s3, %s272
          %s275 = sshll.u32 %s267, 4
          %s276 = int_to_ptr.vmem [resolvable:$true] %s275
          %278 = dma.hbm_to_vmem [thread:$0]  %s273, 32, %s276, %s264
        $region32: #{net_forward.2} parent=15 // pred_fallthru
          _
        // Predicated region
        $region33: #{net_forward.2} parent=15 // pred_check
          %p279 = pneg %p158
        $region34: #{net_forward.2} parent=15 // pred_check_branch
          %281 = sbr.rel (%p279) target = $region36
        $region35: #{net_forward.2} parent=15 // pred_region
          %s282 = sand.u32 %s148, 1
          %s283 = scalar_lea.sflag [#allocation9], %s282
          %s284 = sand.u32 %s148, 1
          %s285 = smul.addr %s284, 2
          %s286 = scalar_lea.vmem [#allocation8], %s285
          %s287 = smul.u32 2, %s27
          %s289 = ssub.s32 32, 32
          %290 = vsyncadd %s283, %s289
          %s291 = smul.addr %s287, 16
          %s292 = scalar_lea.hbm %s4, %s291
          %s294 = sshll.u32 %s286, 4
          %s295 = int_to_ptr.vmem [resolvable:$true] %s294
          %297 = dma.hbm_to_vmem [thread:$0]  %s292, 32, %s295, %s283
        $region36: #{net_forward.2} parent=15 // pred_fallthru
          _
      $region16: #{net_forward.2} parent=5 // pred_fallthru
        _
      %p298 = scmp.le.s32.totalorder 1, %s20
      %p299 = scmp.lt.s32.totalorder %s20, 43
      %p300 = pnand %p298, %p299
      %p301 = pneg %p300
      // Predicated region
      $region37: #{net_forward.2} parent=5 // pred_check
        _
      $region38: #{net_forward.2} parent=5 // pred_check_branch
        %303 = sbr.rel (%p300) target = $region40
      $region39: #{net_forward.2} parent=5 // pred_region
        %s304 = ssub.s32 %s20, 1
        %s305 = sand.u32 %s73, 1
        %s306 = scalar_lea.sflag [#allocation4], %s305
        %s307 = sand.u32 %s73, 1
        %s308 = smul.addr %s307, 7168
        %s309 = scalar_lea.vmem [#allocation3], %s308
        // Predicated region
        $region41: #{net_forward.2} parent=39 // pred_check
          %p310 = pneg %p86
        $region42: #{net_forward.2} parent=39 // pred_check_branch
          %312 = sbr.rel (%p310) target = $region44
        $region43: #{net_forward.2} parent=39 // pred_region
          %313 = dma.done %s306, 114688
        $region44: #{net_forward.2} parent=39 // pred_fallthru
          _
        %s314 = sand.u32 %s25, 1
        %s315 = scalar_lea.sflag [#allocation6], %s314
        %s316 = sand.u32 %s99, 1
        %s317 = smul.addr %s316, 2
        %s318 = scalar_lea.vmem [#allocation5], %s317
        // Predicated region
        $region45: #{net_forward.2} parent=39 // pred_check
          %p319 = pneg %p112
        $region46: #{net_forward.2} parent=39 // pred_check_branch
          %321 = sbr.rel (%p319) target = $region48
        $region47: #{net_forward.2} parent=39 // pred_region
          %322 = dma.done %s315, 32
        $region48: #{net_forward.2} parent=39 // pred_fallthru
          _
        %s323 = sand.u32 %s25, 1
        %s324 = scalar_lea.sflag [#allocation6], %s323
        %s325 = sand.u32 %s125, 1
        %s326 = smul.addr %s325, 2
        %s327 = scalar_lea.vmem [#allocation7], %s326
        // Predicated region
        $region49: #{net_forward.2} parent=39 // pred_check
          %p328 = pneg %p138
        $region50: #{net_forward.2} parent=39 // pred_check_branch
          %330 = sbr.rel (%p328) target = $region52
        $region51: #{net_forward.2} parent=39 // pred_region
          %331 = dma.done %s324, 32
        $region52: #{net_forward.2} parent=39 // pred_fallthru
          _
        %s332 = sand.u32 %s151, 1
        %s333 = scalar_lea.sflag [#allocation9], %s332
        %s334 = sand.u32 %s151, 1
        %s335 = smul.addr %s334, 2
        %s336 = scalar_lea.vmem [#allocation8], %s335
        // Predicated region
        $region53: #{net_forward.2} parent=39 // pred_check
          %p337 = pneg %p164
        $region54: #{net_forward.2} parent=39 // pred_check_branch
          %339 = sbr.rel (%p337) target = $region56
        $region55: #{net_forward.2} parent=39 // pred_region
          %340 = dma.done %s333, 32
        $region56: #{net_forward.2} parent=39 // pred_fallthru
          _
        %s341 = smul.u32 56, %s30
        %p342 = scmp.lt.s32.totalorder %s341, 1175
        %s343 = scalar_select %p342, %s341, 1175
        %s344 = scalar_lea.vmem %s0, %s343
        %p345 = pneg %p58
        %p346 = pneg %p55
        %s347 = sand.u32 %s73, 1
        %s348 = scalar_lea.sflag [#allocation4], %s347
        %s349 = sand.u32 %s73, 1
        %s350 = smul.addr %s349, 7168
        %s351 = scalar_lea.vmem [#allocation3], %s350
        %p352 = pneg %p86
        %p353 = pneg %p83
        %s354 = sand.u32 %s25, 1
        %s355 = scalar_lea.sflag [#allocation6], %s354
        %s356 = sand.u32 %s99, 1
        %s357 = smul.addr %s356, 2
        %s358 = scalar_lea.vmem [#allocation5], %s357
        %p359 = pneg %p112
        %p360 = pneg %p109
        %s361 = sand.u32 %s25, 1
        %s362 = scalar_lea.sflag [#allocation6], %s361
        %s363 = sand.u32 %s125, 1
        %s364 = smul.addr %s363, 2
        %s365 = scalar_lea.vmem [#allocation7], %s364
        %p366 = pneg %p138
        %p367 = pneg %p135
        %s368 = sand.u32 %s151, 1
        %s369 = scalar_lea.sflag [#allocation9], %s368
        %s370 = sand.u32 %s151, 1
        %s371 = smul.addr %s370, 2
        %s372 = scalar_lea.vmem [#allocation8], %s371
        %p373 = pneg %p164
        %p374 = pneg %p161
        %p375 = pneg %p190
        %p376 = pneg %p187
        %s377 = smul.u32 2, %s29
        %p378 = scmp.lt.s32.totalorder %s377, 3
        %s379 = scalar_select %p378, %s377, 3
        %s380 = smul.addr %s379, 2
        %s381 = scalar_lea.vmem %s5, %s380
        %s382 = smul.u32 56, %s30
        %p383 = scmp.lt.s32.totalorder %s382, 1175
        %s384 = scalar_select %p383, %s382, 1175
        %s385 = scalar_lea.vmem %s0, %s384
        %s386 = smul.u32 56, %s30
        %s387 = smul.u32 896, %s30
        %s388 = smul.u32 2, %s29
        %s389 = smul.u32 2, %s29
        %s390 = smul.u32 2, %s29
        %s391 = smul.u32 2, %s29
        %s392 = smul.u32 2, %s29
        %p393 = scmp.lt.s32.totalorder %s392, 3
        %s394 = scalar_select %p393, %s392, 3
        %s395 = smul.addr %s394, 2
        %s396 = scalar_lea.vmem %s5, %s395
        %s397 = smul.u32 2, %s29
        %p398 = scmp.eq.s32.totalorder %s30, 0
        // Predicated region
        $region57: #{net_forward.2} parent=39 // pred_check
          %p399 = pneg %p398
        $region58: #{net_forward.2} parent=39 // pred_check_branch
          %401 = sbr.rel (%p399) target = $region60
        $region59: #{net_forward.2} parent=39 // pred_region
          %402 = vst [vmem:[#allocation2] sm:$0xf] 0.0
        $region60: #{net_forward.2} parent=39 // pred_fallthru
          _
        %v403 = vld [vmem:[#allocation2] sm:$0xf]
        %v404 = vld [vmem:[%s385] sm:$0xff]
        %v405 = vld [vmem:[%s385 + $0x8] sm:$0xff]
        %v406 = vld [vmem:[%s385 + $0x10] sm:$0xff]
        %v407 = vld [vmem:[%s385 + $0x18] sm:$0xff]
        %v408 = vld [vmem:[%s385 + $0x20] sm:$0xff]
        %v409 = vld [vmem:[%s385 + $0x28] sm:$0xff]
        %v410 = vld [vmem:[%s385 + $0x30] sm:$0xff]
        %v411 = vld [vmem:[%s309] sm:$0xff]
        %v412 = vld [vmem:[%s309 + $0x8] sm:$0xff]
        %v413 = vld [vmem:[%s309 + $0x10] sm:$0xff]
        %v414 = vld [vmem:[%s309 + $0x18] sm:$0xff]
        %v415 = vld [vmem:[%s309 + $0x20] sm:$0xff]
        %v416 = vld [vmem:[%s309 + $0x28] sm:$0xff]
        %v417 = vld [vmem:[%s309 + $0x30] sm:$0xff]
        %v418 = vld [vmem:[%s309 + $0x38] sm:$0xff]
        %v419 = vld [vmem:[%s309 + $0x40] sm:$0xff]
        %v420 = vld [vmem:[%s309 + $0x48] sm:$0xff]
        %v421 = vld [vmem:[%s309 + $0x50] sm:$0xff]
        %v422 = vld [vmem:[%s309 + $0x58] sm:$0xff]
        %v423 = vld [vmem:[%s309 + $0x60] sm:$0xff]
        %v424 = vld [vmem:[%s309 + $0x68] sm:$0xff]
        %v425 = vld [vmem:[%s309 + $0x70] sm:$0xff]
        %v426 = vld [vmem:[%s309 + $0x78] sm:$0xff]
        %v427 = vld [vmem:[%s309 + $0x80] sm:$0xff]
        %v428 = vld [vmem:[%s309 + $0x88] sm:$0xff]
        %v429 = vld [vmem:[%s309 + $0x90] sm:$0xff]
        %v430 = vld [vmem:[%s309 + $0x98] sm:$0xff]
        %v431 = vld [vmem:[%s309 + $0xa0] sm:$0xff]
        %v432 = vld [vmem:[%s309 + $0xa8] sm:$0xff]
        %v433 = vld [vmem:[%s309 + $0xb0] sm:$0xff]
        %v434 = vld [vmem:[%s309 + $0xb8] sm:$0xff]
        %v435 = vld [vmem:[%s309 + $0xc0] sm:$0xff]
        %v436 = vld [vmem:[%s309 + $0xc8] sm:$0xff]
        %v437 = vld [vmem:[%s309 + $0xd0] sm:$0xff]
        %v438 = vld [vmem:[%s309 + $0xd8] sm:$0xff]
        %v439 = vld [vmem:[%s309 + $0xe0] sm:$0xff]
        %v440 = vld [vmem:[%s309 + $0xe8] sm:$0xff]
        %v441 = vld [vmem:[%s309 + $0xf0] sm:$0xff]
        %v442 = vld [vmem:[%s309 + $0xf8] sm:$0xff]
        %v443 = vld [vmem:[%s309 + $0x100] sm:$0xff]
        %v444 = vld [vmem:[%s309 + $0x108] sm:$0xff]
        %v445 = vld [vmem:[%s309 + $0x110] sm:$0xff]
        %v446 = vld [vmem:[%s309 + $0x118] sm:$0xff]
        %v447 = vld [vmem:[%s309 + $0x120] sm:$0xff]
        %v448 = vld [vmem:[%s309 + $0x128] sm:$0xff]
        %v449 = vld [vmem:[%s309 + $0x130] sm:$0xff]
        %v450 = vld [vmem:[%s309 + $0x138] sm:$0xff]
        %v451 = vld [vmem:[%s309 + $0x140] sm:$0xff]
        %v452 = vld [vmem:[%s309 + $0x148] sm:$0xff]
        %v453 = vld [vmem:[%s309 + $0x150] sm:$0xff]
        %v454 = vld [vmem:[%s309 + $0x158] sm:$0xff]
        %v455 = vld [vmem:[%s309 + $0x160] sm:$0xff]
        %v456 = vld [vmem:[%s309 + $0x168] sm:$0xff]
        %v457 = vld [vmem:[%s309 + $0x170] sm:$0xff]
        %v458 = vld [vmem:[%s309 + $0x178] sm:$0xff]
        %v459 = vld [vmem:[%s309 + $0x180] sm:$0xff]
        %v460 = vld [vmem:[%s309 + $0x188] sm:$0xff]
        %v461 = vld [vmem:[%s309 + $0x190] sm:$0xff]
        %v462 = vld [vmem:[%s309 + $0x198] sm:$0xff]
        %v463 = vld [vmem:[%s309 + $0x1a0] sm:$0xff]
        %v464 = vld [vmem:[%s309 + $0x1a8] sm:$0xff]
        %v465 = vld [vmem:[%s309 + $0x1b0] sm:$0xff]
        %v466 = vld [vmem:[%s309 + $0x1b8] sm:$0xff]
        %v467 = vld [vmem:[%s309 + $0x1c0] sm:$0xff]
        %v468 = vld [vmem:[%s309 + $0x1c8] sm:$0xff]
        %v469 = vld [vmem:[%s309 + $0x1d0] sm:$0xff]
        %v470 = vld [vmem:[%s309 + $0x1d8] sm:$0xff]
        %v471 = vld [vmem:[%s309 + $0x1e0] sm:$0xff]
        %v472 = vld [vmem:[%s309 + $0x1e8] sm:$0xff]
        %v473 = vld [vmem:[%s309 + $0x1f0] sm:$0xff]
        %v474 = vld [vmem:[%s309 + $0x1f8] sm:$0xff]
        %v475 = vld [vmem:[%s309 + $0x200] sm:$0xff]
        %v476 = vld [vmem:[%s309 + $0x208] sm:$0xff]
        %v477 = vld [vmem:[%s309 + $0x210] sm:$0xff]
        %v478 = vld [vmem:[%s309 + $0x218] sm:$0xff]
        %v479 = vld [vmem:[%s309 + $0x220] sm:$0xff]
        %v480 = vld [vmem:[%s309 + $0x228] sm:$0xff]
        %v481 = vld [vmem:[%s309 + $0x230] sm:$0xff]
        %v482 = vld [vmem:[%s309 + $0x238] sm:$0xff]
        %v483 = vld [vmem:[%s309 + $0x240] sm:$0xff]
        %v484 = vld [vmem:[%s309 + $0x248] sm:$0xff]
        %v485 = vld [vmem:[%s309 + $0x250] sm:$0xff]
        %v486 = vld [vmem:[%s309 + $0x258] sm:$0xff]
        %v487 = vld [vmem:[%s309 + $0x260] sm:$0xff]
        %v488 = vld [vmem:[%s309 + $0x268] sm:$0xff]
        %v489 = vld [vmem:[%s309 + $0x270] sm:$0xff]
        %v490 = vld [vmem:[%s309 + $0x278] sm:$0xff]
        %v491 = vld [vmem:[%s309 + $0x280] sm:$0xff]
        %v492 = vld [vmem:[%s309 + $0x288] sm:$0xff]
        %v493 = vld [vmem:[%s309 + $0x290] sm:$0xff]
        %v494 = vld [vmem:[%s309 + $0x298] sm:$0xff]
        %v495 = vld [vmem:[%s309 + $0x2a0] sm:$0xff]
        %v496 = vld [vmem:[%s309 + $0x2a8] sm:$0xff]
        %v497 = vld [vmem:[%s309 + $0x2b0] sm:$0xff]
        %v498 = vld [vmem:[%s309 + $0x2b8] sm:$0xff]
        %v499 = vld [vmem:[%s309 + $0x2c0] sm:$0xff]
        %v500 = vld [vmem:[%s309 + $0x2c8] sm:$0xff]
        %v501 = vld [vmem:[%s309 + $0x2d0] sm:$0xff]
        %v502 = vld [vmem:[%s309 + $0x2d8] sm:$0xff]
        %v503 = vld [vmem:[%s309 + $0x2e0] sm:$0xff]
        %v504 = vld [vmem:[%s309 + $0x2e8] sm:$0xff]
        %v505 = vld [vmem:[%s309 + $0x2f0] sm:$0xff]
        %v506 = vld [vmem:[%s309 + $0x2f8] sm:$0xff]
        %v507 = vld [vmem:[%s309 + $0x300] sm:$0xff]
        %v508 = vld [vmem:[%s309 + $0x308] sm:$0xff]
        %v509 = vld [vmem:[%s309 + $0x310] sm:$0xff]
        %v510 = vld [vmem:[%s309 + $0x318] sm:$0xff]
        %v511 = vld [vmem:[%s309 + $0x320] sm:$0xff]
        %v512 = vld [vmem:[%s309 + $0x328] sm:$0xff]
        %v513 = vld [vmem:[%s309 + $0x330] sm:$0xff]
        %v514 = vld [vmem:[%s309 + $0x338] sm:$0xff]
        %v515 = vld [vmem:[%s309 + $0x340] sm:$0xff]
        %v516 = vld [vmem:[%s309 + $0x348] sm:$0xff]
        %v517 = vld [vmem:[%s309 + $0x350] sm:$0xff]
        %v518 = vld [vmem:[%s309 + $0x358] sm:$0xff]
        %v519 = vld [vmem:[%s309 + $0x360] sm:$0xff]
        %v520 = vld [vmem:[%s309 + $0x368] sm:$0xff]
        %v521 = vld [vmem:[%s309 + $0x370] sm:$0xff]
        %v522 = vld [vmem:[%s309 + $0x378] sm:$0xff]
        %v523 = vld [vmem:[%s309 + $0x380] sm:$0xff]
        %v524 = vld [vmem:[%s309 + $0x388] sm:$0xff]
        %v525 = vld [vmem:[%s309 + $0x390] sm:$0xff]
        %v526 = vld [vmem:[%s309 + $0x398] sm:$0xff]
        %v527 = vld [vmem:[%s309 + $0x3a0] sm:$0xff]
        %v528 = vld [vmem:[%s309 + $0x3a8] sm:$0xff]
        %v529 = vld [vmem:[%s309 + $0x3b0] sm:$0xff]
        %v530 = vld [vmem:[%s309 + $0x3b8] sm:$0xff]
        %v531 = vld [vmem:[%s309 + $0x3c0] sm:$0xff]
        %v532 = vld [vmem:[%s309 + $0x3c8] sm:$0xff]
        %v533 = vld [vmem:[%s309 + $0x3d0] sm:$0xff]
        %v534 = vld [vmem:[%s309 + $0x3d8] sm:$0xff]
        %v535 = vld [vmem:[%s309 + $0x3e0] sm:$0xff]
        %v536 = vld [vmem:[%s309 + $0x3e8] sm:$0xff]
        %v537 = vld [vmem:[%s309 + $0x3f0] sm:$0xff]
        %v538 = vld [vmem:[%s309 + $0x3f8] sm:$0xff]
        %v539 = vld [vmem:[%s309 + $0x400] sm:$0xff]
        %v540 = vld [vmem:[%s309 + $0x408] sm:$0xff]
        %v541 = vld [vmem:[%s309 + $0x410] sm:$0xff]
        %v542 = vld [vmem:[%s309 + $0x418] sm:$0xff]
        %v543 = vld [vmem:[%s309 + $0x420] sm:$0xff]
        %v544 = vld [vmem:[%s309 + $0x428] sm:$0xff]
        %v545 = vld [vmem:[%s309 + $0x430] sm:$0xff]
        %v546 = vld [vmem:[%s309 + $0x438] sm:$0xff]
        %v547 = vld [vmem:[%s309 + $0x440] sm:$0xff]
        %v548 = vld [vmem:[%s309 + $0x448] sm:$0xff]
        %v549 = vld [vmem:[%s309 + $0x450] sm:$0xff]
        %v550 = vld [vmem:[%s309 + $0x458] sm:$0xff]
        %v551 = vld [vmem:[%s309 + $0x460] sm:$0xff]
        %v552 = vld [vmem:[%s309 + $0x468] sm:$0xff]
        %v553 = vld [vmem:[%s309 + $0x470] sm:$0xff]
        %v554 = vld [vmem:[%s309 + $0x478] sm:$0xff]
        %v555 = vld [vmem:[%s309 + $0x480] sm:$0xff]
        %v556 = vld [vmem:[%s309 + $0x488] sm:$0xff]
        %v557 = vld [vmem:[%s309 + $0x490] sm:$0xff]
        %v558 = vld [vmem:[%s309 + $0x498] sm:$0xff]
        %v559 = vld [vmem:[%s309 + $0x4a0] sm:$0xff]
        %v560 = vld [vmem:[%s309 + $0x4a8] sm:$0xff]
        %v561 = vld [vmem:[%s309 + $0x4b0] sm:$0xff]
        %v562 = vld [vmem:[%s309 + $0x4b8] sm:$0xff]
        %v563 = vld [vmem:[%s309 + $0x4c0] sm:$0xff]
        %v564 = vld [vmem:[%s309 + $0x4c8] sm:$0xff]
        %v565 = vld [vmem:[%s309 + $0x4d0] sm:$0xff]
        %v566 = vld [vmem:[%s309 + $0x4d8] sm:$0xff]
        %v567 = vld [vmem:[%s309 + $0x4e0] sm:$0xff]
        %v568 = vld [vmem:[%s309 + $0x4e8] sm:$0xff]
        %v569 = vld [vmem:[%s309 + $0x4f0] sm:$0xff]
        %v570 = vld [vmem:[%s309 + $0x4f8] sm:$0xff]
        %v571 = vld [vmem:[%s309 + $0x500] sm:$0xff]
        %v572 = vld [vmem:[%s309 + $0x508] sm:$0xff]
        %v573 = vld [vmem:[%s309 + $0x510] sm:$0xff]
        %v574 = vld [vmem:[%s309 + $0x518] sm:$0xff]
        %v575 = vld [vmem:[%s309 + $0x520] sm:$0xff]
        %v576 = vld [vmem:[%s309 + $0x528] sm:$0xff]
        %v577 = vld [vmem:[%s309 + $0x530] sm:$0xff]
        %v578 = vld [vmem:[%s309 + $0x538] sm:$0xff]
        %v579 = vld [vmem:[%s309 + $0x540] sm:$0xff]
        %v580 = vld [vmem:[%s309 + $0x548] sm:$0xff]
        %v581 = vld [vmem:[%s309 + $0x550] sm:$0xff]
        %v582 = vld [vmem:[%s309 + $0x558] sm:$0xff]
        %v583 = vld [vmem:[%s309 + $0x560] sm:$0xff]
        %v584 = vld [vmem:[%s309 + $0x568] sm:$0xff]
        %v585 = vld [vmem:[%s309 + $0x570] sm:$0xff]
        %v586 = vld [vmem:[%s309 + $0x578] sm:$0xff]
        %v587 = vld [vmem:[%s309 + $0x580] sm:$0xff]
        %v588 = vld [vmem:[%s309 + $0x588] sm:$0xff]
        %v589 = vld [vmem:[%s309 + $0x590] sm:$0xff]
        %v590 = vld [vmem:[%s309 + $0x598] sm:$0xff]
        %v591 = vld [vmem:[%s309 + $0x5a0] sm:$0xff]
        %v592 = vld [vmem:[%s309 + $0x5a8] sm:$0xff]
        %v593 = vld [vmem:[%s309 + $0x5b0] sm:$0xff]
        %v594 = vld [vmem:[%s309 + $0x5b8] sm:$0xff]
        %v595 = vld [vmem:[%s309 + $0x5c0] sm:$0xff]
        %v596 = vld [vmem:[%s309 + $0x5c8] sm:$0xff]
        %v597 = vld [vmem:[%s309 + $0x5d0] sm:$0xff]
        %v598 = vld [vmem:[%s309 + $0x5d8] sm:$0xff]
        %v599 = vld [vmem:[%s309 + $0x5e0] sm:$0xff]
        %v600 = vld [vmem:[%s309 + $0x5e8] sm:$0xff]
        %v601 = vld [vmem:[%s309 + $0x5f0] sm:$0xff]
        %v602 = vld [vmem:[%s309 + $0x5f8] sm:$0xff]
        %v603 = vld [vmem:[%s309 + $0x600] sm:$0xff]
        %v604 = vld [vmem:[%s309 + $0x608] sm:$0xff]
        %v605 = vld [vmem:[%s309 + $0x610] sm:$0xff]
        %v606 = vld [vmem:[%s309 + $0x618] sm:$0xff]
        %v607 = vld [vmem:[%s309 + $0x620] sm:$0xff]
        %v608 = vld [vmem:[%s309 + $0x628] sm:$0xff]
        %v609 = vld [vmem:[%s309 + $0x630] sm:$0xff]
        %v610 = vld [vmem:[%s309 + $0x638] sm:$0xff]
        %v611 = vld [vmem:[%s309 + $0x640] sm:$0xff]
        %v612 = vld [vmem:[%s309 + $0x648] sm:$0xff]
        %v613 = vld [vmem:[%s309 + $0x650] sm:$0xff]
        %v614 = vld [vmem:[%s309 + $0x658] sm:$0xff]
        %v615 = vld [vmem:[%s309 + $0x660] sm:$0xff]
        %v616 = vld [vmem:[%s309 + $0x668] sm:$0xff]
        %v617 = vld [vmem:[%s309 + $0x670] sm:$0xff]
        %v618 = vld [vmem:[%s309 + $0x678] sm:$0xff]
        %v619 = vld [vmem:[%s309 + $0x680] sm:$0xff]
        %v620 = vld [vmem:[%s309 + $0x688] sm:$0xff]
        %v621 = vld [vmem:[%s309 + $0x690] sm:$0xff]
        %v622 = vld [vmem:[%s309 + $0x698] sm:$0xff]
        %v623 = vld [vmem:[%s309 + $0x6a0] sm:$0xff]
        %v624 = vld [vmem:[%s309 + $0x6a8] sm:$0xff]
        %v625 = vld [vmem:[%s309 + $0x6b0] sm:$0xff]
        %v626 = vld [vmem:[%s309 + $0x6b8] sm:$0xff]
        %v627 = vld [vmem:[%s309 + $0x6c0] sm:$0xff]
        %v628 = vld [vmem:[%s309 + $0x6c8] sm:$0xff]
        %v629 = vld [vmem:[%s309 + $0x6d0] sm:$0xff]
        %v630 = vld [vmem:[%s309 + $0x6d8] sm:$0xff]
        %v631 = vld [vmem:[%s309 + $0x6e0] sm:$0xff]
        %v632 = vld [vmem:[%s309 + $0x6e8] sm:$0xff]
        %v633 = vld [vmem:[%s309 + $0x6f0] sm:$0xff]
        %v634 = vld [vmem:[%s309 + $0x6f8] sm:$0xff]
        %v635 = vld [vmem:[%s309 + $0x700] sm:$0xff]
        %v636 = vld [vmem:[%s309 + $0x708] sm:$0xff]
        %v637 = vld [vmem:[%s309 + $0x710] sm:$0xff]
        %v638 = vld [vmem:[%s309 + $0x718] sm:$0xff]
        %v639 = vld [vmem:[%s309 + $0x720] sm:$0xff]
        %v640 = vld [vmem:[%s309 + $0x728] sm:$0xff]
        %v641 = vld [vmem:[%s309 + $0x730] sm:$0xff]
        %v642 = vld [vmem:[%s309 + $0x738] sm:$0xff]
        %v643 = vld [vmem:[%s309 + $0x740] sm:$0xff]
        %v644 = vld [vmem:[%s309 + $0x748] sm:$0xff]
        %v645 = vld [vmem:[%s309 + $0x750] sm:$0xff]
        %v646 = vld [vmem:[%s309 + $0x758] sm:$0xff]
        %v647 = vld [vmem:[%s309 + $0x760] sm:$0xff]
        %v648 = vld [vmem:[%s309 + $0x768] sm:$0xff]
        %v649 = vld [vmem:[%s309 + $0x770] sm:$0xff]
        %v650 = vld [vmem:[%s309 + $0x778] sm:$0xff]
        %v651 = vld [vmem:[%s309 + $0x780] sm:$0xff]
        %v652 = vld [vmem:[%s309 + $0x788] sm:$0xff]
        %v653 = vld [vmem:[%s309 + $0x790] sm:$0xff]
        %v654 = vld [vmem:[%s309 + $0x798] sm:$0xff]
        %v655 = vld [vmem:[%s309 + $0x7a0] sm:$0xff]
        %v656 = vld [vmem:[%s309 + $0x7a8] sm:$0xff]
        %v657 = vld [vmem:[%s309 + $0x7b0] sm:$0xff]
        %v658 = vld [vmem:[%s309 + $0x7b8] sm:$0xff]
        %v659 = vld [vmem:[%s309 + $0x7c0] sm:$0xff]
        %v660 = vld [vmem:[%s309 + $0x7c8] sm:$0xff]
        %v661 = vld [vmem:[%s309 + $0x7d0] sm:$0xff]
        %v662 = vld [vmem:[%s309 + $0x7d8] sm:$0xff]
        %v663 = vld [vmem:[%s309 + $0x7e0] sm:$0xff]
        %v664 = vld [vmem:[%s309 + $0x7e8] sm:$0xff]
        %v665 = vld [vmem:[%s309 + $0x7f0] sm:$0xff]
        %v666 = vld [vmem:[%s309 + $0x7f8] sm:$0xff]
        %v667 = vld [vmem:[%s309 + $0x800] sm:$0xff]
        %v668 = vld [vmem:[%s309 + $0x808] sm:$0xff]
        %v669 = vld [vmem:[%s309 + $0x810] sm:$0xff]
        %v670 = vld [vmem:[%s309 + $0x818] sm:$0xff]
        %v671 = vld [vmem:[%s309 + $0x820] sm:$0xff]
        %v672 = vld [vmem:[%s309 + $0x828] sm:$0xff]
        %v673 = vld [vmem:[%s309 + $0x830] sm:$0xff]
        %v674 = vld [vmem:[%s309 + $0x838] sm:$0xff]
        %v675 = vld [vmem:[%s309 + $0x840] sm:$0xff]
        %v676 = vld [vmem:[%s309 + $0x848] sm:$0xff]
        %v677 = vld [vmem:[%s309 + $0x850] sm:$0xff]
        %v678 = vld [vmem:[%s309 + $0x858] sm:$0xff]
        %v679 = vld [vmem:[%s309 + $0x860] sm:$0xff]
        %v680 = vld [vmem:[%s309 + $0x868] sm:$0xff]
        %v681 = vld [vmem:[%s309 + $0x870] sm:$0xff]
        %v682 = vld [vmem:[%s309 + $0x878] sm:$0xff]
        %v683 = vld [vmem:[%s309 + $0x880] sm:$0xff]
        %v684 = vld [vmem:[%s309 + $0x888] sm:$0xff]
        %v685 = vld [vmem:[%s309 + $0x890] sm:$0xff]
        %v686 = vld [vmem:[%s309 + $0x898] sm:$0xff]
        %v687 = vld [vmem:[%s309 + $0x8a0] sm:$0xff]
        %v688 = vld [vmem:[%s309 + $0x8a8] sm:$0xff]
        %v689 = vld [vmem:[%s309 + $0x8b0] sm:$0xff]
        %v690 = vld [vmem:[%s309 + $0x8b8] sm:$0xff]
        %v691 = vld [vmem:[%s309 + $0x8c0] sm:$0xff]
        %v692 = vld [vmem:[%s309 + $0x8c8] sm:$0xff]
        %v693 = vld [vmem:[%s309 + $0x8d0] sm:$0xff]
        %v694 = vld [vmem:[%s309 + $0x8d8] sm:$0xff]
        %v695 = vld [vmem:[%s309 + $0x8e0] sm:$0xff]
        %v696 = vld [vmem:[%s309 + $0x8e8] sm:$0xff]
        %v697 = vld [vmem:[%s309 + $0x8f0] sm:$0xff]
        %v698 = vld [vmem:[%s309 + $0x8f8] sm:$0xff]
        %v699 = vld [vmem:[%s309 + $0x900] sm:$0xff]
        %v700 = vld [vmem:[%s309 + $0x908] sm:$0xff]
        %v701 = vld [vmem:[%s309 + $0x910] sm:$0xff]
        %v702 = vld [vmem:[%s309 + $0x918] sm:$0xff]
        %v703 = vld [vmem:[%s309 + $0x920] sm:$0xff]
        %v704 = vld [vmem:[%s309 + $0x928] sm:$0xff]
        %v705 = vld [vmem:[%s309 + $0x930] sm:$0xff]
        %v706 = vld [vmem:[%s309 + $0x938] sm:$0xff]
        %v707 = vld [vmem:[%s309 + $0x940] sm:$0xff]
        %v708 = vld [vmem:[%s309 + $0x948] sm:$0xff]
        %v709 = vld [vmem:[%s309 + $0x950] sm:$0xff]
        %v710 = vld [vmem:[%s309 + $0x958] sm:$0xff]
        %v711 = vld [vmem:[%s309 + $0x960] sm:$0xff]
        %v712 = vld [vmem:[%s309 + $0x968] sm:$0xff]
        %v713 = vld [vmem:[%s309 + $0x970] sm:$0xff]
        %v714 = vld [vmem:[%s309 + $0x978] sm:$0xff]
        %v715 = vld [vmem:[%s309 + $0x980] sm:$0xff]
        %v716 = vld [vmem:[%s309 + $0x988] sm:$0xff]
        %v717 = vld [vmem:[%s309 + $0x990] sm:$0xff]
        %v718 = vld [vmem:[%s309 + $0x998] sm:$0xff]
        %v719 = vld [vmem:[%s309 + $0x9a0] sm:$0xff]
        %v720 = vld [vmem:[%s309 + $0x9a8] sm:$0xff]
        %v721 = vld [vmem:[%s309 + $0x9b0] sm:$0xff]
        %v722 = vld [vmem:[%s309 + $0x9b8] sm:$0xff]
        %v723 = vld [vmem:[%s309 + $0x9c0] sm:$0xff]
        %v724 = vld [vmem:[%s309 + $0x9c8] sm:$0xff]
        %v725 = vld [vmem:[%s309 + $0x9d0] sm:$0xff]
        %v726 = vld [vmem:[%s309 + $0x9d8] sm:$0xff]
        %v727 = vld [vmem:[%s309 + $0x9e0] sm:$0xff]
        %v728 = vld [vmem:[%s309 + $0x9e8] sm:$0xff]
        %v729 = vld [vmem:[%s309 + $0x9f0] sm:$0xff]
        %v730 = vld [vmem:[%s309 + $0x9f8] sm:$0xff]
        %v731 = vld [vmem:[%s309 + $0xa00] sm:$0xff]
        %v732 = vld [vmem:[%s309 + $0xa08] sm:$0xff]
        %v733 = vld [vmem:[%s309 + $0xa10] sm:$0xff]
        %v734 = vld [vmem:[%s309 + $0xa18] sm:$0xff]
        %v735 = vld [vmem:[%s309 + $0xa20] sm:$0xff]
        %v736 = vld [vmem:[%s309 + $0xa28] sm:$0xff]
        %v737 = vld [vmem:[%s309 + $0xa30] sm:$0xff]
        %v738 = vld [vmem:[%s309 + $0xa38] sm:$0xff]
        %v739 = vld [vmem:[%s309 + $0xa40] sm:$0xff]
        %v740 = vld [vmem:[%s309 + $0xa48] sm:$0xff]
        %v741 = vld [vmem:[%s309 + $0xa50] sm:$0xff]
        %v742 = vld [vmem:[%s309 + $0xa58] sm:$0xff]
        %v743 = vld [vmem:[%s309 + $0xa60] sm:$0xff]
        %v744 = vld [vmem:[%s309 + $0xa68] sm:$0xff]
        %v745 = vld [vmem:[%s309 + $0xa70] sm:$0xff]
        %v746 = vld [vmem:[%s309 + $0xa78] sm:$0xff]
        %v747 = vld [vmem:[%s309 + $0xa80] sm:$0xff]
        %v748 = vld [vmem:[%s309 + $0xa88] sm:$0xff]
        %v749 = vld [vmem:[%s309 + $0xa90] sm:$0xff]
        %v750 = vld [vmem:[%s309 + $0xa98] sm:$0xff]
        %v751 = vld [vmem:[%s309 + $0xaa0] sm:$0xff]
        %v752 = vld [vmem:[%s309 + $0xaa8] sm:$0xff]
        %v753 = vld [vmem:[%s309 + $0xab0] sm:$0xff]
        %v754 = vld [vmem:[%s309 + $0xab8] sm:$0xff]
        %v755 = vld [vmem:[%s309 + $0xac0] sm:$0xff]
        %v756 = vld [vmem:[%s309 + $0xac8] sm:$0xff]
        %v757 = vld [vmem:[%s309 + $0xad0] sm:$0xff]
        %v758 = vld [vmem:[%s309 + $0xad8] sm:$0xff]
        %v759 = vld [vmem:[%s309 + $0xae0] sm:$0xff]
        %v760 = vld [vmem:[%s309 + $0xae8] sm:$0xff]
        %v761 = vld [vmem:[%s309 + $0xaf0] sm:$0xff]
        %v762 = vld [vmem:[%s309 + $0xaf8] sm:$0xff]
        %v763 = vld [vmem:[%s309 + $0xb00] sm:$0xff]
        %v764 = vld [vmem:[%s309 + $0xb08] sm:$0xff]
        %v765 = vld [vmem:[%s309 + $0xb10] sm:$0xff]
        %v766 = vld [vmem:[%s309 + $0xb18] sm:$0xff]
        %v767 = vld [vmem:[%s309 + $0xb20] sm:$0xff]
        %v768 = vld [vmem:[%s309 + $0xb28] sm:$0xff]
        %v769 = vld [vmem:[%s309 + $0xb30] sm:$0xff]
        %v770 = vld [vmem:[%s309 + $0xb38] sm:$0xff]
        %v771 = vld [vmem:[%s309 + $0xb40] sm:$0xff]
        %v772 = vld [vmem:[%s309 + $0xb48] sm:$0xff]
        %v773 = vld [vmem:[%s309 + $0xb50] sm:$0xff]
        %v774 = vld [vmem:[%s309 + $0xb58] sm:$0xff]
        %v775 = vld [vmem:[%s309 + $0xb60] sm:$0xff]
        %v776 = vld [vmem:[%s309 + $0xb68] sm:$0xff]
        %v777 = vld [vmem:[%s309 + $0xb70] sm:$0xff]
        %v778 = vld [vmem:[%s309 + $0xb78] sm:$0xff]
        %v779 = vld [vmem:[%s309 + $0xb80] sm:$0xff]
        %v780 = vld [vmem:[%s309 + $0xb88] sm:$0xff]
        %v781 = vld [vmem:[%s309 + $0xb90] sm:$0xff]
        %v782 = vld [vmem:[%s309 + $0xb98] sm:$0xff]
        %v783 = vld [vmem:[%s309 + $0xba0] sm:$0xff]
        %v784 = vld [vmem:[%s309 + $0xba8] sm:$0xff]
        %v785 = vld [vmem:[%s309 + $0xbb0] sm:$0xff]
        %v786 = vld [vmem:[%s309 + $0xbb8] sm:$0xff]
        %v787 = vld [vmem:[%s309 + $0xbc0] sm:$0xff]
        %v788 = vld [vmem:[%s309 + $0xbc8] sm:$0xff]
        %v789 = vld [vmem:[%s309 + $0xbd0] sm:$0xff]
        %v790 = vld [vmem:[%s309 + $0xbd8] sm:$0xff]
        %v791 = vld [vmem:[%s309 + $0xbe0] sm:$0xff]
        %v792 = vld [vmem:[%s309 + $0xbe8] sm:$0xff]
        %v793 = vld [vmem:[%s309 + $0xbf0] sm:$0xff]
        %v794 = vld [vmem:[%s309 + $0xbf8] sm:$0xff]
        %v795 = vld [vmem:[%s309 + $0xc00] sm:$0xff]
        %v796 = vld [vmem:[%s309 + $0xc08] sm:$0xff]
        %v797 = vld [vmem:[%s309 + $0xc10] sm:$0xff]
        %v798 = vld [vmem:[%s309 + $0xc18] sm:$0xff]
        %v799 = vld [vmem:[%s309 + $0xc20] sm:$0xff]
        %v800 = vld [vmem:[%s309 + $0xc28] sm:$0xff]
        %v801 = vld [vmem:[%s309 + $0xc30] sm:$0xff]
        %v802 = vld [vmem:[%s309 + $0xc38] sm:$0xff]
        %v803 = vld [vmem:[%s309 + $0xc40] sm:$0xff]
        %v804 = vld [vmem:[%s309 + $0xc48] sm:$0xff]
        %v805 = vld [vmem:[%s309 + $0xc50] sm:$0xff]
        %v806 = vld [vmem:[%s309 + $0xc58] sm:$0xff]
        %v807 = vld [vmem:[%s309 + $0xc60] sm:$0xff]
        %v808 = vld [vmem:[%s309 + $0xc68] sm:$0xff]
        %v809 = vld [vmem:[%s309 + $0xc70] sm:$0xff]
        %v810 = vld [vmem:[%s309 + $0xc78] sm:$0xff]
        %v811 = vld [vmem:[%s309 + $0xc80] sm:$0xff]
        %v812 = vld [vmem:[%s309 + $0xc88] sm:$0xff]
        %v813 = vld [vmem:[%s309 + $0xc90] sm:$0xff]
        %v814 = vld [vmem:[%s309 + $0xc98] sm:$0xff]
        %v815 = vld [vmem:[%s309 + $0xca0] sm:$0xff]
        %v816 = vld [vmem:[%s309 + $0xca8] sm:$0xff]
        %v817 = vld [vmem:[%s309 + $0xcb0] sm:$0xff]
        %v818 = vld [vmem:[%s309 + $0xcb8] sm:$0xff]
        %v819 = vld [vmem:[%s309 + $0xcc0] sm:$0xff]
        %v820 = vld [vmem:[%s309 + $0xcc8] sm:$0xff]
        %v821 = vld [vmem:[%s309 + $0xcd0] sm:$0xff]
        %v822 = vld [vmem:[%s309 + $0xcd8] sm:$0xff]
        %v823 = vld [vmem:[%s309 + $0xce0] sm:$0xff]
        %v824 = vld [vmem:[%s309 + $0xce8] sm:$0xff]
        %v825 = vld [vmem:[%s309 + $0xcf0] sm:$0xff]
        %v826 = vld [vmem:[%s309 + $0xcf8] sm:$0xff]
        %v827 = vld [vmem:[%s309 + $0xd00] sm:$0xff]
        %v828 = vld [vmem:[%s309 + $0xd08] sm:$0xff]
        %v829 = vld [vmem:[%s309 + $0xd10] sm:$0xff]
        %v830 = vld [vmem:[%s309 + $0xd18] sm:$0xff]
        %v831 = vld [vmem:[%s309 + $0xd20] sm:$0xff]
        %v832 = vld [vmem:[%s309 + $0xd28] sm:$0xff]
        %v833 = vld [vmem:[%s309 + $0xd30] sm:$0xff]
        %v834 = vld [vmem:[%s309 + $0xd38] sm:$0xff]
        %v835 = vld [vmem:[%s309 + $0xd40] sm:$0xff]
        %v836 = vld [vmem:[%s309 + $0xd48] sm:$0xff]
        %v837 = vld [vmem:[%s309 + $0xd50] sm:$0xff]
        %v838 = vld [vmem:[%s309 + $0xd58] sm:$0xff]
        %v839 = vld [vmem:[%s309 + $0xd60] sm:$0xff]
        %v840 = vld [vmem:[%s309 + $0xd68] sm:$0xff]
        %v841 = vld [vmem:[%s309 + $0xd70] sm:$0xff]
        %v842 = vld [vmem:[%s309 + $0xd78] sm:$0xff]
        %v843 = vld [vmem:[%s309 + $0xd80] sm:$0xff]
        %v844 = vld [vmem:[%s309 + $0xd88] sm:$0xff]
        %v845 = vld [vmem:[%s309 + $0xd90] sm:$0xff]
        %v846 = vld [vmem:[%s309 + $0xd98] sm:$0xff]
        %v847 = vld [vmem:[%s309 + $0xda0] sm:$0xff]
        %v848 = vld [vmem:[%s309 + $0xda8] sm:$0xff]
        %v849 = vld [vmem:[%s309 + $0xdb0] sm:$0xff]
        %v850 = vld [vmem:[%s309 + $0xdb8] sm:$0xff]
        %v851 = vld [vmem:[%s309 + $0xdc0] sm:$0xff]
        %v852 = vld [vmem:[%s309 + $0xdc8] sm:$0xff]
        %v853 = vld [vmem:[%s309 + $0xdd0] sm:$0xff]
        %v854 = vld [vmem:[%s309 + $0xdd8] sm:$0xff]
        %v855 = vld [vmem:[%s309 + $0xde0] sm:$0xff]
        %v856 = vld [vmem:[%s309 + $0xde8] sm:$0xff]
        %v857 = vld [vmem:[%s309 + $0xdf0] sm:$0xff]
        %v858 = vld [vmem:[%s309 + $0xdf8] sm:$0xff]
        %v859 = vld [vmem:[%s309 + $0xe00] sm:$0xff]
        %v860 = vld [vmem:[%s309 + $0xe08] sm:$0xff]
        %v861 = vld [vmem:[%s309 + $0xe10] sm:$0xff]
        %v862 = vld [vmem:[%s309 + $0xe18] sm:$0xff]
        %v863 = vld [vmem:[%s309 + $0xe20] sm:$0xff]
        %v864 = vld [vmem:[%s309 + $0xe28] sm:$0xff]
        %v865 = vld [vmem:[%s309 + $0xe30] sm:$0xff]
        %v866 = vld [vmem:[%s309 + $0xe38] sm:$0xff]
        %v867 = vld [vmem:[%s309 + $0xe40] sm:$0xff]
        %v868 = vld [vmem:[%s309 + $0xe48] sm:$0xff]
        %v869 = vld [vmem:[%s309 + $0xe50] sm:$0xff]
        %v870 = vld [vmem:[%s309 + $0xe58] sm:$0xff]
        %v871 = vld [vmem:[%s309 + $0xe60] sm:$0xff]
        %v872 = vld [vmem:[%s309 + $0xe68] sm:$0xff]
        %v873 = vld [vmem:[%s309 + $0xe70] sm:$0xff]
        %v874 = vld [vmem:[%s309 + $0xe78] sm:$0xff]
        %v875 = vld [vmem:[%s309 + $0xe80] sm:$0xff]
        %v876 = vld [vmem:[%s309 + $0xe88] sm:$0xff]
        %v877 = vld [vmem:[%s309 + $0xe90] sm:$0xff]
        %v878 = vld [vmem:[%s309 + $0xe98] sm:$0xff]
        %v879 = vld [vmem:[%s309 + $0xea0] sm:$0xff]
        %v880 = vld [vmem:[%s309 + $0xea8] sm:$0xff]
        %v881 = vld [vmem:[%s309 + $0xeb0] sm:$0xff]
        %v882 = vld [vmem:[%s309 + $0xeb8] sm:$0xff]
        %v883 = vld [vmem:[%s309 + $0xec0] sm:$0xff]
        %v884 = vld [vmem:[%s309 + $0xec8] sm:$0xff]
        %v885 = vld [vmem:[%s309 + $0xed0] sm:$0xff]
        %v886 = vld [vmem:[%s309 + $0xed8] sm:$0xff]
        %v887 = vld [vmem:[%s309 + $0xee0] sm:$0xff]
        %v888 = vld [vmem:[%s309 + $0xee8] sm:$0xff]
        %v889 = vld [vmem:[%s309 + $0xef0] sm:$0xff]
        %v890 = vld [vmem:[%s309 + $0xef8] sm:$0xff]
        %v891 = vld [vmem:[%s309 + $0xf00] sm:$0xff]
        %v892 = vld [vmem:[%s309 + $0xf08] sm:$0xff]
        %v893 = vld [vmem:[%s309 + $0xf10] sm:$0xff]
        %v894 = vld [vmem:[%s309 + $0xf18] sm:$0xff]
        %v895 = vld [vmem:[%s309 + $0xf20] sm:$0xff]
        %v896 = vld [vmem:[%s309 + $0xf28] sm:$0xff]
        %v897 = vld [vmem:[%s309 + $0xf30] sm:$0xff]
        %v898 = vld [vmem:[%s309 + $0xf38] sm:$0xff]
        %v899 = vld [vmem:[%s309 + $0xf40] sm:$0xff]
        %v900 = vld [vmem:[%s309 + $0xf48] sm:$0xff]
        %v901 = vld [vmem:[%s309 + $0xf50] sm:$0xff]
        %v902 = vld [vmem:[%s309 + $0xf58] sm:$0xff]
        %v903 = vld [vmem:[%s309 + $0xf60] sm:$0xff]
        %v904 = vld [vmem:[%s309 + $0xf68] sm:$0xff]
        %v905 = vld [vmem:[%s309 + $0xf70] sm:$0xff]
        %v906 = vld [vmem:[%s309 + $0xf78] sm:$0xff]
        %v907 = vld [vmem:[%s309 + $0xf80] sm:$0xff]
        %v908 = vld [vmem:[%s309 + $0xf88] sm:$0xff]
        %v909 = vld [vmem:[%s309 + $0xf90] sm:$0xff]
        %v910 = vld [vmem:[%s309 + $0xf98] sm:$0xff]
        %v911 = vld [vmem:[%s309 + $0xfa0] sm:$0xff]
        %v912 = vld [vmem:[%s309 + $0xfa8] sm:$0xff]
        %v913 = vld [vmem:[%s309 + $0xfb0] sm:$0xff]
        %v914 = vld [vmem:[%s309 + $0xfb8] sm:$0xff]
        %v915 = vld [vmem:[%s309 + $0xfc0] sm:$0xff]
        %v916 = vld [vmem:[%s309 + $0xfc8] sm:$0xff]
        %v917 = vld [vmem:[%s309 + $0xfd0] sm:$0xff]
        %v918 = vld [vmem:[%s309 + $0xfd8] sm:$0xff]
        %v919 = vld [vmem:[%s309 + $0xfe0] sm:$0xff]
        %v920 = vld [vmem:[%s309 + $0xfe8] sm:$0xff]
        %v921 = vld [vmem:[%s309 + $0xff0] sm:$0xff]
        %v922 = vld [vmem:[%s309 + $0xff8] sm:$0xff]
        %v923 = vld [vmem:[%s309 + $0x1000] sm:$0xff]
        %v924 = vld [vmem:[%s309 + $0x1008] sm:$0xff]
        %v925 = vld [vmem:[%s309 + $0x1010] sm:$0xff]
        %v926 = vld [vmem:[%s309 + $0x1018] sm:$0xff]
        %v927 = vld [vmem:[%s309 + $0x1020] sm:$0xff]
        %v928 = vld [vmem:[%s309 + $0x1028] sm:$0xff]
        %v929 = vld [vmem:[%s309 + $0x1030] sm:$0xff]
        %v930 = vld [vmem:[%s309 + $0x1038] sm:$0xff]
        %v931 = vld [vmem:[%s309 + $0x1040] sm:$0xff]
        %v932 = vld [vmem:[%s309 + $0x1048] sm:$0xff]
        %v933 = vld [vmem:[%s309 + $0x1050] sm:$0xff]
        %v934 = vld [vmem:[%s309 + $0x1058] sm:$0xff]
        %v935 = vld [vmem:[%s309 + $0x1060] sm:$0xff]
        %v936 = vld [vmem:[%s309 + $0x1068] sm:$0xff]
        %v937 = vld [vmem:[%s309 + $0x1070] sm:$0xff]
        %v938 = vld [vmem:[%s309 + $0x1078] sm:$0xff]
        %v939 = vld [vmem:[%s309 + $0x1080] sm:$0xff]
        %v940 = vld [vmem:[%s309 + $0x1088] sm:$0xff]
        %v941 = vld [vmem:[%s309 + $0x1090] sm:$0xff]
        %v942 = vld [vmem:[%s309 + $0x1098] sm:$0xff]
        %v943 = vld [vmem:[%s309 + $0x10a0] sm:$0xff]
        %v944 = vld [vmem:[%s309 + $0x10a8] sm:$0xff]
        %v945 = vld [vmem:[%s309 + $0x10b0] sm:$0xff]
        %v946 = vld [vmem:[%s309 + $0x10b8] sm:$0xff]
        %v947 = vld [vmem:[%s309 + $0x10c0] sm:$0xff]
        %v948 = vld [vmem:[%s309 + $0x10c8] sm:$0xff]
        %v949 = vld [vmem:[%s309 + $0x10d0] sm:$0xff]
        %v950 = vld [vmem:[%s309 + $0x10d8] sm:$0xff]
        %v951 = vld [vmem:[%s309 + $0x10e0] sm:$0xff]
        %v952 = vld [vmem:[%s309 + $0x10e8] sm:$0xff]
        %v953 = vld [vmem:[%s309 + $0x10f0] sm:$0xff]
        %v954 = vld [vmem:[%s309 + $0x10f8] sm:$0xff]
        %v955 = vld [vmem:[%s309 + $0x1100] sm:$0xff]
        %v956 = vld [vmem:[%s309 + $0x1108] sm:$0xff]
        %v957 = vld [vmem:[%s309 + $0x1110] sm:$0xff]
        %v958 = vld [vmem:[%s309 + $0x1118] sm:$0xff]
        %v959 = vld [vmem:[%s309 + $0x1120] sm:$0xff]
        %v960 = vld [vmem:[%s309 + $0x1128] sm:$0xff]
        %v961 = vld [vmem:[%s309 + $0x1130] sm:$0xff]
        %v962 = vld [vmem:[%s309 + $0x1138] sm:$0xff]
        %v963 = vld [vmem:[%s309 + $0x1140] sm:$0xff]
        %v964 = vld [vmem:[%s309 + $0x1148] sm:$0xff]
        %v965 = vld [vmem:[%s309 + $0x1150] sm:$0xff]
        %v966 = vld [vmem:[%s309 + $0x1158] sm:$0xff]
        %v967 = vld [vmem:[%s309 + $0x1160] sm:$0xff]
        %v968 = vld [vmem:[%s309 + $0x1168] sm:$0xff]
        %v969 = vld [vmem:[%s309 + $0x1170] sm:$0xff]
        %v970 = vld [vmem:[%s309 + $0x1178] sm:$0xff]
        %v971 = vld [vmem:[%s309 + $0x1180] sm:$0xff]
        %v972 = vld [vmem:[%s309 + $0x1188] sm:$0xff]
        %v973 = vld [vmem:[%s309 + $0x1190] sm:$0xff]
        %v974 = vld [vmem:[%s309 + $0x1198] sm:$0xff]
        %v975 = vld [vmem:[%s309 + $0x11a0] sm:$0xff]
        %v976 = vld [vmem:[%s309 + $0x11a8] sm:$0xff]
        %v977 = vld [vmem:[%s309 + $0x11b0] sm:$0xff]
        %v978 = vld [vmem:[%s309 + $0x11b8] sm:$0xff]
        %v979 = vld [vmem:[%s309 + $0x11c0] sm:$0xff]
        %v980 = vld [vmem:[%s309 + $0x11c8] sm:$0xff]
        %v981 = vld [vmem:[%s309 + $0x11d0] sm:$0xff]
        %v982 = vld [vmem:[%s309 + $0x11d8] sm:$0xff]
        %v983 = vld [vmem:[%s309 + $0x11e0] sm:$0xff]
        %v984 = vld [vmem:[%s309 + $0x11e8] sm:$0xff]
        %v985 = vld [vmem:[%s309 + $0x11f0] sm:$0xff]
        %v986 = vld [vmem:[%s309 + $0x11f8] sm:$0xff]
        %v987 = vld [vmem:[%s309 + $0x1200] sm:$0xff]
        %v988 = vld [vmem:[%s309 + $0x1208] sm:$0xff]
        %v989 = vld [vmem:[%s309 + $0x1210] sm:$0xff]
        %v990 = vld [vmem:[%s309 + $0x1218] sm:$0xff]
        %v991 = vld [vmem:[%s309 + $0x1220] sm:$0xff]
        %v992 = vld [vmem:[%s309 + $0x1228] sm:$0xff]
        %v993 = vld [vmem:[%s309 + $0x1230] sm:$0xff]
        %v994 = vld [vmem:[%s309 + $0x1238] sm:$0xff]
        %v995 = vld [vmem:[%s309 + $0x1240] sm:$0xff]
        %v996 = vld [vmem:[%s309 + $0x1248] sm:$0xff]
        %v997 = vld [vmem:[%s309 + $0x1250] sm:$0xff]
        %v998 = vld [vmem:[%s309 + $0x1258] sm:$0xff]
        %v999 = vld [vmem:[%s309 + $0x1260] sm:$0xff]
        %v1000 = vld [vmem:[%s309 + $0x1268] sm:$0xff]
        %v1001 = vld [vmem:[%s309 + $0x1270] sm:$0xff]
        %v1002 = vld [vmem:[%s309 + $0x1278] sm:$0xff]
        %v1003 = vld [vmem:[%s309 + $0x1280] sm:$0xff]
        %v1004 = vld [vmem:[%s309 + $0x1288] sm:$0xff]
        %v1005 = vld [vmem:[%s309 + $0x1290] sm:$0xff]
        %v1006 = vld [vmem:[%s309 + $0x1298] sm:$0xff]
        %v1007 = vld [vmem:[%s309 + $0x12a0] sm:$0xff]
        %v1008 = vld [vmem:[%s309 + $0x12a8] sm:$0xff]
        %v1009 = vld [vmem:[%s309 + $0x12b0] sm:$0xff]
        %v1010 = vld [vmem:[%s309 + $0x12b8] sm:$0xff]
        %v1011 = vld [vmem:[%s309 + $0x12c0] sm:$0xff]
        %v1012 = vld [vmem:[%s309 + $0x12c8] sm:$0xff]
        %v1013 = vld [vmem:[%s309 + $0x12d0] sm:$0xff]
        %v1014 = vld [vmem:[%s309 + $0x12d8] sm:$0xff]
        %v1015 = vld [vmem:[%s309 + $0x12e0] sm:$0xff]
        %v1016 = vld [vmem:[%s309 + $0x12e8] sm:$0xff]
        %v1017 = vld [vmem:[%s309 + $0x12f0] sm:$0xff]
        %v1018 = vld [vmem:[%s309 + $0x12f8] sm:$0xff]
        %v1019 = vld [vmem:[%s309 + $0x1300] sm:$0xff]
        %v1020 = vld [vmem:[%s309 + $0x1308] sm:$0xff]
        %v1021 = vld [vmem:[%s309 + $0x1310] sm:$0xff]
        %v1022 = vld [vmem:[%s309 + $0x1318] sm:$0xff]
        %v1023 = vld [vmem:[%s309 + $0x1320] sm:$0xff]
        %v1024 = vld [vmem:[%s309 + $0x1328] sm:$0xff]
        %v1025 = vld [vmem:[%s309 + $0x1330] sm:$0xff]
        %v1026 = vld [vmem:[%s309 + $0x1338] sm:$0xff]
        %v1027 = vld [vmem:[%s309 + $0x1340] sm:$0xff]
        %v1028 = vld [vmem:[%s309 + $0x1348] sm:$0xff]
        %v1029 = vld [vmem:[%s309 + $0x1350] sm:$0xff]
        %v1030 = vld [vmem:[%s309 + $0x1358] sm:$0xff]
        %v1031 = vld [vmem:[%s309 + $0x1360] sm:$0xff]
        %v1032 = vld [vmem:[%s309 + $0x1368] sm:$0xff]
        %v1033 = vld [vmem:[%s309 + $0x1370] sm:$0xff]
        %v1034 = vld [vmem:[%s309 + $0x1378] sm:$0xff]
        %v1035 = vld [vmem:[%s309 + $0x1380] sm:$0xff]
        %v1036 = vld [vmem:[%s309 + $0x1388] sm:$0xff]
        %v1037 = vld [vmem:[%s309 + $0x1390] sm:$0xff]
        %v1038 = vld [vmem:[%s309 + $0x1398] sm:$0xff]
        %v1039 = vld [vmem:[%s309 + $0x13a0] sm:$0xff]
        %v1040 = vld [vmem:[%s309 + $0x13a8] sm:$0xff]
        %v1041 = vld [vmem:[%s309 + $0x13b0] sm:$0xff]
        %v1042 = vld [vmem:[%s309 + $0x13b8] sm:$0xff]
        %v1043 = vld [vmem:[%s309 + $0x13c0] sm:$0xff]
        %v1044 = vld [vmem:[%s309 + $0x13c8] sm:$0xff]
        %v1045 = vld [vmem:[%s309 + $0x13d0] sm:$0xff]
        %v1046 = vld [vmem:[%s309 + $0x13d8] sm:$0xff]
        %v1047 = vld [vmem:[%s309 + $0x13e0] sm:$0xff]
        %v1048 = vld [vmem:[%s309 + $0x13e8] sm:$0xff]
        %v1049 = vld [vmem:[%s309 + $0x13f0] sm:$0xff]
        %v1050 = vld [vmem:[%s309 + $0x13f8] sm:$0xff]
        %v1051 = vld [vmem:[%s309 + $0x1400] sm:$0xff]
        %v1052 = vld [vmem:[%s309 + $0x1408] sm:$0xff]
        %v1053 = vld [vmem:[%s309 + $0x1410] sm:$0xff]
        %v1054 = vld [vmem:[%s309 + $0x1418] sm:$0xff]
        %v1055 = vld [vmem:[%s309 + $0x1420] sm:$0xff]
        %v1056 = vld [vmem:[%s309 + $0x1428] sm:$0xff]
        %v1057 = vld [vmem:[%s309 + $0x1430] sm:$0xff]
        %v1058 = vld [vmem:[%s309 + $0x1438] sm:$0xff]
        %v1059 = vld [vmem:[%s309 + $0x1440] sm:$0xff]
        %v1060 = vld [vmem:[%s309 + $0x1448] sm:$0xff]
        %v1061 = vld [vmem:[%s309 + $0x1450] sm:$0xff]
        %v1062 = vld [vmem:[%s309 + $0x1458] sm:$0xff]
        %v1063 = vld [vmem:[%s309 + $0x1460] sm:$0xff]
        %v1064 = vld [vmem:[%s309 + $0x1468] sm:$0xff]
        %v1065 = vld [vmem:[%s309 + $0x1470] sm:$0xff]
        %v1066 = vld [vmem:[%s309 + $0x1478] sm:$0xff]
        %v1067 = vld [vmem:[%s309 + $0x1480] sm:$0xff]
        %v1068 = vld [vmem:[%s309 + $0x1488] sm:$0xff]
        %v1069 = vld [vmem:[%s309 + $0x1490] sm:$0xff]
        %v1070 = vld [vmem:[%s309 + $0x1498] sm:$0xff]
        %v1071 = vld [vmem:[%s309 + $0x14a0] sm:$0xff]
        %v1072 = vld [vmem:[%s309 + $0x14a8] sm:$0xff]
        %v1073 = vld [vmem:[%s309 + $0x14b0] sm:$0xff]
        %v1074 = vld [vmem:[%s309 + $0x14b8] sm:$0xff]
        %v1075 = vld [vmem:[%s309 + $0x14c0] sm:$0xff]
        %v1076 = vld [vmem:[%s309 + $0x14c8] sm:$0xff]
        %v1077 = vld [vmem:[%s309 + $0x14d0] sm:$0xff]
        %v1078 = vld [vmem:[%s309 + $0x14d8] sm:$0xff]
        %v1079 = vld [vmem:[%s309 + $0x14e0] sm:$0xff]
        %v1080 = vld [vmem:[%s309 + $0x14e8] sm:$0xff]
        %v1081 = vld [vmem:[%s309 + $0x14f0] sm:$0xff]
        %v1082 = vld [vmem:[%s309 + $0x14f8] sm:$0xff]
        %v1083 = vld [vmem:[%s309 + $0x1500] sm:$0xff]
        %v1084 = vld [vmem:[%s309 + $0x1508] sm:$0xff]
        %v1085 = vld [vmem:[%s309 + $0x1510] sm:$0xff]
        %v1086 = vld [vmem:[%s309 + $0x1518] sm:$0xff]
        %v1087 = vld [vmem:[%s309 + $0x1520] sm:$0xff]
        %v1088 = vld [vmem:[%s309 + $0x1528] sm:$0xff]
        %v1089 = vld [vmem:[%s309 + $0x1530] sm:$0xff]
        %v1090 = vld [vmem:[%s309 + $0x1538] sm:$0xff]
        %v1091 = vld [vmem:[%s309 + $0x1540] sm:$0xff]
        %v1092 = vld [vmem:[%s309 + $0x1548] sm:$0xff]
        %v1093 = vld [vmem:[%s309 + $0x1550] sm:$0xff]
        %v1094 = vld [vmem:[%s309 + $0x1558] sm:$0xff]
        %v1095 = vld [vmem:[%s309 + $0x1560] sm:$0xff]
        %v1096 = vld [vmem:[%s309 + $0x1568] sm:$0xff]
        %v1097 = vld [vmem:[%s309 + $0x1570] sm:$0xff]
        %v1098 = vld [vmem:[%s309 + $0x1578] sm:$0xff]
        %v1099 = vld [vmem:[%s309 + $0x1580] sm:$0xff]
        %v1100 = vld [vmem:[%s309 + $0x1588] sm:$0xff]
        %v1101 = vld [vmem:[%s309 + $0x1590] sm:$0xff]
        %v1102 = vld [vmem:[%s309 + $0x1598] sm:$0xff]
        %v1103 = vld [vmem:[%s309 + $0x15a0] sm:$0xff]
        %v1104 = vld [vmem:[%s309 + $0x15a8] sm:$0xff]
        %v1105 = vld [vmem:[%s309 + $0x15b0] sm:$0xff]
        %v1106 = vld [vmem:[%s309 + $0x15b8] sm:$0xff]
        %v1107 = vld [vmem:[%s309 + $0x15c0] sm:$0xff]
        %v1108 = vld [vmem:[%s309 + $0x15c8] sm:$0xff]
        %v1109 = vld [vmem:[%s309 + $0x15d0] sm:$0xff]
        %v1110 = vld [vmem:[%s309 + $0x15d8] sm:$0xff]
        %v1111 = vld [vmem:[%s309 + $0x15e0] sm:$0xff]
        %v1112 = vld [vmem:[%s309 + $0x15e8] sm:$0xff]
        %v1113 = vld [vmem:[%s309 + $0x15f0] sm:$0xff]
        %v1114 = vld [vmem:[%s309 + $0x15f8] sm:$0xff]
        %v1115 = vld [vmem:[%s309 + $0x1600] sm:$0xff]
        %v1116 = vld [vmem:[%s309 + $0x1608] sm:$0xff]
        %v1117 = vld [vmem:[%s309 + $0x1610] sm:$0xff]
        %v1118 = vld [vmem:[%s309 + $0x1618] sm:$0xff]
        %v1119 = vld [vmem:[%s309 + $0x1620] sm:$0xff]
        %v1120 = vld [vmem:[%s309 + $0x1628] sm:$0xff]
        %v1121 = vld [vmem:[%s309 + $0x1630] sm:$0xff]
        %v1122 = vld [vmem:[%s309 + $0x1638] sm:$0xff]
        %v1123 = vld [vmem:[%s309 + $0x1640] sm:$0xff]
        %v1124 = vld [vmem:[%s309 + $0x1648] sm:$0xff]
        %v1125 = vld [vmem:[%s309 + $0x1650] sm:$0xff]
        %v1126 = vld [vmem:[%s309 + $0x1658] sm:$0xff]
        %v1127 = vld [vmem:[%s309 + $0x1660] sm:$0xff]
        %v1128 = vld [vmem:[%s309 + $0x1668] sm:$0xff]
        %v1129 = vld [vmem:[%s309 + $0x1670] sm:$0xff]
        %v1130 = vld [vmem:[%s309 + $0x1678] sm:$0xff]
        %v1131 = vld [vmem:[%s309 + $0x1680] sm:$0xff]
        %v1132 = vld [vmem:[%s309 + $0x1688] sm:$0xff]
        %v1133 = vld [vmem:[%s309 + $0x1690] sm:$0xff]
        %v1134 = vld [vmem:[%s309 + $0x1698] sm:$0xff]
        %v1135 = vld [vmem:[%s309 + $0x16a0] sm:$0xff]
        %v1136 = vld [vmem:[%s309 + $0x16a8] sm:$0xff]
        %v1137 = vld [vmem:[%s309 + $0x16b0] sm:$0xff]
        %v1138 = vld [vmem:[%s309 + $0x16b8] sm:$0xff]
        %v1139 = vld [vmem:[%s309 + $0x16c0] sm:$0xff]
        %v1140 = vld [vmem:[%s309 + $0x16c8] sm:$0xff]
        %v1141 = vld [vmem:[%s309 + $0x16d0] sm:$0xff]
        %v1142 = vld [vmem:[%s309 + $0x16d8] sm:$0xff]
        %v1143 = vld [vmem:[%s309 + $0x16e0] sm:$0xff]
        %v1144 = vld [vmem:[%s309 + $0x16e8] sm:$0xff]
        %v1145 = vld [vmem:[%s309 + $0x16f0] sm:$0xff]
        %v1146 = vld [vmem:[%s309 + $0x16f8] sm:$0xff]
        %v1147 = vld [vmem:[%s309 + $0x1700] sm:$0xff]
        %v1148 = vld [vmem:[%s309 + $0x1708] sm:$0xff]
        %v1149 = vld [vmem:[%s309 + $0x1710] sm:$0xff]
        %v1150 = vld [vmem:[%s309 + $0x1718] sm:$0xff]
        %v1151 = vld [vmem:[%s309 + $0x1720] sm:$0xff]
        %v1152 = vld [vmem:[%s309 + $0x1728] sm:$0xff]
        %v1153 = vld [vmem:[%s309 + $0x1730] sm:$0xff]
        %v1154 = vld [vmem:[%s309 + $0x1738] sm:$0xff]
        %v1155 = vld [vmem:[%s309 + $0x1740] sm:$0xff]
        %v1156 = vld [vmem:[%s309 + $0x1748] sm:$0xff]
        %v1157 = vld [vmem:[%s309 + $0x1750] sm:$0xff]
        %v1158 = vld [vmem:[%s309 + $0x1758] sm:$0xff]
        %v1159 = vld [vmem:[%s309 + $0x1760] sm:$0xff]
        %v1160 = vld [vmem:[%s309 + $0x1768] sm:$0xff]
        %v1161 = vld [vmem:[%s309 + $0x1770] sm:$0xff]
        %v1162 = vld [vmem:[%s309 + $0x1778] sm:$0xff]
        %v1163 = vld [vmem:[%s309 + $0x1780] sm:$0xff]
        %v1164 = vld [vmem:[%s309 + $0x1788] sm:$0xff]
        %v1165 = vld [vmem:[%s309 + $0x1790] sm:$0xff]
        %v1166 = vld [vmem:[%s309 + $0x1798] sm:$0xff]
        %v1167 = vld [vmem:[%s309 + $0x17a0] sm:$0xff]
        %v1168 = vld [vmem:[%s309 + $0x17a8] sm:$0xff]
        %v1169 = vld [vmem:[%s309 + $0x17b0] sm:$0xff]
        %v1170 = vld [vmem:[%s309 + $0x17b8] sm:$0xff]
        %v1171 = vld [vmem:[%s309 + $0x17c0] sm:$0xff]
        %v1172 = vld [vmem:[%s309 + $0x17c8] sm:$0xff]
        %v1173 = vld [vmem:[%s309 + $0x17d0] sm:$0xff]
        %v1174 = vld [vmem:[%s309 + $0x17d8] sm:$0xff]
        %v1175 = vld [vmem:[%s309 + $0x17e0] sm:$0xff]
        %v1176 = vld [vmem:[%s309 + $0x17e8] sm:$0xff]
        %v1177 = vld [vmem:[%s309 + $0x17f0] sm:$0xff]
        %v1178 = vld [vmem:[%s309 + $0x17f8] sm:$0xff]
        %v1179 = vld [vmem:[%s309 + $0x1800] sm:$0xff]
        %v1180 = vld [vmem:[%s309 + $0x1808] sm:$0xff]
        %v1181 = vld [vmem:[%s309 + $0x1810] sm:$0xff]
        %v1182 = vld [vmem:[%s309 + $0x1818] sm:$0xff]
        %v1183 = vld [vmem:[%s309 + $0x1820] sm:$0xff]
        %v1184 = vld [vmem:[%s309 + $0x1828] sm:$0xff]
        %v1185 = vld [vmem:[%s309 + $0x1830] sm:$0xff]
        %v1186 = vld [vmem:[%s309 + $0x1838] sm:$0xff]
        %v1187 = vld [vmem:[%s309 + $0x1840] sm:$0xff]
        %v1188 = vld [vmem:[%s309 + $0x1848] sm:$0xff]
        %v1189 = vld [vmem:[%s309 + $0x1850] sm:$0xff]
        %v1190 = vld [vmem:[%s309 + $0x1858] sm:$0xff]
        %v1191 = vld [vmem:[%s309 + $0x1860] sm:$0xff]
        %v1192 = vld [vmem:[%s309 + $0x1868] sm:$0xff]
        %v1193 = vld [vmem:[%s309 + $0x1870] sm:$0xff]
        %v1194 = vld [vmem:[%s309 + $0x1878] sm:$0xff]
        %v1195 = vld [vmem:[%s309 + $0x1880] sm:$0xff]
        %v1196 = vld [vmem:[%s309 + $0x1888] sm:$0xff]
        %v1197 = vld [vmem:[%s309 + $0x1890] sm:$0xff]
        %v1198 = vld [vmem:[%s309 + $0x1898] sm:$0xff]
        %v1199 = vld [vmem:[%s309 + $0x18a0] sm:$0xff]
        %v1200 = vld [vmem:[%s309 + $0x18a8] sm:$0xff]
        %v1201 = vld [vmem:[%s309 + $0x18b0] sm:$0xff]
        %v1202 = vld [vmem:[%s309 + $0x18b8] sm:$0xff]
        %v1203 = vld [vmem:[%s309 + $0x18c0] sm:$0xff]
        %v1204 = vld [vmem:[%s309 + $0x18c8] sm:$0xff]
        %v1205 = vld [vmem:[%s309 + $0x18d0] sm:$0xff]
        %v1206 = vld [vmem:[%s309 + $0x18d8] sm:$0xff]
        %v1207 = vld [vmem:[%s309 + $0x18e0] sm:$0xff]
        %v1208 = vld [vmem:[%s309 + $0x18e8] sm:$0xff]
        %v1209 = vld [vmem:[%s309 + $0x18f0] sm:$0xff]
        %v1210 = vld [vmem:[%s309 + $0x18f8] sm:$0xff]
        %v1211 = vld [vmem:[%s309 + $0x1900] sm:$0xff]
        %v1212 = vld [vmem:[%s309 + $0x1908] sm:$0xff]
        %v1213 = vld [vmem:[%s309 + $0x1910] sm:$0xff]
        %v1214 = vld [vmem:[%s309 + $0x1918] sm:$0xff]
        %v1215 = vld [vmem:[%s309 + $0x1920] sm:$0xff]
        %v1216 = vld [vmem:[%s309 + $0x1928] sm:$0xff]
        %v1217 = vld [vmem:[%s309 + $0x1930] sm:$0xff]
        %v1218 = vld [vmem:[%s309 + $0x1938] sm:$0xff]
        %v1219 = vld [vmem:[%s309 + $0x1940] sm:$0xff]
        %v1220 = vld [vmem:[%s309 + $0x1948] sm:$0xff]
        %v1221 = vld [vmem:[%s309 + $0x1950] sm:$0xff]
        %v1222 = vld [vmem:[%s309 + $0x1958] sm:$0xff]
        %v1223 = vld [vmem:[%s309 + $0x1960] sm:$0xff]
        %v1224 = vld [vmem:[%s309 + $0x1968] sm:$0xff]
        %v1225 = vld [vmem:[%s309 + $0x1970] sm:$0xff]
        %v1226 = vld [vmem:[%s309 + $0x1978] sm:$0xff]
        %v1227 = vld [vmem:[%s309 + $0x1980] sm:$0xff]
        %v1228 = vld [vmem:[%s309 + $0x1988] sm:$0xff]
        %v1229 = vld [vmem:[%s309 + $0x1990] sm:$0xff]
        %v1230 = vld [vmem:[%s309 + $0x1998] sm:$0xff]
        %v1231 = vld [vmem:[%s309 + $0x19a0] sm:$0xff]
        %v1232 = vld [vmem:[%s309 + $0x19a8] sm:$0xff]
        %v1233 = vld [vmem:[%s309 + $0x19b0] sm:$0xff]
        %v1234 = vld [vmem:[%s309 + $0x19b8] sm:$0xff]
        %v1235 = vld [vmem:[%s309 + $0x19c0] sm:$0xff]
        %v1236 = vld [vmem:[%s309 + $0x19c8] sm:$0xff]
        %v1237 = vld [vmem:[%s309 + $0x19d0] sm:$0xff]
        %v1238 = vld [vmem:[%s309 + $0x19d8] sm:$0xff]
        %v1239 = vld [vmem:[%s309 + $0x19e0] sm:$0xff]
        %v1240 = vld [vmem:[%s309 + $0x19e8] sm:$0xff]
        %v1241 = vld [vmem:[%s309 + $0x19f0] sm:$0xff]
        %v1242 = vld [vmem:[%s309 + $0x19f8] sm:$0xff]
        %v1243 = vld [vmem:[%s309 + $0x1a00] sm:$0xff]
        %v1244 = vld [vmem:[%s309 + $0x1a08] sm:$0xff]
        %v1245 = vld [vmem:[%s309 + $0x1a10] sm:$0xff]
        %v1246 = vld [vmem:[%s309 + $0x1a18] sm:$0xff]
        %v1247 = vld [vmem:[%s309 + $0x1a20] sm:$0xff]
        %v1248 = vld [vmem:[%s309 + $0x1a28] sm:$0xff]
        %v1249 = vld [vmem:[%s309 + $0x1a30] sm:$0xff]
        %v1250 = vld [vmem:[%s309 + $0x1a38] sm:$0xff]
        %v1251 = vld [vmem:[%s309 + $0x1a40] sm:$0xff]
        %v1252 = vld [vmem:[%s309 + $0x1a48] sm:$0xff]
        %v1253 = vld [vmem:[%s309 + $0x1a50] sm:$0xff]
        %v1254 = vld [vmem:[%s309 + $0x1a58] sm:$0xff]
        %v1255 = vld [vmem:[%s309 + $0x1a60] sm:$0xff]
        %v1256 = vld [vmem:[%s309 + $0x1a68] sm:$0xff]
        %v1257 = vld [vmem:[%s309 + $0x1a70] sm:$0xff]
        %v1258 = vld [vmem:[%s309 + $0x1a78] sm:$0xff]
        %v1259 = vld [vmem:[%s309 + $0x1a80] sm:$0xff]
        %v1260 = vld [vmem:[%s309 + $0x1a88] sm:$0xff]
        %v1261 = vld [vmem:[%s309 + $0x1a90] sm:$0xff]
        %v1262 = vld [vmem:[%s309 + $0x1a98] sm:$0xff]
        %v1263 = vld [vmem:[%s309 + $0x1aa0] sm:$0xff]
        %v1264 = vld [vmem:[%s309 + $0x1aa8] sm:$0xff]
        %v1265 = vld [vmem:[%s309 + $0x1ab0] sm:$0xff]
        %v1266 = vld [vmem:[%s309 + $0x1ab8] sm:$0xff]
        %v1267 = vld [vmem:[%s309 + $0x1ac0] sm:$0xff]
        %v1268 = vld [vmem:[%s309 + $0x1ac8] sm:$0xff]
        %v1269 = vld [vmem:[%s309 + $0x1ad0] sm:$0xff]
        %v1270 = vld [vmem:[%s309 + $0x1ad8] sm:$0xff]
        %v1271 = vld [vmem:[%s309 + $0x1ae0] sm:$0xff]
        %v1272 = vld [vmem:[%s309 + $0x1ae8] sm:$0xff]
        %v1273 = vld [vmem:[%s309 + $0x1af0] sm:$0xff]
        %v1274 = vld [vmem:[%s309 + $0x1af8] sm:$0xff]
        %v1275 = vld [vmem:[%s309 + $0x1b00] sm:$0xff]
        %v1276 = vld [vmem:[%s309 + $0x1b08] sm:$0xff]
        %v1277 = vld [vmem:[%s309 + $0x1b10] sm:$0xff]
        %v1278 = vld [vmem:[%s309 + $0x1b18] sm:$0xff]
        %v1279 = vld [vmem:[%s309 + $0x1b20] sm:$0xff]
        %v1280 = vld [vmem:[%s309 + $0x1b28] sm:$0xff]
        %v1281 = vld [vmem:[%s309 + $0x1b30] sm:$0xff]
        %v1282 = vld [vmem:[%s309 + $0x1b38] sm:$0xff]
        %v1283 = vld [vmem:[%s309 + $0x1b40] sm:$0xff]
        %v1284 = vld [vmem:[%s309 + $0x1b48] sm:$0xff]
        %v1285 = vld [vmem:[%s309 + $0x1b50] sm:$0xff]
        %v1286 = vld [vmem:[%s309 + $0x1b58] sm:$0xff]
        %v1287 = vld [vmem:[%s309 + $0x1b60] sm:$0xff]
        %v1288 = vld [vmem:[%s309 + $0x1b68] sm:$0xff]
        %v1289 = vld [vmem:[%s309 + $0x1b70] sm:$0xff]
        %v1290 = vld [vmem:[%s309 + $0x1b78] sm:$0xff]
        %v1291 = vld [vmem:[%s309 + $0x1b80] sm:$0xff]
        %v1292 = vld [vmem:[%s309 + $0x1b88] sm:$0xff]
        %v1293 = vld [vmem:[%s309 + $0x1b90] sm:$0xff]
        %v1294 = vld [vmem:[%s309 + $0x1b98] sm:$0xff]
        %v1295 = vld [vmem:[%s309 + $0x1ba0] sm:$0xff]
        %v1296 = vld [vmem:[%s309 + $0x1ba8] sm:$0xff]
        %v1297 = vld [vmem:[%s309 + $0x1bb0] sm:$0xff]
        %v1298 = vld [vmem:[%s309 + $0x1bb8] sm:$0xff]
        %v1299 = vld [vmem:[%s309 + $0x1bc0] sm:$0xff]
        %v1300 = vld [vmem:[%s309 + $0x1bc8] sm:$0xff]
        %v1301 = vld [vmem:[%s309 + $0x1bd0] sm:$0xff]
        %v1302 = vld [vmem:[%s309 + $0x1bd8] sm:$0xff]
        %v1303 = vld [vmem:[%s309 + $0x1be0] sm:$0xff]
        %v1304 = vld [vmem:[%s309 + $0x1be8] sm:$0xff]
        %v1305 = vld [vmem:[%s309 + $0x1bf0] sm:$0xff]
        %v1306 = vld [vmem:[%s309 + $0x1bf8] sm:$0xff]
        %v1314 = vcombine.high %v404, %v404
        %v1316 = vunpack.c.l.s4 1966171168
        %v1317 = vunpack.c.0.s8 %v1316
        %v1318 = vlaneseq
        %v1319 = vshrl.u32 %v1318, 7
        %v1320 = vsub.s32 %v1317, %v1319
        %v1321 = vrot.slane %v404, %v1320
        %v1323 = vunpack.c.l.s4 1966171168
        %v1324 = vunpack.c.0.s8 %v1323
        %v1325 = vlaneseq
        %v1326 = vshrl.u32 %v1325, 7
        %v1327 = vsub.s32 %v1324, %v1326
        %v1328 = vrot.slane %v1314, %v1327
        %v1329 = vcombine.high %v1321, %v1321
        %v1330 = vcombine.high %v1328, %v1328
        %v1332 = vunpack.c.l.s4 1966171168
        %v1333 = vunpack.c.0.s8 %v1332
        %v1334 = vlaneseq
        %v1335 = vshrl.u32 %v1334, 7
        %v1336 = vsub.s32 %v1333, %v1335
        %v1337 = vrot.slane %v1321, %v1336
        %v1339 = vunpack.c.l.s4 1966171168
        %v1340 = vunpack.c.0.s8 %v1339
        %v1341 = vlaneseq
        %v1342 = vshrl.u32 %v1341, 7
        %v1343 = vsub.s32 %v1340, %v1342
        %v1344 = vrot.slane %v1328, %v1343
        %v1346 = vunpack.c.l.s4 1966171168
        %v1347 = vunpack.c.0.s8 %v1346
        %v1348 = vlaneseq
        %v1349 = vshrl.u32 %v1348, 7
        %v1350 = vsub.s32 %v1347, %v1349
        %v1351 = vrot.slane %v1329, %v1350
        %v1353 = vunpack.c.l.s4 1966171168
        %v1354 = vunpack.c.0.s8 %v1353
        %v1355 = vlaneseq
        %v1356 = vshrl.u32 %v1355, 7
        %v1357 = vsub.s32 %v1354, %v1356
        %v1358 = vrot.slane %v1330, %v1357
        %v1359 = vcombine.high %v1337, %v1337
        %v1360 = vcombine.high %v1344, %v1344
        %v1361 = vcombine.high %v1351, %v1351
        %v1362 = vcombine.high %v1358, %v1358
        %v1363 = vcombine.high %v405, %v405
        %v1365 = vunpack.c.l.s4 1966171168
        %v1366 = vunpack.c.0.s8 %v1365
        %v1367 = vlaneseq
        %v1368 = vshrl.u32 %v1367, 7
        %v1369 = vsub.s32 %v1366, %v1368
        %v1370 = vrot.slane %v405, %v1369
        %v1372 = vunpack.c.l.s4 1966171168
        %v1373 = vunpack.c.0.s8 %v1372
        %v1374 = vlaneseq
        %v1375 = vshrl.u32 %v1374, 7
        %v1376 = vsub.s32 %v1373, %v1375
        %v1377 = vrot.slane %v1363, %v1376
        %v1378 = vcombine.high %v1370, %v1370
        %v1379 = vcombine.high %v1377, %v1377
        %v1381 = vunpack.c.l.s4 1966171168
        %v1382 = vunpack.c.0.s8 %v1381
        %v1383 = vlaneseq
        %v1384 = vshrl.u32 %v1383, 7
        %v1385 = vsub.s32 %v1382, %v1384
        %v1386 = vrot.slane %v1370, %v1385
        %v1388 = vunpack.c.l.s4 1966171168
        %v1389 = vunpack.c.0.s8 %v1388
        %v1390 = vlaneseq
        %v1391 = vshrl.u32 %v1390, 7
        %v1392 = vsub.s32 %v1389, %v1391
        %v1393 = vrot.slane %v1377, %v1392
        %v1395 = vunpack.c.l.s4 1966171168
        %v1396 = vunpack.c.0.s8 %v1395
        %v1397 = vlaneseq
        %v1398 = vshrl.u32 %v1397, 7
        %v1399 = vsub.s32 %v1396, %v1398
        %v1400 = vrot.slane %v1378, %v1399
        %v1402 = vunpack.c.l.s4 1966171168
        %v1403 = vunpack.c.0.s8 %v1402
        %v1404 = vlaneseq
        %v1405 = vshrl.u32 %v1404, 7
        %v1406 = vsub.s32 %v1403, %v1405
        %v1407 = vrot.slane %v1379, %v1406
        %v1408 = vcombine.high %v1386, %v1386
        %v1409 = vcombine.high %v1393, %v1393
        %v1410 = vcombine.high %v1400, %v1400
        %v1411 = vcombine.high %v1407, %v1407
        %v1412 = vcombine.high %v406, %v406
        %v1414 = vunpack.c.l.s4 1966171168
        %v1415 = vunpack.c.0.s8 %v1414
        %v1416 = vlaneseq
        %v1417 = vshrl.u32 %v1416, 7
        %v1418 = vsub.s32 %v1415, %v1417
        %v1419 = vrot.slane %v406, %v1418
        %v1421 = vunpack.c.l.s4 1966171168
        %v1422 = vunpack.c.0.s8 %v1421
        %v1423 = vlaneseq
        %v1424 = vshrl.u32 %v1423, 7
        %v1425 = vsub.s32 %v1422, %v1424
        %v1426 = vrot.slane %v1412, %v1425
        %v1427 = vcombine.high %v1419, %v1419
        %v1428 = vcombine.high %v1426, %v1426
        %v1430 = vunpack.c.l.s4 1966171168
        %v1431 = vunpack.c.0.s8 %v1430
        %v1432 = vlaneseq
        %v1433 = vshrl.u32 %v1432, 7
        %v1434 = vsub.s32 %v1431, %v1433
        %v1435 = vrot.slane %v1419, %v1434
        %v1437 = vunpack.c.l.s4 1966171168
        %v1438 = vunpack.c.0.s8 %v1437
        %v1439 = vlaneseq
        %v1440 = vshrl.u32 %v1439, 7
        %v1441 = vsub.s32 %v1438, %v1440
        %v1442 = vrot.slane %v1426, %v1441
        %v1444 = vunpack.c.l.s4 1966171168
        %v1445 = vunpack.c.0.s8 %v1444
        %v1446 = vlaneseq
        %v1447 = vshrl.u32 %v1446, 7
        %v1448 = vsub.s32 %v1445, %v1447
        %v1449 = vrot.slane %v1427, %v1448
        %v1451 = vunpack.c.l.s4 1966171168
        %v1452 = vunpack.c.0.s8 %v1451
        %v1453 = vlaneseq
        %v1454 = vshrl.u32 %v1453, 7
        %v1455 = vsub.s32 %v1452, %v1454
        %v1456 = vrot.slane %v1428, %v1455
        %v1457 = vcombine.high %v1435, %v1435
        %v1458 = vcombine.high %v1442, %v1442
        %v1459 = vcombine.high %v1449, %v1449
        %v1460 = vcombine.high %v1456, %v1456
        %v1461 = vcombine.high %v407, %v407
        %v1463 = vunpack.c.l.s4 1966171168
        %v1464 = vunpack.c.0.s8 %v1463
        %v1465 = vlaneseq
        %v1466 = vshrl.u32 %v1465, 7
        %v1467 = vsub.s32 %v1464, %v1466
        %v1468 = vrot.slane %v407, %v1467
        %v1470 = vunpack.c.l.s4 1966171168
        %v1471 = vunpack.c.0.s8 %v1470
        %v1472 = vlaneseq
        %v1473 = vshrl.u32 %v1472, 7
        %v1474 = vsub.s32 %v1471, %v1473
        %v1475 = vrot.slane %v1461, %v1474
        %v1476 = vcombine.high %v1468, %v1468
        %v1477 = vcombine.high %v1475, %v1475
        %v1479 = vunpack.c.l.s4 1966171168
        %v1480 = vunpack.c.0.s8 %v1479
        %v1481 = vlaneseq
        %v1482 = vshrl.u32 %v1481, 7
        %v1483 = vsub.s32 %v1480, %v1482
        %v1484 = vrot.slane %v1468, %v1483
        %v1486 = vunpack.c.l.s4 1966171168
        %v1487 = vunpack.c.0.s8 %v1486
        %v1488 = vlaneseq
        %v1489 = vshrl.u32 %v1488, 7
        %v1490 = vsub.s32 %v1487, %v1489
        %v1491 = vrot.slane %v1475, %v1490
        %v1493 = vunpack.c.l.s4 1966171168
        %v1494 = vunpack.c.0.s8 %v1493
        %v1495 = vlaneseq
        %v1496 = vshrl.u32 %v1495, 7
        %v1497 = vsub.s32 %v1494, %v1496
        %v1498 = vrot.slane %v1476, %v1497
        %v1500 = vunpack.c.l.s4 1966171168
        %v1501 = vunpack.c.0.s8 %v1500
        %v1502 = vlaneseq
        %v1503 = vshrl.u32 %v1502, 7
        %v1504 = vsub.s32 %v1501, %v1503
        %v1505 = vrot.slane %v1477, %v1504
        %v1506 = vcombine.high %v1484, %v1484
        %v1507 = vcombine.high %v1491, %v1491
        %v1508 = vcombine.high %v1498, %v1498
        %v1509 = vcombine.high %v1505, %v1505
        %v1510 = vcombine.high %v408, %v408
        %v1512 = vunpack.c.l.s4 1966171168
        %v1513 = vunpack.c.0.s8 %v1512
        %v1514 = vlaneseq
        %v1515 = vshrl.u32 %v1514, 7
        %v1516 = vsub.s32 %v1513, %v1515
        %v1517 = vrot.slane %v408, %v1516
        %v1519 = vunpack.c.l.s4 1966171168
        %v1520 = vunpack.c.0.s8 %v1519
        %v1521 = vlaneseq
        %v1522 = vshrl.u32 %v1521, 7
        %v1523 = vsub.s32 %v1520, %v1522
        %v1524 = vrot.slane %v1510, %v1523
        %v1525 = vcombine.high %v1517, %v1517
        %v1526 = vcombine.high %v1524, %v1524
        %v1528 = vunpack.c.l.s4 1966171168
        %v1529 = vunpack.c.0.s8 %v1528
        %v1530 = vlaneseq
        %v1531 = vshrl.u32 %v1530, 7
        %v1532 = vsub.s32 %v1529, %v1531
        %v1533 = vrot.slane %v1517, %v1532
        %v1535 = vunpack.c.l.s4 1966171168
        %v1536 = vunpack.c.0.s8 %v1535
        %v1537 = vlaneseq
        %v1538 = vshrl.u32 %v1537, 7
        %v1539 = vsub.s32 %v1536, %v1538
        %v1540 = vrot.slane %v1524, %v1539
        %v1542 = vunpack.c.l.s4 1966171168
        %v1543 = vunpack.c.0.s8 %v1542
        %v1544 = vlaneseq
        %v1545 = vshrl.u32 %v1544, 7
        %v1546 = vsub.s32 %v1543, %v1545
        %v1547 = vrot.slane %v1525, %v1546
        %v1549 = vunpack.c.l.s4 1966171168
        %v1550 = vunpack.c.0.s8 %v1549
        %v1551 = vlaneseq
        %v1552 = vshrl.u32 %v1551, 7
        %v1553 = vsub.s32 %v1550, %v1552
        %v1554 = vrot.slane %v1526, %v1553
        %v1555 = vcombine.high %v1533, %v1533
        %v1556 = vcombine.high %v1540, %v1540
        %v1557 = vcombine.high %v1547, %v1547
        %v1558 = vcombine.high %v1554, %v1554
        %v1559 = vcombine.high %v409, %v409
        %v1561 = vunpack.c.l.s4 1966171168
        %v1562 = vunpack.c.0.s8 %v1561
        %v1563 = vlaneseq
        %v1564 = vshrl.u32 %v1563, 7
        %v1565 = vsub.s32 %v1562, %v1564
        %v1566 = vrot.slane %v409, %v1565
        %v1568 = vunpack.c.l.s4 1966171168
        %v1569 = vunpack.c.0.s8 %v1568
        %v1570 = vlaneseq
        %v1571 = vshrl.u32 %v1570, 7
        %v1572 = vsub.s32 %v1569, %v1571
        %v1573 = vrot.slane %v1559, %v1572
        %v1574 = vcombine.high %v1566, %v1566
        %v1575 = vcombine.high %v1573, %v1573
        %v1577 = vunpack.c.l.s4 1966171168
        %v1578 = vunpack.c.0.s8 %v1577
        %v1579 = vlaneseq
        %v1580 = vshrl.u32 %v1579, 7
        %v1581 = vsub.s32 %v1578, %v1580
        %v1582 = vrot.slane %v1566, %v1581
        %v1584 = vunpack.c.l.s4 1966171168
        %v1585 = vunpack.c.0.s8 %v1584
        %v1586 = vlaneseq
        %v1587 = vshrl.u32 %v1586, 7
        %v1588 = vsub.s32 %v1585, %v1587
        %v1589 = vrot.slane %v1573, %v1588
        %v1591 = vunpack.c.l.s4 1966171168
        %v1592 = vunpack.c.0.s8 %v1591
        %v1593 = vlaneseq
        %v1594 = vshrl.u32 %v1593, 7
        %v1595 = vsub.s32 %v1592, %v1594
        %v1596 = vrot.slane %v1574, %v1595
        %v1598 = vunpack.c.l.s4 1966171168
        %v1599 = vunpack.c.0.s8 %v1598
        %v1600 = vlaneseq
        %v1601 = vshrl.u32 %v1600, 7
        %v1602 = vsub.s32 %v1599, %v1601
        %v1603 = vrot.slane %v1575, %v1602
        %v1604 = vcombine.high %v1582, %v1582
        %v1605 = vcombine.high %v1589, %v1589
        %v1606 = vcombine.high %v1596, %v1596
        %v1607 = vcombine.high %v1603, %v1603
        %v1608 = vcombine.high %v410, %v410
        %v1610 = vunpack.c.l.s4 1966171168
        %v1611 = vunpack.c.0.s8 %v1610
        %v1612 = vlaneseq
        %v1613 = vshrl.u32 %v1612, 7
        %v1614 = vsub.s32 %v1611, %v1613
        %v1615 = vrot.slane %v410, %v1614
        %v1617 = vunpack.c.l.s4 1966171168
        %v1618 = vunpack.c.0.s8 %v1617
        %v1619 = vlaneseq
        %v1620 = vshrl.u32 %v1619, 7
        %v1621 = vsub.s32 %v1618, %v1620
        %v1622 = vrot.slane %v1608, %v1621
        %v1623 = vcombine.high %v1615, %v1615
        %v1624 = vcombine.high %v1622, %v1622
        %v1626 = vunpack.c.l.s4 1966171168
        %v1627 = vunpack.c.0.s8 %v1626
        %v1628 = vlaneseq
        %v1629 = vshrl.u32 %v1628, 7
        %v1630 = vsub.s32 %v1627, %v1629
        %v1631 = vrot.slane %v1615, %v1630
        %v1633 = vunpack.c.l.s4 1966171168
        %v1634 = vunpack.c.0.s8 %v1633
        %v1635 = vlaneseq
        %v1636 = vshrl.u32 %v1635, 7
        %v1637 = vsub.s32 %v1634, %v1636
        %v1638 = vrot.slane %v1622, %v1637
        %v1640 = vunpack.c.l.s4 1966171168
        %v1641 = vunpack.c.0.s8 %v1640
        %v1642 = vlaneseq
        %v1643 = vshrl.u32 %v1642, 7
        %v1644 = vsub.s32 %v1641, %v1643
        %v1645 = vrot.slane %v1623, %v1644
        %v1647 = vunpack.c.l.s4 1966171168
        %v1648 = vunpack.c.0.s8 %v1647
        %v1649 = vlaneseq
        %v1650 = vshrl.u32 %v1649, 7
        %v1651 = vsub.s32 %v1648, %v1650
        %v1652 = vrot.slane %v1624, %v1651
        %v1653 = vcombine.high %v1631, %v1631
        %v1654 = vcombine.high %v1638, %v1638
        %v1655 = vcombine.high %v1645, %v1645
        %v1656 = vcombine.high %v1652, %v1652
        %v2609 = vunpack.c.l.b16 %v411
        %v2610 = vunpack.c.h.b16 %v411
        %v2611 = vunpack.c.l.b16 %v412
        %v2612 = vunpack.c.h.b16 %v412
        %v2613 = vunpack.c.l.b16 %v413
        %v2614 = vunpack.c.h.b16 %v413
        %v2615 = vunpack.c.l.b16 %v414
        %v2616 = vunpack.c.h.b16 %v414
        %v2617 = vunpack.c.l.b16 %v415
        %v2618 = vunpack.c.h.b16 %v415
        %v2619 = vunpack.c.l.b16 %v416
        %v2620 = vunpack.c.h.b16 %v416
        %v2621 = vunpack.c.l.b16 %v417
        %v2622 = vunpack.c.h.b16 %v417
        %v2623 = vunpack.c.l.b16 %v418
        %v2624 = vunpack.c.h.b16 %v418
        %v2625 = vunpack.c.l.b16 %v419
        %v2626 = vunpack.c.h.b16 %v419
        %v2627 = vunpack.c.l.b16 %v420
        %v2628 = vunpack.c.h.b16 %v420
        %v2629 = vunpack.c.l.b16 %v421
        %v2630 = vunpack.c.h.b16 %v421
        %v2631 = vunpack.c.l.b16 %v422
        %v2632 = vunpack.c.h.b16 %v422
        %v2633 = vunpack.c.l.b16 %v423
        %v2634 = vunpack.c.h.b16 %v423
        %v2635 = vunpack.c.l.b16 %v424
        %v2636 = vunpack.c.h.b16 %v424
        %v2637 = vunpack.c.l.b16 %v425
        %v2638 = vunpack.c.h.b16 %v425
        %v2639 = vunpack.c.l.b16 %v426
        %v2640 = vunpack.c.h.b16 %v426
        %v2641 = vunpack.c.l.b16 %v427
        %v2642 = vunpack.c.h.b16 %v427
        %v2643 = vunpack.c.l.b16 %v428
        %v2644 = vunpack.c.h.b16 %v428
        %v2645 = vunpack.c.l.b16 %v429
        %v2646 = vunpack.c.h.b16 %v429
        %v2647 = vunpack.c.l.b16 %v430
        %v2648 = vunpack.c.h.b16 %v430
        %v2649 = vunpack.c.l.b16 %v431
        %v2650 = vunpack.c.h.b16 %v431
        %v2651 = vunpack.c.l.b16 %v432
        %v2652 = vunpack.c.h.b16 %v432
        %v2653 = vunpack.c.l.b16 %v433
        %v2654 = vunpack.c.h.b16 %v433
        %v2655 = vunpack.c.l.b16 %v434
        %v2656 = vunpack.c.h.b16 %v434
        %v2657 = vunpack.c.l.b16 %v435
        %v2658 = vunpack.c.h.b16 %v435
        %v2659 = vunpack.c.l.b16 %v436
        %v2660 = vunpack.c.h.b16 %v436
        %v2661 = vunpack.c.l.b16 %v437
        %v2662 = vunpack.c.h.b16 %v437
        %v2663 = vunpack.c.l.b16 %v438
        %v2664 = vunpack.c.h.b16 %v438
        %v2665 = vunpack.c.l.b16 %v439
        %v2666 = vunpack.c.h.b16 %v439
        %v2667 = vunpack.c.l.b16 %v440
        %v2668 = vunpack.c.h.b16 %v440
        %v2669 = vunpack.c.l.b16 %v441
        %v2670 = vunpack.c.h.b16 %v441
        %v2671 = vunpack.c.l.b16 %v442
        %v2672 = vunpack.c.h.b16 %v442
        %v2673 = vunpack.c.l.b16 %v443
        %v2674 = vunpack.c.h.b16 %v443
        %v2675 = vunpack.c.l.b16 %v444
        %v2676 = vunpack.c.h.b16 %v444
        %v2677 = vunpack.c.l.b16 %v445
        %v2678 = vunpack.c.h.b16 %v445
        %v2679 = vunpack.c.l.b16 %v446
        %v2680 = vunpack.c.h.b16 %v446
        %v2681 = vunpack.c.l.b16 %v447
        %v2682 = vunpack.c.h.b16 %v447
        %v2683 = vunpack.c.l.b16 %v448
        %v2684 = vunpack.c.h.b16 %v448
        %v2685 = vunpack.c.l.b16 %v449
        %v2686 = vunpack.c.h.b16 %v449
        %v2687 = vunpack.c.l.b16 %v450
        %v2688 = vunpack.c.h.b16 %v450
        %v2689 = vunpack.c.l.b16 %v451
        %v2690 = vunpack.c.h.b16 %v451
        %v2691 = vunpack.c.l.b16 %v452
        %v2692 = vunpack.c.h.b16 %v452
        %v2693 = vunpack.c.l.b16 %v453
        %v2694 = vunpack.c.h.b16 %v453
        %v2695 = vunpack.c.l.b16 %v454
        %v2696 = vunpack.c.h.b16 %v454
        %v2697 = vunpack.c.l.b16 %v455
        %v2698 = vunpack.c.h.b16 %v455
        %v2699 = vunpack.c.l.b16 %v456
        %v2700 = vunpack.c.h.b16 %v456
        %v2701 = vunpack.c.l.b16 %v457
        %v2702 = vunpack.c.h.b16 %v457
        %v2703 = vunpack.c.l.b16 %v458
        %v2704 = vunpack.c.h.b16 %v458
        %v2705 = vunpack.c.l.b16 %v459
        %v2706 = vunpack.c.h.b16 %v459
        %v2707 = vunpack.c.l.b16 %v460
        %v2708 = vunpack.c.h.b16 %v460
        %v2709 = vunpack.c.l.b16 %v461
        %v2710 = vunpack.c.h.b16 %v461
        %v2711 = vunpack.c.l.b16 %v462
        %v2712 = vunpack.c.h.b16 %v462
        %v2713 = vunpack.c.l.b16 %v463
        %v2714 = vunpack.c.h.b16 %v463
        %v2715 = vunpack.c.l.b16 %v464
        %v2716 = vunpack.c.h.b16 %v464
        %v2717 = vunpack.c.l.b16 %v465
        %v2718 = vunpack.c.h.b16 %v465
        %v2719 = vunpack.c.l.b16 %v466
        %v2720 = vunpack.c.h.b16 %v466
        %v2721 = vunpack.c.l.b16 %v467
        %v2722 = vunpack.c.h.b16 %v467
        %v2723 = vunpack.c.l.b16 %v468
        %v2724 = vunpack.c.h.b16 %v468
        %v2725 = vunpack.c.l.b16 %v469
        %v2726 = vunpack.c.h.b16 %v469
        %v2727 = vunpack.c.l.b16 %v470
        %v2728 = vunpack.c.h.b16 %v470
        %v2729 = vunpack.c.l.b16 %v471
        %v2730 = vunpack.c.h.b16 %v471
        %v2731 = vunpack.c.l.b16 %v472
        %v2732 = vunpack.c.h.b16 %v472
        %v2733 = vunpack.c.l.b16 %v473
        %v2734 = vunpack.c.h.b16 %v473
        %v2735 = vunpack.c.l.b16 %v474
        %v2736 = vunpack.c.h.b16 %v474
        %v2737 = vunpack.c.l.b16 %v475
        %v2738 = vunpack.c.h.b16 %v475
        %v2739 = vunpack.c.l.b16 %v476
        %v2740 = vunpack.c.h.b16 %v476
        %v2741 = vunpack.c.l.b16 %v477
        %v2742 = vunpack.c.h.b16 %v477
        %v2743 = vunpack.c.l.b16 %v478
        %v2744 = vunpack.c.h.b16 %v478
        %v2745 = vunpack.c.l.b16 %v479
        %v2746 = vunpack.c.h.b16 %v479
        %v2747 = vunpack.c.l.b16 %v480
        %v2748 = vunpack.c.h.b16 %v480
        %v2749 = vunpack.c.l.b16 %v481
        %v2750 = vunpack.c.h.b16 %v481
        %v2751 = vunpack.c.l.b16 %v482
        %v2752 = vunpack.c.h.b16 %v482
        %v2753 = vunpack.c.l.b16 %v483
        %v2754 = vunpack.c.h.b16 %v483
        %v2755 = vunpack.c.l.b16 %v484
        %v2756 = vunpack.c.h.b16 %v484
        %v2757 = vunpack.c.l.b16 %v485
        %v2758 = vunpack.c.h.b16 %v485
        %v2759 = vunpack.c.l.b16 %v486
        %v2760 = vunpack.c.h.b16 %v486
        %v2761 = vunpack.c.l.b16 %v487
        %v2762 = vunpack.c.h.b16 %v487
        %v2763 = vunpack.c.l.b16 %v488
        %v2764 = vunpack.c.h.b16 %v488
        %v2765 = vunpack.c.l.b16 %v489
        %v2766 = vunpack.c.h.b16 %v489
        %v2767 = vunpack.c.l.b16 %v490
        %v2768 = vunpack.c.h.b16 %v490
        %v2769 = vunpack.c.l.b16 %v491
        %v2770 = vunpack.c.h.b16 %v491
        %v2771 = vunpack.c.l.b16 %v492
        %v2772 = vunpack.c.h.b16 %v492
        %v2773 = vunpack.c.l.b16 %v493
        %v2774 = vunpack.c.h.b16 %v493
        %v2775 = vunpack.c.l.b16 %v494
        %v2776 = vunpack.c.h.b16 %v494
        %v2777 = vunpack.c.l.b16 %v495
        %v2778 = vunpack.c.h.b16 %v495
        %v2779 = vunpack.c.l.b16 %v496
        %v2780 = vunpack.c.h.b16 %v496
        %v2781 = vunpack.c.l.b16 %v497
        %v2782 = vunpack.c.h.b16 %v497
        %v2783 = vunpack.c.l.b16 %v498
        %v2784 = vunpack.c.h.b16 %v498
        %v2785 = vunpack.c.l.b16 %v499
        %v2786 = vunpack.c.h.b16 %v499
        %v2787 = vunpack.c.l.b16 %v500
        %v2788 = vunpack.c.h.b16 %v500
        %v2789 = vunpack.c.l.b16 %v501
        %v2790 = vunpack.c.h.b16 %v501
        %v2791 = vunpack.c.l.b16 %v502
        %v2792 = vunpack.c.h.b16 %v502
        %v2793 = vunpack.c.l.b16 %v503
        %v2794 = vunpack.c.h.b16 %v503
        %v2795 = vunpack.c.l.b16 %v504
        %v2796 = vunpack.c.h.b16 %v504
        %v2797 = vunpack.c.l.b16 %v505
        %v2798 = vunpack.c.h.b16 %v505
        %v2799 = vunpack.c.l.b16 %v506
        %v2800 = vunpack.c.h.b16 %v506
        %v2801 = vunpack.c.l.b16 %v507
        %v2802 = vunpack.c.h.b16 %v507
        %v2803 = vunpack.c.l.b16 %v508
        %v2804 = vunpack.c.h.b16 %v508
        %v2805 = vunpack.c.l.b16 %v509
        %v2806 = vunpack.c.h.b16 %v509
        %v2807 = vunpack.c.l.b16 %v510
        %v2808 = vunpack.c.h.b16 %v510
        %v2809 = vunpack.c.l.b16 %v511
        %v2810 = vunpack.c.h.b16 %v511
        %v2811 = vunpack.c.l.b16 %v512
        %v2812 = vunpack.c.h.b16 %v512
        %v2813 = vunpack.c.l.b16 %v513
        %v2814 = vunpack.c.h.b16 %v513
        %v2815 = vunpack.c.l.b16 %v514
        %v2816 = vunpack.c.h.b16 %v514
        %v2817 = vunpack.c.l.b16 %v515
        %v2818 = vunpack.c.h.b16 %v515
        %v2819 = vunpack.c.l.b16 %v516
        %v2820 = vunpack.c.h.b16 %v516
        %v2821 = vunpack.c.l.b16 %v517
        %v2822 = vunpack.c.h.b16 %v517
        %v2823 = vunpack.c.l.b16 %v518
        %v2824 = vunpack.c.h.b16 %v518
        %v2825 = vunpack.c.l.b16 %v519
        %v2826 = vunpack.c.h.b16 %v519
        %v2827 = vunpack.c.l.b16 %v520
        %v2828 = vunpack.c.h.b16 %v520
        %v2829 = vunpack.c.l.b16 %v521
        %v2830 = vunpack.c.h.b16 %v521
        %v2831 = vunpack.c.l.b16 %v522
        %v2832 = vunpack.c.h.b16 %v522
        %v2833 = vunpack.c.l.b16 %v523
        %v2834 = vunpack.c.h.b16 %v523
        %v2835 = vunpack.c.l.b16 %v524
        %v2836 = vunpack.c.h.b16 %v524
        %v2837 = vunpack.c.l.b16 %v525
        %v2838 = vunpack.c.h.b16 %v525
        %v2839 = vunpack.c.l.b16 %v526
        %v2840 = vunpack.c.h.b16 %v526
        %v2841 = vunpack.c.l.b16 %v527
        %v2842 = vunpack.c.h.b16 %v527
        %v2843 = vunpack.c.l.b16 %v528
        %v2844 = vunpack.c.h.b16 %v528
        %v2845 = vunpack.c.l.b16 %v529
        %v2846 = vunpack.c.h.b16 %v529
        %v2847 = vunpack.c.l.b16 %v530
        %v2848 = vunpack.c.h.b16 %v530
        %v2849 = vunpack.c.l.b16 %v531
        %v2850 = vunpack.c.h.b16 %v531
        %v2851 = vunpack.c.l.b16 %v532
        %v2852 = vunpack.c.h.b16 %v532
        %v2853 = vunpack.c.l.b16 %v533
        %v2854 = vunpack.c.h.b16 %v533
        %v2855 = vunpack.c.l.b16 %v534
        %v2856 = vunpack.c.h.b16 %v534
        %v2857 = vunpack.c.l.b16 %v535
        %v2858 = vunpack.c.h.b16 %v535
        %v2859 = vunpack.c.l.b16 %v536
        %v2860 = vunpack.c.h.b16 %v536
        %v2861 = vunpack.c.l.b16 %v537
        %v2862 = vunpack.c.h.b16 %v537
        %v2863 = vunpack.c.l.b16 %v538
        %v2864 = vunpack.c.h.b16 %v538
        %v2865 = vunpack.c.l.b16 %v539
        %v2866 = vunpack.c.h.b16 %v539
        %v2867 = vunpack.c.l.b16 %v540
        %v2868 = vunpack.c.h.b16 %v540
        %v2869 = vunpack.c.l.b16 %v541
        %v2870 = vunpack.c.h.b16 %v541
        %v2871 = vunpack.c.l.b16 %v542
        %v2872 = vunpack.c.h.b16 %v542
        %v2873 = vunpack.c.l.b16 %v543
        %v2874 = vunpack.c.h.b16 %v543
        %v2875 = vunpack.c.l.b16 %v544
        %v2876 = vunpack.c.h.b16 %v544
        %v2877 = vunpack.c.l.b16 %v545
        %v2878 = vunpack.c.h.b16 %v545
        %v2879 = vunpack.c.l.b16 %v546
        %v2880 = vunpack.c.h.b16 %v546
        %v2881 = vunpack.c.l.b16 %v547
        %v2882 = vunpack.c.h.b16 %v547
        %v2883 = vunpack.c.l.b16 %v548
        %v2884 = vunpack.c.h.b16 %v548
        %v2885 = vunpack.c.l.b16 %v549
        %v2886 = vunpack.c.h.b16 %v549
        %v2887 = vunpack.c.l.b16 %v550
        %v2888 = vunpack.c.h.b16 %v550
        %v2889 = vunpack.c.l.b16 %v551
        %v2890 = vunpack.c.h.b16 %v551
        %v2891 = vunpack.c.l.b16 %v552
        %v2892 = vunpack.c.h.b16 %v552
        %v2893 = vunpack.c.l.b16 %v553
        %v2894 = vunpack.c.h.b16 %v553
        %v2895 = vunpack.c.l.b16 %v554
        %v2896 = vunpack.c.h.b16 %v554
        %v2897 = vunpack.c.l.b16 %v555
        %v2898 = vunpack.c.h.b16 %v555
        %v2899 = vunpack.c.l.b16 %v556
        %v2900 = vunpack.c.h.b16 %v556
        %v2901 = vunpack.c.l.b16 %v557
        %v2902 = vunpack.c.h.b16 %v557
        %v2903 = vunpack.c.l.b16 %v558
        %v2904 = vunpack.c.h.b16 %v558
        %v2905 = vunpack.c.l.b16 %v559
        %v2906 = vunpack.c.h.b16 %v559
        %v2907 = vunpack.c.l.b16 %v560
        %v2908 = vunpack.c.h.b16 %v560
        %v2909 = vunpack.c.l.b16 %v561
        %v2910 = vunpack.c.h.b16 %v561
        %v2911 = vunpack.c.l.b16 %v562
        %v2912 = vunpack.c.h.b16 %v562
        %v2913 = vunpack.c.l.b16 %v563
        %v2914 = vunpack.c.h.b16 %v563
        %v2915 = vunpack.c.l.b16 %v564
        %v2916 = vunpack.c.h.b16 %v564
        %v2917 = vunpack.c.l.b16 %v565
        %v2918 = vunpack.c.h.b16 %v565
        %v2919 = vunpack.c.l.b16 %v566
        %v2920 = vunpack.c.h.b16 %v566
        %v2921 = vunpack.c.l.b16 %v567
        %v2922 = vunpack.c.h.b16 %v567
        %v2923 = vunpack.c.l.b16 %v568
        %v2924 = vunpack.c.h.b16 %v568
        %v2925 = vunpack.c.l.b16 %v569
        %v2926 = vunpack.c.h.b16 %v569
        %v2927 = vunpack.c.l.b16 %v570
        %v2928 = vunpack.c.h.b16 %v570
        %v2929 = vunpack.c.l.b16 %v571
        %v2930 = vunpack.c.h.b16 %v571
        %v2931 = vunpack.c.l.b16 %v572
        %v2932 = vunpack.c.h.b16 %v572
        %v2933 = vunpack.c.l.b16 %v573
        %v2934 = vunpack.c.h.b16 %v573
        %v2935 = vunpack.c.l.b16 %v574
        %v2936 = vunpack.c.h.b16 %v574
        %v2937 = vunpack.c.l.b16 %v575
        %v2938 = vunpack.c.h.b16 %v575
        %v2939 = vunpack.c.l.b16 %v576
        %v2940 = vunpack.c.h.b16 %v576
        %v2941 = vunpack.c.l.b16 %v577
        %v2942 = vunpack.c.h.b16 %v577
        %v2943 = vunpack.c.l.b16 %v578
        %v2944 = vunpack.c.h.b16 %v578
        %v2945 = vunpack.c.l.b16 %v579
        %v2946 = vunpack.c.h.b16 %v579
        %v2947 = vunpack.c.l.b16 %v580
        %v2948 = vunpack.c.h.b16 %v580
        %v2949 = vunpack.c.l.b16 %v581
        %v2950 = vunpack.c.h.b16 %v581
        %v2951 = vunpack.c.l.b16 %v582
        %v2952 = vunpack.c.h.b16 %v582
        %v2953 = vunpack.c.l.b16 %v583
        %v2954 = vunpack.c.h.b16 %v583
        %v2955 = vunpack.c.l.b16 %v584
        %v2956 = vunpack.c.h.b16 %v584
        %v2957 = vunpack.c.l.b16 %v585
        %v2958 = vunpack.c.h.b16 %v585
        %v2959 = vunpack.c.l.b16 %v586
        %v2960 = vunpack.c.h.b16 %v586
        %v2961 = vunpack.c.l.b16 %v587
        %v2962 = vunpack.c.h.b16 %v587
        %v2963 = vunpack.c.l.b16 %v588
        %v2964 = vunpack.c.h.b16 %v588
        %v2965 = vunpack.c.l.b16 %v589
        %v2966 = vunpack.c.h.b16 %v589
        %v2967 = vunpack.c.l.b16 %v590
        %v2968 = vunpack.c.h.b16 %v590
        %v2969 = vunpack.c.l.b16 %v591
        %v2970 = vunpack.c.h.b16 %v591
        %v2971 = vunpack.c.l.b16 %v592
        %v2972 = vunpack.c.h.b16 %v592
        %v2973 = vunpack.c.l.b16 %v593
        %v2974 = vunpack.c.h.b16 %v593
        %v2975 = vunpack.c.l.b16 %v594
        %v2976 = vunpack.c.h.b16 %v594
        %v2977 = vunpack.c.l.b16 %v595
        %v2978 = vunpack.c.h.b16 %v595
        %v2979 = vunpack.c.l.b16 %v596
        %v2980 = vunpack.c.h.b16 %v596
        %v2981 = vunpack.c.l.b16 %v597
        %v2982 = vunpack.c.h.b16 %v597
        %v2983 = vunpack.c.l.b16 %v598
        %v2984 = vunpack.c.h.b16 %v598
        %v2985 = vunpack.c.l.b16 %v599
        %v2986 = vunpack.c.h.b16 %v599
        %v2987 = vunpack.c.l.b16 %v600
        %v2988 = vunpack.c.h.b16 %v600
        %v2989 = vunpack.c.l.b16 %v601
        %v2990 = vunpack.c.h.b16 %v601
        %v2991 = vunpack.c.l.b16 %v602
        %v2992 = vunpack.c.h.b16 %v602
        %v2993 = vunpack.c.l.b16 %v603
        %v2994 = vunpack.c.h.b16 %v603
        %v2995 = vunpack.c.l.b16 %v604
        %v2996 = vunpack.c.h.b16 %v604
        %v2997 = vunpack.c.l.b16 %v605
        %v2998 = vunpack.c.h.b16 %v605
        %v2999 = vunpack.c.l.b16 %v606
        %v3000 = vunpack.c.h.b16 %v606
        %v3001 = vunpack.c.l.b16 %v607
        %v3002 = vunpack.c.h.b16 %v607
        %v3003 = vunpack.c.l.b16 %v608
        %v3004 = vunpack.c.h.b16 %v608
        %v3005 = vunpack.c.l.b16 %v609
        %v3006 = vunpack.c.h.b16 %v609
        %v3007 = vunpack.c.l.b16 %v610
        %v3008 = vunpack.c.h.b16 %v610
        %v3009 = vunpack.c.l.b16 %v611
        %v3010 = vunpack.c.h.b16 %v611
        %v3011 = vunpack.c.l.b16 %v612
        %v3012 = vunpack.c.h.b16 %v612
        %v3013 = vunpack.c.l.b16 %v613
        %v3014 = vunpack.c.h.b16 %v613
        %v3015 = vunpack.c.l.b16 %v614
        %v3016 = vunpack.c.h.b16 %v614
        %v3017 = vunpack.c.l.b16 %v615
        %v3018 = vunpack.c.h.b16 %v615
        %v3019 = vunpack.c.l.b16 %v616
        %v3020 = vunpack.c.h.b16 %v616
        %v3021 = vunpack.c.l.b16 %v617
        %v3022 = vunpack.c.h.b16 %v617
        %v3023 = vunpack.c.l.b16 %v618
        %v3024 = vunpack.c.h.b16 %v618
        %v3025 = vunpack.c.l.b16 %v619
        %v3026 = vunpack.c.h.b16 %v619
        %v3027 = vunpack.c.l.b16 %v620
        %v3028 = vunpack.c.h.b16 %v620
        %v3029 = vunpack.c.l.b16 %v621
        %v3030 = vunpack.c.h.b16 %v621
        %v3031 = vunpack.c.l.b16 %v622
        %v3032 = vunpack.c.h.b16 %v622
        %v3033 = vunpack.c.l.b16 %v623
        %v3034 = vunpack.c.h.b16 %v623
        %v3035 = vunpack.c.l.b16 %v624
        %v3036 = vunpack.c.h.b16 %v624
        %v3037 = vunpack.c.l.b16 %v625
        %v3038 = vunpack.c.h.b16 %v625
        %v3039 = vunpack.c.l.b16 %v626
        %v3040 = vunpack.c.h.b16 %v626
        %v3041 = vunpack.c.l.b16 %v627
        %v3042 = vunpack.c.h.b16 %v627
        %v3043 = vunpack.c.l.b16 %v628
        %v3044 = vunpack.c.h.b16 %v628
        %v3045 = vunpack.c.l.b16 %v629
        %v3046 = vunpack.c.h.b16 %v629
        %v3047 = vunpack.c.l.b16 %v630
        %v3048 = vunpack.c.h.b16 %v630
        %v3049 = vunpack.c.l.b16 %v631
        %v3050 = vunpack.c.h.b16 %v631
        %v3051 = vunpack.c.l.b16 %v632
        %v3052 = vunpack.c.h.b16 %v632
        %v3053 = vunpack.c.l.b16 %v633
        %v3054 = vunpack.c.h.b16 %v633
        %v3055 = vunpack.c.l.b16 %v634
        %v3056 = vunpack.c.h.b16 %v634
        %v3057 = vunpack.c.l.b16 %v635
        %v3058 = vunpack.c.h.b16 %v635
        %v3059 = vunpack.c.l.b16 %v636
        %v3060 = vunpack.c.h.b16 %v636
        %v3061 = vunpack.c.l.b16 %v637
        %v3062 = vunpack.c.h.b16 %v637
        %v3063 = vunpack.c.l.b16 %v638
        %v3064 = vunpack.c.h.b16 %v638
        %v3065 = vunpack.c.l.b16 %v639
        %v3066 = vunpack.c.h.b16 %v639
        %v3067 = vunpack.c.l.b16 %v640
        %v3068 = vunpack.c.h.b16 %v640
        %v3069 = vunpack.c.l.b16 %v641
        %v3070 = vunpack.c.h.b16 %v641
        %v3071 = vunpack.c.l.b16 %v642
        %v3072 = vunpack.c.h.b16 %v642
        %v3073 = vunpack.c.l.b16 %v643
        %v3074 = vunpack.c.h.b16 %v643
        %v3075 = vunpack.c.l.b16 %v644
        %v3076 = vunpack.c.h.b16 %v644
        %v3077 = vunpack.c.l.b16 %v645
        %v3078 = vunpack.c.h.b16 %v645
        %v3079 = vunpack.c.l.b16 %v646
        %v3080 = vunpack.c.h.b16 %v646
        %v3081 = vunpack.c.l.b16 %v647
        %v3082 = vunpack.c.h.b16 %v647
        %v3083 = vunpack.c.l.b16 %v648
        %v3084 = vunpack.c.h.b16 %v648
        %v3085 = vunpack.c.l.b16 %v649
        %v3086 = vunpack.c.h.b16 %v649
        %v3087 = vunpack.c.l.b16 %v650
        %v3088 = vunpack.c.h.b16 %v650
        %v3089 = vunpack.c.l.b16 %v651
        %v3090 = vunpack.c.h.b16 %v651
        %v3091 = vunpack.c.l.b16 %v652
        %v3092 = vunpack.c.h.b16 %v652
        %v3093 = vunpack.c.l.b16 %v653
        %v3094 = vunpack.c.h.b16 %v653
        %v3095 = vunpack.c.l.b16 %v654
        %v3096 = vunpack.c.h.b16 %v654
        %v3097 = vunpack.c.l.b16 %v655
        %v3098 = vunpack.c.h.b16 %v655
        %v3099 = vunpack.c.l.b16 %v656
        %v3100 = vunpack.c.h.b16 %v656
        %v3101 = vunpack.c.l.b16 %v657
        %v3102 = vunpack.c.h.b16 %v657
        %v3103 = vunpack.c.l.b16 %v658
        %v3104 = vunpack.c.h.b16 %v658
        %v3105 = vunpack.c.l.b16 %v659
        %v3106 = vunpack.c.h.b16 %v659
        %v3107 = vunpack.c.l.b16 %v660
        %v3108 = vunpack.c.h.b16 %v660
        %v3109 = vunpack.c.l.b16 %v661
        %v3110 = vunpack.c.h.b16 %v661
        %v3111 = vunpack.c.l.b16 %v662
        %v3112 = vunpack.c.h.b16 %v662
        %v3113 = vunpack.c.l.b16 %v663
        %v3114 = vunpack.c.h.b16 %v663
        %v3115 = vunpack.c.l.b16 %v664
        %v3116 = vunpack.c.h.b16 %v664
        %v3117 = vunpack.c.l.b16 %v665
        %v3118 = vunpack.c.h.b16 %v665
        %v3119 = vunpack.c.l.b16 %v666
        %v3120 = vunpack.c.h.b16 %v666
        %v3121 = vunpack.c.l.b16 %v667
        %v3122 = vunpack.c.h.b16 %v667
        %v3123 = vunpack.c.l.b16 %v668
        %v3124 = vunpack.c.h.b16 %v668
        %v3125 = vunpack.c.l.b16 %v669
        %v3126 = vunpack.c.h.b16 %v669
        %v3127 = vunpack.c.l.b16 %v670
        %v3128 = vunpack.c.h.b16 %v670
        %v3129 = vunpack.c.l.b16 %v671
        %v3130 = vunpack.c.h.b16 %v671
        %v3131 = vunpack.c.l.b16 %v672
        %v3132 = vunpack.c.h.b16 %v672
        %v3133 = vunpack.c.l.b16 %v673
        %v3134 = vunpack.c.h.b16 %v673
        %v3135 = vunpack.c.l.b16 %v674
        %v3136 = vunpack.c.h.b16 %v674
        %v3137 = vunpack.c.l.b16 %v675
        %v3138 = vunpack.c.h.b16 %v675
        %v3139 = vunpack.c.l.b16 %v676
        %v3140 = vunpack.c.h.b16 %v676
        %v3141 = vunpack.c.l.b16 %v677
        %v3142 = vunpack.c.h.b16 %v677
        %v3143 = vunpack.c.l.b16 %v678
        %v3144 = vunpack.c.h.b16 %v678
        %v3145 = vunpack.c.l.b16 %v679
        %v3146 = vunpack.c.h.b16 %v679
        %v3147 = vunpack.c.l.b16 %v680
        %v3148 = vunpack.c.h.b16 %v680
        %v3149 = vunpack.c.l.b16 %v681
        %v3150 = vunpack.c.h.b16 %v681
        %v3151 = vunpack.c.l.b16 %v682
        %v3152 = vunpack.c.h.b16 %v682
        %v3153 = vunpack.c.l.b16 %v683
        %v3154 = vunpack.c.h.b16 %v683
        %v3155 = vunpack.c.l.b16 %v684
        %v3156 = vunpack.c.h.b16 %v684
        %v3157 = vunpack.c.l.b16 %v685
        %v3158 = vunpack.c.h.b16 %v685
        %v3159 = vunpack.c.l.b16 %v686
        %v3160 = vunpack.c.h.b16 %v686
        %v3161 = vunpack.c.l.b16 %v687
        %v3162 = vunpack.c.h.b16 %v687
        %v3163 = vunpack.c.l.b16 %v688
        %v3164 = vunpack.c.h.b16 %v688
        %v3165 = vunpack.c.l.b16 %v689
        %v3166 = vunpack.c.h.b16 %v689
        %v3167 = vunpack.c.l.b16 %v690
        %v3168 = vunpack.c.h.b16 %v690
        %v3169 = vunpack.c.l.b16 %v691
        %v3170 = vunpack.c.h.b16 %v691
        %v3171 = vunpack.c.l.b16 %v692
        %v3172 = vunpack.c.h.b16 %v692
        %v3173 = vunpack.c.l.b16 %v693
        %v3174 = vunpack.c.h.b16 %v693
        %v3175 = vunpack.c.l.b16 %v694
        %v3176 = vunpack.c.h.b16 %v694
        %v3177 = vunpack.c.l.b16 %v695
        %v3178 = vunpack.c.h.b16 %v695
        %v3179 = vunpack.c.l.b16 %v696
        %v3180 = vunpack.c.h.b16 %v696
        %v3181 = vunpack.c.l.b16 %v697
        %v3182 = vunpack.c.h.b16 %v697
        %v3183 = vunpack.c.l.b16 %v698
        %v3184 = vunpack.c.h.b16 %v698
        %v3185 = vunpack.c.l.b16 %v699
        %v3186 = vunpack.c.h.b16 %v699
        %v3187 = vunpack.c.l.b16 %v700
        %v3188 = vunpack.c.h.b16 %v700
        %v3189 = vunpack.c.l.b16 %v701
        %v3190 = vunpack.c.h.b16 %v701
        %v3191 = vunpack.c.l.b16 %v702
        %v3192 = vunpack.c.h.b16 %v702
        %v3193 = vunpack.c.l.b16 %v703
        %v3194 = vunpack.c.h.b16 %v703
        %v3195 = vunpack.c.l.b16 %v704
        %v3196 = vunpack.c.h.b16 %v704
        %v3197 = vunpack.c.l.b16 %v705
        %v3198 = vunpack.c.h.b16 %v705
        %v3199 = vunpack.c.l.b16 %v706
        %v3200 = vunpack.c.h.b16 %v706
        %v3201 = vunpack.c.l.b16 %v707
        %v3202 = vunpack.c.h.b16 %v707
        %v3203 = vunpack.c.l.b16 %v708
        %v3204 = vunpack.c.h.b16 %v708
        %v3205 = vunpack.c.l.b16 %v709
        %v3206 = vunpack.c.h.b16 %v709
        %v3207 = vunpack.c.l.b16 %v710
        %v3208 = vunpack.c.h.b16 %v710
        %v3209 = vunpack.c.l.b16 %v711
        %v3210 = vunpack.c.h.b16 %v711
        %v3211 = vunpack.c.l.b16 %v712
        %v3212 = vunpack.c.h.b16 %v712
        %v3213 = vunpack.c.l.b16 %v713
        %v3214 = vunpack.c.h.b16 %v713
        %v3215 = vunpack.c.l.b16 %v714
        %v3216 = vunpack.c.h.b16 %v714
        %v3217 = vunpack.c.l.b16 %v715
        %v3218 = vunpack.c.h.b16 %v715
        %v3219 = vunpack.c.l.b16 %v716
        %v3220 = vunpack.c.h.b16 %v716
        %v3221 = vunpack.c.l.b16 %v717
        %v3222 = vunpack.c.h.b16 %v717
        %v3223 = vunpack.c.l.b16 %v718
        %v3224 = vunpack.c.h.b16 %v718
        %v3225 = vunpack.c.l.b16 %v719
        %v3226 = vunpack.c.h.b16 %v719
        %v3227 = vunpack.c.l.b16 %v720
        %v3228 = vunpack.c.h.b16 %v720
        %v3229 = vunpack.c.l.b16 %v721
        %v3230 = vunpack.c.h.b16 %v721
        %v3231 = vunpack.c.l.b16 %v722
        %v3232 = vunpack.c.h.b16 %v722
        %v3233 = vunpack.c.l.b16 %v723
        %v3234 = vunpack.c.h.b16 %v723
        %v3235 = vunpack.c.l.b16 %v724
        %v3236 = vunpack.c.h.b16 %v724
        %v3237 = vunpack.c.l.b16 %v725
        %v3238 = vunpack.c.h.b16 %v725
        %v3239 = vunpack.c.l.b16 %v726
        %v3240 = vunpack.c.h.b16 %v726
        %v3241 = vunpack.c.l.b16 %v727
        %v3242 = vunpack.c.h.b16 %v727
        %v3243 = vunpack.c.l.b16 %v728
        %v3244 = vunpack.c.h.b16 %v728
        %v3245 = vunpack.c.l.b16 %v729
        %v3246 = vunpack.c.h.b16 %v729
        %v3247 = vunpack.c.l.b16 %v730
        %v3248 = vunpack.c.h.b16 %v730
        %v3249 = vunpack.c.l.b16 %v731
        %v3250 = vunpack.c.h.b16 %v731
        %v3251 = vunpack.c.l.b16 %v732
        %v3252 = vunpack.c.h.b16 %v732
        %v3253 = vunpack.c.l.b16 %v733
        %v3254 = vunpack.c.h.b16 %v733
        %v3255 = vunpack.c.l.b16 %v734
        %v3256 = vunpack.c.h.b16 %v734
        %v3257 = vunpack.c.l.b16 %v735
        %v3258 = vunpack.c.h.b16 %v735
        %v3259 = vunpack.c.l.b16 %v736
        %v3260 = vunpack.c.h.b16 %v736
        %v3261 = vunpack.c.l.b16 %v737
        %v3262 = vunpack.c.h.b16 %v737
        %v3263 = vunpack.c.l.b16 %v738
        %v3264 = vunpack.c.h.b16 %v738
        %v3265 = vunpack.c.l.b16 %v739
        %v3266 = vunpack.c.h.b16 %v739
        %v3267 = vunpack.c.l.b16 %v740
        %v3268 = vunpack.c.h.b16 %v740
        %v3269 = vunpack.c.l.b16 %v741
        %v3270 = vunpack.c.h.b16 %v741
        %v3271 = vunpack.c.l.b16 %v742
        %v3272 = vunpack.c.h.b16 %v742
        %v3273 = vunpack.c.l.b16 %v743
        %v3274 = vunpack.c.h.b16 %v743
        %v3275 = vunpack.c.l.b16 %v744
        %v3276 = vunpack.c.h.b16 %v744
        %v3277 = vunpack.c.l.b16 %v745
        %v3278 = vunpack.c.h.b16 %v745
        %v3279 = vunpack.c.l.b16 %v746
        %v3280 = vunpack.c.h.b16 %v746
        %v3281 = vunpack.c.l.b16 %v747
        %v3282 = vunpack.c.h.b16 %v747
        %v3283 = vunpack.c.l.b16 %v748
        %v3284 = vunpack.c.h.b16 %v748
        %v3285 = vunpack.c.l.b16 %v749
        %v3286 = vunpack.c.h.b16 %v749
        %v3287 = vunpack.c.l.b16 %v750
        %v3288 = vunpack.c.h.b16 %v750
        %v3289 = vunpack.c.l.b16 %v751
        %v3290 = vunpack.c.h.b16 %v751
        %v3291 = vunpack.c.l.b16 %v752
        %v3292 = vunpack.c.h.b16 %v752
        %v3293 = vunpack.c.l.b16 %v753
        %v3294 = vunpack.c.h.b16 %v753
        %v3295 = vunpack.c.l.b16 %v754
        %v3296 = vunpack.c.h.b16 %v754
        %v3297 = vunpack.c.l.b16 %v755
        %v3298 = vunpack.c.h.b16 %v755
        %v3299 = vunpack.c.l.b16 %v756
        %v3300 = vunpack.c.h.b16 %v756
        %v3301 = vunpack.c.l.b16 %v757
        %v3302 = vunpack.c.h.b16 %v757
        %v3303 = vunpack.c.l.b16 %v758
        %v3304 = vunpack.c.h.b16 %v758
        %v3305 = vunpack.c.l.b16 %v759
        %v3306 = vunpack.c.h.b16 %v759
        %v3307 = vunpack.c.l.b16 %v760
        %v3308 = vunpack.c.h.b16 %v760
        %v3309 = vunpack.c.l.b16 %v761
        %v3310 = vunpack.c.h.b16 %v761
        %v3311 = vunpack.c.l.b16 %v762
        %v3312 = vunpack.c.h.b16 %v762
        %v3313 = vunpack.c.l.b16 %v763
        %v3314 = vunpack.c.h.b16 %v763
        %v3315 = vunpack.c.l.b16 %v764
        %v3316 = vunpack.c.h.b16 %v764
        %v3317 = vunpack.c.l.b16 %v765
        %v3318 = vunpack.c.h.b16 %v765
        %v3319 = vunpack.c.l.b16 %v766
        %v3320 = vunpack.c.h.b16 %v766
        %v3321 = vunpack.c.l.b16 %v767
        %v3322 = vunpack.c.h.b16 %v767
        %v3323 = vunpack.c.l.b16 %v768
        %v3324 = vunpack.c.h.b16 %v768
        %v3325 = vunpack.c.l.b16 %v769
        %v3326 = vunpack.c.h.b16 %v769
        %v3327 = vunpack.c.l.b16 %v770
        %v3328 = vunpack.c.h.b16 %v770
        %v3329 = vunpack.c.l.b16 %v771
        %v3330 = vunpack.c.h.b16 %v771
        %v3331 = vunpack.c.l.b16 %v772
        %v3332 = vunpack.c.h.b16 %v772
        %v3333 = vunpack.c.l.b16 %v773
        %v3334 = vunpack.c.h.b16 %v773
        %v3335 = vunpack.c.l.b16 %v774
        %v3336 = vunpack.c.h.b16 %v774
        %v3337 = vunpack.c.l.b16 %v775
        %v3338 = vunpack.c.h.b16 %v775
        %v3339 = vunpack.c.l.b16 %v776
        %v3340 = vunpack.c.h.b16 %v776
        %v3341 = vunpack.c.l.b16 %v777
        %v3342 = vunpack.c.h.b16 %v777
        %v3343 = vunpack.c.l.b16 %v778
        %v3344 = vunpack.c.h.b16 %v778
        %v3345 = vunpack.c.l.b16 %v779
        %v3346 = vunpack.c.h.b16 %v779
        %v3347 = vunpack.c.l.b16 %v780
        %v3348 = vunpack.c.h.b16 %v780
        %v3349 = vunpack.c.l.b16 %v781
        %v3350 = vunpack.c.h.b16 %v781
        %v3351 = vunpack.c.l.b16 %v782
        %v3352 = vunpack.c.h.b16 %v782
        %v3353 = vunpack.c.l.b16 %v783
        %v3354 = vunpack.c.h.b16 %v783
        %v3355 = vunpack.c.l.b16 %v784
        %v3356 = vunpack.c.h.b16 %v784
        %v3357 = vunpack.c.l.b16 %v785
        %v3358 = vunpack.c.h.b16 %v785
        %v3359 = vunpack.c.l.b16 %v786
        %v3360 = vunpack.c.h.b16 %v786
        %v3361 = vunpack.c.l.b16 %v787
        %v3362 = vunpack.c.h.b16 %v787
        %v3363 = vunpack.c.l.b16 %v788
        %v3364 = vunpack.c.h.b16 %v788
        %v3365 = vunpack.c.l.b16 %v789
        %v3366 = vunpack.c.h.b16 %v789
        %v3367 = vunpack.c.l.b16 %v790
        %v3368 = vunpack.c.h.b16 %v790
        %v3369 = vunpack.c.l.b16 %v791
        %v3370 = vunpack.c.h.b16 %v791
        %v3371 = vunpack.c.l.b16 %v792
        %v3372 = vunpack.c.h.b16 %v792
        %v3373 = vunpack.c.l.b16 %v793
        %v3374 = vunpack.c.h.b16 %v793
        %v3375 = vunpack.c.l.b16 %v794
        %v3376 = vunpack.c.h.b16 %v794
        %v3377 = vunpack.c.l.b16 %v795
        %v3378 = vunpack.c.h.b16 %v795
        %v3379 = vunpack.c.l.b16 %v796
        %v3380 = vunpack.c.h.b16 %v796
        %v3381 = vunpack.c.l.b16 %v797
        %v3382 = vunpack.c.h.b16 %v797
        %v3383 = vunpack.c.l.b16 %v798
        %v3384 = vunpack.c.h.b16 %v798
        %v3385 = vunpack.c.l.b16 %v799
        %v3386 = vunpack.c.h.b16 %v799
        %v3387 = vunpack.c.l.b16 %v800
        %v3388 = vunpack.c.h.b16 %v800
        %v3389 = vunpack.c.l.b16 %v801
        %v3390 = vunpack.c.h.b16 %v801
        %v3391 = vunpack.c.l.b16 %v802
        %v3392 = vunpack.c.h.b16 %v802
        %v3393 = vunpack.c.l.b16 %v803
        %v3394 = vunpack.c.h.b16 %v803
        %v3395 = vunpack.c.l.b16 %v804
        %v3396 = vunpack.c.h.b16 %v804
        %v3397 = vunpack.c.l.b16 %v805
        %v3398 = vunpack.c.h.b16 %v805
        %v3399 = vunpack.c.l.b16 %v806
        %v3400 = vunpack.c.h.b16 %v806
        %v3401 = vunpack.c.l.b16 %v807
        %v3402 = vunpack.c.h.b16 %v807
        %v3403 = vunpack.c.l.b16 %v808
        %v3404 = vunpack.c.h.b16 %v808
        %v3405 = vunpack.c.l.b16 %v809
        %v3406 = vunpack.c.h.b16 %v809
        %v3407 = vunpack.c.l.b16 %v810
        %v3408 = vunpack.c.h.b16 %v810
        %v3409 = vunpack.c.l.b16 %v811
        %v3410 = vunpack.c.h.b16 %v811
        %v3411 = vunpack.c.l.b16 %v812
        %v3412 = vunpack.c.h.b16 %v812
        %v3413 = vunpack.c.l.b16 %v813
        %v3414 = vunpack.c.h.b16 %v813
        %v3415 = vunpack.c.l.b16 %v814
        %v3416 = vunpack.c.h.b16 %v814
        %v3417 = vunpack.c.l.b16 %v815
        %v3418 = vunpack.c.h.b16 %v815
        %v3419 = vunpack.c.l.b16 %v816
        %v3420 = vunpack.c.h.b16 %v816
        %v3421 = vunpack.c.l.b16 %v817
        %v3422 = vunpack.c.h.b16 %v817
        %v3423 = vunpack.c.l.b16 %v818
        %v3424 = vunpack.c.h.b16 %v818
        %v3425 = vunpack.c.l.b16 %v819
        %v3426 = vunpack.c.h.b16 %v819
        %v3427 = vunpack.c.l.b16 %v820
        %v3428 = vunpack.c.h.b16 %v820
        %v3429 = vunpack.c.l.b16 %v821
        %v3430 = vunpack.c.h.b16 %v821
        %v3431 = vunpack.c.l.b16 %v822
        %v3432 = vunpack.c.h.b16 %v822
        %v3433 = vunpack.c.l.b16 %v823
        %v3434 = vunpack.c.h.b16 %v823
        %v3435 = vunpack.c.l.b16 %v824
        %v3436 = vunpack.c.h.b16 %v824
        %v3437 = vunpack.c.l.b16 %v825
        %v3438 = vunpack.c.h.b16 %v825
        %v3439 = vunpack.c.l.b16 %v826
        %v3440 = vunpack.c.h.b16 %v826
        %v3441 = vunpack.c.l.b16 %v827
        %v3442 = vunpack.c.h.b16 %v827
        %v3443 = vunpack.c.l.b16 %v828
        %v3444 = vunpack.c.h.b16 %v828
        %v3445 = vunpack.c.l.b16 %v829
        %v3446 = vunpack.c.h.b16 %v829
        %v3447 = vunpack.c.l.b16 %v830
        %v3448 = vunpack.c.h.b16 %v830
        %v3449 = vunpack.c.l.b16 %v831
        %v3450 = vunpack.c.h.b16 %v831
        %v3451 = vunpack.c.l.b16 %v832
        %v3452 = vunpack.c.h.b16 %v832
        %v3453 = vunpack.c.l.b16 %v833
        %v3454 = vunpack.c.h.b16 %v833
        %v3455 = vunpack.c.l.b16 %v834
        %v3456 = vunpack.c.h.b16 %v834
        %v3457 = vunpack.c.l.b16 %v835
        %v3458 = vunpack.c.h.b16 %v835
        %v3459 = vunpack.c.l.b16 %v836
        %v3460 = vunpack.c.h.b16 %v836
        %v3461 = vunpack.c.l.b16 %v837
        %v3462 = vunpack.c.h.b16 %v837
        %v3463 = vunpack.c.l.b16 %v838
        %v3464 = vunpack.c.h.b16 %v838
        %v3465 = vunpack.c.l.b16 %v839
        %v3466 = vunpack.c.h.b16 %v839
        %v3467 = vunpack.c.l.b16 %v840
        %v3468 = vunpack.c.h.b16 %v840
        %v3469 = vunpack.c.l.b16 %v841
        %v3470 = vunpack.c.h.b16 %v841
        %v3471 = vunpack.c.l.b16 %v842
        %v3472 = vunpack.c.h.b16 %v842
        %v3473 = vunpack.c.l.b16 %v843
        %v3474 = vunpack.c.h.b16 %v843
        %v3475 = vunpack.c.l.b16 %v844
        %v3476 = vunpack.c.h.b16 %v844
        %v3477 = vunpack.c.l.b16 %v845
        %v3478 = vunpack.c.h.b16 %v845
        %v3479 = vunpack.c.l.b16 %v846
        %v3480 = vunpack.c.h.b16 %v846
        %v3481 = vunpack.c.l.b16 %v847
        %v3482 = vunpack.c.h.b16 %v847
        %v3483 = vunpack.c.l.b16 %v848
        %v3484 = vunpack.c.h.b16 %v848
        %v3485 = vunpack.c.l.b16 %v849
        %v3486 = vunpack.c.h.b16 %v849
        %v3487 = vunpack.c.l.b16 %v850
        %v3488 = vunpack.c.h.b16 %v850
        %v3489 = vunpack.c.l.b16 %v851
        %v3490 = vunpack.c.h.b16 %v851
        %v3491 = vunpack.c.l.b16 %v852
        %v3492 = vunpack.c.h.b16 %v852
        %v3493 = vunpack.c.l.b16 %v853
        %v3494 = vunpack.c.h.b16 %v853
        %v3495 = vunpack.c.l.b16 %v854
        %v3496 = vunpack.c.h.b16 %v854
        %v3497 = vunpack.c.l.b16 %v855
        %v3498 = vunpack.c.h.b16 %v855
        %v3499 = vunpack.c.l.b16 %v856
        %v3500 = vunpack.c.h.b16 %v856
        %v3501 = vunpack.c.l.b16 %v857
        %v3502 = vunpack.c.h.b16 %v857
        %v3503 = vunpack.c.l.b16 %v858
        %v3504 = vunpack.c.h.b16 %v858
        %v3505 = vunpack.c.l.b16 %v859
        %v3506 = vunpack.c.h.b16 %v859
        %v3507 = vunpack.c.l.b16 %v860
        %v3508 = vunpack.c.h.b16 %v860
        %v3509 = vunpack.c.l.b16 %v861
        %v3510 = vunpack.c.h.b16 %v861
        %v3511 = vunpack.c.l.b16 %v862
        %v3512 = vunpack.c.h.b16 %v862
        %v3513 = vunpack.c.l.b16 %v863
        %v3514 = vunpack.c.h.b16 %v863
        %v3515 = vunpack.c.l.b16 %v864
        %v3516 = vunpack.c.h.b16 %v864
        %v3517 = vunpack.c.l.b16 %v865
        %v3518 = vunpack.c.h.b16 %v865
        %v3519 = vunpack.c.l.b16 %v866
        %v3520 = vunpack.c.h.b16 %v866
        %v3521 = vunpack.c.l.b16 %v867
        %v3522 = vunpack.c.h.b16 %v867
        %v3523 = vunpack.c.l.b16 %v868
        %v3524 = vunpack.c.h.b16 %v868
        %v3525 = vunpack.c.l.b16 %v869
        %v3526 = vunpack.c.h.b16 %v869
        %v3527 = vunpack.c.l.b16 %v870
        %v3528 = vunpack.c.h.b16 %v870
        %v3529 = vunpack.c.l.b16 %v871
        %v3530 = vunpack.c.h.b16 %v871
        %v3531 = vunpack.c.l.b16 %v872
        %v3532 = vunpack.c.h.b16 %v872
        %v3533 = vunpack.c.l.b16 %v873
        %v3534 = vunpack.c.h.b16 %v873
        %v3535 = vunpack.c.l.b16 %v874
        %v3536 = vunpack.c.h.b16 %v874
        %v3537 = vunpack.c.l.b16 %v875
        %v3538 = vunpack.c.h.b16 %v875
        %v3539 = vunpack.c.l.b16 %v876
        %v3540 = vunpack.c.h.b16 %v876
        %v3541 = vunpack.c.l.b16 %v877
        %v3542 = vunpack.c.h.b16 %v877
        %v3543 = vunpack.c.l.b16 %v878
        %v3544 = vunpack.c.h.b16 %v878
        %v3545 = vunpack.c.l.b16 %v879
        %v3546 = vunpack.c.h.b16 %v879
        %v3547 = vunpack.c.l.b16 %v880
        %v3548 = vunpack.c.h.b16 %v880
        %v3549 = vunpack.c.l.b16 %v881
        %v3550 = vunpack.c.h.b16 %v881
        %v3551 = vunpack.c.l.b16 %v882
        %v3552 = vunpack.c.h.b16 %v882
        %v3553 = vunpack.c.l.b16 %v883
        %v3554 = vunpack.c.h.b16 %v883
        %v3555 = vunpack.c.l.b16 %v884
        %v3556 = vunpack.c.h.b16 %v884
        %v3557 = vunpack.c.l.b16 %v885
        %v3558 = vunpack.c.h.b16 %v885
        %v3559 = vunpack.c.l.b16 %v886
        %v3560 = vunpack.c.h.b16 %v886
        %v3561 = vunpack.c.l.b16 %v887
        %v3562 = vunpack.c.h.b16 %v887
        %v3563 = vunpack.c.l.b16 %v888
        %v3564 = vunpack.c.h.b16 %v888
        %v3565 = vunpack.c.l.b16 %v889
        %v3566 = vunpack.c.h.b16 %v889
        %v3567 = vunpack.c.l.b16 %v890
        %v3568 = vunpack.c.h.b16 %v890
        %v3569 = vunpack.c.l.b16 %v891
        %v3570 = vunpack.c.h.b16 %v891
        %v3571 = vunpack.c.l.b16 %v892
        %v3572 = vunpack.c.h.b16 %v892
        %v3573 = vunpack.c.l.b16 %v893
        %v3574 = vunpack.c.h.b16 %v893
        %v3575 = vunpack.c.l.b16 %v894
        %v3576 = vunpack.c.h.b16 %v894
        %v3577 = vunpack.c.l.b16 %v895
        %v3578 = vunpack.c.h.b16 %v895
        %v3579 = vunpack.c.l.b16 %v896
        %v3580 = vunpack.c.h.b16 %v896
        %v3581 = vunpack.c.l.b16 %v897
        %v3582 = vunpack.c.h.b16 %v897
        %v3583 = vunpack.c.l.b16 %v898
        %v3584 = vunpack.c.h.b16 %v898
        %v3585 = vunpack.c.l.b16 %v899
        %v3586 = vunpack.c.h.b16 %v899
        %v3587 = vunpack.c.l.b16 %v900
        %v3588 = vunpack.c.h.b16 %v900
        %v3589 = vunpack.c.l.b16 %v901
        %v3590 = vunpack.c.h.b16 %v901
        %v3591 = vunpack.c.l.b16 %v902
        %v3592 = vunpack.c.h.b16 %v902
        %v3593 = vunpack.c.l.b16 %v903
        %v3594 = vunpack.c.h.b16 %v903
        %v3595 = vunpack.c.l.b16 %v904
        %v3596 = vunpack.c.h.b16 %v904
        %v3597 = vunpack.c.l.b16 %v905
        %v3598 = vunpack.c.h.b16 %v905
        %v3599 = vunpack.c.l.b16 %v906
        %v3600 = vunpack.c.h.b16 %v906
        %v3601 = vunpack.c.l.b16 %v907
        %v3602 = vunpack.c.h.b16 %v907
        %v3603 = vunpack.c.l.b16 %v908
        %v3604 = vunpack.c.h.b16 %v908
        %v3605 = vunpack.c.l.b16 %v909
        %v3606 = vunpack.c.h.b16 %v909
        %v3607 = vunpack.c.l.b16 %v910
        %v3608 = vunpack.c.h.b16 %v910
        %v3609 = vunpack.c.l.b16 %v911
        %v3610 = vunpack.c.h.b16 %v911
        %v3611 = vunpack.c.l.b16 %v912
        %v3612 = vunpack.c.h.b16 %v912
        %v3613 = vunpack.c.l.b16 %v913
        %v3614 = vunpack.c.h.b16 %v913
        %v3615 = vunpack.c.l.b16 %v914
        %v3616 = vunpack.c.h.b16 %v914
        %v3617 = vunpack.c.l.b16 %v915
        %v3618 = vunpack.c.h.b16 %v915
        %v3619 = vunpack.c.l.b16 %v916
        %v3620 = vunpack.c.h.b16 %v916
        %v3621 = vunpack.c.l.b16 %v917
        %v3622 = vunpack.c.h.b16 %v917
        %v3623 = vunpack.c.l.b16 %v918
        %v3624 = vunpack.c.h.b16 %v918
        %v3625 = vunpack.c.l.b16 %v919
        %v3626 = vunpack.c.h.b16 %v919
        %v3627 = vunpack.c.l.b16 %v920
        %v3628 = vunpack.c.h.b16 %v920
        %v3629 = vunpack.c.l.b16 %v921
        %v3630 = vunpack.c.h.b16 %v921
        %v3631 = vunpack.c.l.b16 %v922
        %v3632 = vunpack.c.h.b16 %v922
        %v3633 = vunpack.c.l.b16 %v923
        %v3634 = vunpack.c.h.b16 %v923
        %v3635 = vunpack.c.l.b16 %v924
        %v3636 = vunpack.c.h.b16 %v924
        %v3637 = vunpack.c.l.b16 %v925
        %v3638 = vunpack.c.h.b16 %v925
        %v3639 = vunpack.c.l.b16 %v926
        %v3640 = vunpack.c.h.b16 %v926
        %v3641 = vunpack.c.l.b16 %v927
        %v3642 = vunpack.c.h.b16 %v927
        %v3643 = vunpack.c.l.b16 %v928
        %v3644 = vunpack.c.h.b16 %v928
        %v3645 = vunpack.c.l.b16 %v929
        %v3646 = vunpack.c.h.b16 %v929
        %v3647 = vunpack.c.l.b16 %v930
        %v3648 = vunpack.c.h.b16 %v930
        %v3649 = vunpack.c.l.b16 %v931
        %v3650 = vunpack.c.h.b16 %v931
        %v3651 = vunpack.c.l.b16 %v932
        %v3652 = vunpack.c.h.b16 %v932
        %v3653 = vunpack.c.l.b16 %v933
        %v3654 = vunpack.c.h.b16 %v933
        %v3655 = vunpack.c.l.b16 %v934
        %v3656 = vunpack.c.h.b16 %v934
        %v3657 = vunpack.c.l.b16 %v935
        %v3658 = vunpack.c.h.b16 %v935
        %v3659 = vunpack.c.l.b16 %v936
        %v3660 = vunpack.c.h.b16 %v936
        %v3661 = vunpack.c.l.b16 %v937
        %v3662 = vunpack.c.h.b16 %v937
        %v3663 = vunpack.c.l.b16 %v938
        %v3664 = vunpack.c.h.b16 %v938
        %v3665 = vunpack.c.l.b16 %v939
        %v3666 = vunpack.c.h.b16 %v939
        %v3667 = vunpack.c.l.b16 %v940
        %v3668 = vunpack.c.h.b16 %v940
        %v3669 = vunpack.c.l.b16 %v941
        %v3670 = vunpack.c.h.b16 %v941
        %v3671 = vunpack.c.l.b16 %v942
        %v3672 = vunpack.c.h.b16 %v942
        %v3673 = vunpack.c.l.b16 %v943
        %v3674 = vunpack.c.h.b16 %v943
        %v3675 = vunpack.c.l.b16 %v944
        %v3676 = vunpack.c.h.b16 %v944
        %v3677 = vunpack.c.l.b16 %v945
        %v3678 = vunpack.c.h.b16 %v945
        %v3679 = vunpack.c.l.b16 %v946
        %v3680 = vunpack.c.h.b16 %v946
        %v3681 = vunpack.c.l.b16 %v947
        %v3682 = vunpack.c.h.b16 %v947
        %v3683 = vunpack.c.l.b16 %v948
        %v3684 = vunpack.c.h.b16 %v948
        %v3685 = vunpack.c.l.b16 %v949
        %v3686 = vunpack.c.h.b16 %v949
        %v3687 = vunpack.c.l.b16 %v950
        %v3688 = vunpack.c.h.b16 %v950
        %v3689 = vunpack.c.l.b16 %v951
        %v3690 = vunpack.c.h.b16 %v951
        %v3691 = vunpack.c.l.b16 %v952
        %v3692 = vunpack.c.h.b16 %v952
        %v3693 = vunpack.c.l.b16 %v953
        %v3694 = vunpack.c.h.b16 %v953
        %v3695 = vunpack.c.l.b16 %v954
        %v3696 = vunpack.c.h.b16 %v954
        %v3697 = vunpack.c.l.b16 %v955
        %v3698 = vunpack.c.h.b16 %v955
        %v3699 = vunpack.c.l.b16 %v956
        %v3700 = vunpack.c.h.b16 %v956
        %v3701 = vunpack.c.l.b16 %v957
        %v3702 = vunpack.c.h.b16 %v957
        %v3703 = vunpack.c.l.b16 %v958
        %v3704 = vunpack.c.h.b16 %v958
        %v3705 = vunpack.c.l.b16 %v959
        %v3706 = vunpack.c.h.b16 %v959
        %v3707 = vunpack.c.l.b16 %v960
        %v3708 = vunpack.c.h.b16 %v960
        %v3709 = vunpack.c.l.b16 %v961
        %v3710 = vunpack.c.h.b16 %v961
        %v3711 = vunpack.c.l.b16 %v962
        %v3712 = vunpack.c.h.b16 %v962
        %v3713 = vunpack.c.l.b16 %v963
        %v3714 = vunpack.c.h.b16 %v963
        %v3715 = vunpack.c.l.b16 %v964
        %v3716 = vunpack.c.h.b16 %v964
        %v3717 = vunpack.c.l.b16 %v965
        %v3718 = vunpack.c.h.b16 %v965
        %v3719 = vunpack.c.l.b16 %v966
        %v3720 = vunpack.c.h.b16 %v966
        %v3721 = vunpack.c.l.b16 %v967
        %v3722 = vunpack.c.h.b16 %v967
        %v3723 = vunpack.c.l.b16 %v968
        %v3724 = vunpack.c.h.b16 %v968
        %v3725 = vunpack.c.l.b16 %v969
        %v3726 = vunpack.c.h.b16 %v969
        %v3727 = vunpack.c.l.b16 %v970
        %v3728 = vunpack.c.h.b16 %v970
        %v3729 = vunpack.c.l.b16 %v971
        %v3730 = vunpack.c.h.b16 %v971
        %v3731 = vunpack.c.l.b16 %v972
        %v3732 = vunpack.c.h.b16 %v972
        %v3733 = vunpack.c.l.b16 %v973
        %v3734 = vunpack.c.h.b16 %v973
        %v3735 = vunpack.c.l.b16 %v974
        %v3736 = vunpack.c.h.b16 %v974
        %v3737 = vunpack.c.l.b16 %v975
        %v3738 = vunpack.c.h.b16 %v975
        %v3739 = vunpack.c.l.b16 %v976
        %v3740 = vunpack.c.h.b16 %v976
        %v3741 = vunpack.c.l.b16 %v977
        %v3742 = vunpack.c.h.b16 %v977
        %v3743 = vunpack.c.l.b16 %v978
        %v3744 = vunpack.c.h.b16 %v978
        %v3745 = vunpack.c.l.b16 %v979
        %v3746 = vunpack.c.h.b16 %v979
        %v3747 = vunpack.c.l.b16 %v980
        %v3748 = vunpack.c.h.b16 %v980
        %v3749 = vunpack.c.l.b16 %v981
        %v3750 = vunpack.c.h.b16 %v981
        %v3751 = vunpack.c.l.b16 %v982
        %v3752 = vunpack.c.h.b16 %v982
        %v3753 = vunpack.c.l.b16 %v983
        %v3754 = vunpack.c.h.b16 %v983
        %v3755 = vunpack.c.l.b16 %v984
        %v3756 = vunpack.c.h.b16 %v984
        %v3757 = vunpack.c.l.b16 %v985
        %v3758 = vunpack.c.h.b16 %v985
        %v3759 = vunpack.c.l.b16 %v986
        %v3760 = vunpack.c.h.b16 %v986
        %v3761 = vunpack.c.l.b16 %v987
        %v3762 = vunpack.c.h.b16 %v987
        %v3763 = vunpack.c.l.b16 %v988
        %v3764 = vunpack.c.h.b16 %v988
        %v3765 = vunpack.c.l.b16 %v989
        %v3766 = vunpack.c.h.b16 %v989
        %v3767 = vunpack.c.l.b16 %v990
        %v3768 = vunpack.c.h.b16 %v990
        %v3769 = vunpack.c.l.b16 %v991
        %v3770 = vunpack.c.h.b16 %v991
        %v3771 = vunpack.c.l.b16 %v992
        %v3772 = vunpack.c.h.b16 %v992
        %v3773 = vunpack.c.l.b16 %v993
        %v3774 = vunpack.c.h.b16 %v993
        %v3775 = vunpack.c.l.b16 %v994
        %v3776 = vunpack.c.h.b16 %v994
        %v3777 = vunpack.c.l.b16 %v995
        %v3778 = vunpack.c.h.b16 %v995
        %v3779 = vunpack.c.l.b16 %v996
        %v3780 = vunpack.c.h.b16 %v996
        %v3781 = vunpack.c.l.b16 %v997
        %v3782 = vunpack.c.h.b16 %v997
        %v3783 = vunpack.c.l.b16 %v998
        %v3784 = vunpack.c.h.b16 %v998
        %v3785 = vunpack.c.l.b16 %v999
        %v3786 = vunpack.c.h.b16 %v999
        %v3787 = vunpack.c.l.b16 %v1000
        %v3788 = vunpack.c.h.b16 %v1000
        %v3789 = vunpack.c.l.b16 %v1001
        %v3790 = vunpack.c.h.b16 %v1001
        %v3791 = vunpack.c.l.b16 %v1002
        %v3792 = vunpack.c.h.b16 %v1002
        %v3793 = vunpack.c.l.b16 %v1003
        %v3794 = vunpack.c.h.b16 %v1003
        %v3795 = vunpack.c.l.b16 %v1004
        %v3796 = vunpack.c.h.b16 %v1004
        %v3797 = vunpack.c.l.b16 %v1005
        %v3798 = vunpack.c.h.b16 %v1005
        %v3799 = vunpack.c.l.b16 %v1006
        %v3800 = vunpack.c.h.b16 %v1006
        %v3801 = vunpack.c.l.b16 %v1007
        %v3802 = vunpack.c.h.b16 %v1007
        %v3803 = vunpack.c.l.b16 %v1008
        %v3804 = vunpack.c.h.b16 %v1008
        %v3805 = vunpack.c.l.b16 %v1009
        %v3806 = vunpack.c.h.b16 %v1009
        %v3807 = vunpack.c.l.b16 %v1010
        %v3808 = vunpack.c.h.b16 %v1010
        %v3809 = vunpack.c.l.b16 %v1011
        %v3810 = vunpack.c.h.b16 %v1011
        %v3811 = vunpack.c.l.b16 %v1012
        %v3812 = vunpack.c.h.b16 %v1012
        %v3813 = vunpack.c.l.b16 %v1013
        %v3814 = vunpack.c.h.b16 %v1013
        %v3815 = vunpack.c.l.b16 %v1014
        %v3816 = vunpack.c.h.b16 %v1014
        %v3817 = vunpack.c.l.b16 %v1015
        %v3818 = vunpack.c.h.b16 %v1015
        %v3819 = vunpack.c.l.b16 %v1016
        %v3820 = vunpack.c.h.b16 %v1016
        %v3821 = vunpack.c.l.b16 %v1017
        %v3822 = vunpack.c.h.b16 %v1017
        %v3823 = vunpack.c.l.b16 %v1018
        %v3824 = vunpack.c.h.b16 %v1018
        %v3825 = vunpack.c.l.b16 %v1019
        %v3826 = vunpack.c.h.b16 %v1019
        %v3827 = vunpack.c.l.b16 %v1020
        %v3828 = vunpack.c.h.b16 %v1020
        %v3829 = vunpack.c.l.b16 %v1021
        %v3830 = vunpack.c.h.b16 %v1021
        %v3831 = vunpack.c.l.b16 %v1022
        %v3832 = vunpack.c.h.b16 %v1022
        %v3833 = vunpack.c.l.b16 %v1023
        %v3834 = vunpack.c.h.b16 %v1023
        %v3835 = vunpack.c.l.b16 %v1024
        %v3836 = vunpack.c.h.b16 %v1024
        %v3837 = vunpack.c.l.b16 %v1025
        %v3838 = vunpack.c.h.b16 %v1025
        %v3839 = vunpack.c.l.b16 %v1026
        %v3840 = vunpack.c.h.b16 %v1026
        %v3841 = vunpack.c.l.b16 %v1027
        %v3842 = vunpack.c.h.b16 %v1027
        %v3843 = vunpack.c.l.b16 %v1028
        %v3844 = vunpack.c.h.b16 %v1028
        %v3845 = vunpack.c.l.b16 %v1029
        %v3846 = vunpack.c.h.b16 %v1029
        %v3847 = vunpack.c.l.b16 %v1030
        %v3848 = vunpack.c.h.b16 %v1030
        %v3849 = vunpack.c.l.b16 %v1031
        %v3850 = vunpack.c.h.b16 %v1031
        %v3851 = vunpack.c.l.b16 %v1032
        %v3852 = vunpack.c.h.b16 %v1032
        %v3853 = vunpack.c.l.b16 %v1033
        %v3854 = vunpack.c.h.b16 %v1033
        %v3855 = vunpack.c.l.b16 %v1034
        %v3856 = vunpack.c.h.b16 %v1034
        %v3857 = vunpack.c.l.b16 %v1035
        %v3858 = vunpack.c.h.b16 %v1035
        %v3859 = vunpack.c.l.b16 %v1036
        %v3860 = vunpack.c.h.b16 %v1036
        %v3861 = vunpack.c.l.b16 %v1037
        %v3862 = vunpack.c.h.b16 %v1037
        %v3863 = vunpack.c.l.b16 %v1038
        %v3864 = vunpack.c.h.b16 %v1038
        %v3865 = vunpack.c.l.b16 %v1039
        %v3866 = vunpack.c.h.b16 %v1039
        %v3867 = vunpack.c.l.b16 %v1040
        %v3868 = vunpack.c.h.b16 %v1040
        %v3869 = vunpack.c.l.b16 %v1041
        %v3870 = vunpack.c.h.b16 %v1041
        %v3871 = vunpack.c.l.b16 %v1042
        %v3872 = vunpack.c.h.b16 %v1042
        %v3873 = vunpack.c.l.b16 %v1043
        %v3874 = vunpack.c.h.b16 %v1043
        %v3875 = vunpack.c.l.b16 %v1044
        %v3876 = vunpack.c.h.b16 %v1044
        %v3877 = vunpack.c.l.b16 %v1045
        %v3878 = vunpack.c.h.b16 %v1045
        %v3879 = vunpack.c.l.b16 %v1046
        %v3880 = vunpack.c.h.b16 %v1046
        %v3881 = vunpack.c.l.b16 %v1047
        %v3882 = vunpack.c.h.b16 %v1047
        %v3883 = vunpack.c.l.b16 %v1048
        %v3884 = vunpack.c.h.b16 %v1048
        %v3885 = vunpack.c.l.b16 %v1049
        %v3886 = vunpack.c.h.b16 %v1049
        %v3887 = vunpack.c.l.b16 %v1050
        %v3888 = vunpack.c.h.b16 %v1050
        %v3889 = vunpack.c.l.b16 %v1051
        %v3890 = vunpack.c.h.b16 %v1051
        %v3891 = vunpack.c.l.b16 %v1052
        %v3892 = vunpack.c.h.b16 %v1052
        %v3893 = vunpack.c.l.b16 %v1053
        %v3894 = vunpack.c.h.b16 %v1053
        %v3895 = vunpack.c.l.b16 %v1054
        %v3896 = vunpack.c.h.b16 %v1054
        %v3897 = vunpack.c.l.b16 %v1055
        %v3898 = vunpack.c.h.b16 %v1055
        %v3899 = vunpack.c.l.b16 %v1056
        %v3900 = vunpack.c.h.b16 %v1056
        %v3901 = vunpack.c.l.b16 %v1057
        %v3902 = vunpack.c.h.b16 %v1057
        %v3903 = vunpack.c.l.b16 %v1058
        %v3904 = vunpack.c.h.b16 %v1058
        %v3905 = vunpack.c.l.b16 %v1059
        %v3906 = vunpack.c.h.b16 %v1059
        %v3907 = vunpack.c.l.b16 %v1060
        %v3908 = vunpack.c.h.b16 %v1060
        %v3909 = vunpack.c.l.b16 %v1061
        %v3910 = vunpack.c.h.b16 %v1061
        %v3911 = vunpack.c.l.b16 %v1062
        %v3912 = vunpack.c.h.b16 %v1062
        %v3913 = vunpack.c.l.b16 %v1063
        %v3914 = vunpack.c.h.b16 %v1063
        %v3915 = vunpack.c.l.b16 %v1064
        %v3916 = vunpack.c.h.b16 %v1064
        %v3917 = vunpack.c.l.b16 %v1065
        %v3918 = vunpack.c.h.b16 %v1065
        %v3919 = vunpack.c.l.b16 %v1066
        %v3920 = vunpack.c.h.b16 %v1066
        %v3921 = vunpack.c.l.b16 %v1067
        %v3922 = vunpack.c.h.b16 %v1067
        %v3923 = vunpack.c.l.b16 %v1068
        %v3924 = vunpack.c.h.b16 %v1068
        %v3925 = vunpack.c.l.b16 %v1069
        %v3926 = vunpack.c.h.b16 %v1069
        %v3927 = vunpack.c.l.b16 %v1070
        %v3928 = vunpack.c.h.b16 %v1070
        %v3929 = vunpack.c.l.b16 %v1071
        %v3930 = vunpack.c.h.b16 %v1071
        %v3931 = vunpack.c.l.b16 %v1072
        %v3932 = vunpack.c.h.b16 %v1072
        %v3933 = vunpack.c.l.b16 %v1073
        %v3934 = vunpack.c.h.b16 %v1073
        %v3935 = vunpack.c.l.b16 %v1074
        %v3936 = vunpack.c.h.b16 %v1074
        %v3937 = vunpack.c.l.b16 %v1075
        %v3938 = vunpack.c.h.b16 %v1075
        %v3939 = vunpack.c.l.b16 %v1076
        %v3940 = vunpack.c.h.b16 %v1076
        %v3941 = vunpack.c.l.b16 %v1077
        %v3942 = vunpack.c.h.b16 %v1077
        %v3943 = vunpack.c.l.b16 %v1078
        %v3944 = vunpack.c.h.b16 %v1078
        %v3945 = vunpack.c.l.b16 %v1079
        %v3946 = vunpack.c.h.b16 %v1079
        %v3947 = vunpack.c.l.b16 %v1080
        %v3948 = vunpack.c.h.b16 %v1080
        %v3949 = vunpack.c.l.b16 %v1081
        %v3950 = vunpack.c.h.b16 %v1081
        %v3951 = vunpack.c.l.b16 %v1082
        %v3952 = vunpack.c.h.b16 %v1082
        %v3953 = vunpack.c.l.b16 %v1083
        %v3954 = vunpack.c.h.b16 %v1083
        %v3955 = vunpack.c.l.b16 %v1084
        %v3956 = vunpack.c.h.b16 %v1084
        %v3957 = vunpack.c.l.b16 %v1085
        %v3958 = vunpack.c.h.b16 %v1085
        %v3959 = vunpack.c.l.b16 %v1086
        %v3960 = vunpack.c.h.b16 %v1086
        %v3961 = vunpack.c.l.b16 %v1087
        %v3962 = vunpack.c.h.b16 %v1087
        %v3963 = vunpack.c.l.b16 %v1088
        %v3964 = vunpack.c.h.b16 %v1088
        %v3965 = vunpack.c.l.b16 %v1089
        %v3966 = vunpack.c.h.b16 %v1089
        %v3967 = vunpack.c.l.b16 %v1090
        %v3968 = vunpack.c.h.b16 %v1090
        %v3969 = vunpack.c.l.b16 %v1091
        %v3970 = vunpack.c.h.b16 %v1091
        %v3971 = vunpack.c.l.b16 %v1092
        %v3972 = vunpack.c.h.b16 %v1092
        %v3973 = vunpack.c.l.b16 %v1093
        %v3974 = vunpack.c.h.b16 %v1093
        %v3975 = vunpack.c.l.b16 %v1094
        %v3976 = vunpack.c.h.b16 %v1094
        %v3977 = vunpack.c.l.b16 %v1095
        %v3978 = vunpack.c.h.b16 %v1095
        %v3979 = vunpack.c.l.b16 %v1096
        %v3980 = vunpack.c.h.b16 %v1096
        %v3981 = vunpack.c.l.b16 %v1097
        %v3982 = vunpack.c.h.b16 %v1097
        %v3983 = vunpack.c.l.b16 %v1098
        %v3984 = vunpack.c.h.b16 %v1098
        %v3985 = vunpack.c.l.b16 %v1099
        %v3986 = vunpack.c.h.b16 %v1099
        %v3987 = vunpack.c.l.b16 %v1100
        %v3988 = vunpack.c.h.b16 %v1100
        %v3989 = vunpack.c.l.b16 %v1101
        %v3990 = vunpack.c.h.b16 %v1101
        %v3991 = vunpack.c.l.b16 %v1102
        %v3992 = vunpack.c.h.b16 %v1102
        %v3993 = vunpack.c.l.b16 %v1103
        %v3994 = vunpack.c.h.b16 %v1103
        %v3995 = vunpack.c.l.b16 %v1104
        %v3996 = vunpack.c.h.b16 %v1104
        %v3997 = vunpack.c.l.b16 %v1105
        %v3998 = vunpack.c.h.b16 %v1105
        %v3999 = vunpack.c.l.b16 %v1106
        %v4000 = vunpack.c.h.b16 %v1106
        %v4001 = vunpack.c.l.b16 %v1107
        %v4002 = vunpack.c.h.b16 %v1107
        %v4003 = vunpack.c.l.b16 %v1108
        %v4004 = vunpack.c.h.b16 %v1108
        %v4005 = vunpack.c.l.b16 %v1109
        %v4006 = vunpack.c.h.b16 %v1109
        %v4007 = vunpack.c.l.b16 %v1110
        %v4008 = vunpack.c.h.b16 %v1110
        %v4009 = vunpack.c.l.b16 %v1111
        %v4010 = vunpack.c.h.b16 %v1111
        %v4011 = vunpack.c.l.b16 %v1112
        %v4012 = vunpack.c.h.b16 %v1112
        %v4013 = vunpack.c.l.b16 %v1113
        %v4014 = vunpack.c.h.b16 %v1113
        %v4015 = vunpack.c.l.b16 %v1114
        %v4016 = vunpack.c.h.b16 %v1114
        %v4017 = vunpack.c.l.b16 %v1115
        %v4018 = vunpack.c.h.b16 %v1115
        %v4019 = vunpack.c.l.b16 %v1116
        %v4020 = vunpack.c.h.b16 %v1116
        %v4021 = vunpack.c.l.b16 %v1117
        %v4022 = vunpack.c.h.b16 %v1117
        %v4023 = vunpack.c.l.b16 %v1118
        %v4024 = vunpack.c.h.b16 %v1118
        %v4025 = vunpack.c.l.b16 %v1119
        %v4026 = vunpack.c.h.b16 %v1119
        %v4027 = vunpack.c.l.b16 %v1120
        %v4028 = vunpack.c.h.b16 %v1120
        %v4029 = vunpack.c.l.b16 %v1121
        %v4030 = vunpack.c.h.b16 %v1121
        %v4031 = vunpack.c.l.b16 %v1122
        %v4032 = vunpack.c.h.b16 %v1122
        %v4033 = vunpack.c.l.b16 %v1123
        %v4034 = vunpack.c.h.b16 %v1123
        %v4035 = vunpack.c.l.b16 %v1124
        %v4036 = vunpack.c.h.b16 %v1124
        %v4037 = vunpack.c.l.b16 %v1125
        %v4038 = vunpack.c.h.b16 %v1125
        %v4039 = vunpack.c.l.b16 %v1126
        %v4040 = vunpack.c.h.b16 %v1126
        %v4041 = vunpack.c.l.b16 %v1127
        %v4042 = vunpack.c.h.b16 %v1127
        %v4043 = vunpack.c.l.b16 %v1128
        %v4044 = vunpack.c.h.b16 %v1128
        %v4045 = vunpack.c.l.b16 %v1129
        %v4046 = vunpack.c.h.b16 %v1129
        %v4047 = vunpack.c.l.b16 %v1130
        %v4048 = vunpack.c.h.b16 %v1130
        %v4049 = vunpack.c.l.b16 %v1131
        %v4050 = vunpack.c.h.b16 %v1131
        %v4051 = vunpack.c.l.b16 %v1132
        %v4052 = vunpack.c.h.b16 %v1132
        %v4053 = vunpack.c.l.b16 %v1133
        %v4054 = vunpack.c.h.b16 %v1133
        %v4055 = vunpack.c.l.b16 %v1134
        %v4056 = vunpack.c.h.b16 %v1134
        %v4057 = vunpack.c.l.b16 %v1135
        %v4058 = vunpack.c.h.b16 %v1135
        %v4059 = vunpack.c.l.b16 %v1136
        %v4060 = vunpack.c.h.b16 %v1136
        %v4061 = vunpack.c.l.b16 %v1137
        %v4062 = vunpack.c.h.b16 %v1137
        %v4063 = vunpack.c.l.b16 %v1138
        %v4064 = vunpack.c.h.b16 %v1138
        %v4065 = vunpack.c.l.b16 %v1139
        %v4066 = vunpack.c.h.b16 %v1139
        %v4067 = vunpack.c.l.b16 %v1140
        %v4068 = vunpack.c.h.b16 %v1140
        %v4069 = vunpack.c.l.b16 %v1141
        %v4070 = vunpack.c.h.b16 %v1141
        %v4071 = vunpack.c.l.b16 %v1142
        %v4072 = vunpack.c.h.b16 %v1142
        %v4073 = vunpack.c.l.b16 %v1143
        %v4074 = vunpack.c.h.b16 %v1143
        %v4075 = vunpack.c.l.b16 %v1144
        %v4076 = vunpack.c.h.b16 %v1144
        %v4077 = vunpack.c.l.b16 %v1145
        %v4078 = vunpack.c.h.b16 %v1145
        %v4079 = vunpack.c.l.b16 %v1146
        %v4080 = vunpack.c.h.b16 %v1146
        %v4081 = vunpack.c.l.b16 %v1147
        %v4082 = vunpack.c.h.b16 %v1147
        %v4083 = vunpack.c.l.b16 %v1148
        %v4084 = vunpack.c.h.b16 %v1148
        %v4085 = vunpack.c.l.b16 %v1149
        %v4086 = vunpack.c.h.b16 %v1149
        %v4087 = vunpack.c.l.b16 %v1150
        %v4088 = vunpack.c.h.b16 %v1150
        %v4089 = vunpack.c.l.b16 %v1151
        %v4090 = vunpack.c.h.b16 %v1151
        %v4091 = vunpack.c.l.b16 %v1152
        %v4092 = vunpack.c.h.b16 %v1152
        %v4093 = vunpack.c.l.b16 %v1153
        %v4094 = vunpack.c.h.b16 %v1153
        %v4095 = vunpack.c.l.b16 %v1154
        %v4096 = vunpack.c.h.b16 %v1154
        %v4097 = vunpack.c.l.b16 %v1155
        %v4098 = vunpack.c.h.b16 %v1155
        %v4099 = vunpack.c.l.b16 %v1156
        %v4100 = vunpack.c.h.b16 %v1156
        %v4101 = vunpack.c.l.b16 %v1157
        %v4102 = vunpack.c.h.b16 %v1157
        %v4103 = vunpack.c.l.b16 %v1158
        %v4104 = vunpack.c.h.b16 %v1158
        %v4105 = vunpack.c.l.b16 %v1159
        %v4106 = vunpack.c.h.b16 %v1159
        %v4107 = vunpack.c.l.b16 %v1160
        %v4108 = vunpack.c.h.b16 %v1160
        %v4109 = vunpack.c.l.b16 %v1161
        %v4110 = vunpack.c.h.b16 %v1161
        %v4111 = vunpack.c.l.b16 %v1162
        %v4112 = vunpack.c.h.b16 %v1162
        %v4113 = vunpack.c.l.b16 %v1163
        %v4114 = vunpack.c.h.b16 %v1163
        %v4115 = vunpack.c.l.b16 %v1164
        %v4116 = vunpack.c.h.b16 %v1164
        %v4117 = vunpack.c.l.b16 %v1165
        %v4118 = vunpack.c.h.b16 %v1165
        %v4119 = vunpack.c.l.b16 %v1166
        %v4120 = vunpack.c.h.b16 %v1166
        %v4121 = vunpack.c.l.b16 %v1167
        %v4122 = vunpack.c.h.b16 %v1167
        %v4123 = vunpack.c.l.b16 %v1168
        %v4124 = vunpack.c.h.b16 %v1168
        %v4125 = vunpack.c.l.b16 %v1169
        %v4126 = vunpack.c.h.b16 %v1169
        %v4127 = vunpack.c.l.b16 %v1170
        %v4128 = vunpack.c.h.b16 %v1170
        %v4129 = vunpack.c.l.b16 %v1171
        %v4130 = vunpack.c.h.b16 %v1171
        %v4131 = vunpack.c.l.b16 %v1172
        %v4132 = vunpack.c.h.b16 %v1172
        %v4133 = vunpack.c.l.b16 %v1173
        %v4134 = vunpack.c.h.b16 %v1173
        %v4135 = vunpack.c.l.b16 %v1174
        %v4136 = vunpack.c.h.b16 %v1174
        %v4137 = vunpack.c.l.b16 %v1175
        %v4138 = vunpack.c.h.b16 %v1175
        %v4139 = vunpack.c.l.b16 %v1176
        %v4140 = vunpack.c.h.b16 %v1176
        %v4141 = vunpack.c.l.b16 %v1177
        %v4142 = vunpack.c.h.b16 %v1177
        %v4143 = vunpack.c.l.b16 %v1178
        %v4144 = vunpack.c.h.b16 %v1178
        %v4145 = vunpack.c.l.b16 %v1179
        %v4146 = vunpack.c.h.b16 %v1179
        %v4147 = vunpack.c.l.b16 %v1180
        %v4148 = vunpack.c.h.b16 %v1180
        %v4149 = vunpack.c.l.b16 %v1181
        %v4150 = vunpack.c.h.b16 %v1181
        %v4151 = vunpack.c.l.b16 %v1182
        %v4152 = vunpack.c.h.b16 %v1182
        %v4153 = vunpack.c.l.b16 %v1183
        %v4154 = vunpack.c.h.b16 %v1183
        %v4155 = vunpack.c.l.b16 %v1184
        %v4156 = vunpack.c.h.b16 %v1184
        %v4157 = vunpack.c.l.b16 %v1185
        %v4158 = vunpack.c.h.b16 %v1185
        %v4159 = vunpack.c.l.b16 %v1186
        %v4160 = vunpack.c.h.b16 %v1186
        %v4161 = vunpack.c.l.b16 %v1187
        %v4162 = vunpack.c.h.b16 %v1187
        %v4163 = vunpack.c.l.b16 %v1188
        %v4164 = vunpack.c.h.b16 %v1188
        %v4165 = vunpack.c.l.b16 %v1189
        %v4166 = vunpack.c.h.b16 %v1189
        %v4167 = vunpack.c.l.b16 %v1190
        %v4168 = vunpack.c.h.b16 %v1190
        %v4169 = vunpack.c.l.b16 %v1191
        %v4170 = vunpack.c.h.b16 %v1191
        %v4171 = vunpack.c.l.b16 %v1192
        %v4172 = vunpack.c.h.b16 %v1192
        %v4173 = vunpack.c.l.b16 %v1193
        %v4174 = vunpack.c.h.b16 %v1193
        %v4175 = vunpack.c.l.b16 %v1194
        %v4176 = vunpack.c.h.b16 %v1194
        %v4177 = vunpack.c.l.b16 %v1195
        %v4178 = vunpack.c.h.b16 %v1195
        %v4179 = vunpack.c.l.b16 %v1196
        %v4180 = vunpack.c.h.b16 %v1196
        %v4181 = vunpack.c.l.b16 %v1197
        %v4182 = vunpack.c.h.b16 %v1197
        %v4183 = vunpack.c.l.b16 %v1198
        %v4184 = vunpack.c.h.b16 %v1198
        %v4185 = vunpack.c.l.b16 %v1199
        %v4186 = vunpack.c.h.b16 %v1199
        %v4187 = vunpack.c.l.b16 %v1200
        %v4188 = vunpack.c.h.b16 %v1200
        %v4189 = vunpack.c.l.b16 %v1201
        %v4190 = vunpack.c.h.b16 %v1201
        %v4191 = vunpack.c.l.b16 %v1202
        %v4192 = vunpack.c.h.b16 %v1202
        %v4193 = vunpack.c.l.b16 %v1203
        %v4194 = vunpack.c.h.b16 %v1203
        %v4195 = vunpack.c.l.b16 %v1204
        %v4196 = vunpack.c.h.b16 %v1204
        %v4197 = vunpack.c.l.b16 %v1205
        %v4198 = vunpack.c.h.b16 %v1205
        %v4199 = vunpack.c.l.b16 %v1206
        %v4200 = vunpack.c.h.b16 %v1206
        %v4201 = vunpack.c.l.b16 %v1207
        %v4202 = vunpack.c.h.b16 %v1207
        %v4203 = vunpack.c.l.b16 %v1208
        %v4204 = vunpack.c.h.b16 %v1208
        %v4205 = vunpack.c.l.b16 %v1209
        %v4206 = vunpack.c.h.b16 %v1209
        %v4207 = vunpack.c.l.b16 %v1210
        %v4208 = vunpack.c.h.b16 %v1210
        %v4209 = vunpack.c.l.b16 %v1211
        %v4210 = vunpack.c.h.b16 %v1211
        %v4211 = vunpack.c.l.b16 %v1212
        %v4212 = vunpack.c.h.b16 %v1212
        %v4213 = vunpack.c.l.b16 %v1213
        %v4214 = vunpack.c.h.b16 %v1213
        %v4215 = vunpack.c.l.b16 %v1214
        %v4216 = vunpack.c.h.b16 %v1214
        %v4217 = vunpack.c.l.b16 %v1215
        %v4218 = vunpack.c.h.b16 %v1215
        %v4219 = vunpack.c.l.b16 %v1216
        %v4220 = vunpack.c.h.b16 %v1216
        %v4221 = vunpack.c.l.b16 %v1217
        %v4222 = vunpack.c.h.b16 %v1217
        %v4223 = vunpack.c.l.b16 %v1218
        %v4224 = vunpack.c.h.b16 %v1218
        %v4225 = vunpack.c.l.b16 %v1219
        %v4226 = vunpack.c.h.b16 %v1219
        %v4227 = vunpack.c.l.b16 %v1220
        %v4228 = vunpack.c.h.b16 %v1220
        %v4229 = vunpack.c.l.b16 %v1221
        %v4230 = vunpack.c.h.b16 %v1221
        %v4231 = vunpack.c.l.b16 %v1222
        %v4232 = vunpack.c.h.b16 %v1222
        %v4233 = vunpack.c.l.b16 %v1223
        %v4234 = vunpack.c.h.b16 %v1223
        %v4235 = vunpack.c.l.b16 %v1224
        %v4236 = vunpack.c.h.b16 %v1224
        %v4237 = vunpack.c.l.b16 %v1225
        %v4238 = vunpack.c.h.b16 %v1225
        %v4239 = vunpack.c.l.b16 %v1226
        %v4240 = vunpack.c.h.b16 %v1226
        %v4241 = vunpack.c.l.b16 %v1227
        %v4242 = vunpack.c.h.b16 %v1227
        %v4243 = vunpack.c.l.b16 %v1228
        %v4244 = vunpack.c.h.b16 %v1228
        %v4245 = vunpack.c.l.b16 %v1229
        %v4246 = vunpack.c.h.b16 %v1229
        %v4247 = vunpack.c.l.b16 %v1230
        %v4248 = vunpack.c.h.b16 %v1230
        %v4249 = vunpack.c.l.b16 %v1231
        %v4250 = vunpack.c.h.b16 %v1231
        %v4251 = vunpack.c.l.b16 %v1232
        %v4252 = vunpack.c.h.b16 %v1232
        %v4253 = vunpack.c.l.b16 %v1233
        %v4254 = vunpack.c.h.b16 %v1233
        %v4255 = vunpack.c.l.b16 %v1234
        %v4256 = vunpack.c.h.b16 %v1234
        %v4257 = vunpack.c.l.b16 %v1235
        %v4258 = vunpack.c.h.b16 %v1235
        %v4259 = vunpack.c.l.b16 %v1236
        %v4260 = vunpack.c.h.b16 %v1236
        %v4261 = vunpack.c.l.b16 %v1237
        %v4262 = vunpack.c.h.b16 %v1237
        %v4263 = vunpack.c.l.b16 %v1238
        %v4264 = vunpack.c.h.b16 %v1238
        %v4265 = vunpack.c.l.b16 %v1239
        %v4266 = vunpack.c.h.b16 %v1239
        %v4267 = vunpack.c.l.b16 %v1240
        %v4268 = vunpack.c.h.b16 %v1240
        %v4269 = vunpack.c.l.b16 %v1241
        %v4270 = vunpack.c.h.b16 %v1241
        %v4271 = vunpack.c.l.b16 %v1242
        %v4272 = vunpack.c.h.b16 %v1242
        %v4273 = vunpack.c.l.b16 %v1243
        %v4274 = vunpack.c.h.b16 %v1243
        %v4275 = vunpack.c.l.b16 %v1244
        %v4276 = vunpack.c.h.b16 %v1244
        %v4277 = vunpack.c.l.b16 %v1245
        %v4278 = vunpack.c.h.b16 %v1245
        %v4279 = vunpack.c.l.b16 %v1246
        %v4280 = vunpack.c.h.b16 %v1246
        %v4281 = vunpack.c.l.b16 %v1247
        %v4282 = vunpack.c.h.b16 %v1247
        %v4283 = vunpack.c.l.b16 %v1248
        %v4284 = vunpack.c.h.b16 %v1248
        %v4285 = vunpack.c.l.b16 %v1249
        %v4286 = vunpack.c.h.b16 %v1249
        %v4287 = vunpack.c.l.b16 %v1250
        %v4288 = vunpack.c.h.b16 %v1250
        %v4289 = vunpack.c.l.b16 %v1251
        %v4290 = vunpack.c.h.b16 %v1251
        %v4291 = vunpack.c.l.b16 %v1252
        %v4292 = vunpack.c.h.b16 %v1252
        %v4293 = vunpack.c.l.b16 %v1253
        %v4294 = vunpack.c.h.b16 %v1253
        %v4295 = vunpack.c.l.b16 %v1254
        %v4296 = vunpack.c.h.b16 %v1254
        %v4297 = vunpack.c.l.b16 %v1255
        %v4298 = vunpack.c.h.b16 %v1255
        %v4299 = vunpack.c.l.b16 %v1256
        %v4300 = vunpack.c.h.b16 %v1256
        %v4301 = vunpack.c.l.b16 %v1257
        %v4302 = vunpack.c.h.b16 %v1257
        %v4303 = vunpack.c.l.b16 %v1258
        %v4304 = vunpack.c.h.b16 %v1258
        %v4305 = vunpack.c.l.b16 %v1259
        %v4306 = vunpack.c.h.b16 %v1259
        %v4307 = vunpack.c.l.b16 %v1260
        %v4308 = vunpack.c.h.b16 %v1260
        %v4309 = vunpack.c.l.b16 %v1261
        %v4310 = vunpack.c.h.b16 %v1261
        %v4311 = vunpack.c.l.b16 %v1262
        %v4312 = vunpack.c.h.b16 %v1262
        %v4313 = vunpack.c.l.b16 %v1263
        %v4314 = vunpack.c.h.b16 %v1263
        %v4315 = vunpack.c.l.b16 %v1264
        %v4316 = vunpack.c.h.b16 %v1264
        %v4317 = vunpack.c.l.b16 %v1265
        %v4318 = vunpack.c.h.b16 %v1265
        %v4319 = vunpack.c.l.b16 %v1266
        %v4320 = vunpack.c.h.b16 %v1266
        %v4321 = vunpack.c.l.b16 %v1267
        %v4322 = vunpack.c.h.b16 %v1267
        %v4323 = vunpack.c.l.b16 %v1268
        %v4324 = vunpack.c.h.b16 %v1268
        %v4325 = vunpack.c.l.b16 %v1269
        %v4326 = vunpack.c.h.b16 %v1269
        %v4327 = vunpack.c.l.b16 %v1270
        %v4328 = vunpack.c.h.b16 %v1270
        %v4329 = vunpack.c.l.b16 %v1271
        %v4330 = vunpack.c.h.b16 %v1271
        %v4331 = vunpack.c.l.b16 %v1272
        %v4332 = vunpack.c.h.b16 %v1272
        %v4333 = vunpack.c.l.b16 %v1273
        %v4334 = vunpack.c.h.b16 %v1273
        %v4335 = vunpack.c.l.b16 %v1274
        %v4336 = vunpack.c.h.b16 %v1274
        %v4337 = vunpack.c.l.b16 %v1275
        %v4338 = vunpack.c.h.b16 %v1275
        %v4339 = vunpack.c.l.b16 %v1276
        %v4340 = vunpack.c.h.b16 %v1276
        %v4341 = vunpack.c.l.b16 %v1277
        %v4342 = vunpack.c.h.b16 %v1277
        %v4343 = vunpack.c.l.b16 %v1278
        %v4344 = vunpack.c.h.b16 %v1278
        %v4345 = vunpack.c.l.b16 %v1279
        %v4346 = vunpack.c.h.b16 %v1279
        %v4347 = vunpack.c.l.b16 %v1280
        %v4348 = vunpack.c.h.b16 %v1280
        %v4349 = vunpack.c.l.b16 %v1281
        %v4350 = vunpack.c.h.b16 %v1281
        %v4351 = vunpack.c.l.b16 %v1282
        %v4352 = vunpack.c.h.b16 %v1282
        %v4353 = vunpack.c.l.b16 %v1283
        %v4354 = vunpack.c.h.b16 %v1283
        %v4355 = vunpack.c.l.b16 %v1284
        %v4356 = vunpack.c.h.b16 %v1284
        %v4357 = vunpack.c.l.b16 %v1285
        %v4358 = vunpack.c.h.b16 %v1285
        %v4359 = vunpack.c.l.b16 %v1286
        %v4360 = vunpack.c.h.b16 %v1286
        %v4361 = vunpack.c.l.b16 %v1287
        %v4362 = vunpack.c.h.b16 %v1287
        %v4363 = vunpack.c.l.b16 %v1288
        %v4364 = vunpack.c.h.b16 %v1288
        %v4365 = vunpack.c.l.b16 %v1289
        %v4366 = vunpack.c.h.b16 %v1289
        %v4367 = vunpack.c.l.b16 %v1290
        %v4368 = vunpack.c.h.b16 %v1290
        %v4369 = vunpack.c.l.b16 %v1291
        %v4370 = vunpack.c.h.b16 %v1291
        %v4371 = vunpack.c.l.b16 %v1292
        %v4372 = vunpack.c.h.b16 %v1292
        %v4373 = vunpack.c.l.b16 %v1293
        %v4374 = vunpack.c.h.b16 %v1293
        %v4375 = vunpack.c.l.b16 %v1294
        %v4376 = vunpack.c.h.b16 %v1294
        %v4377 = vunpack.c.l.b16 %v1295
        %v4378 = vunpack.c.h.b16 %v1295
        %v4379 = vunpack.c.l.b16 %v1296
        %v4380 = vunpack.c.h.b16 %v1296
        %v4381 = vunpack.c.l.b16 %v1297
        %v4382 = vunpack.c.h.b16 %v1297
        %v4383 = vunpack.c.l.b16 %v1298
        %v4384 = vunpack.c.h.b16 %v1298
        %v4385 = vunpack.c.l.b16 %v1299
        %v4386 = vunpack.c.h.b16 %v1299
        %v4387 = vunpack.c.l.b16 %v1300
        %v4388 = vunpack.c.h.b16 %v1300
        %v4389 = vunpack.c.l.b16 %v1301
        %v4390 = vunpack.c.h.b16 %v1301
        %v4391 = vunpack.c.l.b16 %v1302
        %v4392 = vunpack.c.h.b16 %v1302
        %v4393 = vunpack.c.l.b16 %v1303
        %v4394 = vunpack.c.h.b16 %v1303
        %v4395 = vunpack.c.l.b16 %v1304
        %v4396 = vunpack.c.h.b16 %v1304
        %v4397 = vunpack.c.l.b16 %v1305
        %v4398 = vunpack.c.h.b16 %v1305
        %v4399 = vunpack.c.l.b16 %v1306
        %v4400 = vunpack.c.h.b16 %v1306
        %v4401 = vpack.c.b16 %v2611, %v2609
        %v4402 = vpack.c.b16 %v2612, %v2610
        %v4403 = vpack.c.b16 %v2615, %v2613
        %v4404 = vpack.c.b16 %v2616, %v2614
        %v4405 = vpack.c.b16 %v2619, %v2617
        %v4406 = vpack.c.b16 %v2620, %v2618
        %v4407 = vpack.c.b16 %v2623, %v2621
        %v4408 = vpack.c.b16 %v2624, %v2622
        %v4409 = vpack.c.b16 %v2627, %v2625
        %v4410 = vpack.c.b16 %v2628, %v2626
        %v4411 = vpack.c.b16 %v2631, %v2629
        %v4412 = vpack.c.b16 %v2632, %v2630
        %v4413 = vpack.c.b16 %v2635, %v2633
        %v4414 = vpack.c.b16 %v2636, %v2634
        %v4415 = vpack.c.b16 %v2639, %v2637
        %v4416 = vpack.c.b16 %v2640, %v2638
        %v4417 = vpack.c.b16 %v2643, %v2641
        %v4418 = vpack.c.b16 %v2644, %v2642
        %v4419 = vpack.c.b16 %v2647, %v2645
        %v4420 = vpack.c.b16 %v2648, %v2646
        %v4421 = vpack.c.b16 %v2651, %v2649
        %v4422 = vpack.c.b16 %v2652, %v2650
        %v4423 = vpack.c.b16 %v2655, %v2653
        %v4424 = vpack.c.b16 %v2656, %v2654
        %v4425 = vpack.c.b16 %v2659, %v2657
        %v4426 = vpack.c.b16 %v2660, %v2658
        %v4427 = vpack.c.b16 %v2663, %v2661
        %v4428 = vpack.c.b16 %v2664, %v2662
        %v4429 = vpack.c.b16 %v2667, %v2665
        %v4430 = vpack.c.b16 %v2668, %v2666
        %v4431 = vpack.c.b16 %v2671, %v2669
        %v4432 = vpack.c.b16 %v2672, %v2670
        %v4433 = vpack.c.b16 %v2675, %v2673
        %v4434 = vpack.c.b16 %v2676, %v2674
        %v4435 = vpack.c.b16 %v2679, %v2677
        %v4436 = vpack.c.b16 %v2680, %v2678
        %v4437 = vpack.c.b16 %v2683, %v2681
        %v4438 = vpack.c.b16 %v2684, %v2682
        %v4439 = vpack.c.b16 %v2687, %v2685
        %v4440 = vpack.c.b16 %v2688, %v2686
        %v4441 = vpack.c.b16 %v2691, %v2689
        %v4442 = vpack.c.b16 %v2692, %v2690
        %v4443 = vpack.c.b16 %v2695, %v2693
        %v4444 = vpack.c.b16 %v2696, %v2694
        %v4445 = vpack.c.b16 %v2699, %v2697
        %v4446 = vpack.c.b16 %v2700, %v2698
        %v4447 = vpack.c.b16 %v2703, %v2701
        %v4448 = vpack.c.b16 %v2704, %v2702
        %v4449 = vpack.c.b16 %v2707, %v2705
        %v4450 = vpack.c.b16 %v2708, %v2706
        %v4451 = vpack.c.b16 %v2711, %v2709
        %v4452 = vpack.c.b16 %v2712, %v2710
        %v4453 = vpack.c.b16 %v2715, %v2713
        %v4454 = vpack.c.b16 %v2716, %v2714
        %v4455 = vpack.c.b16 %v2719, %v2717
        %v4456 = vpack.c.b16 %v2720, %v2718
        %v4457 = vpack.c.b16 %v2723, %v2721
        %v4458 = vpack.c.b16 %v2724, %v2722
        %v4459 = vpack.c.b16 %v2727, %v2725
        %v4460 = vpack.c.b16 %v2728, %v2726
        %v4461 = vpack.c.b16 %v2731, %v2729
        %v4462 = vpack.c.b16 %v2732, %v2730
        %v4463 = vpack.c.b16 %v2735, %v2733
        %v4464 = vpack.c.b16 %v2736, %v2734
        %v4465 = vpack.c.b16 %v2739, %v2737
        %v4466 = vpack.c.b16 %v2740, %v2738
        %v4467 = vpack.c.b16 %v2743, %v2741
        %v4468 = vpack.c.b16 %v2744, %v2742
        %v4469 = vpack.c.b16 %v2747, %v2745
        %v4470 = vpack.c.b16 %v2748, %v2746
        %v4471 = vpack.c.b16 %v2751, %v2749
        %v4472 = vpack.c.b16 %v2752, %v2750
        %v4473 = vpack.c.b16 %v2755, %v2753
        %v4474 = vpack.c.b16 %v2756, %v2754
        %v4475 = vpack.c.b16 %v2759, %v2757
        %v4476 = vpack.c.b16 %v2760, %v2758
        %v4477 = vpack.c.b16 %v2763, %v2761
        %v4478 = vpack.c.b16 %v2764, %v2762
        %v4479 = vpack.c.b16 %v2767, %v2765
        %v4480 = vpack.c.b16 %v2768, %v2766
        %v4481 = vpack.c.b16 %v2771, %v2769
        %v4482 = vpack.c.b16 %v2772, %v2770
        %v4483 = vpack.c.b16 %v2775, %v2773
        %v4484 = vpack.c.b16 %v2776, %v2774
        %v4485 = vpack.c.b16 %v2779, %v2777
        %v4486 = vpack.c.b16 %v2780, %v2778
        %v4487 = vpack.c.b16 %v2783, %v2781
        %v4488 = vpack.c.b16 %v2784, %v2782
        %v4489 = vpack.c.b16 %v2787, %v2785
        %v4490 = vpack.c.b16 %v2788, %v2786
        %v4491 = vpack.c.b16 %v2791, %v2789
        %v4492 = vpack.c.b16 %v2792, %v2790
        %v4493 = vpack.c.b16 %v2795, %v2793
        %v4494 = vpack.c.b16 %v2796, %v2794
        %v4495 = vpack.c.b16 %v2799, %v2797
        %v4496 = vpack.c.b16 %v2800, %v2798
        %v4497 = vpack.c.b16 %v2803, %v2801
        %v4498 = vpack.c.b16 %v2804, %v2802
        %v4499 = vpack.c.b16 %v2807, %v2805
        %v4500 = vpack.c.b16 %v2808, %v2806
        %v4501 = vpack.c.b16 %v2811, %v2809
        %v4502 = vpack.c.b16 %v2812, %v2810
        %v4503 = vpack.c.b16 %v2815, %v2813
        %v4504 = vpack.c.b16 %v2816, %v2814
        %v4505 = vpack.c.b16 %v2819, %v2817
        %v4506 = vpack.c.b16 %v2820, %v2818
        %v4507 = vpack.c.b16 %v2823, %v2821
        %v4508 = vpack.c.b16 %v2824, %v2822
        %v4509 = vpack.c.b16 %v2827, %v2825
        %v4510 = vpack.c.b16 %v2828, %v2826
        %v4511 = vpack.c.b16 %v2831, %v2829
        %v4512 = vpack.c.b16 %v2832, %v2830
        %v4513 = vpack.c.b16 %v2835, %v2833
        %v4514 = vpack.c.b16 %v2836, %v2834
        %v4515 = vpack.c.b16 %v2839, %v2837
        %v4516 = vpack.c.b16 %v2840, %v2838
        %v4517 = vpack.c.b16 %v2843, %v2841
        %v4518 = vpack.c.b16 %v2844, %v2842
        %v4519 = vpack.c.b16 %v2847, %v2845
        %v4520 = vpack.c.b16 %v2848, %v2846
        %v4521 = vpack.c.b16 %v2851, %v2849
        %v4522 = vpack.c.b16 %v2852, %v2850
        %v4523 = vpack.c.b16 %v2855, %v2853
        %v4524 = vpack.c.b16 %v2856, %v2854
        %v4525 = vpack.c.b16 %v2859, %v2857
        %v4526 = vpack.c.b16 %v2860, %v2858
        %v4527 = vpack.c.b16 %v2863, %v2861
        %v4528 = vpack.c.b16 %v2864, %v2862
        %v4529 = vpack.c.b16 %v2867, %v2865
        %v4530 = vpack.c.b16 %v2868, %v2866
        %v4531 = vpack.c.b16 %v2871, %v2869
        %v4532 = vpack.c.b16 %v2872, %v2870
        %v4533 = vpack.c.b16 %v2875, %v2873
        %v4534 = vpack.c.b16 %v2876, %v2874
        %v4535 = vpack.c.b16 %v2879, %v2877
        %v4536 = vpack.c.b16 %v2880, %v2878
        %v4537 = vpack.c.b16 %v2883, %v2881
        %v4538 = vpack.c.b16 %v2884, %v2882
        %v4539 = vpack.c.b16 %v2887, %v2885
        %v4540 = vpack.c.b16 %v2888, %v2886
        %v4541 = vpack.c.b16 %v2891, %v2889
        %v4542 = vpack.c.b16 %v2892, %v2890
        %v4543 = vpack.c.b16 %v2895, %v2893
        %v4544 = vpack.c.b16 %v2896, %v2894
        %v4545 = vpack.c.b16 %v2899, %v2897
        %v4546 = vpack.c.b16 %v2900, %v2898
        %v4547 = vpack.c.b16 %v2903, %v2901
        %v4548 = vpack.c.b16 %v2904, %v2902
        %v4549 = vpack.c.b16 %v2907, %v2905
        %v4550 = vpack.c.b16 %v2908, %v2906
        %v4551 = vpack.c.b16 %v2911, %v2909
        %v4552 = vpack.c.b16 %v2912, %v2910
        %v4553 = vpack.c.b16 %v2915, %v2913
        %v4554 = vpack.c.b16 %v2916, %v2914
        %v4555 = vpack.c.b16 %v2919, %v2917
        %v4556 = vpack.c.b16 %v2920, %v2918
        %v4557 = vpack.c.b16 %v2923, %v2921
        %v4558 = vpack.c.b16 %v2924, %v2922
        %v4559 = vpack.c.b16 %v2927, %v2925
        %v4560 = vpack.c.b16 %v2928, %v2926
        %v4561 = vpack.c.b16 %v2931, %v2929
        %v4562 = vpack.c.b16 %v2932, %v2930
        %v4563 = vpack.c.b16 %v2935, %v2933
        %v4564 = vpack.c.b16 %v2936, %v2934
        %v4565 = vpack.c.b16 %v2939, %v2937
        %v4566 = vpack.c.b16 %v2940, %v2938
        %v4567 = vpack.c.b16 %v2943, %v2941
        %v4568 = vpack.c.b16 %v2944, %v2942
        %v4569 = vpack.c.b16 %v2947, %v2945
        %v4570 = vpack.c.b16 %v2948, %v2946
        %v4571 = vpack.c.b16 %v2951, %v2949
        %v4572 = vpack.c.b16 %v2952, %v2950
        %v4573 = vpack.c.b16 %v2955, %v2953
        %v4574 = vpack.c.b16 %v2956, %v2954
        %v4575 = vpack.c.b16 %v2959, %v2957
        %v4576 = vpack.c.b16 %v2960, %v2958
        %v4577 = vpack.c.b16 %v2963, %v2961
        %v4578 = vpack.c.b16 %v2964, %v2962
        %v4579 = vpack.c.b16 %v2967, %v2965
        %v4580 = vpack.c.b16 %v2968, %v2966
        %v4581 = vpack.c.b16 %v2971, %v2969
        %v4582 = vpack.c.b16 %v2972, %v2970
        %v4583 = vpack.c.b16 %v2975, %v2973
        %v4584 = vpack.c.b16 %v2976, %v2974
        %v4585 = vpack.c.b16 %v2979, %v2977
        %v4586 = vpack.c.b16 %v2980, %v2978
        %v4587 = vpack.c.b16 %v2983, %v2981
        %v4588 = vpack.c.b16 %v2984, %v2982
        %v4589 = vpack.c.b16 %v2987, %v2985
        %v4590 = vpack.c.b16 %v2988, %v2986
        %v4591 = vpack.c.b16 %v2991, %v2989
        %v4592 = vpack.c.b16 %v2992, %v2990
        %v4593 = vpack.c.b16 %v2995, %v2993
        %v4594 = vpack.c.b16 %v2996, %v2994
        %v4595 = vpack.c.b16 %v2999, %v2997
        %v4596 = vpack.c.b16 %v3000, %v2998
        %v4597 = vpack.c.b16 %v3003, %v3001
        %v4598 = vpack.c.b16 %v3004, %v3002
        %v4599 = vpack.c.b16 %v3007, %v3005
        %v4600 = vpack.c.b16 %v3008, %v3006
        %v4601 = vpack.c.b16 %v3011, %v3009
        %v4602 = vpack.c.b16 %v3012, %v3010
        %v4603 = vpack.c.b16 %v3015, %v3013
        %v4604 = vpack.c.b16 %v3016, %v3014
        %v4605 = vpack.c.b16 %v3019, %v3017
        %v4606 = vpack.c.b16 %v3020, %v3018
        %v4607 = vpack.c.b16 %v3023, %v3021
        %v4608 = vpack.c.b16 %v3024, %v3022
        %v4609 = vpack.c.b16 %v3027, %v3025
        %v4610 = vpack.c.b16 %v3028, %v3026
        %v4611 = vpack.c.b16 %v3031, %v3029
        %v4612 = vpack.c.b16 %v3032, %v3030
        %v4613 = vpack.c.b16 %v3035, %v3033
        %v4614 = vpack.c.b16 %v3036, %v3034
        %v4615 = vpack.c.b16 %v3039, %v3037
        %v4616 = vpack.c.b16 %v3040, %v3038
        %v4617 = vpack.c.b16 %v3043, %v3041
        %v4618 = vpack.c.b16 %v3044, %v3042
        %v4619 = vpack.c.b16 %v3047, %v3045
        %v4620 = vpack.c.b16 %v3048, %v3046
        %v4621 = vpack.c.b16 %v3051, %v3049
        %v4622 = vpack.c.b16 %v3052, %v3050
        %v4623 = vpack.c.b16 %v3055, %v3053
        %v4624 = vpack.c.b16 %v3056, %v3054
        %v4625 = vpack.c.b16 %v3059, %v3057
        %v4626 = vpack.c.b16 %v3060, %v3058
        %v4627 = vpack.c.b16 %v3063, %v3061
        %v4628 = vpack.c.b16 %v3064, %v3062
        %v4629 = vpack.c.b16 %v3067, %v3065
        %v4630 = vpack.c.b16 %v3068, %v3066
        %v4631 = vpack.c.b16 %v3071, %v3069
        %v4632 = vpack.c.b16 %v3072, %v3070
        %v4633 = vpack.c.b16 %v3075, %v3073
        %v4634 = vpack.c.b16 %v3076, %v3074
        %v4635 = vpack.c.b16 %v3079, %v3077
        %v4636 = vpack.c.b16 %v3080, %v3078
        %v4637 = vpack.c.b16 %v3083, %v3081
        %v4638 = vpack.c.b16 %v3084, %v3082
        %v4639 = vpack.c.b16 %v3087, %v3085
        %v4640 = vpack.c.b16 %v3088, %v3086
        %v4641 = vpack.c.b16 %v3091, %v3089
        %v4642 = vpack.c.b16 %v3092, %v3090
        %v4643 = vpack.c.b16 %v3095, %v3093
        %v4644 = vpack.c.b16 %v3096, %v3094
        %v4645 = vpack.c.b16 %v3099, %v3097
        %v4646 = vpack.c.b16 %v3100, %v3098
        %v4647 = vpack.c.b16 %v3103, %v3101
        %v4648 = vpack.c.b16 %v3104, %v3102
        %v4649 = vpack.c.b16 %v3107, %v3105
        %v4650 = vpack.c.b16 %v3108, %v3106
        %v4651 = vpack.c.b16 %v3111, %v3109
        %v4652 = vpack.c.b16 %v3112, %v3110
        %v4653 = vpack.c.b16 %v3115, %v3113
        %v4654 = vpack.c.b16 %v3116, %v3114
        %v4655 = vpack.c.b16 %v3119, %v3117
        %v4656 = vpack.c.b16 %v3120, %v3118
        %v4657 = vpack.c.b16 %v3123, %v3121
        %v4658 = vpack.c.b16 %v3124, %v3122
        %v4659 = vpack.c.b16 %v3127, %v3125
        %v4660 = vpack.c.b16 %v3128, %v3126
        %v4661 = vpack.c.b16 %v3131, %v3129
        %v4662 = vpack.c.b16 %v3132, %v3130
        %v4663 = vpack.c.b16 %v3135, %v3133
        %v4664 = vpack.c.b16 %v3136, %v3134
        %v4665 = vpack.c.b16 %v3139, %v3137
        %v4666 = vpack.c.b16 %v3140, %v3138
        %v4667 = vpack.c.b16 %v3143, %v3141
        %v4668 = vpack.c.b16 %v3144, %v3142
        %v4669 = vpack.c.b16 %v3147, %v3145
        %v4670 = vpack.c.b16 %v3148, %v3146
        %v4671 = vpack.c.b16 %v3151, %v3149
        %v4672 = vpack.c.b16 %v3152, %v3150
        %v4673 = vpack.c.b16 %v3155, %v3153
        %v4674 = vpack.c.b16 %v3156, %v3154
        %v4675 = vpack.c.b16 %v3159, %v3157
        %v4676 = vpack.c.b16 %v3160, %v3158
        %v4677 = vpack.c.b16 %v3163, %v3161
        %v4678 = vpack.c.b16 %v3164, %v3162
        %v4679 = vpack.c.b16 %v3167, %v3165
        %v4680 = vpack.c.b16 %v3168, %v3166
        %v4681 = vpack.c.b16 %v3171, %v3169
        %v4682 = vpack.c.b16 %v3172, %v3170
        %v4683 = vpack.c.b16 %v3175, %v3173
        %v4684 = vpack.c.b16 %v3176, %v3174
        %v4685 = vpack.c.b16 %v3179, %v3177
        %v4686 = vpack.c.b16 %v3180, %v3178
        %v4687 = vpack.c.b16 %v3183, %v3181
        %v4688 = vpack.c.b16 %v3184, %v3182
        %v4689 = vpack.c.b16 %v3187, %v3185
        %v4690 = vpack.c.b16 %v3188, %v3186
        %v4691 = vpack.c.b16 %v3191, %v3189
        %v4692 = vpack.c.b16 %v3192, %v3190
        %v4693 = vpack.c.b16 %v3195, %v3193
        %v4694 = vpack.c.b16 %v3196, %v3194
        %v4695 = vpack.c.b16 %v3199, %v3197
        %v4696 = vpack.c.b16 %v3200, %v3198
        %v4697 = vpack.c.b16 %v3203, %v3201
        %v4698 = vpack.c.b16 %v3204, %v3202
        %v4699 = vpack.c.b16 %v3207, %v3205
        %v4700 = vpack.c.b16 %v3208, %v3206
        %v4701 = vpack.c.b16 %v3211, %v3209
        %v4702 = vpack.c.b16 %v3212, %v3210
        %v4703 = vpack.c.b16 %v3215, %v3213
        %v4704 = vpack.c.b16 %v3216, %v3214
        %v4705 = vpack.c.b16 %v3219, %v3217
        %v4706 = vpack.c.b16 %v3220, %v3218
        %v4707 = vpack.c.b16 %v3223, %v3221
        %v4708 = vpack.c.b16 %v3224, %v3222
        %v4709 = vpack.c.b16 %v3227, %v3225
        %v4710 = vpack.c.b16 %v3228, %v3226
        %v4711 = vpack.c.b16 %v3231, %v3229
        %v4712 = vpack.c.b16 %v3232, %v3230
        %v4713 = vpack.c.b16 %v3235, %v3233
        %v4714 = vpack.c.b16 %v3236, %v3234
        %v4715 = vpack.c.b16 %v3239, %v3237
        %v4716 = vpack.c.b16 %v3240, %v3238
        %v4717 = vpack.c.b16 %v3243, %v3241
        %v4718 = vpack.c.b16 %v3244, %v3242
        %v4719 = vpack.c.b16 %v3247, %v3245
        %v4720 = vpack.c.b16 %v3248, %v3246
        %v4721 = vpack.c.b16 %v3251, %v3249
        %v4722 = vpack.c.b16 %v3252, %v3250
        %v4723 = vpack.c.b16 %v3255, %v3253
        %v4724 = vpack.c.b16 %v3256, %v3254
        %v4725 = vpack.c.b16 %v3259, %v3257
        %v4726 = vpack.c.b16 %v3260, %v3258
        %v4727 = vpack.c.b16 %v3263, %v3261
        %v4728 = vpack.c.b16 %v3264, %v3262
        %v4729 = vpack.c.b16 %v3267, %v3265
        %v4730 = vpack.c.b16 %v3268, %v3266
        %v4731 = vpack.c.b16 %v3271, %v3269
        %v4732 = vpack.c.b16 %v3272, %v3270
        %v4733 = vpack.c.b16 %v3275, %v3273
        %v4734 = vpack.c.b16 %v3276, %v3274
        %v4735 = vpack.c.b16 %v3279, %v3277
        %v4736 = vpack.c.b16 %v3280, %v3278
        %v4737 = vpack.c.b16 %v3283, %v3281
        %v4738 = vpack.c.b16 %v3284, %v3282
        %v4739 = vpack.c.b16 %v3287, %v3285
        %v4740 = vpack.c.b16 %v3288, %v3286
        %v4741 = vpack.c.b16 %v3291, %v3289
        %v4742 = vpack.c.b16 %v3292, %v3290
        %v4743 = vpack.c.b16 %v3295, %v3293
        %v4744 = vpack.c.b16 %v3296, %v3294
        %v4745 = vpack.c.b16 %v3299, %v3297
        %v4746 = vpack.c.b16 %v3300, %v3298
        %v4747 = vpack.c.b16 %v3303, %v3301
        %v4748 = vpack.c.b16 %v3304, %v3302
        %v4749 = vpack.c.b16 %v3307, %v3305
        %v4750 = vpack.c.b16 %v3308, %v3306
        %v4751 = vpack.c.b16 %v3311, %v3309
        %v4752 = vpack.c.b16 %v3312, %v3310
        %v4753 = vpack.c.b16 %v3315, %v3313
        %v4754 = vpack.c.b16 %v3316, %v3314
        %v4755 = vpack.c.b16 %v3319, %v3317
        %v4756 = vpack.c.b16 %v3320, %v3318
        %v4757 = vpack.c.b16 %v3323, %v3321
        %v4758 = vpack.c.b16 %v3324, %v3322
        %v4759 = vpack.c.b16 %v3327, %v3325
        %v4760 = vpack.c.b16 %v3328, %v3326
        %v4761 = vpack.c.b16 %v3331, %v3329
        %v4762 = vpack.c.b16 %v3332, %v3330
        %v4763 = vpack.c.b16 %v3335, %v3333
        %v4764 = vpack.c.b16 %v3336, %v3334
        %v4765 = vpack.c.b16 %v3339, %v3337
        %v4766 = vpack.c.b16 %v3340, %v3338
        %v4767 = vpack.c.b16 %v3343, %v3341
        %v4768 = vpack.c.b16 %v3344, %v3342
        %v4769 = vpack.c.b16 %v3347, %v3345
        %v4770 = vpack.c.b16 %v3348, %v3346
        %v4771 = vpack.c.b16 %v3351, %v3349
        %v4772 = vpack.c.b16 %v3352, %v3350
        %v4773 = vpack.c.b16 %v3355, %v3353
        %v4774 = vpack.c.b16 %v3356, %v3354
        %v4775 = vpack.c.b16 %v3359, %v3357
        %v4776 = vpack.c.b16 %v3360, %v3358
        %v4777 = vpack.c.b16 %v3363, %v3361
        %v4778 = vpack.c.b16 %v3364, %v3362
        %v4779 = vpack.c.b16 %v3367, %v3365
        %v4780 = vpack.c.b16 %v3368, %v3366
        %v4781 = vpack.c.b16 %v3371, %v3369
        %v4782 = vpack.c.b16 %v3372, %v3370
        %v4783 = vpack.c.b16 %v3375, %v3373
        %v4784 = vpack.c.b16 %v3376, %v3374
        %v4785 = vpack.c.b16 %v3379, %v3377
        %v4786 = vpack.c.b16 %v3380, %v3378
        %v4787 = vpack.c.b16 %v3383, %v3381
        %v4788 = vpack.c.b16 %v3384, %v3382
        %v4789 = vpack.c.b16 %v3387, %v3385
        %v4790 = vpack.c.b16 %v3388, %v3386
        %v4791 = vpack.c.b16 %v3391, %v3389
        %v4792 = vpack.c.b16 %v3392, %v3390
        %v4793 = vpack.c.b16 %v3395, %v3393
        %v4794 = vpack.c.b16 %v3396, %v3394
        %v4795 = vpack.c.b16 %v3399, %v3397
        %v4796 = vpack.c.b16 %v3400, %v3398
        %v4797 = vpack.c.b16 %v3403, %v3401
        %v4798 = vpack.c.b16 %v3404, %v3402
        %v4799 = vpack.c.b16 %v3407, %v3405
        %v4800 = vpack.c.b16 %v3408, %v3406
        %v4801 = vpack.c.b16 %v3411, %v3409
        %v4802 = vpack.c.b16 %v3412, %v3410
        %v4803 = vpack.c.b16 %v3415, %v3413
        %v4804 = vpack.c.b16 %v3416, %v3414
        %v4805 = vpack.c.b16 %v3419, %v3417
        %v4806 = vpack.c.b16 %v3420, %v3418
        %v4807 = vpack.c.b16 %v3423, %v3421
        %v4808 = vpack.c.b16 %v3424, %v3422
        %v4809 = vpack.c.b16 %v3427, %v3425
        %v4810 = vpack.c.b16 %v3428, %v3426
        %v4811 = vpack.c.b16 %v3431, %v3429
        %v4812 = vpack.c.b16 %v3432, %v3430
        %v4813 = vpack.c.b16 %v3435, %v3433
        %v4814 = vpack.c.b16 %v3436, %v3434
        %v4815 = vpack.c.b16 %v3439, %v3437
        %v4816 = vpack.c.b16 %v3440, %v3438
        %v4817 = vpack.c.b16 %v3443, %v3441
        %v4818 = vpack.c.b16 %v3444, %v3442
        %v4819 = vpack.c.b16 %v3447, %v3445
        %v4820 = vpack.c.b16 %v3448, %v3446
        %v4821 = vpack.c.b16 %v3451, %v3449
        %v4822 = vpack.c.b16 %v3452, %v3450
        %v4823 = vpack.c.b16 %v3455, %v3453
        %v4824 = vpack.c.b16 %v3456, %v3454
        %v4825 = vpack.c.b16 %v3459, %v3457
        %v4826 = vpack.c.b16 %v3460, %v3458
        %v4827 = vpack.c.b16 %v3463, %v3461
        %v4828 = vpack.c.b16 %v3464, %v3462
        %v4829 = vpack.c.b16 %v3467, %v3465
        %v4830 = vpack.c.b16 %v3468, %v3466
        %v4831 = vpack.c.b16 %v3471, %v3469
        %v4832 = vpack.c.b16 %v3472, %v3470
        %v4833 = vpack.c.b16 %v3475, %v3473
        %v4834 = vpack.c.b16 %v3476, %v3474
        %v4835 = vpack.c.b16 %v3479, %v3477
        %v4836 = vpack.c.b16 %v3480, %v3478
        %v4837 = vpack.c.b16 %v3483, %v3481
        %v4838 = vpack.c.b16 %v3484, %v3482
        %v4839 = vpack.c.b16 %v3487, %v3485
        %v4840 = vpack.c.b16 %v3488, %v3486
        %v4841 = vpack.c.b16 %v3491, %v3489
        %v4842 = vpack.c.b16 %v3492, %v3490
        %v4843 = vpack.c.b16 %v3495, %v3493
        %v4844 = vpack.c.b16 %v3496, %v3494
        %v4845 = vpack.c.b16 %v3499, %v3497
        %v4846 = vpack.c.b16 %v3500, %v3498
        %v4847 = vpack.c.b16 %v3503, %v3501
        %v4848 = vpack.c.b16 %v3504, %v3502
        %v4849 = vpack.c.b16 %v3507, %v3505
        %v4850 = vpack.c.b16 %v3508, %v3506
        %v4851 = vpack.c.b16 %v3511, %v3509
        %v4852 = vpack.c.b16 %v3512, %v3510
        %v4853 = vpack.c.b16 %v3515, %v3513
        %v4854 = vpack.c.b16 %v3516, %v3514
        %v4855 = vpack.c.b16 %v3519, %v3517
        %v4856 = vpack.c.b16 %v3520, %v3518
        %v4857 = vpack.c.b16 %v3523, %v3521
        %v4858 = vpack.c.b16 %v3524, %v3522
        %v4859 = vpack.c.b16 %v3527, %v3525
        %v4860 = vpack.c.b16 %v3528, %v3526
        %v4861 = vpack.c.b16 %v3531, %v3529
        %v4862 = vpack.c.b16 %v3532, %v3530
        %v4863 = vpack.c.b16 %v3535, %v3533
        %v4864 = vpack.c.b16 %v3536, %v3534
        %v4865 = vpack.c.b16 %v3539, %v3537
        %v4866 = vpack.c.b16 %v3540, %v3538
        %v4867 = vpack.c.b16 %v3543, %v3541
        %v4868 = vpack.c.b16 %v3544, %v3542
        %v4869 = vpack.c.b16 %v3547, %v3545
        %v4870 = vpack.c.b16 %v3548, %v3546
        %v4871 = vpack.c.b16 %v3551, %v3549
        %v4872 = vpack.c.b16 %v3552, %v3550
        %v4873 = vpack.c.b16 %v3555, %v3553
        %v4874 = vpack.c.b16 %v3556, %v3554
        %v4875 = vpack.c.b16 %v3559, %v3557
        %v4876 = vpack.c.b16 %v3560, %v3558
        %v4877 = vpack.c.b16 %v3563, %v3561
        %v4878 = vpack.c.b16 %v3564, %v3562
        %v4879 = vpack.c.b16 %v3567, %v3565
        %v4880 = vpack.c.b16 %v3568, %v3566
        %v4881 = vpack.c.b16 %v3571, %v3569
        %v4882 = vpack.c.b16 %v3572, %v3570
        %v4883 = vpack.c.b16 %v3575, %v3573
        %v4884 = vpack.c.b16 %v3576, %v3574
        %v4885 = vpack.c.b16 %v3579, %v3577
        %v4886 = vpack.c.b16 %v3580, %v3578
        %v4887 = vpack.c.b16 %v3583, %v3581
        %v4888 = vpack.c.b16 %v3584, %v3582
        %v4889 = vpack.c.b16 %v3587, %v3585
        %v4890 = vpack.c.b16 %v3588, %v3586
        %v4891 = vpack.c.b16 %v3591, %v3589
        %v4892 = vpack.c.b16 %v3592, %v3590
        %v4893 = vpack.c.b16 %v3595, %v3593
        %v4894 = vpack.c.b16 %v3596, %v3594
        %v4895 = vpack.c.b16 %v3599, %v3597
        %v4896 = vpack.c.b16 %v3600, %v3598
        %v4897 = vpack.c.b16 %v3603, %v3601
        %v4898 = vpack.c.b16 %v3604, %v3602
        %v4899 = vpack.c.b16 %v3607, %v3605
        %v4900 = vpack.c.b16 %v3608, %v3606
        %v4901 = vpack.c.b16 %v3611, %v3609
        %v4902 = vpack.c.b16 %v3612, %v3610
        %v4903 = vpack.c.b16 %v3615, %v3613
        %v4904 = vpack.c.b16 %v3616, %v3614
        %v4905 = vpack.c.b16 %v3619, %v3617
        %v4906 = vpack.c.b16 %v3620, %v3618
        %v4907 = vpack.c.b16 %v3623, %v3621
        %v4908 = vpack.c.b16 %v3624, %v3622
        %v4909 = vpack.c.b16 %v3627, %v3625
        %v4910 = vpack.c.b16 %v3628, %v3626
        %v4911 = vpack.c.b16 %v3631, %v3629
        %v4912 = vpack.c.b16 %v3632, %v3630
        %v4913 = vpack.c.b16 %v3635, %v3633
        %v4914 = vpack.c.b16 %v3636, %v3634
        %v4915 = vpack.c.b16 %v3639, %v3637
        %v4916 = vpack.c.b16 %v3640, %v3638
        %v4917 = vpack.c.b16 %v3643, %v3641
        %v4918 = vpack.c.b16 %v3644, %v3642
        %v4919 = vpack.c.b16 %v3647, %v3645
        %v4920 = vpack.c.b16 %v3648, %v3646
        %v4921 = vpack.c.b16 %v3651, %v3649
        %v4922 = vpack.c.b16 %v3652, %v3650
        %v4923 = vpack.c.b16 %v3655, %v3653
        %v4924 = vpack.c.b16 %v3656, %v3654
        %v4925 = vpack.c.b16 %v3659, %v3657
        %v4926 = vpack.c.b16 %v3660, %v3658
        %v4927 = vpack.c.b16 %v3663, %v3661
        %v4928 = vpack.c.b16 %v3664, %v3662
        %v4929 = vpack.c.b16 %v3667, %v3665
        %v4930 = vpack.c.b16 %v3668, %v3666
        %v4931 = vpack.c.b16 %v3671, %v3669
        %v4932 = vpack.c.b16 %v3672, %v3670
        %v4933 = vpack.c.b16 %v3675, %v3673
        %v4934 = vpack.c.b16 %v3676, %v3674
        %v4935 = vpack.c.b16 %v3679, %v3677
        %v4936 = vpack.c.b16 %v3680, %v3678
        %v4937 = vpack.c.b16 %v3683, %v3681
        %v4938 = vpack.c.b16 %v3684, %v3682
        %v4939 = vpack.c.b16 %v3687, %v3685
        %v4940 = vpack.c.b16 %v3688, %v3686
        %v4941 = vpack.c.b16 %v3691, %v3689
        %v4942 = vpack.c.b16 %v3692, %v3690
        %v4943 = vpack.c.b16 %v3695, %v3693
        %v4944 = vpack.c.b16 %v3696, %v3694
        %v4945 = vpack.c.b16 %v3699, %v3697
        %v4946 = vpack.c.b16 %v3700, %v3698
        %v4947 = vpack.c.b16 %v3703, %v3701
        %v4948 = vpack.c.b16 %v3704, %v3702
        %v4949 = vpack.c.b16 %v3707, %v3705
        %v4950 = vpack.c.b16 %v3708, %v3706
        %v4951 = vpack.c.b16 %v3711, %v3709
        %v4952 = vpack.c.b16 %v3712, %v3710
        %v4953 = vpack.c.b16 %v3715, %v3713
        %v4954 = vpack.c.b16 %v3716, %v3714
        %v4955 = vpack.c.b16 %v3719, %v3717
        %v4956 = vpack.c.b16 %v3720, %v3718
        %v4957 = vpack.c.b16 %v3723, %v3721
        %v4958 = vpack.c.b16 %v3724, %v3722
        %v4959 = vpack.c.b16 %v3727, %v3725
        %v4960 = vpack.c.b16 %v3728, %v3726
        %v4961 = vpack.c.b16 %v3731, %v3729
        %v4962 = vpack.c.b16 %v3732, %v3730
        %v4963 = vpack.c.b16 %v3735, %v3733
        %v4964 = vpack.c.b16 %v3736, %v3734
        %v4965 = vpack.c.b16 %v3739, %v3737
        %v4966 = vpack.c.b16 %v3740, %v3738
        %v4967 = vpack.c.b16 %v3743, %v3741
        %v4968 = vpack.c.b16 %v3744, %v3742
        %v4969 = vpack.c.b16 %v3747, %v3745
        %v4970 = vpack.c.b16 %v3748, %v3746
        %v4971 = vpack.c.b16 %v3751, %v3749
        %v4972 = vpack.c.b16 %v3752, %v3750
        %v4973 = vpack.c.b16 %v3755, %v3753
        %v4974 = vpack.c.b16 %v3756, %v3754
        %v4975 = vpack.c.b16 %v3759, %v3757
        %v4976 = vpack.c.b16 %v3760, %v3758
        %v4977 = vpack.c.b16 %v3763, %v3761
        %v4978 = vpack.c.b16 %v3764, %v3762
        %v4979 = vpack.c.b16 %v3767, %v3765
        %v4980 = vpack.c.b16 %v3768, %v3766
        %v4981 = vpack.c.b16 %v3771, %v3769
        %v4982 = vpack.c.b16 %v3772, %v3770
        %v4983 = vpack.c.b16 %v3775, %v3773
        %v4984 = vpack.c.b16 %v3776, %v3774
        %v4985 = vpack.c.b16 %v3779, %v3777
        %v4986 = vpack.c.b16 %v3780, %v3778
        %v4987 = vpack.c.b16 %v3783, %v3781
        %v4988 = vpack.c.b16 %v3784, %v3782
        %v4989 = vpack.c.b16 %v3787, %v3785
        %v4990 = vpack.c.b16 %v3788, %v3786
        %v4991 = vpack.c.b16 %v3791, %v3789
        %v4992 = vpack.c.b16 %v3792, %v3790
        %v4993 = vpack.c.b16 %v3795, %v3793
        %v4994 = vpack.c.b16 %v3796, %v3794
        %v4995 = vpack.c.b16 %v3799, %v3797
        %v4996 = vpack.c.b16 %v3800, %v3798
        %v4997 = vpack.c.b16 %v3803, %v3801
        %v4998 = vpack.c.b16 %v3804, %v3802
        %v4999 = vpack.c.b16 %v3807, %v3805
        %v5000 = vpack.c.b16 %v3808, %v3806
        %v5001 = vpack.c.b16 %v3811, %v3809
        %v5002 = vpack.c.b16 %v3812, %v3810
        %v5003 = vpack.c.b16 %v3815, %v3813
        %v5004 = vpack.c.b16 %v3816, %v3814
        %v5005 = vpack.c.b16 %v3819, %v3817
        %v5006 = vpack.c.b16 %v3820, %v3818
        %v5007 = vpack.c.b16 %v3823, %v3821
        %v5008 = vpack.c.b16 %v3824, %v3822
        %v5009 = vpack.c.b16 %v3827, %v3825
        %v5010 = vpack.c.b16 %v3828, %v3826
        %v5011 = vpack.c.b16 %v3831, %v3829
        %v5012 = vpack.c.b16 %v3832, %v3830
        %v5013 = vpack.c.b16 %v3835, %v3833
        %v5014 = vpack.c.b16 %v3836, %v3834
        %v5015 = vpack.c.b16 %v3839, %v3837
        %v5016 = vpack.c.b16 %v3840, %v3838
        %v5017 = vpack.c.b16 %v3843, %v3841
        %v5018 = vpack.c.b16 %v3844, %v3842
        %v5019 = vpack.c.b16 %v3847, %v3845
        %v5020 = vpack.c.b16 %v3848, %v3846
        %v5021 = vpack.c.b16 %v3851, %v3849
        %v5022 = vpack.c.b16 %v3852, %v3850
        %v5023 = vpack.c.b16 %v3855, %v3853
        %v5024 = vpack.c.b16 %v3856, %v3854
        %v5025 = vpack.c.b16 %v3859, %v3857
        %v5026 = vpack.c.b16 %v3860, %v3858
        %v5027 = vpack.c.b16 %v3863, %v3861
        %v5028 = vpack.c.b16 %v3864, %v3862
        %v5029 = vpack.c.b16 %v3867, %v3865
        %v5030 = vpack.c.b16 %v3868, %v3866
        %v5031 = vpack.c.b16 %v3871, %v3869
        %v5032 = vpack.c.b16 %v3872, %v3870
        %v5033 = vpack.c.b16 %v3875, %v3873
        %v5034 = vpack.c.b16 %v3876, %v3874
        %v5035 = vpack.c.b16 %v3879, %v3877
        %v5036 = vpack.c.b16 %v3880, %v3878
        %v5037 = vpack.c.b16 %v3883, %v3881
        %v5038 = vpack.c.b16 %v3884, %v3882
        %v5039 = vpack.c.b16 %v3887, %v3885
        %v5040 = vpack.c.b16 %v3888, %v3886
        %v5041 = vpack.c.b16 %v3891, %v3889
        %v5042 = vpack.c.b16 %v3892, %v3890
        %v5043 = vpack.c.b16 %v3895, %v3893
        %v5044 = vpack.c.b16 %v3896, %v3894
        %v5045 = vpack.c.b16 %v3899, %v3897
        %v5046 = vpack.c.b16 %v3900, %v3898
        %v5047 = vpack.c.b16 %v3903, %v3901
        %v5048 = vpack.c.b16 %v3904, %v3902
        %v5049 = vpack.c.b16 %v3907, %v3905
        %v5050 = vpack.c.b16 %v3908, %v3906
        %v5051 = vpack.c.b16 %v3911, %v3909
        %v5052 = vpack.c.b16 %v3912, %v3910
        %v5053 = vpack.c.b16 %v3915, %v3913
        %v5054 = vpack.c.b16 %v3916, %v3914
        %v5055 = vpack.c.b16 %v3919, %v3917
        %v5056 = vpack.c.b16 %v3920, %v3918
        %v5057 = vpack.c.b16 %v3923, %v3921
        %v5058 = vpack.c.b16 %v3924, %v3922
        %v5059 = vpack.c.b16 %v3927, %v3925
        %v5060 = vpack.c.b16 %v3928, %v3926
        %v5061 = vpack.c.b16 %v3931, %v3929
        %v5062 = vpack.c.b16 %v3932, %v3930
        %v5063 = vpack.c.b16 %v3935, %v3933
        %v5064 = vpack.c.b16 %v3936, %v3934
        %v5065 = vpack.c.b16 %v3939, %v3937
        %v5066 = vpack.c.b16 %v3940, %v3938
        %v5067 = vpack.c.b16 %v3943, %v3941
        %v5068 = vpack.c.b16 %v3944, %v3942
        %v5069 = vpack.c.b16 %v3947, %v3945
        %v5070 = vpack.c.b16 %v3948, %v3946
        %v5071 = vpack.c.b16 %v3951, %v3949
        %v5072 = vpack.c.b16 %v3952, %v3950
        %v5073 = vpack.c.b16 %v3955, %v3953
        %v5074 = vpack.c.b16 %v3956, %v3954
        %v5075 = vpack.c.b16 %v3959, %v3957
        %v5076 = vpack.c.b16 %v3960, %v3958
        %v5077 = vpack.c.b16 %v3963, %v3961
        %v5078 = vpack.c.b16 %v3964, %v3962
        %v5079 = vpack.c.b16 %v3967, %v3965
        %v5080 = vpack.c.b16 %v3968, %v3966
        %v5081 = vpack.c.b16 %v3971, %v3969
        %v5082 = vpack.c.b16 %v3972, %v3970
        %v5083 = vpack.c.b16 %v3975, %v3973
        %v5084 = vpack.c.b16 %v3976, %v3974
        %v5085 = vpack.c.b16 %v3979, %v3977
        %v5086 = vpack.c.b16 %v3980, %v3978
        %v5087 = vpack.c.b16 %v3983, %v3981
        %v5088 = vpack.c.b16 %v3984, %v3982
        %v5089 = vpack.c.b16 %v3987, %v3985
        %v5090 = vpack.c.b16 %v3988, %v3986
        %v5091 = vpack.c.b16 %v3991, %v3989
        %v5092 = vpack.c.b16 %v3992, %v3990
        %v5093 = vpack.c.b16 %v3995, %v3993
        %v5094 = vpack.c.b16 %v3996, %v3994
        %v5095 = vpack.c.b16 %v3999, %v3997
        %v5096 = vpack.c.b16 %v4000, %v3998
        %v5097 = vpack.c.b16 %v4003, %v4001
        %v5098 = vpack.c.b16 %v4004, %v4002
        %v5099 = vpack.c.b16 %v4007, %v4005
        %v5100 = vpack.c.b16 %v4008, %v4006
        %v5101 = vpack.c.b16 %v4011, %v4009
        %v5102 = vpack.c.b16 %v4012, %v4010
        %v5103 = vpack.c.b16 %v4015, %v4013
        %v5104 = vpack.c.b16 %v4016, %v4014
        %v5105 = vpack.c.b16 %v4019, %v4017
        %v5106 = vpack.c.b16 %v4020, %v4018
        %v5107 = vpack.c.b16 %v4023, %v4021
        %v5108 = vpack.c.b16 %v4024, %v4022
        %v5109 = vpack.c.b16 %v4027, %v4025
        %v5110 = vpack.c.b16 %v4028, %v4026
        %v5111 = vpack.c.b16 %v4031, %v4029
        %v5112 = vpack.c.b16 %v4032, %v4030
        %v5113 = vpack.c.b16 %v4035, %v4033
        %v5114 = vpack.c.b16 %v4036, %v4034
        %v5115 = vpack.c.b16 %v4039, %v4037
        %v5116 = vpack.c.b16 %v4040, %v4038
        %v5117 = vpack.c.b16 %v4043, %v4041
        %v5118 = vpack.c.b16 %v4044, %v4042
        %v5119 = vpack.c.b16 %v4047, %v4045
        %v5120 = vpack.c.b16 %v4048, %v4046
        %v5121 = vpack.c.b16 %v4051, %v4049
        %v5122 = vpack.c.b16 %v4052, %v4050
        %v5123 = vpack.c.b16 %v4055, %v4053
        %v5124 = vpack.c.b16 %v4056, %v4054
        %v5125 = vpack.c.b16 %v4059, %v4057
        %v5126 = vpack.c.b16 %v4060, %v4058
        %v5127 = vpack.c.b16 %v4063, %v4061
        %v5128 = vpack.c.b16 %v4064, %v4062
        %v5129 = vpack.c.b16 %v4067, %v4065
        %v5130 = vpack.c.b16 %v4068, %v4066
        %v5131 = vpack.c.b16 %v4071, %v4069
        %v5132 = vpack.c.b16 %v4072, %v4070
        %v5133 = vpack.c.b16 %v4075, %v4073
        %v5134 = vpack.c.b16 %v4076, %v4074
        %v5135 = vpack.c.b16 %v4079, %v4077
        %v5136 = vpack.c.b16 %v4080, %v4078
        %v5137 = vpack.c.b16 %v4083, %v4081
        %v5138 = vpack.c.b16 %v4084, %v4082
        %v5139 = vpack.c.b16 %v4087, %v4085
        %v5140 = vpack.c.b16 %v4088, %v4086
        %v5141 = vpack.c.b16 %v4091, %v4089
        %v5142 = vpack.c.b16 %v4092, %v4090
        %v5143 = vpack.c.b16 %v4095, %v4093
        %v5144 = vpack.c.b16 %v4096, %v4094
        %v5145 = vpack.c.b16 %v4099, %v4097
        %v5146 = vpack.c.b16 %v4100, %v4098
        %v5147 = vpack.c.b16 %v4103, %v4101
        %v5148 = vpack.c.b16 %v4104, %v4102
        %v5149 = vpack.c.b16 %v4107, %v4105
        %v5150 = vpack.c.b16 %v4108, %v4106
        %v5151 = vpack.c.b16 %v4111, %v4109
        %v5152 = vpack.c.b16 %v4112, %v4110
        %v5153 = vpack.c.b16 %v4115, %v4113
        %v5154 = vpack.c.b16 %v4116, %v4114
        %v5155 = vpack.c.b16 %v4119, %v4117
        %v5156 = vpack.c.b16 %v4120, %v4118
        %v5157 = vpack.c.b16 %v4123, %v4121
        %v5158 = vpack.c.b16 %v4124, %v4122
        %v5159 = vpack.c.b16 %v4127, %v4125
        %v5160 = vpack.c.b16 %v4128, %v4126
        %v5161 = vpack.c.b16 %v4131, %v4129
        %v5162 = vpack.c.b16 %v4132, %v4130
        %v5163 = vpack.c.b16 %v4135, %v4133
        %v5164 = vpack.c.b16 %v4136, %v4134
        %v5165 = vpack.c.b16 %v4139, %v4137
        %v5166 = vpack.c.b16 %v4140, %v4138
        %v5167 = vpack.c.b16 %v4143, %v4141
        %v5168 = vpack.c.b16 %v4144, %v4142
        %v5169 = vpack.c.b16 %v4147, %v4145
        %v5170 = vpack.c.b16 %v4148, %v4146
        %v5171 = vpack.c.b16 %v4151, %v4149
        %v5172 = vpack.c.b16 %v4152, %v4150
        %v5173 = vpack.c.b16 %v4155, %v4153
        %v5174 = vpack.c.b16 %v4156, %v4154
        %v5175 = vpack.c.b16 %v4159, %v4157
        %v5176 = vpack.c.b16 %v4160, %v4158
        %v5177 = vpack.c.b16 %v4163, %v4161
        %v5178 = vpack.c.b16 %v4164, %v4162
        %v5179 = vpack.c.b16 %v4167, %v4165
        %v5180 = vpack.c.b16 %v4168, %v4166
        %v5181 = vpack.c.b16 %v4171, %v4169
        %v5182 = vpack.c.b16 %v4172, %v4170
        %v5183 = vpack.c.b16 %v4175, %v4173
        %v5184 = vpack.c.b16 %v4176, %v4174
        %v5185 = vpack.c.b16 %v4179, %v4177
        %v5186 = vpack.c.b16 %v4180, %v4178
        %v5187 = vpack.c.b16 %v4183, %v4181
        %v5188 = vpack.c.b16 %v4184, %v4182
        %v5189 = vpack.c.b16 %v4187, %v4185
        %v5190 = vpack.c.b16 %v4188, %v4186
        %v5191 = vpack.c.b16 %v4191, %v4189
        %v5192 = vpack.c.b16 %v4192, %v4190
        %v5193 = vpack.c.b16 %v4195, %v4193
        %v5194 = vpack.c.b16 %v4196, %v4194
        %v5195 = vpack.c.b16 %v4199, %v4197
        %v5196 = vpack.c.b16 %v4200, %v4198
        %v5197 = vpack.c.b16 %v4203, %v4201
        %v5198 = vpack.c.b16 %v4204, %v4202
        %v5199 = vpack.c.b16 %v4207, %v4205
        %v5200 = vpack.c.b16 %v4208, %v4206
        %v5201 = vpack.c.b16 %v4211, %v4209
        %v5202 = vpack.c.b16 %v4212, %v4210
        %v5203 = vpack.c.b16 %v4215, %v4213
        %v5204 = vpack.c.b16 %v4216, %v4214
        %v5205 = vpack.c.b16 %v4219, %v4217
        %v5206 = vpack.c.b16 %v4220, %v4218
        %v5207 = vpack.c.b16 %v4223, %v4221
        %v5208 = vpack.c.b16 %v4224, %v4222
        %v5209 = vpack.c.b16 %v4227, %v4225
        %v5210 = vpack.c.b16 %v4228, %v4226
        %v5211 = vpack.c.b16 %v4231, %v4229
        %v5212 = vpack.c.b16 %v4232, %v4230
        %v5213 = vpack.c.b16 %v4235, %v4233
        %v5214 = vpack.c.b16 %v4236, %v4234
        %v5215 = vpack.c.b16 %v4239, %v4237
        %v5216 = vpack.c.b16 %v4240, %v4238
        %v5217 = vpack.c.b16 %v4243, %v4241
        %v5218 = vpack.c.b16 %v4244, %v4242
        %v5219 = vpack.c.b16 %v4247, %v4245
        %v5220 = vpack.c.b16 %v4248, %v4246
        %v5221 = vpack.c.b16 %v4251, %v4249
        %v5222 = vpack.c.b16 %v4252, %v4250
        %v5223 = vpack.c.b16 %v4255, %v4253
        %v5224 = vpack.c.b16 %v4256, %v4254
        %v5225 = vpack.c.b16 %v4259, %v4257
        %v5226 = vpack.c.b16 %v4260, %v4258
        %v5227 = vpack.c.b16 %v4263, %v4261
        %v5228 = vpack.c.b16 %v4264, %v4262
        %v5229 = vpack.c.b16 %v4267, %v4265
        %v5230 = vpack.c.b16 %v4268, %v4266
        %v5231 = vpack.c.b16 %v4271, %v4269
        %v5232 = vpack.c.b16 %v4272, %v4270
        %v5233 = vpack.c.b16 %v4275, %v4273
        %v5234 = vpack.c.b16 %v4276, %v4274
        %v5235 = vpack.c.b16 %v4279, %v4277
        %v5236 = vpack.c.b16 %v4280, %v4278
        %v5237 = vpack.c.b16 %v4283, %v4281
        %v5238 = vpack.c.b16 %v4284, %v4282
        %v5239 = vpack.c.b16 %v4287, %v4285
        %v5240 = vpack.c.b16 %v4288, %v4286
        %v5241 = vpack.c.b16 %v4291, %v4289
        %v5242 = vpack.c.b16 %v4292, %v4290
        %v5243 = vpack.c.b16 %v4295, %v4293
        %v5244 = vpack.c.b16 %v4296, %v4294
        %v5245 = vpack.c.b16 %v4299, %v4297
        %v5246 = vpack.c.b16 %v4300, %v4298
        %v5247 = vpack.c.b16 %v4303, %v4301
        %v5248 = vpack.c.b16 %v4304, %v4302
        %v5249 = vpack.c.b16 %v4307, %v4305
        %v5250 = vpack.c.b16 %v4308, %v4306
        %v5251 = vpack.c.b16 %v4311, %v4309
        %v5252 = vpack.c.b16 %v4312, %v4310
        %v5253 = vpack.c.b16 %v4315, %v4313
        %v5254 = vpack.c.b16 %v4316, %v4314
        %v5255 = vpack.c.b16 %v4319, %v4317
        %v5256 = vpack.c.b16 %v4320, %v4318
        %v5257 = vpack.c.b16 %v4323, %v4321
        %v5258 = vpack.c.b16 %v4324, %v4322
        %v5259 = vpack.c.b16 %v4327, %v4325
        %v5260 = vpack.c.b16 %v4328, %v4326
        %v5261 = vpack.c.b16 %v4331, %v4329
        %v5262 = vpack.c.b16 %v4332, %v4330
        %v5263 = vpack.c.b16 %v4335, %v4333
        %v5264 = vpack.c.b16 %v4336, %v4334
        %v5265 = vpack.c.b16 %v4339, %v4337
        %v5266 = vpack.c.b16 %v4340, %v4338
        %v5267 = vpack.c.b16 %v4343, %v4341
        %v5268 = vpack.c.b16 %v4344, %v4342
        %v5269 = vpack.c.b16 %v4347, %v4345
        %v5270 = vpack.c.b16 %v4348, %v4346
        %v5271 = vpack.c.b16 %v4351, %v4349
        %v5272 = vpack.c.b16 %v4352, %v4350
        %v5273 = vpack.c.b16 %v4355, %v4353
        %v5274 = vpack.c.b16 %v4356, %v4354
        %v5275 = vpack.c.b16 %v4359, %v4357
        %v5276 = vpack.c.b16 %v4360, %v4358
        %v5277 = vpack.c.b16 %v4363, %v4361
        %v5278 = vpack.c.b16 %v4364, %v4362
        %v5279 = vpack.c.b16 %v4367, %v4365
        %v5280 = vpack.c.b16 %v4368, %v4366
        %v5281 = vpack.c.b16 %v4371, %v4369
        %v5282 = vpack.c.b16 %v4372, %v4370
        %v5283 = vpack.c.b16 %v4375, %v4373
        %v5284 = vpack.c.b16 %v4376, %v4374
        %v5285 = vpack.c.b16 %v4379, %v4377
        %v5286 = vpack.c.b16 %v4380, %v4378
        %v5287 = vpack.c.b16 %v4383, %v4381
        %v5288 = vpack.c.b16 %v4384, %v4382
        %v5289 = vpack.c.b16 %v4387, %v4385
        %v5290 = vpack.c.b16 %v4388, %v4386
        %v5291 = vpack.c.b16 %v4391, %v4389
        %v5292 = vpack.c.b16 %v4392, %v4390
        %v5293 = vpack.c.b16 %v4395, %v4393
        %v5294 = vpack.c.b16 %v4396, %v4394
        %v5295 = vpack.c.b16 %v4399, %v4397
        %v5296 = vpack.c.b16 %v4400, %v4398
        %6193 = vmatprep.subr.bf16.mxu0 %v4416
        %6194 = vmatpush1.bf16.msra.mxu0 %v4415
        %6195 = vmatprep.subr.bf16.mxu0 %v4414
        %6196 = vmatpush1.bf16.msra.mxu0 %v4413
        %6197 = vmatprep.subr.bf16.mxu0 %v4412
        %6198 = vmatpush1.bf16.msra.mxu0 %v4411
        %6199 = vmatprep.subr.bf16.mxu0 %v4410
        %6200 = vmatpush1.bf16.msra.mxu0 %v4409
        %6201 = vmatprep.subr.bf16.mxu0 %v4408
        %6202 = vmatpush1.bf16.msra.mxu0 %v4407
        %6203 = vmatprep.subr.bf16.mxu0 %v4406
        %6204 = vmatpush1.bf16.msra.mxu0 %v4405
        %6205 = vmatprep.subr.bf16.mxu0 %v4404
        %6206 = vmatpush1.bf16.msra.mxu0 %v4403
        %6207 = vmatprep.subr.bf16.mxu0 %v4402
        %6208 = vmatpush1.bf16.msra.mxu0 %v4401
        %6209 = vmatprep.subr.bf16.mxu0 %v4432
        %6210 = vmatpush2.bf16.msra.mxu0 %v4431
        %6211 = vmatprep.subr.bf16.mxu0 %v4430
        %6212 = vmatpush2.bf16.msra.mxu0 %v4429
        %6213 = vmatprep.subr.bf16.mxu0 %v4428
        %6214 = vmatpush2.bf16.msra.mxu0 %v4427
        %6215 = vmatprep.subr.bf16.mxu0 %v4426
        %6216 = vmatpush2.bf16.msra.mxu0 %v4425
        %6217 = vmatprep.subr.bf16.mxu0 %v4424
        %6218 = vmatpush2.bf16.msra.mxu0 %v4423
        %6219 = vmatprep.subr.bf16.mxu0 %v4422
        %6220 = vmatpush2.bf16.msra.mxu0 %v4421
        %6221 = vmatprep.subr.bf16.mxu0 %v4420
        %6222 = vmatpush2.bf16.msra.mxu0 %v4419
        %6223 = vmatprep.subr.bf16.mxu0 %v4418
        %6224 = vmatpush2.bf16.msra.mxu0 %v4417
        %6225 = vmatprep.mubr.bf16.mxu0 %v1351
        %6226 = vmatmul.mubr.bf16.gmra.mxu0 %v1337
        %v6227 = vpop.f32.mrf.mxu0
        %v6228 = vadd.f32 0.0, %v6227
        %v6229 = vpop.f32.mrf.mxu0
        %v6230 = vadd.f32 0.0, %v6229
        %v6231 = vpop.f32.mrf.mxu0
        %v6232 = vpop.f32.mrf.mxu0
        %6233 = vdwg.mxu0
        %6234 = vmatprep.subr.bf16.mxu0 %v4448
        %6235 = vmatpush1.bf16.msra.mxu0 %v4447
        %6236 = vmatprep.subr.bf16.mxu0 %v4446
        %6237 = vmatpush1.bf16.msra.mxu0 %v4445
        %6238 = vmatprep.subr.bf16.mxu0 %v4444
        %6239 = vmatpush1.bf16.msra.mxu0 %v4443
        %6240 = vmatprep.subr.bf16.mxu0 %v4442
        %6241 = vmatpush1.bf16.msra.mxu0 %v4441
        %6242 = vmatprep.subr.bf16.mxu0 %v4440
        %6243 = vmatpush1.bf16.msra.mxu0 %v4439
        %6244 = vmatprep.subr.bf16.mxu0 %v4438
        %6245 = vmatpush1.bf16.msra.mxu0 %v4437
        %6246 = vmatprep.subr.bf16.mxu0 %v4436
        %6247 = vmatpush1.bf16.msra.mxu0 %v4435
        %6248 = vmatprep.subr.bf16.mxu0 %v4434
        %6249 = vmatpush1.bf16.msra.mxu0 %v4433
        %6250 = vmatprep.subr.bf16.mxu0 %v4464
        %6251 = vmatpush2.bf16.msra.mxu0 %v4463
        %6252 = vmatprep.subr.bf16.mxu0 %v4462
        %6253 = vmatpush2.bf16.msra.mxu0 %v4461
        %6254 = vmatprep.subr.bf16.mxu0 %v4460
        %6255 = vmatpush2.bf16.msra.mxu0 %v4459
        %6256 = vmatprep.subr.bf16.mxu0 %v4458
        %6257 = vmatpush2.bf16.msra.mxu0 %v4457
        %6258 = vmatprep.subr.bf16.mxu0 %v4456
        %6259 = vmatpush2.bf16.msra.mxu0 %v4455
        %6260 = vmatprep.subr.bf16.mxu0 %v4454
        %6261 = vmatpush2.bf16.msra.mxu0 %v4453
        %6262 = vmatprep.subr.bf16.mxu0 %v4452
        %6263 = vmatpush2.bf16.msra.mxu0 %v4451
        %6264 = vmatprep.subr.bf16.mxu0 %v4450
        %6265 = vmatpush2.bf16.msra.mxu0 %v4449
        %6266 = vmatprep.mubr.bf16.mxu0 %v1361
        %6267 = vmatmul.mubr.bf16.gmra.mxu0 %v1359
        %v6268 = vpop.f32.mrf.mxu0
        %v6269 = vadd.f32 %v6228, %v6268
        %v6270 = vpop.f32.mrf.mxu0
        %v6271 = vadd.f32 %v6230, %v6270
        %v6272 = vpop.f32.mrf.mxu0
        %v6273 = vpop.f32.mrf.mxu0
        %6274 = vdwg.mxu0
        %6275 = vmatprep.subr.bf16.mxu0 %v4480
        %6276 = vmatpush1.bf16.msra.mxu0 %v4479
        %6277 = vmatprep.subr.bf16.mxu0 %v4478
        %6278 = vmatpush1.bf16.msra.mxu0 %v4477
        %6279 = vmatprep.subr.bf16.mxu0 %v4476
        %6280 = vmatpush1.bf16.msra.mxu0 %v4475
        %6281 = vmatprep.subr.bf16.mxu0 %v4474
        %6282 = vmatpush1.bf16.msra.mxu0 %v4473
        %6283 = vmatprep.subr.bf16.mxu0 %v4472
        %6284 = vmatpush1.bf16.msra.mxu0 %v4471
        %6285 = vmatprep.subr.bf16.mxu0 %v4470
        %6286 = vmatpush1.bf16.msra.mxu0 %v4469
        %6287 = vmatprep.subr.bf16.mxu0 %v4468
        %6288 = vmatpush1.bf16.msra.mxu0 %v4467
        %6289 = vmatprep.subr.bf16.mxu0 %v4466
        %6290 = vmatpush1.bf16.msra.mxu0 %v4465
        %6291 = vmatprep.subr.bf16.mxu0 %v4496
        %6292 = vmatpush2.bf16.msra.mxu0 %v4495
        %6293 = vmatprep.subr.bf16.mxu0 %v4494
        %6294 = vmatpush2.bf16.msra.mxu0 %v4493
        %6295 = vmatprep.subr.bf16.mxu0 %v4492
        %6296 = vmatpush2.bf16.msra.mxu0 %v4491
        %6297 = vmatprep.subr.bf16.mxu0 %v4490
        %6298 = vmatpush2.bf16.msra.mxu0 %v4489
        %6299 = vmatprep.subr.bf16.mxu0 %v4488
        %6300 = vmatpush2.bf16.msra.mxu0 %v4487
        %6301 = vmatprep.subr.bf16.mxu0 %v4486
        %6302 = vmatpush2.bf16.msra.mxu0 %v4485
        %6303 = vmatprep.subr.bf16.mxu0 %v4484
        %6304 = vmatpush2.bf16.msra.mxu0 %v4483
        %6305 = vmatprep.subr.bf16.mxu0 %v4482
        %6306 = vmatpush2.bf16.msra.mxu0 %v4481
        %6307 = vmatprep.mubr.bf16.mxu0 %v1358
        %6308 = vmatmul.mubr.bf16.gmra.mxu0 %v1344
        %v6309 = vpop.f32.mrf.mxu0
        %v6310 = vadd.f32 %v6269, %v6309
        %v6311 = vpop.f32.mrf.mxu0
        %v6312 = vadd.f32 %v6271, %v6311
        %v6313 = vpop.f32.mrf.mxu0
        %v6314 = vpop.f32.mrf.mxu0
        %6315 = vdwg.mxu0
        %6316 = vmatprep.subr.bf16.mxu0 %v4512
        %6317 = vmatpush1.bf16.msra.mxu0 %v4511
        %6318 = vmatprep.subr.bf16.mxu0 %v4510
        %6319 = vmatpush1.bf16.msra.mxu0 %v4509
        %6320 = vmatprep.subr.bf16.mxu0 %v4508
        %6321 = vmatpush1.bf16.msra.mxu0 %v4507
        %6322 = vmatprep.subr.bf16.mxu0 %v4506
        %6323 = vmatpush1.bf16.msra.mxu0 %v4505
        %6324 = vmatprep.subr.bf16.mxu0 %v4504
        %6325 = vmatpush1.bf16.msra.mxu0 %v4503
        %6326 = vmatprep.subr.bf16.mxu0 %v4502
        %6327 = vmatpush1.bf16.msra.mxu0 %v4501
        %6328 = vmatprep.subr.bf16.mxu0 %v4500
        %6329 = vmatpush1.bf16.msra.mxu0 %v4499
        %6330 = vmatprep.subr.bf16.mxu0 %v4498
        %6331 = vmatpush1.bf16.msra.mxu0 %v4497
        %6332 = vmatprep.subr.bf16.mxu0 %v4528
        %6333 = vmatpush2.bf16.msra.mxu0 %v4527
        %6334 = vmatprep.subr.bf16.mxu0 %v4526
        %6335 = vmatpush2.bf16.msra.mxu0 %v4525
        %6336 = vmatprep.subr.bf16.mxu0 %v4524
        %6337 = vmatpush2.bf16.msra.mxu0 %v4523
        %6338 = vmatprep.subr.bf16.mxu0 %v4522
        %6339 = vmatpush2.bf16.msra.mxu0 %v4521
        %6340 = vmatprep.subr.bf16.mxu0 %v4520
        %6341 = vmatpush2.bf16.msra.mxu0 %v4519
        %6342 = vmatprep.subr.bf16.mxu0 %v4518
        %6343 = vmatpush2.bf16.msra.mxu0 %v4517
        %6344 = vmatprep.subr.bf16.mxu0 %v4516
        %6345 = vmatpush2.bf16.msra.mxu0 %v4515
        %6346 = vmatprep.subr.bf16.mxu0 %v4514
        %6347 = vmatpush2.bf16.msra.mxu0 %v4513
        %6348 = vmatprep.mubr.bf16.mxu0 %v1362
        %6349 = vmatmul.mubr.bf16.gmra.mxu0 %v1360
        %v6350 = vpop.f32.mrf.mxu0
        %v6351 = vadd.f32 %v6310, %v6350
        %v6352 = vpop.f32.mrf.mxu0
        %v6353 = vadd.f32 %v6312, %v6352
        %v6354 = vpop.f32.mrf.mxu0
        %v6355 = vpop.f32.mrf.mxu0
        %6356 = vdwg.mxu0
        %6357 = vmatprep.subr.bf16.mxu0 %v4544
        %6358 = vmatpush1.bf16.msra.mxu0 %v4543
        %6359 = vmatprep.subr.bf16.mxu0 %v4542
        %6360 = vmatpush1.bf16.msra.mxu0 %v4541
        %6361 = vmatprep.subr.bf16.mxu0 %v4540
        %6362 = vmatpush1.bf16.msra.mxu0 %v4539
        %6363 = vmatprep.subr.bf16.mxu0 %v4538
        %6364 = vmatpush1.bf16.msra.mxu0 %v4537
        %6365 = vmatprep.subr.bf16.mxu0 %v4536
        %6366 = vmatpush1.bf16.msra.mxu0 %v4535
        %6367 = vmatprep.subr.bf16.mxu0 %v4534
        %6368 = vmatpush1.bf16.msra.mxu0 %v4533
        %6369 = vmatprep.subr.bf16.mxu0 %v4532
        %6370 = vmatpush1.bf16.msra.mxu0 %v4531
        %6371 = vmatprep.subr.bf16.mxu0 %v4530
        %6372 = vmatpush1.bf16.msra.mxu0 %v4529
        %6373 = vmatprep.subr.bf16.mxu0 %v4560
        %6374 = vmatpush2.bf16.msra.mxu0 %v4559
        %6375 = vmatprep.subr.bf16.mxu0 %v4558
        %6376 = vmatpush2.bf16.msra.mxu0 %v4557
        %6377 = vmatprep.subr.bf16.mxu0 %v4556
        %6378 = vmatpush2.bf16.msra.mxu0 %v4555
        %6379 = vmatprep.subr.bf16.mxu0 %v4554
        %6380 = vmatpush2.bf16.msra.mxu0 %v4553
        %6381 = vmatprep.subr.bf16.mxu0 %v4552
        %6382 = vmatpush2.bf16.msra.mxu0 %v4551
        %6383 = vmatprep.subr.bf16.mxu0 %v4550
        %6384 = vmatpush2.bf16.msra.mxu0 %v4549
        %6385 = vmatprep.subr.bf16.mxu0 %v4548
        %6386 = vmatpush2.bf16.msra.mxu0 %v4547
        %6387 = vmatprep.subr.bf16.mxu0 %v4546
        %6388 = vmatpush2.bf16.msra.mxu0 %v4545
        %6389 = vmatprep.mubr.bf16.mxu0 %v1400
        %6390 = vmatmul.mubr.bf16.gmra.mxu0 %v1386
        %v6391 = vpop.f32.mrf.mxu0
        %v6392 = vadd.f32 %v6351, %v6391
        %v6393 = vpop.f32.mrf.mxu0
        %v6394 = vadd.f32 %v6353, %v6393
        %v6395 = vpop.f32.mrf.mxu0
        %v6396 = vpop.f32.mrf.mxu0
        %6397 = vdwg.mxu0
        %6398 = vmatprep.subr.bf16.mxu0 %v4576
        %6399 = vmatpush1.bf16.msra.mxu0 %v4575
        %6400 = vmatprep.subr.bf16.mxu0 %v4574
        %6401 = vmatpush1.bf16.msra.mxu0 %v4573
        %6402 = vmatprep.subr.bf16.mxu0 %v4572
        %6403 = vmatpush1.bf16.msra.mxu0 %v4571
        %6404 = vmatprep.subr.bf16.mxu0 %v4570
        %6405 = vmatpush1.bf16.msra.mxu0 %v4569
        %6406 = vmatprep.subr.bf16.mxu0 %v4568
        %6407 = vmatpush1.bf16.msra.mxu0 %v4567
        %6408 = vmatprep.subr.bf16.mxu0 %v4566
        %6409 = vmatpush1.bf16.msra.mxu0 %v4565
        %6410 = vmatprep.subr.bf16.mxu0 %v4564
        %6411 = vmatpush1.bf16.msra.mxu0 %v4563
        %6412 = vmatprep.subr.bf16.mxu0 %v4562
        %6413 = vmatpush1.bf16.msra.mxu0 %v4561
        %6414 = vmatprep.subr.bf16.mxu0 %v4592
        %6415 = vmatpush2.bf16.msra.mxu0 %v4591
        %6416 = vmatprep.subr.bf16.mxu0 %v4590
        %6417 = vmatpush2.bf16.msra.mxu0 %v4589
        %6418 = vmatprep.subr.bf16.mxu0 %v4588
        %6419 = vmatpush2.bf16.msra.mxu0 %v4587
        %6420 = vmatprep.subr.bf16.mxu0 %v4586
        %6421 = vmatpush2.bf16.msra.mxu0 %v4585
        %6422 = vmatprep.subr.bf16.mxu0 %v4584
        %6423 = vmatpush2.bf16.msra.mxu0 %v4583
        %6424 = vmatprep.subr.bf16.mxu0 %v4582
        %6425 = vmatpush2.bf16.msra.mxu0 %v4581
        %6426 = vmatprep.subr.bf16.mxu0 %v4580
        %6427 = vmatpush2.bf16.msra.mxu0 %v4579
        %6428 = vmatprep.subr.bf16.mxu0 %v4578
        %6429 = vmatpush2.bf16.msra.mxu0 %v4577
        %6430 = vmatprep.mubr.bf16.mxu0 %v1410
        %6431 = vmatmul.mubr.bf16.gmra.mxu0 %v1408
        %v6432 = vpop.f32.mrf.mxu0
        %v6433 = vadd.f32 %v6392, %v6432
        %v6434 = vpop.f32.mrf.mxu0
        %v6435 = vadd.f32 %v6394, %v6434
        %v6436 = vpop.f32.mrf.mxu0
        %v6437 = vpop.f32.mrf.mxu0
        %6438 = vdwg.mxu0
        %6439 = vmatprep.subr.bf16.mxu0 %v4608
        %6440 = vmatpush1.bf16.msra.mxu0 %v4607
        %6441 = vmatprep.subr.bf16.mxu0 %v4606
        %6442 = vmatpush1.bf16.msra.mxu0 %v4605
        %6443 = vmatprep.subr.bf16.mxu0 %v4604
        %6444 = vmatpush1.bf16.msra.mxu0 %v4603
        %6445 = vmatprep.subr.bf16.mxu0 %v4602
        %6446 = vmatpush1.bf16.msra.mxu0 %v4601
        %6447 = vmatprep.subr.bf16.mxu0 %v4600
        %6448 = vmatpush1.bf16.msra.mxu0 %v4599
        %6449 = vmatprep.subr.bf16.mxu0 %v4598
        %6450 = vmatpush1.bf16.msra.mxu0 %v4597
        %6451 = vmatprep.subr.bf16.mxu0 %v4596
        %6452 = vmatpush1.bf16.msra.mxu0 %v4595
        %6453 = vmatprep.subr.bf16.mxu0 %v4594
        %6454 = vmatpush1.bf16.msra.mxu0 %v4593
        %6455 = vmatprep.subr.bf16.mxu0 %v4624
        %6456 = vmatpush2.bf16.msra.mxu0 %v4623
        %6457 = vmatprep.subr.bf16.mxu0 %v4622
        %6458 = vmatpush2.bf16.msra.mxu0 %v4621
        %6459 = vmatprep.subr.bf16.mxu0 %v4620
        %6460 = vmatpush2.bf16.msra.mxu0 %v4619
        %6461 = vmatprep.subr.bf16.mxu0 %v4618
        %6462 = vmatpush2.bf16.msra.mxu0 %v4617
        %6463 = vmatprep.subr.bf16.mxu0 %v4616
        %6464 = vmatpush2.bf16.msra.mxu0 %v4615
        %6465 = vmatprep.subr.bf16.mxu0 %v4614
        %6466 = vmatpush2.bf16.msra.mxu0 %v4613
        %6467 = vmatprep.subr.bf16.mxu0 %v4612
        %6468 = vmatpush2.bf16.msra.mxu0 %v4611
        %6469 = vmatprep.subr.bf16.mxu0 %v4610
        %6470 = vmatpush2.bf16.msra.mxu0 %v4609
        %6471 = vmatprep.mubr.bf16.mxu0 %v1407
        %6472 = vmatmul.mubr.bf16.gmra.mxu0 %v1393
        %v6473 = vpop.f32.mrf.mxu0
        %v6474 = vadd.f32 %v6433, %v6473
        %v6475 = vpop.f32.mrf.mxu0
        %v6476 = vadd.f32 %v6435, %v6475
        %v6477 = vpop.f32.mrf.mxu0
        %v6478 = vpop.f32.mrf.mxu0
        %6479 = vdwg.mxu0
        %6480 = vmatprep.subr.bf16.mxu0 %v4640
        %6481 = vmatpush1.bf16.msra.mxu0 %v4639
        %6482 = vmatprep.subr.bf16.mxu0 %v4638
        %6483 = vmatpush1.bf16.msra.mxu0 %v4637
        %6484 = vmatprep.subr.bf16.mxu0 %v4636
        %6485 = vmatpush1.bf16.msra.mxu0 %v4635
        %6486 = vmatprep.subr.bf16.mxu0 %v4634
        %6487 = vmatpush1.bf16.msra.mxu0 %v4633
        %6488 = vmatprep.subr.bf16.mxu0 %v4632
        %6489 = vmatpush1.bf16.msra.mxu0 %v4631
        %6490 = vmatprep.subr.bf16.mxu0 %v4630
        %6491 = vmatpush1.bf16.msra.mxu0 %v4629
        %6492 = vmatprep.subr.bf16.mxu0 %v4628
        %6493 = vmatpush1.bf16.msra.mxu0 %v4627
        %6494 = vmatprep.subr.bf16.mxu0 %v4626
        %6495 = vmatpush1.bf16.msra.mxu0 %v4625
        %6496 = vmatprep.subr.bf16.mxu0 %v4656
        %6497 = vmatpush2.bf16.msra.mxu0 %v4655
        %6498 = vmatprep.subr.bf16.mxu0 %v4654
        %6499 = vmatpush2.bf16.msra.mxu0 %v4653
        %6500 = vmatprep.subr.bf16.mxu0 %v4652
        %6501 = vmatpush2.bf16.msra.mxu0 %v4651
        %6502 = vmatprep.subr.bf16.mxu0 %v4650
        %6503 = vmatpush2.bf16.msra.mxu0 %v4649
        %6504 = vmatprep.subr.bf16.mxu0 %v4648
        %6505 = vmatpush2.bf16.msra.mxu0 %v4647
        %6506 = vmatprep.subr.bf16.mxu0 %v4646
        %6507 = vmatpush2.bf16.msra.mxu0 %v4645
        %6508 = vmatprep.subr.bf16.mxu0 %v4644
        %6509 = vmatpush2.bf16.msra.mxu0 %v4643
        %6510 = vmatprep.subr.bf16.mxu0 %v4642
        %6511 = vmatpush2.bf16.msra.mxu0 %v4641
        %6512 = vmatprep.mubr.bf16.mxu0 %v1411
        %6513 = vmatmul.mubr.bf16.gmra.mxu0 %v1409
        %v6514 = vpop.f32.mrf.mxu0
        %v6515 = vadd.f32 %v6474, %v6514
        %v6516 = vpop.f32.mrf.mxu0
        %v6517 = vadd.f32 %v6476, %v6516
        %v6518 = vpop.f32.mrf.mxu0
        %v6519 = vpop.f32.mrf.mxu0
        %6520 = vdwg.mxu0
        %6521 = vmatprep.subr.bf16.mxu0 %v4672
        %6522 = vmatpush1.bf16.msra.mxu0 %v4671
        %6523 = vmatprep.subr.bf16.mxu0 %v4670
        %6524 = vmatpush1.bf16.msra.mxu0 %v4669
        %6525 = vmatprep.subr.bf16.mxu0 %v4668
        %6526 = vmatpush1.bf16.msra.mxu0 %v4667
        %6527 = vmatprep.subr.bf16.mxu0 %v4666
        %6528 = vmatpush1.bf16.msra.mxu0 %v4665
        %6529 = vmatprep.subr.bf16.mxu0 %v4664
        %6530 = vmatpush1.bf16.msra.mxu0 %v4663
        %6531 = vmatprep.subr.bf16.mxu0 %v4662
        %6532 = vmatpush1.bf16.msra.mxu0 %v4661
        %6533 = vmatprep.subr.bf16.mxu0 %v4660
        %6534 = vmatpush1.bf16.msra.mxu0 %v4659
        %6535 = vmatprep.subr.bf16.mxu0 %v4658
        %6536 = vmatpush1.bf16.msra.mxu0 %v4657
        %6537 = vmatprep.subr.bf16.mxu0 %v4688
        %6538 = vmatpush2.bf16.msra.mxu0 %v4687
        %6539 = vmatprep.subr.bf16.mxu0 %v4686
        %6540 = vmatpush2.bf16.msra.mxu0 %v4685
        %6541 = vmatprep.subr.bf16.mxu0 %v4684
        %6542 = vmatpush2.bf16.msra.mxu0 %v4683
        %6543 = vmatprep.subr.bf16.mxu0 %v4682
        %6544 = vmatpush2.bf16.msra.mxu0 %v4681
        %6545 = vmatprep.subr.bf16.mxu0 %v4680
        %6546 = vmatpush2.bf16.msra.mxu0 %v4679
        %6547 = vmatprep.subr.bf16.mxu0 %v4678
        %6548 = vmatpush2.bf16.msra.mxu0 %v4677
        %6549 = vmatprep.subr.bf16.mxu0 %v4676
        %6550 = vmatpush2.bf16.msra.mxu0 %v4675
        %6551 = vmatprep.subr.bf16.mxu0 %v4674
        %6552 = vmatpush2.bf16.msra.mxu0 %v4673
        %6553 = vmatprep.mubr.bf16.mxu0 %v1449
        %6554 = vmatmul.mubr.bf16.gmra.mxu0 %v1435
        %v6555 = vpop.f32.mrf.mxu0
        %v6556 = vadd.f32 %v6515, %v6555
        %v6557 = vpop.f32.mrf.mxu0
        %v6558 = vadd.f32 %v6517, %v6557
        %v6559 = vpop.f32.mrf.mxu0
        %v6560 = vpop.f32.mrf.mxu0
        %6561 = vdwg.mxu0
        %6562 = vmatprep.subr.bf16.mxu0 %v4704
        %6563 = vmatpush1.bf16.msra.mxu0 %v4703
        %6564 = vmatprep.subr.bf16.mxu0 %v4702
        %6565 = vmatpush1.bf16.msra.mxu0 %v4701
        %6566 = vmatprep.subr.bf16.mxu0 %v4700
        %6567 = vmatpush1.bf16.msra.mxu0 %v4699
        %6568 = vmatprep.subr.bf16.mxu0 %v4698
        %6569 = vmatpush1.bf16.msra.mxu0 %v4697
        %6570 = vmatprep.subr.bf16.mxu0 %v4696
        %6571 = vmatpush1.bf16.msra.mxu0 %v4695
        %6572 = vmatprep.subr.bf16.mxu0 %v4694
        %6573 = vmatpush1.bf16.msra.mxu0 %v4693
        %6574 = vmatprep.subr.bf16.mxu0 %v4692
        %6575 = vmatpush1.bf16.msra.mxu0 %v4691
        %6576 = vmatprep.subr.bf16.mxu0 %v4690
        %6577 = vmatpush1.bf16.msra.mxu0 %v4689
        %6578 = vmatprep.subr.bf16.mxu0 %v4720
        %6579 = vmatpush2.bf16.msra.mxu0 %v4719
        %6580 = vmatprep.subr.bf16.mxu0 %v4718
        %6581 = vmatpush2.bf16.msra.mxu0 %v4717
        %6582 = vmatprep.subr.bf16.mxu0 %v4716
        %6583 = vmatpush2.bf16.msra.mxu0 %v4715
        %6584 = vmatprep.subr.bf16.mxu0 %v4714
        %6585 = vmatpush2.bf16.msra.mxu0 %v4713
        %6586 = vmatprep.subr.bf16.mxu0 %v4712
        %6587 = vmatpush2.bf16.msra.mxu0 %v4711
        %6588 = vmatprep.subr.bf16.mxu0 %v4710
        %6589 = vmatpush2.bf16.msra.mxu0 %v4709
        %6590 = vmatprep.subr.bf16.mxu0 %v4708
        %6591 = vmatpush2.bf16.msra.mxu0 %v4707
        %6592 = vmatprep.subr.bf16.mxu0 %v4706
        %6593 = vmatpush2.bf16.msra.mxu0 %v4705
        %6594 = vmatprep.mubr.bf16.mxu0 %v1459
        %6595 = vmatmul.mubr.bf16.gmra.mxu0 %v1457
        %v6596 = vpop.f32.mrf.mxu0
        %v6597 = vadd.f32 %v6556, %v6596
        %v6598 = vpop.f32.mrf.mxu0
        %v6599 = vadd.f32 %v6558, %v6598
        %v6600 = vpop.f32.mrf.mxu0
        %v6601 = vpop.f32.mrf.mxu0
        %6602 = vdwg.mxu0
        %6603 = vmatprep.subr.bf16.mxu0 %v4736
        %6604 = vmatpush1.bf16.msra.mxu0 %v4735
        %6605 = vmatprep.subr.bf16.mxu0 %v4734
        %6606 = vmatpush1.bf16.msra.mxu0 %v4733
        %6607 = vmatprep.subr.bf16.mxu0 %v4732
        %6608 = vmatpush1.bf16.msra.mxu0 %v4731
        %6609 = vmatprep.subr.bf16.mxu0 %v4730
        %6610 = vmatpush1.bf16.msra.mxu0 %v4729
        %6611 = vmatprep.subr.bf16.mxu0 %v4728
        %6612 = vmatpush1.bf16.msra.mxu0 %v4727
        %6613 = vmatprep.subr.bf16.mxu0 %v4726
        %6614 = vmatpush1.bf16.msra.mxu0 %v4725
        %6615 = vmatprep.subr.bf16.mxu0 %v4724
        %6616 = vmatpush1.bf16.msra.mxu0 %v4723
        %6617 = vmatprep.subr.bf16.mxu0 %v4722
        %6618 = vmatpush1.bf16.msra.mxu0 %v4721
        %6619 = vmatprep.subr.bf16.mxu0 %v4752
        %6620 = vmatpush2.bf16.msra.mxu0 %v4751
        %6621 = vmatprep.subr.bf16.mxu0 %v4750
        %6622 = vmatpush2.bf16.msra.mxu0 %v4749
        %6623 = vmatprep.subr.bf16.mxu0 %v4748
        %6624 = vmatpush2.bf16.msra.mxu0 %v4747
        %6625 = vmatprep.subr.bf16.mxu0 %v4746
        %6626 = vmatpush2.bf16.msra.mxu0 %v4745
        %6627 = vmatprep.subr.bf16.mxu0 %v4744
        %6628 = vmatpush2.bf16.msra.mxu0 %v4743
        %6629 = vmatprep.subr.bf16.mxu0 %v4742
        %6630 = vmatpush2.bf16.msra.mxu0 %v4741
        %6631 = vmatprep.subr.bf16.mxu0 %v4740
        %6632 = vmatpush2.bf16.msra.mxu0 %v4739
        %6633 = vmatprep.subr.bf16.mxu0 %v4738
        %6634 = vmatpush2.bf16.msra.mxu0 %v4737
        %6635 = vmatprep.mubr.bf16.mxu0 %v1456
        %6636 = vmatmul.mubr.bf16.gmra.mxu0 %v1442
        %v6637 = vpop.f32.mrf.mxu0
        %v6638 = vadd.f32 %v6597, %v6637
        %v6639 = vpop.f32.mrf.mxu0
        %v6640 = vadd.f32 %v6599, %v6639
        %v6641 = vpop.f32.mrf.mxu0
        %v6642 = vpop.f32.mrf.mxu0
        %6643 = vdwg.mxu0
        %6644 = vmatprep.subr.bf16.mxu0 %v4768
        %6645 = vmatpush1.bf16.msra.mxu0 %v4767
        %6646 = vmatprep.subr.bf16.mxu0 %v4766
        %6647 = vmatpush1.bf16.msra.mxu0 %v4765
        %6648 = vmatprep.subr.bf16.mxu0 %v4764
        %6649 = vmatpush1.bf16.msra.mxu0 %v4763
        %6650 = vmatprep.subr.bf16.mxu0 %v4762
        %6651 = vmatpush1.bf16.msra.mxu0 %v4761
        %6652 = vmatprep.subr.bf16.mxu0 %v4760
        %6653 = vmatpush1.bf16.msra.mxu0 %v4759
        %6654 = vmatprep.subr.bf16.mxu0 %v4758
        %6655 = vmatpush1.bf16.msra.mxu0 %v4757
        %6656 = vmatprep.subr.bf16.mxu0 %v4756
        %6657 = vmatpush1.bf16.msra.mxu0 %v4755
        %6658 = vmatprep.subr.bf16.mxu0 %v4754
        %6659 = vmatpush1.bf16.msra.mxu0 %v4753
        %6660 = vmatprep.subr.bf16.mxu0 %v4784
        %6661 = vmatpush2.bf16.msra.mxu0 %v4783
        %6662 = vmatprep.subr.bf16.mxu0 %v4782
        %6663 = vmatpush2.bf16.msra.mxu0 %v4781
        %6664 = vmatprep.subr.bf16.mxu0 %v4780
        %6665 = vmatpush2.bf16.msra.mxu0 %v4779
        %6666 = vmatprep.subr.bf16.mxu0 %v4778
        %6667 = vmatpush2.bf16.msra.mxu0 %v4777
        %6668 = vmatprep.subr.bf16.mxu0 %v4776
        %6669 = vmatpush2.bf16.msra.mxu0 %v4775
        %6670 = vmatprep.subr.bf16.mxu0 %v4774
        %6671 = vmatpush2.bf16.msra.mxu0 %v4773
        %6672 = vmatprep.subr.bf16.mxu0 %v4772
        %6673 = vmatpush2.bf16.msra.mxu0 %v4771
        %6674 = vmatprep.subr.bf16.mxu0 %v4770
        %6675 = vmatpush2.bf16.msra.mxu0 %v4769
        %6676 = vmatprep.mubr.bf16.mxu0 %v1460
        %6677 = vmatmul.mubr.bf16.gmra.mxu0 %v1458
        %v6678 = vpop.f32.mrf.mxu0
        %v6679 = vadd.f32 %v6638, %v6678
        %v6680 = vpop.f32.mrf.mxu0
        %v6681 = vadd.f32 %v6640, %v6680
        %v6682 = vpop.f32.mrf.mxu0
        %v6683 = vpop.f32.mrf.mxu0
        %6684 = vdwg.mxu0
        %6685 = vmatprep.subr.bf16.mxu0 %v4800
        %6686 = vmatpush1.bf16.msra.mxu0 %v4799
        %6687 = vmatprep.subr.bf16.mxu0 %v4798
        %6688 = vmatpush1.bf16.msra.mxu0 %v4797
        %6689 = vmatprep.subr.bf16.mxu0 %v4796
        %6690 = vmatpush1.bf16.msra.mxu0 %v4795
        %6691 = vmatprep.subr.bf16.mxu0 %v4794
        %6692 = vmatpush1.bf16.msra.mxu0 %v4793
        %6693 = vmatprep.subr.bf16.mxu0 %v4792
        %6694 = vmatpush1.bf16.msra.mxu0 %v4791
        %6695 = vmatprep.subr.bf16.mxu0 %v4790
        %6696 = vmatpush1.bf16.msra.mxu0 %v4789
        %6697 = vmatprep.subr.bf16.mxu0 %v4788
        %6698 = vmatpush1.bf16.msra.mxu0 %v4787
        %6699 = vmatprep.subr.bf16.mxu0 %v4786
        %6700 = vmatpush1.bf16.msra.mxu0 %v4785
        %6701 = vmatprep.subr.bf16.mxu0 %v4816
        %6702 = vmatpush2.bf16.msra.mxu0 %v4815
        %6703 = vmatprep.subr.bf16.mxu0 %v4814
        %6704 = vmatpush2.bf16.msra.mxu0 %v4813
        %6705 = vmatprep.subr.bf16.mxu0 %v4812
        %6706 = vmatpush2.bf16.msra.mxu0 %v4811
        %6707 = vmatprep.subr.bf16.mxu0 %v4810
        %6708 = vmatpush2.bf16.msra.mxu0 %v4809
        %6709 = vmatprep.subr.bf16.mxu0 %v4808
        %6710 = vmatpush2.bf16.msra.mxu0 %v4807
        %6711 = vmatprep.subr.bf16.mxu0 %v4806
        %6712 = vmatpush2.bf16.msra.mxu0 %v4805
        %6713 = vmatprep.subr.bf16.mxu0 %v4804
        %6714 = vmatpush2.bf16.msra.mxu0 %v4803
        %6715 = vmatprep.subr.bf16.mxu0 %v4802
        %6716 = vmatpush2.bf16.msra.mxu0 %v4801
        %6717 = vmatprep.mubr.bf16.mxu0 %v1498
        %6718 = vmatmul.mubr.bf16.gmra.mxu0 %v1484
        %v6719 = vpop.f32.mrf.mxu0
        %v6720 = vadd.f32 %v6679, %v6719
        %v6721 = vpop.f32.mrf.mxu0
        %v6722 = vadd.f32 %v6681, %v6721
        %v6723 = vpop.f32.mrf.mxu0
        %v6724 = vpop.f32.mrf.mxu0
        %6725 = vdwg.mxu0
        %6726 = vmatprep.subr.bf16.mxu0 %v4832
        %6727 = vmatpush1.bf16.msra.mxu0 %v4831
        %6728 = vmatprep.subr.bf16.mxu0 %v4830
        %6729 = vmatpush1.bf16.msra.mxu0 %v4829
        %6730 = vmatprep.subr.bf16.mxu0 %v4828
        %6731 = vmatpush1.bf16.msra.mxu0 %v4827
        %6732 = vmatprep.subr.bf16.mxu0 %v4826
        %6733 = vmatpush1.bf16.msra.mxu0 %v4825
        %6734 = vmatprep.subr.bf16.mxu0 %v4824
        %6735 = vmatpush1.bf16.msra.mxu0 %v4823
        %6736 = vmatprep.subr.bf16.mxu0 %v4822
        %6737 = vmatpush1.bf16.msra.mxu0 %v4821
        %6738 = vmatprep.subr.bf16.mxu0 %v4820
        %6739 = vmatpush1.bf16.msra.mxu0 %v4819
        %6740 = vmatprep.subr.bf16.mxu0 %v4818
        %6741 = vmatpush1.bf16.msra.mxu0 %v4817
        %6742 = vmatprep.subr.bf16.mxu0 %v4848
        %6743 = vmatpush2.bf16.msra.mxu0 %v4847
        %6744 = vmatprep.subr.bf16.mxu0 %v4846
        %6745 = vmatpush2.bf16.msra.mxu0 %v4845
        %6746 = vmatprep.subr.bf16.mxu0 %v4844
        %6747 = vmatpush2.bf16.msra.mxu0 %v4843
        %6748 = vmatprep.subr.bf16.mxu0 %v4842
        %6749 = vmatpush2.bf16.msra.mxu0 %v4841
        %6750 = vmatprep.subr.bf16.mxu0 %v4840
        %6751 = vmatpush2.bf16.msra.mxu0 %v4839
        %6752 = vmatprep.subr.bf16.mxu0 %v4838
        %6753 = vmatpush2.bf16.msra.mxu0 %v4837
        %6754 = vmatprep.subr.bf16.mxu0 %v4836
        %6755 = vmatpush2.bf16.msra.mxu0 %v4835
        %6756 = vmatprep.subr.bf16.mxu0 %v4834
        %6757 = vmatpush2.bf16.msra.mxu0 %v4833
        %6758 = vmatprep.mubr.bf16.mxu0 %v1508
        %6759 = vmatmul.mubr.bf16.gmra.mxu0 %v1506
        %v6760 = vpop.f32.mrf.mxu0
        %v6761 = vadd.f32 %v6720, %v6760
        %v6762 = vpop.f32.mrf.mxu0
        %v6763 = vadd.f32 %v6722, %v6762
        %v6764 = vpop.f32.mrf.mxu0
        %v6765 = vpop.f32.mrf.mxu0
        %6766 = vdwg.mxu0
        %6767 = vmatprep.subr.bf16.mxu0 %v4864
        %6768 = vmatpush1.bf16.msra.mxu0 %v4863
        %6769 = vmatprep.subr.bf16.mxu0 %v4862
        %6770 = vmatpush1.bf16.msra.mxu0 %v4861
        %6771 = vmatprep.subr.bf16.mxu0 %v4860
        %6772 = vmatpush1.bf16.msra.mxu0 %v4859
        %6773 = vmatprep.subr.bf16.mxu0 %v4858
        %6774 = vmatpush1.bf16.msra.mxu0 %v4857
        %6775 = vmatprep.subr.bf16.mxu0 %v4856
        %6776 = vmatpush1.bf16.msra.mxu0 %v4855
        %6777 = vmatprep.subr.bf16.mxu0 %v4854
        %6778 = vmatpush1.bf16.msra.mxu0 %v4853
        %6779 = vmatprep.subr.bf16.mxu0 %v4852
        %6780 = vmatpush1.bf16.msra.mxu0 %v4851
        %6781 = vmatprep.subr.bf16.mxu0 %v4850
        %6782 = vmatpush1.bf16.msra.mxu0 %v4849
        %6783 = vmatprep.subr.bf16.mxu0 %v4880
        %6784 = vmatpush2.bf16.msra.mxu0 %v4879
        %6785 = vmatprep.subr.bf16.mxu0 %v4878
        %6786 = vmatpush2.bf16.msra.mxu0 %v4877
        %6787 = vmatprep.subr.bf16.mxu0 %v4876
        %6788 = vmatpush2.bf16.msra.mxu0 %v4875
        %6789 = vmatprep.subr.bf16.mxu0 %v4874
        %6790 = vmatpush2.bf16.msra.mxu0 %v4873
        %6791 = vmatprep.subr.bf16.mxu0 %v4872
        %6792 = vmatpush2.bf16.msra.mxu0 %v4871
        %6793 = vmatprep.subr.bf16.mxu0 %v4870
        %6794 = vmatpush2.bf16.msra.mxu0 %v4869
        %6795 = vmatprep.subr.bf16.mxu0 %v4868
        %6796 = vmatpush2.bf16.msra.mxu0 %v4867
        %6797 = vmatprep.subr.bf16.mxu0 %v4866
        %6798 = vmatpush2.bf16.msra.mxu0 %v4865
        %6799 = vmatprep.mubr.bf16.mxu0 %v1505
        %6800 = vmatmul.mubr.bf16.gmra.mxu0 %v1491
        %v6801 = vpop.f32.mrf.mxu0
        %v6802 = vadd.f32 %v6761, %v6801
        %v6803 = vpop.f32.mrf.mxu0
        %v6804 = vadd.f32 %v6763, %v6803
        %v6805 = vpop.f32.mrf.mxu0
        %v6806 = vpop.f32.mrf.mxu0
        %6807 = vdwg.mxu0
        %6808 = vmatprep.subr.bf16.mxu0 %v4896
        %6809 = vmatpush1.bf16.msra.mxu0 %v4895
        %6810 = vmatprep.subr.bf16.mxu0 %v4894
        %6811 = vmatpush1.bf16.msra.mxu0 %v4893
        %6812 = vmatprep.subr.bf16.mxu0 %v4892
        %6813 = vmatpush1.bf16.msra.mxu0 %v4891
        %6814 = vmatprep.subr.bf16.mxu0 %v4890
        %6815 = vmatpush1.bf16.msra.mxu0 %v4889
        %6816 = vmatprep.subr.bf16.mxu0 %v4888
        %6817 = vmatpush1.bf16.msra.mxu0 %v4887
        %6818 = vmatprep.subr.bf16.mxu0 %v4886
        %6819 = vmatpush1.bf16.msra.mxu0 %v4885
        %6820 = vmatprep.subr.bf16.mxu0 %v4884
        %6821 = vmatpush1.bf16.msra.mxu0 %v4883
        %6822 = vmatprep.subr.bf16.mxu0 %v4882
        %6823 = vmatpush1.bf16.msra.mxu0 %v4881
        %6824 = vmatprep.subr.bf16.mxu0 %v4912
        %6825 = vmatpush2.bf16.msra.mxu0 %v4911
        %6826 = vmatprep.subr.bf16.mxu0 %v4910
        %6827 = vmatpush2.bf16.msra.mxu0 %v4909
        %6828 = vmatprep.subr.bf16.mxu0 %v4908
        %6829 = vmatpush2.bf16.msra.mxu0 %v4907
        %6830 = vmatprep.subr.bf16.mxu0 %v4906
        %6831 = vmatpush2.bf16.msra.mxu0 %v4905
        %6832 = vmatprep.subr.bf16.mxu0 %v4904
        %6833 = vmatpush2.bf16.msra.mxu0 %v4903
        %6834 = vmatprep.subr.bf16.mxu0 %v4902
        %6835 = vmatpush2.bf16.msra.mxu0 %v4901
        %6836 = vmatprep.subr.bf16.mxu0 %v4900
        %6837 = vmatpush2.bf16.msra.mxu0 %v4899
        %6838 = vmatprep.subr.bf16.mxu0 %v4898
        %6839 = vmatpush2.bf16.msra.mxu0 %v4897
        %6840 = vmatprep.mubr.bf16.mxu0 %v1509
        %6841 = vmatmul.mubr.bf16.gmra.mxu0 %v1507
        %v6842 = vpop.f32.mrf.mxu0
        %v6843 = vadd.f32 %v6802, %v6842
        %v6844 = vpop.f32.mrf.mxu0
        %v6845 = vadd.f32 %v6804, %v6844
        %v6846 = vpop.f32.mrf.mxu0
        %v6847 = vpop.f32.mrf.mxu0
        %6848 = vdwg.mxu0
        %6849 = vmatprep.subr.bf16.mxu0 %v4928
        %6850 = vmatpush1.bf16.msra.mxu0 %v4927
        %6851 = vmatprep.subr.bf16.mxu0 %v4926
        %6852 = vmatpush1.bf16.msra.mxu0 %v4925
        %6853 = vmatprep.subr.bf16.mxu0 %v4924
        %6854 = vmatpush1.bf16.msra.mxu0 %v4923
        %6855 = vmatprep.subr.bf16.mxu0 %v4922
        %6856 = vmatpush1.bf16.msra.mxu0 %v4921
        %6857 = vmatprep.subr.bf16.mxu0 %v4920
        %6858 = vmatpush1.bf16.msra.mxu0 %v4919
        %6859 = vmatprep.subr.bf16.mxu0 %v4918
        %6860 = vmatpush1.bf16.msra.mxu0 %v4917
        %6861 = vmatprep.subr.bf16.mxu0 %v4916
        %6862 = vmatpush1.bf16.msra.mxu0 %v4915
        %6863 = vmatprep.subr.bf16.mxu0 %v4914
        %6864 = vmatpush1.bf16.msra.mxu0 %v4913
        %6865 = vmatprep.subr.bf16.mxu0 %v4944
        %6866 = vmatpush2.bf16.msra.mxu0 %v4943
        %6867 = vmatprep.subr.bf16.mxu0 %v4942
        %6868 = vmatpush2.bf16.msra.mxu0 %v4941
        %6869 = vmatprep.subr.bf16.mxu0 %v4940
        %6870 = vmatpush2.bf16.msra.mxu0 %v4939
        %6871 = vmatprep.subr.bf16.mxu0 %v4938
        %6872 = vmatpush2.bf16.msra.mxu0 %v4937
        %6873 = vmatprep.subr.bf16.mxu0 %v4936
        %6874 = vmatpush2.bf16.msra.mxu0 %v4935
        %6875 = vmatprep.subr.bf16.mxu0 %v4934
        %6876 = vmatpush2.bf16.msra.mxu0 %v4933
        %6877 = vmatprep.subr.bf16.mxu0 %v4932
        %6878 = vmatpush2.bf16.msra.mxu0 %v4931
        %6879 = vmatprep.subr.bf16.mxu0 %v4930
        %6880 = vmatpush2.bf16.msra.mxu0 %v4929
        %6881 = vmatprep.mubr.bf16.mxu0 %v1547
        %6882 = vmatmul.mubr.bf16.gmra.mxu0 %v1533
        %v6883 = vpop.f32.mrf.mxu0
        %v6884 = vadd.f32 %v6843, %v6883
        %v6885 = vpop.f32.mrf.mxu0
        %v6886 = vadd.f32 %v6845, %v6885
        %v6887 = vpop.f32.mrf.mxu0
        %v6888 = vpop.f32.mrf.mxu0
        %6889 = vdwg.mxu0
        %6890 = vmatprep.subr.bf16.mxu0 %v4960
        %6891 = vmatpush1.bf16.msra.mxu0 %v4959
        %6892 = vmatprep.subr.bf16.mxu0 %v4958
        %6893 = vmatpush1.bf16.msra.mxu0 %v4957
        %6894 = vmatprep.subr.bf16.mxu0 %v4956
        %6895 = vmatpush1.bf16.msra.mxu0 %v4955
        %6896 = vmatprep.subr.bf16.mxu0 %v4954
        %6897 = vmatpush1.bf16.msra.mxu0 %v4953
        %6898 = vmatprep.subr.bf16.mxu0 %v4952
        %6899 = vmatpush1.bf16.msra.mxu0 %v4951
        %6900 = vmatprep.subr.bf16.mxu0 %v4950
        %6901 = vmatpush1.bf16.msra.mxu0 %v4949
        %6902 = vmatprep.subr.bf16.mxu0 %v4948
        %6903 = vmatpush1.bf16.msra.mxu0 %v4947
        %6904 = vmatprep.subr.bf16.mxu0 %v4946
        %6905 = vmatpush1.bf16.msra.mxu0 %v4945
        %6906 = vmatprep.subr.bf16.mxu0 %v4976
        %6907 = vmatpush2.bf16.msra.mxu0 %v4975
        %6908 = vmatprep.subr.bf16.mxu0 %v4974
        %6909 = vmatpush2.bf16.msra.mxu0 %v4973
        %6910 = vmatprep.subr.bf16.mxu0 %v4972
        %6911 = vmatpush2.bf16.msra.mxu0 %v4971
        %6912 = vmatprep.subr.bf16.mxu0 %v4970
        %6913 = vmatpush2.bf16.msra.mxu0 %v4969
        %6914 = vmatprep.subr.bf16.mxu0 %v4968
        %6915 = vmatpush2.bf16.msra.mxu0 %v4967
        %6916 = vmatprep.subr.bf16.mxu0 %v4966
        %6917 = vmatpush2.bf16.msra.mxu0 %v4965
        %6918 = vmatprep.subr.bf16.mxu0 %v4964
        %6919 = vmatpush2.bf16.msra.mxu0 %v4963
        %6920 = vmatprep.subr.bf16.mxu0 %v4962
        %6921 = vmatpush2.bf16.msra.mxu0 %v4961
        %6922 = vmatprep.mubr.bf16.mxu0 %v1557
        %6923 = vmatmul.mubr.bf16.gmra.mxu0 %v1555
        %v6924 = vpop.f32.mrf.mxu0
        %v6925 = vadd.f32 %v6884, %v6924
        %v6926 = vpop.f32.mrf.mxu0
        %v6927 = vadd.f32 %v6886, %v6926
        %v6928 = vpop.f32.mrf.mxu0
        %v6929 = vpop.f32.mrf.mxu0
        %6930 = vdwg.mxu0
        %6931 = vmatprep.subr.bf16.mxu0 %v4992
        %6932 = vmatpush1.bf16.msra.mxu0 %v4991
        %6933 = vmatprep.subr.bf16.mxu0 %v4990
        %6934 = vmatpush1.bf16.msra.mxu0 %v4989
        %6935 = vmatprep.subr.bf16.mxu0 %v4988
        %6936 = vmatpush1.bf16.msra.mxu0 %v4987
        %6937 = vmatprep.subr.bf16.mxu0 %v4986
        %6938 = vmatpush1.bf16.msra.mxu0 %v4985
        %6939 = vmatprep.subr.bf16.mxu0 %v4984
        %6940 = vmatpush1.bf16.msra.mxu0 %v4983
        %6941 = vmatprep.subr.bf16.mxu0 %v4982
        %6942 = vmatpush1.bf16.msra.mxu0 %v4981
        %6943 = vmatprep.subr.bf16.mxu0 %v4980
        %6944 = vmatpush1.bf16.msra.mxu0 %v4979
        %6945 = vmatprep.subr.bf16.mxu0 %v4978
        %6946 = vmatpush1.bf16.msra.mxu0 %v4977
        %6947 = vmatprep.subr.bf16.mxu0 %v5008
        %6948 = vmatpush2.bf16.msra.mxu0 %v5007
        %6949 = vmatprep.subr.bf16.mxu0 %v5006
        %6950 = vmatpush2.bf16.msra.mxu0 %v5005
        %6951 = vmatprep.subr.bf16.mxu0 %v5004
        %6952 = vmatpush2.bf16.msra.mxu0 %v5003
        %6953 = vmatprep.subr.bf16.mxu0 %v5002
        %6954 = vmatpush2.bf16.msra.mxu0 %v5001
        %6955 = vmatprep.subr.bf16.mxu0 %v5000
        %6956 = vmatpush2.bf16.msra.mxu0 %v4999
        %6957 = vmatprep.subr.bf16.mxu0 %v4998
        %6958 = vmatpush2.bf16.msra.mxu0 %v4997
        %6959 = vmatprep.subr.bf16.mxu0 %v4996
        %6960 = vmatpush2.bf16.msra.mxu0 %v4995
        %6961 = vmatprep.subr.bf16.mxu0 %v4994
        %6962 = vmatpush2.bf16.msra.mxu0 %v4993
        %6963 = vmatprep.mubr.bf16.mxu0 %v1554
        %6964 = vmatmul.mubr.bf16.gmra.mxu0 %v1540
        %v6965 = vpop.f32.mrf.mxu0
        %v6966 = vadd.f32 %v6925, %v6965
        %v6967 = vpop.f32.mrf.mxu0
        %v6968 = vadd.f32 %v6927, %v6967
        %v6969 = vpop.f32.mrf.mxu0
        %v6970 = vpop.f32.mrf.mxu0
        %6971 = vdwg.mxu0
        %6972 = vmatprep.subr.bf16.mxu0 %v5024
        %6973 = vmatpush1.bf16.msra.mxu0 %v5023
        %6974 = vmatprep.subr.bf16.mxu0 %v5022
        %6975 = vmatpush1.bf16.msra.mxu0 %v5021
        %6976 = vmatprep.subr.bf16.mxu0 %v5020
        %6977 = vmatpush1.bf16.msra.mxu0 %v5019
        %6978 = vmatprep.subr.bf16.mxu0 %v5018
        %6979 = vmatpush1.bf16.msra.mxu0 %v5017
        %6980 = vmatprep.subr.bf16.mxu0 %v5016
        %6981 = vmatpush1.bf16.msra.mxu0 %v5015
        %6982 = vmatprep.subr.bf16.mxu0 %v5014
        %6983 = vmatpush1.bf16.msra.mxu0 %v5013
        %6984 = vmatprep.subr.bf16.mxu0 %v5012
        %6985 = vmatpush1.bf16.msra.mxu0 %v5011
        %6986 = vmatprep.subr.bf16.mxu0 %v5010
        %6987 = vmatpush1.bf16.msra.mxu0 %v5009
        %6988 = vmatprep.subr.bf16.mxu0 %v5040
        %6989 = vmatpush2.bf16.msra.mxu0 %v5039
        %6990 = vmatprep.subr.bf16.mxu0 %v5038
        %6991 = vmatpush2.bf16.msra.mxu0 %v5037
        %6992 = vmatprep.subr.bf16.mxu0 %v5036
        %6993 = vmatpush2.bf16.msra.mxu0 %v5035
        %6994 = vmatprep.subr.bf16.mxu0 %v5034
        %6995 = vmatpush2.bf16.msra.mxu0 %v5033
        %6996 = vmatprep.subr.bf16.mxu0 %v5032
        %6997 = vmatpush2.bf16.msra.mxu0 %v5031
        %6998 = vmatprep.subr.bf16.mxu0 %v5030
        %6999 = vmatpush2.bf16.msra.mxu0 %v5029
        %7000 = vmatprep.subr.bf16.mxu0 %v5028
        %7001 = vmatpush2.bf16.msra.mxu0 %v5027
        %7002 = vmatprep.subr.bf16.mxu0 %v5026
        %7003 = vmatpush2.bf16.msra.mxu0 %v5025
        %7004 = vmatprep.mubr.bf16.mxu0 %v1558
        %7005 = vmatmul.mubr.bf16.gmra.mxu0 %v1556
        %v7006 = vpop.f32.mrf.mxu0
        %v7007 = vadd.f32 %v6966, %v7006
        %v7008 = vpop.f32.mrf.mxu0
        %v7009 = vadd.f32 %v6968, %v7008
        %v7010 = vpop.f32.mrf.mxu0
        %v7011 = vpop.f32.mrf.mxu0
        %7012 = vdwg.mxu0
        %7013 = vmatprep.subr.bf16.mxu0 %v5056
        %7014 = vmatpush1.bf16.msra.mxu0 %v5055
        %7015 = vmatprep.subr.bf16.mxu0 %v5054
        %7016 = vmatpush1.bf16.msra.mxu0 %v5053
        %7017 = vmatprep.subr.bf16.mxu0 %v5052
        %7018 = vmatpush1.bf16.msra.mxu0 %v5051
        %7019 = vmatprep.subr.bf16.mxu0 %v5050
        %7020 = vmatpush1.bf16.msra.mxu0 %v5049
        %7021 = vmatprep.subr.bf16.mxu0 %v5048
        %7022 = vmatpush1.bf16.msra.mxu0 %v5047
        %7023 = vmatprep.subr.bf16.mxu0 %v5046
        %7024 = vmatpush1.bf16.msra.mxu0 %v5045
        %7025 = vmatprep.subr.bf16.mxu0 %v5044
        %7026 = vmatpush1.bf16.msra.mxu0 %v5043
        %7027 = vmatprep.subr.bf16.mxu0 %v5042
        %7028 = vmatpush1.bf16.msra.mxu0 %v5041
        %7029 = vmatprep.subr.bf16.mxu0 %v5072
        %7030 = vmatpush2.bf16.msra.mxu0 %v5071
        %7031 = vmatprep.subr.bf16.mxu0 %v5070
        %7032 = vmatpush2.bf16.msra.mxu0 %v5069
        %7033 = vmatprep.subr.bf16.mxu0 %v5068
        %7034 = vmatpush2.bf16.msra.mxu0 %v5067
        %7035 = vmatprep.subr.bf16.mxu0 %v5066
        %7036 = vmatpush2.bf16.msra.mxu0 %v5065
        %7037 = vmatprep.subr.bf16.mxu0 %v5064
        %7038 = vmatpush2.bf16.msra.mxu0 %v5063
        %7039 = vmatprep.subr.bf16.mxu0 %v5062
        %7040 = vmatpush2.bf16.msra.mxu0 %v5061
        %7041 = vmatprep.subr.bf16.mxu0 %v5060
        %7042 = vmatpush2.bf16.msra.mxu0 %v5059
        %7043 = vmatprep.subr.bf16.mxu0 %v5058
        %7044 = vmatpush2.bf16.msra.mxu0 %v5057
        %7045 = vmatprep.mubr.bf16.mxu0 %v1596
        %7046 = vmatmul.mubr.bf16.gmra.mxu0 %v1582
        %v7047 = vpop.f32.mrf.mxu0
        %v7048 = vadd.f32 %v7007, %v7047
        %v7049 = vpop.f32.mrf.mxu0
        %v7050 = vadd.f32 %v7009, %v7049
        %v7051 = vpop.f32.mrf.mxu0
        %v7052 = vpop.f32.mrf.mxu0
        %7053 = vdwg.mxu0
        %7054 = vmatprep.subr.bf16.mxu0 %v5088
        %7055 = vmatpush1.bf16.msra.mxu0 %v5087
        %7056 = vmatprep.subr.bf16.mxu0 %v5086
        %7057 = vmatpush1.bf16.msra.mxu0 %v5085
        %7058 = vmatprep.subr.bf16.mxu0 %v5084
        %7059 = vmatpush1.bf16.msra.mxu0 %v5083
        %7060 = vmatprep.subr.bf16.mxu0 %v5082
        %7061 = vmatpush1.bf16.msra.mxu0 %v5081
        %7062 = vmatprep.subr.bf16.mxu0 %v5080
        %7063 = vmatpush1.bf16.msra.mxu0 %v5079
        %7064 = vmatprep.subr.bf16.mxu0 %v5078
        %7065 = vmatpush1.bf16.msra.mxu0 %v5077
        %7066 = vmatprep.subr.bf16.mxu0 %v5076
        %7067 = vmatpush1.bf16.msra.mxu0 %v5075
        %7068 = vmatprep.subr.bf16.mxu0 %v5074
        %7069 = vmatpush1.bf16.msra.mxu0 %v5073
        %7070 = vmatprep.subr.bf16.mxu0 %v5104
        %7071 = vmatpush2.bf16.msra.mxu0 %v5103
        %7072 = vmatprep.subr.bf16.mxu0 %v5102
        %7073 = vmatpush2.bf16.msra.mxu0 %v5101
        %7074 = vmatprep.subr.bf16.mxu0 %v5100
        %7075 = vmatpush2.bf16.msra.mxu0 %v5099
        %7076 = vmatprep.subr.bf16.mxu0 %v5098
        %7077 = vmatpush2.bf16.msra.mxu0 %v5097
        %7078 = vmatprep.subr.bf16.mxu0 %v5096
        %7079 = vmatpush2.bf16.msra.mxu0 %v5095
        %7080 = vmatprep.subr.bf16.mxu0 %v5094
        %7081 = vmatpush2.bf16.msra.mxu0 %v5093
        %7082 = vmatprep.subr.bf16.mxu0 %v5092
        %7083 = vmatpush2.bf16.msra.mxu0 %v5091
        %7084 = vmatprep.subr.bf16.mxu0 %v5090
        %7085 = vmatpush2.bf16.msra.mxu0 %v5089
        %7086 = vmatprep.mubr.bf16.mxu0 %v1606
        %7087 = vmatmul.mubr.bf16.gmra.mxu0 %v1604
        %v7088 = vpop.f32.mrf.mxu0
        %v7089 = vadd.f32 %v7048, %v7088
        %v7090 = vpop.f32.mrf.mxu0
        %v7091 = vadd.f32 %v7050, %v7090
        %v7092 = vpop.f32.mrf.mxu0
        %v7093 = vpop.f32.mrf.mxu0
        %7094 = vdwg.mxu0
        %7095 = vmatprep.subr.bf16.mxu0 %v5120
        %7096 = vmatpush1.bf16.msra.mxu0 %v5119
        %7097 = vmatprep.subr.bf16.mxu0 %v5118
        %7098 = vmatpush1.bf16.msra.mxu0 %v5117
        %7099 = vmatprep.subr.bf16.mxu0 %v5116
        %7100 = vmatpush1.bf16.msra.mxu0 %v5115
        %7101 = vmatprep.subr.bf16.mxu0 %v5114
        %7102 = vmatpush1.bf16.msra.mxu0 %v5113
        %7103 = vmatprep.subr.bf16.mxu0 %v5112
        %7104 = vmatpush1.bf16.msra.mxu0 %v5111
        %7105 = vmatprep.subr.bf16.mxu0 %v5110
        %7106 = vmatpush1.bf16.msra.mxu0 %v5109
        %7107 = vmatprep.subr.bf16.mxu0 %v5108
        %7108 = vmatpush1.bf16.msra.mxu0 %v5107
        %7109 = vmatprep.subr.bf16.mxu0 %v5106
        %7110 = vmatpush1.bf16.msra.mxu0 %v5105
        %7111 = vmatprep.subr.bf16.mxu0 %v5136
        %7112 = vmatpush2.bf16.msra.mxu0 %v5135
        %7113 = vmatprep.subr.bf16.mxu0 %v5134
        %7114 = vmatpush2.bf16.msra.mxu0 %v5133
        %7115 = vmatprep.subr.bf16.mxu0 %v5132
        %7116 = vmatpush2.bf16.msra.mxu0 %v5131
        %7117 = vmatprep.subr.bf16.mxu0 %v5130
        %7118 = vmatpush2.bf16.msra.mxu0 %v5129
        %7119 = vmatprep.subr.bf16.mxu0 %v5128
        %7120 = vmatpush2.bf16.msra.mxu0 %v5127
        %7121 = vmatprep.subr.bf16.mxu0 %v5126
        %7122 = vmatpush2.bf16.msra.mxu0 %v5125
        %7123 = vmatprep.subr.bf16.mxu0 %v5124
        %7124 = vmatpush2.bf16.msra.mxu0 %v5123
        %7125 = vmatprep.subr.bf16.mxu0 %v5122
        %7126 = vmatpush2.bf16.msra.mxu0 %v5121
        %7127 = vmatprep.mubr.bf16.mxu0 %v1603
        %7128 = vmatmul.mubr.bf16.gmra.mxu0 %v1589
        %v7129 = vpop.f32.mrf.mxu0
        %v7130 = vadd.f32 %v7089, %v7129
        %v7131 = vpop.f32.mrf.mxu0
        %v7132 = vadd.f32 %v7091, %v7131
        %v7133 = vpop.f32.mrf.mxu0
        %v7134 = vpop.f32.mrf.mxu0
        %7135 = vdwg.mxu0
        %7136 = vmatprep.subr.bf16.mxu0 %v5152
        %7137 = vmatpush1.bf16.msra.mxu0 %v5151
        %7138 = vmatprep.subr.bf16.mxu0 %v5150
        %7139 = vmatpush1.bf16.msra.mxu0 %v5149
        %7140 = vmatprep.subr.bf16.mxu0 %v5148
        %7141 = vmatpush1.bf16.msra.mxu0 %v5147
        %7142 = vmatprep.subr.bf16.mxu0 %v5146
        %7143 = vmatpush1.bf16.msra.mxu0 %v5145
        %7144 = vmatprep.subr.bf16.mxu0 %v5144
        %7145 = vmatpush1.bf16.msra.mxu0 %v5143
        %7146 = vmatprep.subr.bf16.mxu0 %v5142
        %7147 = vmatpush1.bf16.msra.mxu0 %v5141
        %7148 = vmatprep.subr.bf16.mxu0 %v5140
        %7149 = vmatpush1.bf16.msra.mxu0 %v5139
        %7150 = vmatprep.subr.bf16.mxu0 %v5138
        %7151 = vmatpush1.bf16.msra.mxu0 %v5137
        %7152 = vmatprep.subr.bf16.mxu0 %v5168
        %7153 = vmatpush2.bf16.msra.mxu0 %v5167
        %7154 = vmatprep.subr.bf16.mxu0 %v5166
        %7155 = vmatpush2.bf16.msra.mxu0 %v5165
        %7156 = vmatprep.subr.bf16.mxu0 %v5164
        %7157 = vmatpush2.bf16.msra.mxu0 %v5163
        %7158 = vmatprep.subr.bf16.mxu0 %v5162
        %7159 = vmatpush2.bf16.msra.mxu0 %v5161
        %7160 = vmatprep.subr.bf16.mxu0 %v5160
        %7161 = vmatpush2.bf16.msra.mxu0 %v5159
        %7162 = vmatprep.subr.bf16.mxu0 %v5158
        %7163 = vmatpush2.bf16.msra.mxu0 %v5157
        %7164 = vmatprep.subr.bf16.mxu0 %v5156
        %7165 = vmatpush2.bf16.msra.mxu0 %v5155
        %7166 = vmatprep.subr.bf16.mxu0 %v5154
        %7167 = vmatpush2.bf16.msra.mxu0 %v5153
        %7168 = vmatprep.mubr.bf16.mxu0 %v1607
        %7169 = vmatmul.mubr.bf16.gmra.mxu0 %v1605
        %v7170 = vpop.f32.mrf.mxu0
        %v7171 = vadd.f32 %v7130, %v7170
        %v7172 = vpop.f32.mrf.mxu0
        %v7173 = vadd.f32 %v7132, %v7172
        %v7174 = vpop.f32.mrf.mxu0
        %v7175 = vpop.f32.mrf.mxu0
        %7176 = vdwg.mxu0
        %7177 = vmatprep.subr.bf16.mxu0 %v5184
        %7178 = vmatpush1.bf16.msra.mxu0 %v5183
        %7179 = vmatprep.subr.bf16.mxu0 %v5182
        %7180 = vmatpush1.bf16.msra.mxu0 %v5181
        %7181 = vmatprep.subr.bf16.mxu0 %v5180
        %7182 = vmatpush1.bf16.msra.mxu0 %v5179
        %7183 = vmatprep.subr.bf16.mxu0 %v5178
        %7184 = vmatpush1.bf16.msra.mxu0 %v5177
        %7185 = vmatprep.subr.bf16.mxu0 %v5176
        %7186 = vmatpush1.bf16.msra.mxu0 %v5175
        %7187 = vmatprep.subr.bf16.mxu0 %v5174
        %7188 = vmatpush1.bf16.msra.mxu0 %v5173
        %7189 = vmatprep.subr.bf16.mxu0 %v5172
        %7190 = vmatpush1.bf16.msra.mxu0 %v5171
        %7191 = vmatprep.subr.bf16.mxu0 %v5170
        %7192 = vmatpush1.bf16.msra.mxu0 %v5169
        %7193 = vmatprep.subr.bf16.mxu0 %v5200
        %7194 = vmatpush2.bf16.msra.mxu0 %v5199
        %7195 = vmatprep.subr.bf16.mxu0 %v5198
        %7196 = vmatpush2.bf16.msra.mxu0 %v5197
        %7197 = vmatprep.subr.bf16.mxu0 %v5196
        %7198 = vmatpush2.bf16.msra.mxu0 %v5195
        %7199 = vmatprep.subr.bf16.mxu0 %v5194
        %7200 = vmatpush2.bf16.msra.mxu0 %v5193
        %7201 = vmatprep.subr.bf16.mxu0 %v5192
        %7202 = vmatpush2.bf16.msra.mxu0 %v5191
        %7203 = vmatprep.subr.bf16.mxu0 %v5190
        %7204 = vmatpush2.bf16.msra.mxu0 %v5189
        %7205 = vmatprep.subr.bf16.mxu0 %v5188
        %7206 = vmatpush2.bf16.msra.mxu0 %v5187
        %7207 = vmatprep.subr.bf16.mxu0 %v5186
        %7208 = vmatpush2.bf16.msra.mxu0 %v5185
        %7209 = vmatprep.mubr.bf16.mxu0 %v1645
        %7210 = vmatmul.mubr.bf16.gmra.mxu0 %v1631
        %v7211 = vpop.f32.mrf.mxu0
        %v7212 = vadd.f32 %v7171, %v7211
        %v7213 = vpop.f32.mrf.mxu0
        %v7214 = vadd.f32 %v7173, %v7213
        %v7215 = vpop.f32.mrf.mxu0
        %v7216 = vpop.f32.mrf.mxu0
        %7217 = vdwg.mxu0
        %7218 = vmatprep.subr.bf16.mxu0 %v5216
        %7219 = vmatpush1.bf16.msra.mxu0 %v5215
        %7220 = vmatprep.subr.bf16.mxu0 %v5214
        %7221 = vmatpush1.bf16.msra.mxu0 %v5213
        %7222 = vmatprep.subr.bf16.mxu0 %v5212
        %7223 = vmatpush1.bf16.msra.mxu0 %v5211
        %7224 = vmatprep.subr.bf16.mxu0 %v5210
        %7225 = vmatpush1.bf16.msra.mxu0 %v5209
        %7226 = vmatprep.subr.bf16.mxu0 %v5208
        %7227 = vmatpush1.bf16.msra.mxu0 %v5207
        %7228 = vmatprep.subr.bf16.mxu0 %v5206
        %7229 = vmatpush1.bf16.msra.mxu0 %v5205
        %7230 = vmatprep.subr.bf16.mxu0 %v5204
        %7231 = vmatpush1.bf16.msra.mxu0 %v5203
        %7232 = vmatprep.subr.bf16.mxu0 %v5202
        %7233 = vmatpush1.bf16.msra.mxu0 %v5201
        %7234 = vmatprep.subr.bf16.mxu0 %v5232
        %7235 = vmatpush2.bf16.msra.mxu0 %v5231
        %7236 = vmatprep.subr.bf16.mxu0 %v5230
        %7237 = vmatpush2.bf16.msra.mxu0 %v5229
        %7238 = vmatprep.subr.bf16.mxu0 %v5228
        %7239 = vmatpush2.bf16.msra.mxu0 %v5227
        %7240 = vmatprep.subr.bf16.mxu0 %v5226
        %7241 = vmatpush2.bf16.msra.mxu0 %v5225
        %7242 = vmatprep.subr.bf16.mxu0 %v5224
        %7243 = vmatpush2.bf16.msra.mxu0 %v5223
        %7244 = vmatprep.subr.bf16.mxu0 %v5222
        %7245 = vmatpush2.bf16.msra.mxu0 %v5221
        %7246 = vmatprep.subr.bf16.mxu0 %v5220
        %7247 = vmatpush2.bf16.msra.mxu0 %v5219
        %7248 = vmatprep.subr.bf16.mxu0 %v5218
        %7249 = vmatpush2.bf16.msra.mxu0 %v5217
        %7250 = vmatprep.mubr.bf16.mxu0 %v1655
        %7251 = vmatmul.mubr.bf16.gmra.mxu0 %v1653
        %v7252 = vpop.f32.mrf.mxu0
        %v7253 = vadd.f32 %v7212, %v7252
        %v7254 = vpop.f32.mrf.mxu0
        %v7255 = vadd.f32 %v7214, %v7254
        %v7256 = vpop.f32.mrf.mxu0
        %v7257 = vpop.f32.mrf.mxu0
        %7258 = vdwg.mxu0
        %7259 = vmatprep.subr.bf16.mxu0 %v5248
        %7260 = vmatpush1.bf16.msra.mxu0 %v5247
        %7261 = vmatprep.subr.bf16.mxu0 %v5246
        %7262 = vmatpush1.bf16.msra.mxu0 %v5245
        %7263 = vmatprep.subr.bf16.mxu0 %v5244
        %7264 = vmatpush1.bf16.msra.mxu0 %v5243
        %7265 = vmatprep.subr.bf16.mxu0 %v5242
        %7266 = vmatpush1.bf16.msra.mxu0 %v5241
        %7267 = vmatprep.subr.bf16.mxu0 %v5240
        %7268 = vmatpush1.bf16.msra.mxu0 %v5239
        %7269 = vmatprep.subr.bf16.mxu0 %v5238
        %7270 = vmatpush1.bf16.msra.mxu0 %v5237
        %7271 = vmatprep.subr.bf16.mxu0 %v5236
        %7272 = vmatpush1.bf16.msra.mxu0 %v5235
        %7273 = vmatprep.subr.bf16.mxu0 %v5234
        %7274 = vmatpush1.bf16.msra.mxu0 %v5233
        %7275 = vmatprep.subr.bf16.mxu0 %v5264
        %7276 = vmatpush2.bf16.msra.mxu0 %v5263
        %7277 = vmatprep.subr.bf16.mxu0 %v5262
        %7278 = vmatpush2.bf16.msra.mxu0 %v5261
        %7279 = vmatprep.subr.bf16.mxu0 %v5260
        %7280 = vmatpush2.bf16.msra.mxu0 %v5259
        %7281 = vmatprep.subr.bf16.mxu0 %v5258
        %7282 = vmatpush2.bf16.msra.mxu0 %v5257
        %7283 = vmatprep.subr.bf16.mxu0 %v5256
        %7284 = vmatpush2.bf16.msra.mxu0 %v5255
        %7285 = vmatprep.subr.bf16.mxu0 %v5254
        %7286 = vmatpush2.bf16.msra.mxu0 %v5253
        %7287 = vmatprep.subr.bf16.mxu0 %v5252
        %7288 = vmatpush2.bf16.msra.mxu0 %v5251
        %7289 = vmatprep.subr.bf16.mxu0 %v5250
        %7290 = vmatpush2.bf16.msra.mxu0 %v5249
        %7291 = vmatprep.mubr.bf16.mxu0 %v1652
        %7292 = vmatmul.mubr.bf16.gmra.mxu0 %v1638
        %v7293 = vpop.f32.mrf.mxu0
        %v7294 = vadd.f32 %v7253, %v7293
        %v7295 = vpop.f32.mrf.mxu0
        %v7296 = vadd.f32 %v7255, %v7295
        %v7297 = vpop.f32.mrf.mxu0
        %v7298 = vpop.f32.mrf.mxu0
        %7299 = vdwg.mxu0
        %7300 = vmatprep.subr.bf16.mxu0 %v5280
        %7301 = vmatpush1.bf16.msra.mxu0 %v5279
        %7302 = vmatprep.subr.bf16.mxu0 %v5278
        %7303 = vmatpush1.bf16.msra.mxu0 %v5277
        %7304 = vmatprep.subr.bf16.mxu0 %v5276
        %7305 = vmatpush1.bf16.msra.mxu0 %v5275
        %7306 = vmatprep.subr.bf16.mxu0 %v5274
        %7307 = vmatpush1.bf16.msra.mxu0 %v5273
        %7308 = vmatprep.subr.bf16.mxu0 %v5272
        %7309 = vmatpush1.bf16.msra.mxu0 %v5271
        %7310 = vmatprep.subr.bf16.mxu0 %v5270
        %7311 = vmatpush1.bf16.msra.mxu0 %v5269
        %7312 = vmatprep.subr.bf16.mxu0 %v5268
        %7313 = vmatpush1.bf16.msra.mxu0 %v5267
        %7314 = vmatprep.subr.bf16.mxu0 %v5266
        %7315 = vmatpush1.bf16.msra.mxu0 %v5265
        %7316 = vmatprep.subr.bf16.mxu0 %v5296
        %7317 = vmatpush2.bf16.msra.mxu0 %v5295
        %7318 = vmatprep.subr.bf16.mxu0 %v5294
        %7319 = vmatpush2.bf16.msra.mxu0 %v5293
        %7320 = vmatprep.subr.bf16.mxu0 %v5292
        %7321 = vmatpush2.bf16.msra.mxu0 %v5291
        %7322 = vmatprep.subr.bf16.mxu0 %v5290
        %7323 = vmatpush2.bf16.msra.mxu0 %v5289
        %7324 = vmatprep.subr.bf16.mxu0 %v5288
        %7325 = vmatpush2.bf16.msra.mxu0 %v5287
        %7326 = vmatprep.subr.bf16.mxu0 %v5286
        %7327 = vmatpush2.bf16.msra.mxu0 %v5285
        %7328 = vmatprep.subr.bf16.mxu0 %v5284
        %7329 = vmatpush2.bf16.msra.mxu0 %v5283
        %7330 = vmatprep.subr.bf16.mxu0 %v5282
        %7331 = vmatpush2.bf16.msra.mxu0 %v5281
        %7332 = vmatprep.mubr.bf16.mxu0 %v1656
        %7333 = vmatmul.mubr.bf16.gmra.mxu0 %v1654
        %v7334 = vpop.f32.mrf.mxu0
        %v7335 = vadd.f32 %v7294, %v7334
        %v7336 = vpop.f32.mrf.mxu0
        %v7337 = vadd.f32 %v7296, %v7336
        %v7338 = vpop.f32.mrf.mxu0
        %v7339 = vpop.f32.mrf.mxu0
        %7340 = vdwg.mxu0
        %v7343 = vcombine.low %v7335, %v7337
        %v7345 = vunpack.c.l.s4 1983009808
        %v7346 = vunpack.c.0.s8 %v7345
        %v7347 = vlaneseq
        %v7348 = vshrl.u32 %v7347, 7
        %v7349 = vsub.s32 %v7346, %v7348
        %v7350 = vrot.slane %v7343, %v7349
        %v7352 = vadd.f32 %v403, %v7350
        %7353 = vst [vmem:[#allocation2] sm:$0xf] %v7352
        %p7354 = scmp.eq.s32.totalorder %s30, 20
        // Predicated region
        $region61: #{net_forward.2} parent=39 // pred_check
          %p7355 = pneg %p7354
        $region62: #{net_forward.2} parent=39 // pred_check_branch
          %7357 = sbr.rel (%p7355) target = $region64
        $region63: #{net_forward.2} parent=39 // pred_region
          %v7358 = vld [vmem:[#allocation2] sm:$0xf]
          %v7359 = vld [vmem:[%s318] sm:$0x3]
          %v7361 = vlaneseq
          %v7362 = vshrl.u32 %v7361, 7
          %v7363 = vsub.s32 0, %v7362
          %v7364 = vrot.slane %v7359, %v7363
          %v7365 = vlaneseq
          %v7366 = vshrl.u32 %v7365, 7
          %v7367 = vsub.s32 1, %v7366
          %v7368 = vrot.slane %v7359, %v7367
          %v7369 = vcombine.low %v7364, %v7368
          %v7371 = vunpack.c.l.s4 1983009808
          %v7372 = vunpack.c.0.s8 %v7371
          %v7373 = vlaneseq
          %v7374 = vshrl.u32 %v7373, 7
          %v7375 = vsub.s32 %v7372, %v7374
          %v7376 = vrot.slane %v7369, %v7375
          %v7378 = vadd.f32 %v7358, %v7376
          %v7379 = vmax.f32 %v7378, 0.0
          %v7382 = vunpack.c.l.s4 1983009808
          %v7383 = vunpack.c.0.s8 %v7382
          %v7384 = vlaneseq
          %v7385 = vshrl.u32 %v7384, 7
          %v7386 = vsub.s32 %v7383, %v7385
          %v7387 = vrot.slane %v7379, %v7386
          %v7388 = vcombine.high %v7387, %v7387
          %vm7391 = vcmask 1041408
          %v7392 = vsel %vm7391, %v7387, 0.0
          %v7393 = vrot.slane %v7392, 4
          %v7394 = vadd.f32 %v7392, %v7393
          %v7395 = vrot.slane %v7394, 2
          %v7396 = vadd.f32 %v7394, %v7395
          %v7397 = vrot.slane %v7396, 1
          %v7398 = vadd.f32 %v7396, %v7397
          %v7399 = vsel %vm7391, %v7388, 0.0
          %v7400 = vrot.slane %v7399, 4
          %v7401 = vadd.f32 %v7399, %v7400
          %v7402 = vrot.slane %v7401, 2
          %v7403 = vadd.f32 %v7401, %v7402
          %v7404 = vrot.slane %v7403, 1
          %v7405 = vadd.f32 %v7403, %v7404
          %v7406 = vrcp.pop 2.0
          %v7407 = vmul.f32 %v7398, %v7406
          %v7408 = vmul.f32 %v7405, %v7406
          %v7411 = vcombine.low %v7407, %v7408
          %v7413 = vunpack.c.l.s4 1983009808
          %v7414 = vunpack.c.0.s8 %v7413
          %v7415 = vlaneseq
          %v7416 = vshrl.u32 %v7415, 7
          %v7417 = vsub.s32 %v7414, %v7416
          %v7418 = vrot.slane %v7411, %v7417
          %v7420 = vsub.f32 %v7379, %v7418
          %v7421 = vmul.f32 %v7420, %v7420
          %v7424 = vunpack.c.l.s4 1983009808
          %v7425 = vunpack.c.0.s8 %v7424
          %v7426 = vlaneseq
          %v7427 = vshrl.u32 %v7426, 7
          %v7428 = vsub.s32 %v7425, %v7427
          %v7429 = vrot.slane %v7421, %v7428
          %v7430 = vcombine.high %v7429, %v7429
          %v7433 = vsel %vm7391, %v7429, 0.0
          %v7434 = vrot.slane %v7433, 4
          %v7435 = vadd.f32 %v7433, %v7434
          %v7436 = vrot.slane %v7435, 2
          %v7437 = vadd.f32 %v7435, %v7436
          %v7438 = vrot.slane %v7437, 1
          %v7439 = vadd.f32 %v7437, %v7438
          %v7440 = vsel %vm7391, %v7430, 0.0
          %v7441 = vrot.slane %v7440, 4
          %v7442 = vadd.f32 %v7440, %v7441
          %v7443 = vrot.slane %v7442, 2
          %v7444 = vadd.f32 %v7442, %v7443
          %v7445 = vrot.slane %v7444, 1
          %v7446 = vadd.f32 %v7444, %v7445
          %v7447 = vmul.f32 %v7439, %v7406
          %v7448 = vmul.f32 %v7446, %v7406
          %v7449 = vadd.f32 %v7447, 1e-05
          %v7450 = vadd.f32 %v7448, 1e-05
          %v7451 = vrsqrt.pop %v7449
          %v7452 = vrsqrt.pop %v7450
          %v7455 = vcombine.low %v7451, %v7452
          %v7457 = vunpack.c.l.s4 1983009808
          %v7458 = vunpack.c.0.s8 %v7457
          %v7459 = vlaneseq
          %v7460 = vshrl.u32 %v7459, 7
          %v7461 = vsub.s32 %v7458, %v7460
          %v7462 = vrot.slane %v7455, %v7461
          %v7464 = vmul.f32 %v7420, %v7462
          %v7465 = vld [vmem:[%s327] sm:$0x3]
          %v7467 = vlaneseq
          %v7468 = vshrl.u32 %v7467, 7
          %v7469 = vsub.s32 0, %v7468
          %v7470 = vrot.slane %v7465, %v7469
          %v7471 = vlaneseq
          %v7472 = vshrl.u32 %v7471, 7
          %v7473 = vsub.s32 1, %v7472
          %v7474 = vrot.slane %v7465, %v7473
          %v7475 = vcombine.low %v7470, %v7474
          %v7477 = vunpack.c.l.s4 1983009808
          %v7478 = vunpack.c.0.s8 %v7477
          %v7479 = vlaneseq
          %v7480 = vshrl.u32 %v7479, 7
          %v7481 = vsub.s32 %v7478, %v7480
          %v7482 = vrot.slane %v7475, %v7481
          %v7484 = vmul.f32 %v7464, %v7482
          %v7485 = vld [vmem:[%s336] sm:$0x3]
          %v7487 = vlaneseq
          %v7488 = vshrl.u32 %v7487, 7
          %v7489 = vsub.s32 0, %v7488
          %v7490 = vrot.slane %v7485, %v7489
          %v7491 = vlaneseq
          %v7492 = vshrl.u32 %v7491, 7
          %v7493 = vsub.s32 1, %v7492
          %v7494 = vrot.slane %v7485, %v7493
          %v7495 = vcombine.low %v7490, %v7494
          %v7497 = vunpack.c.l.s4 1983009808
          %v7498 = vunpack.c.0.s8 %v7497
          %v7499 = vlaneseq
          %v7500 = vshrl.u32 %v7499, 7
          %v7501 = vsub.s32 %v7498, %v7500
          %v7502 = vrot.slane %v7495, %v7501
          %v7504 = vadd.f32 %v7484, %v7502
          %7505 = vst [vmem:[%s396] sm:$0xf] %v7504
        $region64: #{net_forward.2} parent=39 // pred_fallthru
          _
        %s7506 = smul.u32 2, %s29
        %p7507 = scmp.lt.s32.totalorder %s7506, 3
        %s7508 = scalar_select %p7507, %s7506, 3
        %s7509 = smul.addr %s7508, 2
        %s7510 = scalar_lea.vmem %s5, %s7509
        // Predicated region
        $region65: #{net_forward.2} parent=39 // pred_check
          %p7511 = pneg %p187
        $region66: #{net_forward.2} parent=39 // pred_check_branch
          %7513 = sbr.rel (%p7511) target = $region68
        $region67: #{net_forward.2} parent=39 // pred_region
          %s7514 = smul.u32 2, %s29
        $region68: #{net_forward.2} parent=39 // pred_fallthru
          _
      $region40: #{net_forward.2} parent=5 // pred_fallthru
        _
      %p7515 = scmp.le.s32.totalorder 2, %s20
      // Predicated region
      $region69: #{net_forward.2} parent=5 // pred_check
        %p7516 = pneg %p7515
      $region70: #{net_forward.2} parent=5 // pred_check_branch
        %7518 = sbr.rel (%p7516) target = $region72
      $region71: #{net_forward.2} parent=5 // pred_region
        %s7519 = ssub.s32 %s20, 2
        // Predicated region
        $region73: #{net_forward.2} parent=71 // pred_check
          %p7520 = pneg %p193
        $region74: #{net_forward.2} parent=71 // pred_check_branch
          %7522 = sbr.rel (%p7520) target = $region76
        $region75: #{net_forward.2} parent=71 // pred_region
          %s7523 = smul.u32 2, %s31
          %p7524 = scmp.lt.s32.totalorder %s7523, 3
          %s7525 = scalar_select %p7524, %s7523, 3
          %s7526 = smul.addr %s7525, 2
          %s7527 = scalar_lea.vmem %s5, %s7526
        $region76: #{net_forward.2} parent=71 // pred_fallthru
          _
      $region72: #{net_forward.2} parent=5 // pred_fallthru
        _
    $region6: #{net_forward.2} parent=1 // loop_footer
      %s24 = sadd.s32 1, %s20
    $region7: #{net_forward.2} parent=1 // loop_footer_branch
      %19 = sbr.rel target = $region3
    $region8: #{net_forward.2} parent=1 // loop_exit
      _
    %7528 = vsyncpa [#allocation4], 1
    %s7529 = scalar_lea.sflag [#allocation4], 1
    %7530 = vsyncpa %s7529, 1
    %7531 = vsyncpa [#allocation6], 1
    %s7532 = scalar_lea.sflag [#allocation6], 1
    %7533 = vsyncpa %s7532, 1
    %7534 = vsyncpa [#allocation9], 1
    %s7535 = scalar_lea.sflag [#allocation9], 1
    %7536 = vsyncpa %s7535, 1

</llo_original>
